<compile_context>
chip_gen: v7x
topology: tpu7x:2x2x1
jax: 0.10.0
libtpu: 0.0.40
codegen_flags: <defaults>
</compile_context>

<pallas_src>
import numpy as np
import jax
import jax.numpy as jnp
from jax.experimental import pallas as pl
from jax.experimental.pallas import tpu as pltpu

# --- module hyper-parameters (consistent with HyperSheetMLP.__init__) ---
POINT_DIM = 3
MIN_DEG = 0
MAX_DEG = 4          # posenc dim = 2 * (MAX_DEG - MIN_DEG) * POINT_DIM = 24
DEPTH = 6
WIDTH = 64
SKIPS = (4,)
OUT_CHANNELS = 8     # == embed dim, required by the use_residual branch
EMBED_DIM = 8
USE_RESIDUAL = True

LANES = 128
W_ALIGN = 16                 # bf16 sublane tile height
MXU_DTYPE = jnp.bfloat16     # matmul operand dtype (f32 accumulation everywhere)


def make_posenc_basis(min_deg, max_deg, point_dim):
    """posenc(x) == sin(x @ basis + phase), exact re-expression of sin/cos features."""
    num_deg = max_deg - min_deg
    scales = 2.0 ** np.arange(min_deg, max_deg, dtype=np.float32)          # (D,)
    eye = np.eye(point_dim, dtype=np.float32)                              # (P, P)
    b_full = (eye[:, None, None, :]
              * scales[None, :, None, None]
              * np.ones((1, 1, 2, 1), np.float32))
    phase_full = (np.array([0.0, 0.5 * np.pi], np.float32)[None, :, None]
                  * np.ones((num_deg, 1, point_dim), np.float32))
    basis = b_full.reshape(point_dim, -1)                                  # (P, 2*D*P)
    phase = phase_full.reshape(1, -1)                                      # (1, 2*D*P)
    return basis, phase


def init_params(key, point_dim, embed_dim, min_deg, max_deg, depth, width,
                skips, out_channels):
    """torch.nn.Linear-style uniform init. Returns per-layer (w, b) + output (w, b)."""
    posenc_dim = 2 * (max_deg - min_deg) * point_dim
    in_feature = posenc_dim + embed_dim

    def dense(k, fan_in, fan_out):
        kw, kb = jax.random.split(k)
        lim = 1.0 / np.sqrt(fan_in)
        w = jax.random.uniform(kw, (fan_in, fan_out), jnp.float32, -lim, lim)
        b = jax.random.uniform(kb, (fan_out,), jnp.float32, -lim, lim)
        return w, b

    keys = jax.random.split(key, depth + 1)
    # skip layer consumes [inputs | x]  ->  fan_in = in_feature + width (input part first)
    layers = [dense(keys[0], in_feature, width)]
    for i in range(1, depth):
        fan_in = in_feature + width if i in skips else width
        layers.append(dense(keys[i], fan_in, width))
    out_layer = dense(keys[depth], width, out_channels)
    return layers, out_layer


def pack_params(layers, out_layer, *, point_dim, embed_dim, min_deg, max_deg,
                depth, skips, width, out_channels, w_dtype=MXU_DTYPE):
    """Pack all parameters into two slabs plus a static 'plan' of row offsets.

    w_slab (K_pad, 128) bf16 : stacked weight blocks (16-row aligned starts).
      - fused input-projection blocks: lanes [0:W] = layer 0, [W:2W] = skip layer
      - hidden / output blocks, zero-row-padded so 128-lane activations with a
        garbage half multiply exact zeros (no lane slicing needed in-kernel).
    f_slab (16, 128) f32     : rows [0:P]=posenc basis, row P=phase, then bias rows.
    """
    assert len(skips) == 1 and 0 < skips[0] < depth, "packing assumes one skip layer"
    skip = skips[0]
    assert 2 * width <= LANES and out_channels <= LANES
    posenc_dim = 2 * (max_deg - min_deg) * point_dim
    in_feature = posenc_dim + embed_dim
    basis, phase = make_posenc_basis(min_deg, max_deg, point_dim)

    blocks = []          # (row_offset, np.float32 array of shape (rows, 128))
    cursor = [0]

    def add_block(arr):
        off = cursor[0]
        blocks.append((off, arr))
        cursor[0] = off + ((arr.shape[0] + W_ALIGN - 1) // W_ALIGN) * W_ALIGN
        return off

    W0 = np.asarray(layers[0][0], np.float32)                  # (in_feature, W)
    Ws = np.asarray(layers[skip][0], np.float32)               # (in_feature + W, W)

    fe_feat = np.zeros((posenc_dim, LANES), np.float32)
    fe_feat[:, :width] = W0[:posenc_dim]
    fe_feat[:, width:2 * width] = Ws[:posenc_dim]
    fe_emb = np.zeros((embed_dim, LANES), np.float32)
    fe_emb[:, :width] = W0[posenc_dim:in_feature]
    fe_emb[:, width:2 * width] = Ws[posenc_dim:in_feature]
    fe_feat_off = add_block(fe_feat)
    fe_emb_off = add_block(fe_emb)

    layer_plan = []
    next_bias_row = point_dim + 2                  # basis rows, phase row, bias_both row
    state = "low"       # layer-0 output: 128-lane activation, real data in lanes [0:W]
    for i in range(1, depth):
        Wi = np.asarray(layers[i][0], np.float32)
        rows_in = width if state == "narrow" else 2 * width
        row_off = 0 if state in ("narrow", "low") else width
        blk = np.zeros((rows_in, LANES), np.float32)
        if i == skip:
            # only the x-part of the skip weight; feat/emb part lives in the fused blocks
            blk[row_off:row_off + width, width:2 * width] = Wi[in_feature:in_feature + width]
            off = add_block(blk)
            layer_plan.append(dict(off=off, rows=rows_in, is_skip=True, bias_row=-1))
            state = "high"
        else:
            blk[row_off:row_off + width, :width] = Wi
            off = add_block(blk)
            layer_plan.append(dict(off=off, rows=rows_in, is_skip=False,
                                   bias_row=next_bias_row))
            next_bias_row += 1
            state = "narrow"

    Wo = np.asarray(out_layer[0], np.float32)
    rows_in = width if state == "narrow" else 2 * width
    row_off = 0 if state in ("narrow", "low") else width
    blk = np.zeros((rows_in, LANES), np.float32)
    blk[row_off:row_off + width, :out_channels] = Wo
    out_off = add_block(blk)
    out_rows = rows_in
    out_bias_row = next_bias_row
    next_bias_row += 1

    k_pad = ((cursor[0] + W_ALIGN - 1) // W_ALIGN) * W_ALIGN
    w_slab = np.zeros((k_pad, LANES), np.float32)
    for off, arr in blocks:
        w_slab[off:off + arr.shape[0], :] = arr

    rows_pad = ((next_bias_row + 7) // 8) * 8
    f_slab = np.zeros((rows_pad, LANES), np.float32)
    f_slab[:point_dim, :posenc_dim] = basis
    f_slab[point_dim, :posenc_dim] = phase.reshape(-1)
    # bias_both row: lanes [0:W] = layer-0 bias, [W:2W] = skip-layer bias
    f_slab[point_dim + 1, :width] = np.asarray(layers[0][1], np.float32)
    f_slab[point_dim + 1, width:2 * width] = np.asarray(layers[skip][1], np.float32)
    for spec, i in zip([s for s in layer_plan if not s["is_skip"]],
                       [i for i in range(1, depth) if i != skip]):
        f_slab[spec["bias_row"], :width] = np.asarray(layers[i][1], np.float32)
    f_slab[out_bias_row, :out_channels] = np.asarray(out_layer[1], np.float32)

    plan = dict(fe_feat_off=fe_feat_off, fe_emb_off=fe_emb_off,
                phase_row=point_dim, bias_both_row=point_dim + 1,
                layers=tuple(tuple(sorted(d.items())) for d in layer_plan),
                out_off=out_off, out_rows=out_rows, out_bias_row=out_bias_row)

    return (jnp.asarray(w_slab, w_dtype), jnp.asarray(f_slab, jnp.float32), plan)


def make_kernel(*, plan, point_dim, embed_dim, posenc_dim, width, out_channels,
                use_residual, out_dtype, mxu_dtype=MXU_DTYPE):
    f32 = jnp.float32
    layer_plan = [dict(t) for t in plan["layers"]]
    fo, eo = plan["fe_feat_off"], plan["fe_emb_off"]
    phase_row, bb_row = plan["phase_row"], plan["bias_both_row"]
    oo, orows, obr = plan["out_off"], plan["out_rows"], plan["out_bias_row"]

    def kernel(in_ref, w_ref, f_ref, out_ref):
        x_in = in_ref[...]                                      # (tm, P+E) fused input
        pts = x_in[:, :point_dim].astype(f32)                   # (tm, P)
        emb = x_in[:, point_dim:point_dim + embed_dim].astype(f32)   # (tm, E)

        # --- positional encoding in f32: sin(points @ B + phase) ---
        basis = f_ref[0:point_dim, :posenc_dim]                 # (P, 24) f32
        phase = f_ref[phase_row:phase_row + 1, :posenc_dim]     # (1, 24) f32
        feat = jnp.sin(jnp.dot(pts, basis, preferred_element_type=f32) + phase)

        # bf16 only at MXU inputs; accumulation + all elementwise work stay f32.
        feat_m = feat.astype(mxu_dtype)
        emb_m = emb.astype(mxu_dtype)

        def mm(a, w):
            return jnp.dot(a, w, preferred_element_type=f32)

        # --- fused input projection for layer 0 AND the skip layer (one 128-lane pass):
        # lanes [0:W] = layer-0 pre-activation, lanes [W:2W] = skip-layer feat/emb part.
        fe = (mm(feat_m, w_ref[fo:fo + posenc_dim, :])
              + mm(emb_m, w_ref[eo:eo + embed_dim, :])
              + f_ref[bb_row:bb_row + 1, :])
        x = jnp.maximum(fe, 0.0)        # (tm, 128): real x0 in low lanes, rest harmless

        # --- hidden layers; zero-padded weight rows absorb the garbage lane halves ---
        for spec in layer_plan:
            off, rows = spec["off"], spec["rows"]
            if spec["is_skip"]:
                # skip layer: fe high lanes already hold feat/emb part + bias
                x = jnp.maximum(fe + mm(x.astype(mxu_dtype), w_ref[off:off + rows, :]),
                                0.0)    # (tm, 128): real data in high lanes
            else:
                br = spec["bias_row"]
                x = jnp.maximum(
                    mm(x.astype(mxu_dtype), w_ref[off:off + rows, :width])
                    + f_ref[br:br + 1, :width], 0.0)            # (tm, W)

        # --- output layer + output activation (ReLU per the module __init__) ---
        out = jnp.maximum(
            mm(x.astype(mxu_dtype), w_ref[oo:oo + orows, :out_channels])
            + f_ref[obr:obr + 1, :out_channels], 0.0)
        if use_residual:
            out = out + emb
        out_ref[...] = out.astype(out_dtype)

    return kernel


def _pick_tile_rows(n, requested=None):
    if requested is not None:
        return requested
    # Big tiles amortize the ~0.35us/step overhead; keep >=2 grid steps when possible
    # so the "parallel" axis can shard across v7x's 2 TensorCores.
    t = 1024
    while t > 256 and pl.cdiv(n, t) < 2:
        t //= 2
    return t


def hypersheet_mlp(points, embed, packed, *, depth=DEPTH, skips=SKIPS,
                   use_residual=USE_RESIDUAL, out_channels=OUT_CHANNELS,
                   min_deg=MIN_DEG, max_deg=MAX_DEG, width=WIDTH, tile_rows=None):
    w_slab, f_slab, plan = packed
    n, point_dim = points.shape
    embed_dim = embed.shape[1]
    posenc_dim = 2 * (max_deg - min_deg) * point_dim
    in_dim = point_dim + embed_dim

    tile_rows = _pick_tile_rows(n, tile_rows)

    # Fuse points+embed into one lane-contiguous block; pad rows so cdiv grid covers N.
    fused = jnp.concatenate([points, embed], axis=-1).astype(jnp.float32)   # (n, P+E)
    n_tiles = pl.cdiv(n, tile_rows)
    n_pad = n_tiles * tile_rows
    if n_pad != n:
        fused = jnp.pad(fused, ((0, n_pad - n), (0, 0)))

    kernel = make_kernel(
        plan=plan, point_dim=point_dim, embed_dim=embed_dim, posenc_dim=posenc_dim,
        width=width, out_channels=out_channels, use_residual=use_residual,
        out_dtype=points.dtype)

    out = pl.pallas_call(
        kernel,
        out_shape=jax.ShapeDtypeStruct((n_pad, out_channels), points.dtype),
        grid_spec=pltpu.PrefetchScalarGridSpec(
            num_scalar_prefetch=0,
            grid=(n_tiles,),
            in_specs=[
                pl.BlockSpec((tile_rows, in_dim), lambda i: (i, 0)),
                pl.BlockSpec(w_slab.shape, lambda i: (0, 0)),   # resident weight slab
                pl.BlockSpec(f_slab.shape, lambda i: (0, 0)),   # basis/phase/bias slab
            ],
            out_specs=pl.BlockSpec((tile_rows, out_channels), lambda i: (i, 0)),
        ),
        compiler_params=pltpu.CompilerParams(
            dimension_semantics=("parallel",),
            vmem_limit_bytes=32 * 1024 * 1024,
        ),
    )(fused, w_slab, f_slab)

    return out[:n]


def reference(points, embed, layers, out_layer, *, min_deg, max_deg, depth, skips,
              use_residual, mxu_dtype=MXU_DTYPE):
    """Pure-JAX reference with the same numerics (bf16 MXU operands, f32 accumulate)."""
    basis, phase = make_posenc_basis(min_deg, max_deg, points.shape[-1])
    feat = jnp.sin(points @ jnp.asarray(basis) + jnp.asarray(phase))
    inputs = jnp.concatenate([feat, embed], -1)

    def mm(a, w):
        return jnp.dot(a.astype(mxu_dtype), w.astype(mxu_dtype),
                       preferred_element_type=jnp.float32)

    w, b = layers[0]
    x = jax.nn.relu(mm(inputs, w) + b)
    for i in range(1, depth):
        w, b = layers[i]
        a = jnp.concatenate([inputs, x], -1) if i in skips else x
        x = jax.nn.relu(mm(a, w) + b)
    w, b = out_layer
    out = jax.nn.relu(mm(x, w) + b)
    if use_residual:
        out = out + embed
    return out


if __name__ == "__main__":
    key = jax.random.PRNGKey(0)
    k_pts, k_emb, k_par = jax.random.split(key, 3)

    N = 1000   # deliberately NOT a multiple of the row tile (exercises cdiv + padding)
    points = jax.random.normal(k_pts, (N, POINT_DIM), jnp.float32)
    embed = jax.random.normal(k_emb, (N, EMBED_DIM), jnp.float32)

    layers, out_layer = init_params(k_par, POINT_DIM, EMBED_DIM, MIN_DEG, MAX_DEG,
                                    DEPTH, WIDTH, SKIPS, OUT_CHANNELS)
    packed = pack_params(layers, out_layer, point_dim=POINT_DIM, embed_dim=EMBED_DIM,
                         min_deg=MIN_DEG, max_deg=MAX_DEG, depth=DEPTH, skips=SKIPS,
                         width=WIDTH, out_channels=OUT_CHANNELS)

    out = hypersheet_mlp(points, embed, packed)
    out = jax.block_until_ready(out)

    ref = reference(points, embed, layers, out_layer, min_deg=MIN_DEG, max_deg=MAX_DEG,
                    depth=DEPTH, skips=SKIPS, use_residual=USE_RESIDUAL)

    assert out.shape == (N, OUT_CHANNELS)
    np.testing.assert_allclose(np.asarray(out), np.asarray(ref), rtol=5e-3, atol=5e-3)
    print("KERNEL_OK")
</pallas_src>

<mosaic_0001>
module attributes {stable_mosaic.version = 11 : i64} {
  func.func @kernel(%arg0: i32, %arg1: memref<512x11xf32, #tpu.memory_space<vmem>>, %arg2: memref<560x128xbf16, #tpu.memory_space<vmem>>, %arg3: memref<16x128xf32, #tpu.memory_space<vmem>>, %arg4: memref<512x8xf32, #tpu.memory_space<vmem>>) attributes {dimension_semantics = [#tpu.dimension_semantics<parallel>], iteration_bounds = array<i64: 2>, scalar_prefetch = 0 : i64, scratch_operands = 0 : i64, tpu.core_type = #tpu.core_type<tc>, window_params = [{transform_indices = @transform_0, window_bounds = array<i64: 512, 11>}, {pipeline_mode = #tpu.pipeline_mode<synchronous>, transform_indices = @transform_1, window_bounds = array<i64: 560, 128>}, {pipeline_mode = #tpu.pipeline_mode<synchronous>, transform_indices = @transform_2, window_bounds = array<i64: 16, 128>}, {transform_indices = @transform_3, window_bounds = array<i64: 512, 8>}]} {
    %c0 = arith.constant 0 : index
    %c0_0 = arith.constant 0 : index
    %0 = vector.load %arg1[%c0, %c0_0] : memref<512x11xf32, #tpu.memory_space<vmem>>, vector<512x11xf32>
    %1 = vector.extract_strided_slice %0 {offsets = [0, 0], sizes = [512, 3], strides = [1, 1]} : vector<512x11xf32> to vector<512x3xf32>
    %2 = vector.extract_strided_slice %0 {offsets = [0, 3], sizes = [512, 8], strides = [1, 1]} : vector<512x11xf32> to vector<512x8xf32>
    %c0_1 = arith.constant 0 : index
    %c0_2 = arith.constant 0 : index
    %3 = vector.load %arg3[%c0_1, %c0_2] : memref<16x128xf32, #tpu.memory_space<vmem>>, vector<3x24xf32>
    %c3 = arith.constant 3 : index
    %c0_3 = arith.constant 0 : index
    %4 = vector.load %arg3[%c3, %c0_3] : memref<16x128xf32, #tpu.memory_space<vmem>>, vector<1x24xf32>
    %cst = arith.constant dense<0.000000e+00> : vector<512x24xf32>
    %5 = tpu.matmul %1, %3, %cst {dimension_numbers = #tpu.dot_dimension_numbers<[1], [0], [0], [1], [0, 0, 1, 1], [], []>} : vector<512x3xf32>, vector<3x24xf32>, vector<512x24xf32> -> vector<512x24xf32>
    %6 = vector.broadcast %4 : vector<1x24xf32> to vector<512x24xf32>
    %7 = arith.addf %5, %6 : vector<512x24xf32>
    %8 = math.sin %7 : vector<512x24xf32>
    %9 = arith.truncf %8 : vector<512x24xf32> to vector<512x24xbf16>
    %10 = arith.truncf %2 : vector<512x8xf32> to vector<512x8xbf16>
    %c0_4 = arith.constant 0 : index
    %c0_5 = arith.constant 0 : index
    %11 = vector.load %arg2[%c0_4, %c0_5] : memref<560x128xbf16, #tpu.memory_space<vmem>>, vector<24x128xbf16>
    %cst_6 = arith.constant dense<0.000000e+00> : vector<512x128xf32>
    %12 = tpu.matmul %9, %11, %cst_6 {dimension_numbers = #tpu.dot_dimension_numbers<[1], [0], [0], [1], [0, 0, 1, 1], [], []>} : vector<512x24xbf16>, vector<24x128xbf16>, vector<512x128xf32> -> vector<512x128xf32>
    %c32 = arith.constant 32 : index
    %c0_7 = arith.constant 0 : index
    %13 = vector.load %arg2[%c32, %c0_7] : memref<560x128xbf16, #tpu.memory_space<vmem>>, vector<8x128xbf16>
    %cst_8 = arith.constant dense<0.000000e+00> : vector<512x128xf32>
    %14 = tpu.matmul %10, %13, %cst_8 {dimension_numbers = #tpu.dot_dimension_numbers<[1], [0], [0], [1], [0, 0, 1, 1], [], []>} : vector<512x8xbf16>, vector<8x128xbf16>, vector<512x128xf32> -> vector<512x128xf32>
    %15 = arith.addf %12, %14 : vector<512x128xf32>
    %c4 = arith.constant 4 : index
    %c0_9 = arith.constant 0 : index
    %16 = vector.load %arg3[%c4, %c0_9] : memref<16x128xf32, #tpu.memory_space<vmem>>, vector<1x128xf32>
    %17 = vector.broadcast %16 : vector<1x128xf32> to vector<512x128xf32>
    %18 = arith.addf %15, %17 : vector<512x128xf32>
    %cst_10 = arith.constant 0.000000e+00 : f32
    %19 = vector.broadcast %cst_10 : f32 to vector<512x128xf32>
    %20 = arith.maximumf %18, %19 : vector<512x128xf32>
    %21 = arith.truncf %20 : vector<512x128xf32> to vector<512x128xbf16>
    %c48 = arith.constant 48 : index
    %c0_11 = arith.constant 0 : index
    %22 = vector.load %arg2[%c48, %c0_11] : memref<560x128xbf16, #tpu.memory_space<vmem>>, vector<128x64xbf16>
    %cst_12 = arith.constant dense<0.000000e+00> : vector<512x64xf32>
    %23 = tpu.matmul %21, %22, %cst_12 {dimension_numbers = #tpu.dot_dimension_numbers<[1], [0], [0], [1], [0, 0, 1, 1], [], []>} : vector<512x128xbf16>, vector<128x64xbf16>, vector<512x64xf32> -> vector<512x64xf32>
    %c5 = arith.constant 5 : index
    %c0_13 = arith.constant 0 : index
    %24 = vector.load %arg3[%c5, %c0_13] : memref<16x128xf32, #tpu.memory_space<vmem>>, vector<1x64xf32>
    %25 = vector.broadcast %24 : vector<1x64xf32> to vector<512x64xf32>
    %26 = arith.addf %23, %25 : vector<512x64xf32>
    %cst_14 = arith.constant 0.000000e+00 : f32
    %27 = vector.broadcast %cst_14 : f32 to vector<512x64xf32>
    %28 = arith.maximumf %26, %27 : vector<512x64xf32>
    %29 = arith.truncf %28 : vector<512x64xf32> to vector<512x64xbf16>
    %c176 = arith.constant 176 : index
    %c0_15 = arith.constant 0 : index
    %30 = vector.load %arg2[%c176, %c0_15] : memref<560x128xbf16, #tpu.memory_space<vmem>>, vector<64x64xbf16>
    %cst_16 = arith.constant dense<0.000000e+00> : vector<512x64xf32>
    %31 = tpu.matmul %29, %30, %cst_16 {dimension_numbers = #tpu.dot_dimension_numbers<[1], [0], [0], [1], [0, 0, 1, 1], [], []>} : vector<512x64xbf16>, vector<64x64xbf16>, vector<512x64xf32> -> vector<512x64xf32>
    %c6 = arith.constant 6 : index
    %c0_17 = arith.constant 0 : index
    %32 = vector.load %arg3[%c6, %c0_17] : memref<16x128xf32, #tpu.memory_space<vmem>>, vector<1x64xf32>
    %33 = vector.broadcast %32 : vector<1x64xf32> to vector<512x64xf32>
    %34 = arith.addf %31, %33 : vector<512x64xf32>
    %cst_18 = arith.constant 0.000000e+00 : f32
    %35 = vector.broadcast %cst_18 : f32 to vector<512x64xf32>
    %36 = arith.maximumf %34, %35 : vector<512x64xf32>
    %37 = arith.truncf %36 : vector<512x64xf32> to vector<512x64xbf16>
    %c240 = arith.constant 240 : index
    %c0_19 = arith.constant 0 : index
    %38 = vector.load %arg2[%c240, %c0_19] : memref<560x128xbf16, #tpu.memory_space<vmem>>, vector<64x64xbf16>
    %cst_20 = arith.constant dense<0.000000e+00> : vector<512x64xf32>
    %39 = tpu.matmul %37, %38, %cst_20 {dimension_numbers = #tpu.dot_dimension_numbers<[1], [0], [0], [1], [0, 0, 1, 1], [], []>} : vector<512x64xbf16>, vector<64x64xbf16>, vector<512x64xf32> -> vector<512x64xf32>
    %c7 = arith.constant 7 : index
    %c0_21 = arith.constant 0 : index
    %40 = vector.load %arg3[%c7, %c0_21] : memref<16x128xf32, #tpu.memory_space<vmem>>, vector<1x64xf32>
    %41 = vector.broadcast %40 : vector<1x64xf32> to vector<512x64xf32>
    %42 = arith.addf %39, %41 : vector<512x64xf32>
    %cst_22 = arith.constant 0.000000e+00 : f32
    %43 = vector.broadcast %cst_22 : f32 to vector<512x64xf32>
    %44 = arith.maximumf %42, %43 : vector<512x64xf32>
    %45 = arith.truncf %44 : vector<512x64xf32> to vector<512x64xbf16>
    %c304 = arith.constant 304 : index
    %c0_23 = arith.constant 0 : index
    %46 = vector.load %arg2[%c304, %c0_23] : memref<560x128xbf16, #tpu.memory_space<vmem>>, vector<64x128xbf16>
    %cst_24 = arith.constant dense<0.000000e+00> : vector<512x128xf32>
    %47 = tpu.matmul %45, %46, %cst_24 {dimension_numbers = #tpu.dot_dimension_numbers<[1], [0], [0], [1], [0, 0, 1, 1], [], []>} : vector<512x64xbf16>, vector<64x128xbf16>, vector<512x128xf32> -> vector<512x128xf32>
    %48 = arith.addf %18, %47 : vector<512x128xf32>
    %cst_25 = arith.constant 0.000000e+00 : f32
    %49 = vector.broadcast %cst_25 : f32 to vector<512x128xf32>
    %50 = arith.maximumf %48, %49 : vector<512x128xf32>
    %51 = arith.truncf %50 : vector<512x128xf32> to vector<512x128xbf16>
    %c368 = arith.constant 368 : index
    %c0_26 = arith.constant 0 : index
    %52 = vector.load %arg2[%c368, %c0_26] : memref<560x128xbf16, #tpu.memory_space<vmem>>, vector<128x64xbf16>
    %cst_27 = arith.constant dense<0.000000e+00> : vector<512x64xf32>
    %53 = tpu.matmul %51, %52, %cst_27 {dimension_numbers = #tpu.dot_dimension_numbers<[1], [0], [0], [1], [0, 0, 1, 1], [], []>} : vector<512x128xbf16>, vector<128x64xbf16>, vector<512x64xf32> -> vector<512x64xf32>
    %c8 = arith.constant 8 : index
    %c0_28 = arith.constant 0 : index
    %54 = vector.load %arg3[%c8, %c0_28] : memref<16x128xf32, #tpu.memory_space<vmem>>, vector<1x64xf32>
    %55 = vector.broadcast %54 : vector<1x64xf32> to vector<512x64xf32>
    %56 = arith.addf %53, %55 : vector<512x64xf32>
    %cst_29 = arith.constant 0.000000e+00 : f32
    %57 = vector.broadcast %cst_29 : f32 to vector<512x64xf32>
    %58 = arith.maximumf %56, %57 : vector<512x64xf32>
    %59 = arith.truncf %58 : vector<512x64xf32> to vector<512x64xbf16>
    %c496 = arith.constant 496 : index
    %c0_30 = arith.constant 0 : index
    %60 = vector.load %arg2[%c496, %c0_30] : memref<560x128xbf16, #tpu.memory_space<vmem>>, vector<64x8xbf16>
    %cst_31 = arith.constant dense<0.000000e+00> : vector<512x8xf32>
    %61 = tpu.matmul %59, %60, %cst_31 {dimension_numbers = #tpu.dot_dimension_numbers<[1], [0], [0], [1], [0, 0, 1, 1], [], []>} : vector<512x64xbf16>, vector<64x8xbf16>, vector<512x8xf32> -> vector<512x8xf32>
    %c9 = arith.constant 9 : index
    %c0_32 = arith.constant 0 : index
    %62 = vector.load %arg3[%c9, %c0_32] : memref<16x128xf32, #tpu.memory_space<vmem>>, vector<1x8xf32>
    %63 = vector.broadcast %62 : vector<1x8xf32> to vector<512x8xf32>
    %64 = arith.addf %61, %63 : vector<512x8xf32>
    %cst_33 = arith.constant 0.000000e+00 : f32
    %65 = vector.broadcast %cst_33 : f32 to vector<512x8xf32>
    %66 = arith.maximumf %64, %65 : vector<512x8xf32>
    %67 = arith.addf %66, %2 : vector<512x8xf32>
    %c0_34 = arith.constant 0 : index
    %c0_35 = arith.constant 0 : index
    %68 = vector.load %arg4[%c0_34, %c0_35] : memref<512x8xf32, #tpu.memory_space<vmem>>, vector<512x8xf32>
    tpu.vector_store %arg4[%c0_34, %c0_35], %67 {strides = array<i32>} : memref<512x8xf32, #tpu.memory_space<vmem>>, vector<512x8xf32>,
    return
  }
  func.func @transform_0(%arg0: i32) -> (i32, i32) {
    %c0_i32 = arith.constant 0 : i32
    %c0_i32_0 = arith.constant 0 : i32
    return %arg0, %c0_i32 : i32, i32
  }
  func.func @transform_1(%arg0: i32) -> (i32, i32) {
    %c0_i32 = arith.constant 0 : i32
    %c0_i32_0 = arith.constant 0 : i32
    %c0_i32_1 = arith.constant 0 : i32
    return %c0_i32, %c0_i32_0 : i32, i32
  }
  func.func @transform_2(%arg0: i32) -> (i32, i32) {
    %c0_i32 = arith.constant 0 : i32
    %c0_i32_0 = arith.constant 0 : i32
    %c0_i32_1 = arith.constant 0 : i32
    return %c0_i32, %c0_i32_0 : i32, i32
  }
  func.func @transform_3(%arg0: i32) -> (i32, i32) {
    %c0_i32 = arith.constant 0 : i32
    %c0_i32_0 = arith.constant 0 : i32
    return %arg0, %c0_i32 : i32, i32
  }
}

</mosaic_0001>

<llo_original>
// kernel: tpu_custom_call.1
$region0: #{tpu_custom_call.1}
  #allocation0 [shape = 'u32[]', space=smem, size = 0x4, offset = 0x4, fixed_abs, tag = 'smem constant byte address 0x4 - core index']
  #allocation1 [shape = 'u32[144,128]{1,0:T(1,128)}', space=vmem, size = 0x12000, scoped, tag = 'internal scratch']
  %s0 = inlined_call_operand.vmem [shape: f32[1024,11], index: 0, kind: input, shape index: {}]
  %s1 = inlined_call_operand.vmem [shape: bf16[560,128], index: 1, kind: input, shape index: {}]
  %s2 = inlined_call_operand.vmem [shape: f32[16,128], index: 2, kind: input, shape index: {}]
  %s3 = inlined_call_operand.vmem [shape: f32[1024,8], index: 3, kind: output, shape index: {}]
  %s4 = sld [smem:[#allocation0]]
  $region45: #{tpu_custom_call.1} parent=0
    _
  %s6 = ssub.s32 1, %s4
  %s7 = scalar_select 0, %s6, %s4
  loop: start=0, step=1, limit=4
  $region2: #{tpu_custom_call.1} parent=0 // loop_pre_header
    _
  $region3: #{tpu_custom_call.1} parent=0 // loop_header
    %s9 = sphi 0, %s13
    %p10 = scmp.ge.s32.totalorder %s9, 4
    %s19 = sphi 0, %s21
    %s22 = sphi 0, %s19
    %s23 = sphi 0, %s22
    %s39 = sphi 0, %s23
    %s43 = sphi 0, %s43
    %s45 = sphi 0, %s43
    %s46 = sphi 0, %s45
    %s60 = sphi 0, %s46
    %s64 = sphi 0, %s64
    %s66 = sphi 0, %s64
    %s67 = sphi 0, %s66
    %s81 = sphi 0, %s67
    %s87 = sphi 0, %s89
    %s90 = sphi 0, %s87
    %s91 = sphi 0, %s90
    %s107 = sphi 0, %s91
  $region4: #{tpu_custom_call.1} parent=0 // loop_header_branch
    %12 = sbr.rel (%p10) target = $region8
  $region5: #{tpu_custom_call.1} parent=0 // loop_body
    %s14 = ssub.s32 %s9, 1
    %s15 = ssub.s32 %s9, 2
    %s16 = sadd.s32 %s9, 1
    %s17 = ssub.s32 %s9, %s16
    %p18 = scmp.eq.s32.totalorder %s17, 0
    %s20 = sadd.s32 %s19, 1
    %s21 = scalar_select %p18, %s19, %s20
    %p24 = pneg %p18
    %p25 = scmp.eq.s32.totalorder %s9, 1
    %p26 = por %p24, %p25
    %p27 = scmp.ne.s32.totalorder %s19, %s22
    %p28 = scmp.eq.s32.totalorder %s9, 0
    %p29 = por %p27, %p28
    %p30 = scmp.ne.s32.totalorder %s19, %s22
    %p31 = scmp.eq.s32.totalorder %s14, 1
    %p32 = por %p30, %p31
    %p33 = scmp.ne.s32.totalorder %s22, %s23
    %p34 = scmp.eq.s32.totalorder %s14, 0
    %p35 = por %p33, %p34
    %p36 = scmp.ne.s32.totalorder %s22, %s23
    %p37 = scmp.eq.s32.totalorder %s15, 1
    %p38 = por %p36, %p37
    %p40 = scmp.ne.s32.totalorder %s23, %s39
    %p41 = scmp.eq.s32.totalorder %s15, 0
    %p42 = por %p40, %p41
    %s44 = sadd.s32 %s43, 1
    %p47 = scmp.eq.s32.totalorder %s9, 1
    %p48 = scmp.ne.s32.totalorder %s43, %s45
    %p49 = scmp.eq.s32.totalorder %s9, 0
    %p50 = por %p48, %p49
    %p51 = scmp.ne.s32.totalorder %s43, %s45
    %p52 = scmp.eq.s32.totalorder %s14, 1
    %p53 = por %p51, %p52
    %p54 = scmp.ne.s32.totalorder %s45, %s46
    %p55 = scmp.eq.s32.totalorder %s14, 0
    %p56 = por %p54, %p55
    %p57 = scmp.ne.s32.totalorder %s45, %s46
    %p58 = scmp.eq.s32.totalorder %s15, 1
    %p59 = por %p57, %p58
    %p61 = scmp.ne.s32.totalorder %s46, %s60
    %p62 = scmp.eq.s32.totalorder %s15, 0
    %p63 = por %p61, %p62
    %s65 = sadd.s32 %s64, 1
    %p68 = scmp.eq.s32.totalorder %s9, 1
    %p69 = scmp.ne.s32.totalorder %s64, %s66
    %p70 = scmp.eq.s32.totalorder %s9, 0
    %p71 = por %p69, %p70
    %p72 = scmp.ne.s32.totalorder %s64, %s66
    %p73 = scmp.eq.s32.totalorder %s14, 1
    %p74 = por %p72, %p73
    %p75 = scmp.ne.s32.totalorder %s66, %s67
    %p76 = scmp.eq.s32.totalorder %s14, 0
    %p77 = por %p75, %p76
    %p78 = scmp.ne.s32.totalorder %s66, %s67
    %p79 = scmp.eq.s32.totalorder %s15, 1
    %p80 = por %p78, %p79
    %p82 = scmp.ne.s32.totalorder %s67, %s81
    %p83 = scmp.eq.s32.totalorder %s15, 0
    %p84 = por %p82, %p83
    %s85 = ssub.s32 %s9, %s16
    %p86 = scmp.eq.s32.totalorder %s85, 0
    %s88 = sadd.s32 %s87, 1
    %s89 = scalar_select %p86, %s87, %s88
    %p92 = pneg %p86
    %p93 = scmp.eq.s32.totalorder %s9, 1
    %p94 = por %p92, %p93
    %p95 = scmp.ne.s32.totalorder %s87, %s90
    %p96 = scmp.eq.s32.totalorder %s9, 0
    %p97 = por %p95, %p96
    %p98 = scmp.ne.s32.totalorder %s87, %s90
    %p99 = scmp.eq.s32.totalorder %s14, 1
    %p100 = por %p98, %p99
    %p101 = scmp.ne.s32.totalorder %s90, %s91
    %p102 = scmp.eq.s32.totalorder %s14, 0
    %p103 = por %p101, %p102
    %p104 = scmp.ne.s32.totalorder %s90, %s91
    %p105 = scmp.eq.s32.totalorder %s15, 1
    %p106 = por %p104, %p105
    %p108 = scmp.ne.s32.totalorder %s91, %s107
    %p109 = scmp.eq.s32.totalorder %s15, 0
    %p110 = por %p108, %p109
    %p111 = scmp.le.s32.totalorder 1, %s9
    %p112 = scmp.lt.s32.totalorder %s9, 3
    %p113 = pnand %p111, %p112
    %p114 = pneg %p113
    // Predicated region
    $region9: #{tpu_custom_call.1} parent=5 // pred_check
      _
    $region10: #{tpu_custom_call.1} parent=5 // pred_check_branch
      %116 = sbr.rel (%p113) target = $region12
    $region11: #{tpu_custom_call.1} parent=5 // pred_region
      %s117 = ssub.s32 %s9, 1
      // Predicated region
      $region13: #{tpu_custom_call.1} parent=11 // pred_check
        %p118 = pneg %p56
      $region14: #{tpu_custom_call.1} parent=11 // pred_check_branch
        %120 = sbr.rel (%p118) target = $region16
      $region15: #{tpu_custom_call.1} parent=11 // pred_region
        _
      $region16: #{tpu_custom_call.1} parent=11 // pred_fallthru
        _
      // Predicated region
      $region17: #{tpu_custom_call.1} parent=11 // pred_check
        %p121 = pneg %p77
      $region18: #{tpu_custom_call.1} parent=11 // pred_check_branch
        %123 = sbr.rel (%p121) target = $region20
      $region19: #{tpu_custom_call.1} parent=11 // pred_region
        _
      $region20: #{tpu_custom_call.1} parent=11 // pred_fallthru
        _
    $region12: #{tpu_custom_call.1} parent=5 // pred_fallthru
      _
    %p124 = scmp.lt.s32.totalorder %s9, 2
    // Predicated region
    $region21: #{tpu_custom_call.1} parent=5 // pred_check
      %p125 = pneg %p124
    $region22: #{tpu_custom_call.1} parent=5 // pred_check_branch
      %127 = sbr.rel (%p125) target = $region24
    $region23: #{tpu_custom_call.1} parent=5 // pred_region
      // Predicated region
      $region25: #{tpu_custom_call.1} parent=23 // pred_check
        %p128 = pneg %p29
      $region26: #{tpu_custom_call.1} parent=23 // pred_check_branch
        %130 = sbr.rel (%p128) target = $region28
      $region27: #{tpu_custom_call.1} parent=23 // pred_region
        %s131 = smul.u32 64, %s9
        %p132 = scmp.lt.s32.totalorder %s131, 127
        %s133 = scalar_select %p132, %s131, 127
        %s134 = smul.addr %s133, 8
        %s135 = scalar_lea.vmem %s0, %s134
        %s136 = smul.u32 64, %s9
      $region28: #{tpu_custom_call.1} parent=23 // pred_fallthru
        _
    $region24: #{tpu_custom_call.1} parent=5 // pred_fallthru
      _
    %p137 = scmp.le.s32.totalorder 1, %s9
    %p138 = scmp.lt.s32.totalorder %s9, 3
    %p139 = pnand %p137, %p138
    %p140 = pneg %p139
    // Predicated region
    $region29: #{tpu_custom_call.1} parent=5 // pred_check
      _
    $region30: #{tpu_custom_call.1} parent=5 // pred_check_branch
      %142 = sbr.rel (%p139) target = $region32
    $region31: #{tpu_custom_call.1} parent=5 // pred_region
      %s143 = ssub.s32 %s9, 1
      %s144 = smul.u32 64, %s14
      %p145 = scmp.lt.s32.totalorder %s144, 127
      %s146 = scalar_select %p145, %s144, 127
      %s147 = smul.addr %s146, 8
      %s148 = scalar_lea.vmem %s0, %s147
      %p149 = pneg %p35
      %p150 = pneg %p32
      %p151 = pneg %p56
      %p152 = pneg %p53
      %p153 = pneg %p77
      %p154 = pneg %p74
      %p155 = pneg %p103
      %p156 = pneg %p100
      %s157 = smul.u32 64, %s14
      %p158 = scmp.lt.s32.totalorder %s157, 127
      %s159 = scalar_select %p158, %s157, 127
      %s160 = smul.addr %s159, 8
      %s161 = scalar_lea.vmem %s3, %s160
      %s162 = smul.u32 64, %s14
      %p163 = scmp.lt.s32.totalorder %s162, 127
      %s164 = scalar_select %p163, %s162, 127
      %s165 = smul.addr %s164, 8
      %s166 = scalar_lea.vmem %s0, %s165
      %s167 = smul.u32 64, %s14
      %s168 = smul.u32 64, %s14
      %p169 = scmp.lt.s32.totalorder %s168, 127
      %s170 = scalar_select %p169, %s168, 127
      %s171 = smul.addr %s170, 8
      %s172 = scalar_lea.vmem %s3, %s171
      %s173 = smul.u32 64, %s14
      %v175 = vld [vmem:[%s166] sm:$0xff]
      %v176 = vld [vmem:[%s166 + $0x8] sm:$0xff]
      %v177 = vld [vmem:[%s166 + $0x10] sm:$0xff]
      %v178 = vld [vmem:[%s166 + $0x18] sm:$0xff]
      %v179 = vld [vmem:[%s166 + $0x20] sm:$0xff]
      %v180 = vld [vmem:[%s166 + $0x28] sm:$0xff]
      %v181 = vld [vmem:[%s166 + $0x30] sm:$0xff]
      %v182 = vld [vmem:[%s166 + $0x38] sm:$0xff]
      %v183 = vld [vmem:[%s166 + $0x40] sm:$0xff]
      %v184 = vld [vmem:[%s166 + $0x48] sm:$0xff]
      %v185 = vld [vmem:[%s166 + $0x50] sm:$0xff]
      %v186 = vld [vmem:[%s166 + $0x58] sm:$0xff]
      %v187 = vld [vmem:[%s166 + $0x60] sm:$0xff]
      %v188 = vld [vmem:[%s166 + $0x68] sm:$0xff]
      %v189 = vld [vmem:[%s166 + $0x70] sm:$0xff]
      %v190 = vld [vmem:[%s166 + $0x78] sm:$0xff]
      %v191 = vld [vmem:[%s166 + $0x80] sm:$0xff]
      %v192 = vld [vmem:[%s166 + $0x88] sm:$0xff]
      %v193 = vld [vmem:[%s166 + $0x90] sm:$0xff]
      %v194 = vld [vmem:[%s166 + $0x98] sm:$0xff]
      %v195 = vld [vmem:[%s166 + $0xa0] sm:$0xff]
      %v196 = vld [vmem:[%s166 + $0xa8] sm:$0xff]
      %v197 = vld [vmem:[%s166 + $0xb0] sm:$0xff]
      %v198 = vld [vmem:[%s166 + $0xb8] sm:$0xff]
      %v199 = vld [vmem:[%s166 + $0xc0] sm:$0xff]
      %v200 = vld [vmem:[%s166 + $0xc8] sm:$0xff]
      %v201 = vld [vmem:[%s166 + $0xd0] sm:$0xff]
      %v202 = vld [vmem:[%s166 + $0xd8] sm:$0xff]
      %v203 = vld [vmem:[%s166 + $0xe0] sm:$0xff]
      %v204 = vld [vmem:[%s166 + $0xe8] sm:$0xff]
      %v205 = vld [vmem:[%s166 + $0xf0] sm:$0xff]
      %v206 = vld [vmem:[%s166 + $0xf8] sm:$0xff]
      %v207 = vld [vmem:[%s166 + $0x100] sm:$0xff]
      %v208 = vld [vmem:[%s166 + $0x108] sm:$0xff]
      %v209 = vld [vmem:[%s166 + $0x110] sm:$0xff]
      %v210 = vld [vmem:[%s166 + $0x118] sm:$0xff]
      %v211 = vld [vmem:[%s166 + $0x120] sm:$0xff]
      %v212 = vld [vmem:[%s166 + $0x128] sm:$0xff]
      %v213 = vld [vmem:[%s166 + $0x130] sm:$0xff]
      %v214 = vld [vmem:[%s166 + $0x138] sm:$0xff]
      %v215 = vld [vmem:[%s166 + $0x140] sm:$0xff]
      %v216 = vld [vmem:[%s166 + $0x148] sm:$0xff]
      %v217 = vld [vmem:[%s166 + $0x150] sm:$0xff]
      %v218 = vld [vmem:[%s166 + $0x158] sm:$0xff]
      %v219 = vld [vmem:[%s166 + $0x160] sm:$0xff]
      %v220 = vld [vmem:[%s166 + $0x168] sm:$0xff]
      %v221 = vld [vmem:[%s166 + $0x170] sm:$0xff]
      %v222 = vld [vmem:[%s166 + $0x178] sm:$0xff]
      %v223 = vld [vmem:[%s166 + $0x180] sm:$0xff]
      %v224 = vld [vmem:[%s166 + $0x188] sm:$0xff]
      %v225 = vld [vmem:[%s166 + $0x190] sm:$0xff]
      %v226 = vld [vmem:[%s166 + $0x198] sm:$0xff]
      %v227 = vld [vmem:[%s166 + $0x1a0] sm:$0xff]
      %v228 = vld [vmem:[%s166 + $0x1a8] sm:$0xff]
      %v229 = vld [vmem:[%s166 + $0x1b0] sm:$0xff]
      %v230 = vld [vmem:[%s166 + $0x1b8] sm:$0xff]
      %v231 = vld [vmem:[%s166 + $0x1c0] sm:$0xff]
      %v232 = vld [vmem:[%s166 + $0x1c8] sm:$0xff]
      %v233 = vld [vmem:[%s166 + $0x1d0] sm:$0xff]
      %v234 = vld [vmem:[%s166 + $0x1d8] sm:$0xff]
      %v235 = vld [vmem:[%s166 + $0x1e0] sm:$0xff]
      %v236 = vld [vmem:[%s166 + $0x1e8] sm:$0xff]
      %v237 = vld [vmem:[%s166 + $0x1f0] sm:$0xff]
      %v238 = vld [vmem:[%s166 + $0x1f8] sm:$0xff]
      %v239 = vld [vmem:[%s2] sm:$0x7]
      %v240 = vld [vmem:[%s2 + $0x3] sm:$0x1]
      %v241 = vlaneseq
      %v242 = vshrl.u32 %v241, 7
      %v243 = vsub.s32 0, %v242
      %v244 = vrot.slane %v240, %v243
      %vm245 = vcmask 23552
      %v247 = vsel %vm245, %v175, 0
      %v250 = vsel %vm245, %v176, 0
      %v253 = vsel %vm245, %v177, 0
      %v256 = vsel %vm245, %v178, 0
      %v259 = vsel %vm245, %v179, 0
      %v262 = vsel %vm245, %v180, 0
      %v265 = vsel %vm245, %v181, 0
      %v268 = vsel %vm245, %v182, 0
      %v271 = vsel %vm245, %v183, 0
      %v274 = vsel %vm245, %v184, 0
      %v277 = vsel %vm245, %v185, 0
      %v280 = vsel %vm245, %v186, 0
      %v283 = vsel %vm245, %v187, 0
      %v286 = vsel %vm245, %v188, 0
      %v289 = vsel %vm245, %v189, 0
      %v292 = vsel %vm245, %v190, 0
      %v295 = vsel %vm245, %v191, 0
      %v298 = vsel %vm245, %v192, 0
      %v301 = vsel %vm245, %v193, 0
      %v304 = vsel %vm245, %v194, 0
      %v307 = vsel %vm245, %v195, 0
      %v310 = vsel %vm245, %v196, 0
      %v313 = vsel %vm245, %v197, 0
      %v316 = vsel %vm245, %v198, 0
      %v319 = vsel %vm245, %v199, 0
      %v322 = vsel %vm245, %v200, 0
      %v325 = vsel %vm245, %v201, 0
      %v328 = vsel %vm245, %v202, 0
      %v331 = vsel %vm245, %v203, 0
      %v334 = vsel %vm245, %v204, 0
      %v337 = vsel %vm245, %v205, 0
      %v340 = vsel %vm245, %v206, 0
      %v343 = vsel %vm245, %v207, 0
      %v346 = vsel %vm245, %v208, 0
      %v349 = vsel %vm245, %v209, 0
      %v352 = vsel %vm245, %v210, 0
      %v355 = vsel %vm245, %v211, 0
      %v358 = vsel %vm245, %v212, 0
      %v361 = vsel %vm245, %v213, 0
      %v364 = vsel %vm245, %v214, 0
      %v367 = vsel %vm245, %v215, 0
      %v370 = vsel %vm245, %v216, 0
      %v373 = vsel %vm245, %v217, 0
      %v376 = vsel %vm245, %v218, 0
      %v379 = vsel %vm245, %v219, 0
      %v382 = vsel %vm245, %v220, 0
      %v385 = vsel %vm245, %v221, 0
      %v388 = vsel %vm245, %v222, 0
      %v391 = vsel %vm245, %v223, 0
      %v394 = vsel %vm245, %v224, 0
      %v397 = vsel %vm245, %v225, 0
      %v400 = vsel %vm245, %v226, 0
      %v403 = vsel %vm245, %v227, 0
      %v406 = vsel %vm245, %v228, 0
      %v409 = vsel %vm245, %v229, 0
      %v412 = vsel %vm245, %v230, 0
      %v415 = vsel %vm245, %v231, 0
      %v418 = vsel %vm245, %v232, 0
      %v421 = vsel %vm245, %v233, 0
      %v424 = vsel %vm245, %v234, 0
      %v427 = vsel %vm245, %v235, 0
      %v430 = vsel %vm245, %v236, 0
      %v433 = vsel %vm245, %v237, 0
      %v436 = vsel %vm245, %v238, 0
      %vm438 = vcmask 1042432
      %v440 = vsel %vm438, %v239, 0
      %442 = vmatprep.subr.mxu0 0.0
      %443 = vmatpush1.msra.mxu0 %v440
      %444 = vmatprep.subr.mxu0 0.0
      %445 = vmatpush1.msra.mxu0 0.0
      %446 = vmatprep.subr.mxu0 0.0
      %447 = vmatpush1.msra.mxu0 0.0
      %448 = vmatprep.subr.mxu0 0.0
      %449 = vmatpush1.msra.mxu0 0.0
      %450 = vmatprep.subr.mxu0 0.0
      %451 = vmatpush1.msra.mxu0 0.0
      %452 = vmatprep.subr.mxu0 0.0
      %453 = vmatpush1.msra.mxu0 0.0
      %454 = vmatprep.subr.mxu0 0.0
      %455 = vmatpush1.msra.mxu0 0.0
      %456 = vmatprep.subr.mxu0 0.0
      %457 = vmatpush1.msra.mxu0 0.0
      %458 = vmatprep.subr.mxu0 0.0
      %459 = vmatpush1.msra.mxu0 0.0
      %460 = vmatprep.subr.mxu0 0.0
      %461 = vmatpush1.msra.mxu0 0.0
      %462 = vmatprep.subr.mxu0 0.0
      %463 = vmatpush1.msra.mxu0 0.0
      %464 = vmatprep.subr.mxu0 0.0
      %465 = vmatpush1.msra.mxu0 0.0
      %466 = vmatprep.subr.mxu0 0.0
      %467 = vmatpush1.msra.mxu0 0.0
      %468 = vmatprep.subr.mxu0 0.0
      %469 = vmatpush1.msra.mxu0 0.0
      %470 = vmatprep.subr.mxu0 0.0
      %471 = vmatpush1.msra.mxu0 0.0
      %472 = vmatprep.subr.mxu0 0.0
      %473 = vmatpush1.msra.mxu0 0.0
      %474 = vmatprep.subr.mxu0 0.0
      %475 = vmatpush1.msra.mxu0 0.0
      %476 = vmatprep.subr.mxu0 0.0
      %477 = vmatpush1.msra.mxu0 0.0
      %478 = vmatprep.subr.mxu0 0.0
      %479 = vmatpush1.msra.mxu0 0.0
      %480 = vmatprep.subr.mxu0 0.0
      %481 = vmatpush1.msra.mxu0 0.0
      %482 = vmatprep.subr.mxu0 0.0
      %483 = vmatpush1.msra.mxu0 0.0
      %484 = vmatprep.subr.mxu0 0.0
      %485 = vmatpush1.msra.mxu0 0.0
      %486 = vmatprep.subr.mxu0 0.0
      %487 = vmatpush1.msra.mxu0 0.0
      %488 = vmatprep.subr.mxu0 0.0
      %489 = vmatpush1.msra.mxu0 0.0
      %490 = vmatprep.subr.mxu0 0.0
      %491 = vmatpush1.msra.mxu0 0.0
      %492 = vmatprep.subr.mxu0 0.0
      %493 = vmatpush1.msra.mxu0 0.0
      %494 = vmatprep.subr.mxu0 0.0
      %495 = vmatpush1.msra.mxu0 0.0
      %496 = vmatprep.subr.mxu0 0.0
      %497 = vmatpush1.msra.mxu0 0.0
      %498 = vmatprep.subr.mxu0 0.0
      %499 = vmatpush1.msra.mxu0 0.0
      %500 = vmatprep.subr.mxu0 0.0
      %501 = vmatpush1.msra.mxu0 0.0
      %502 = vmatprep.subr.mxu0 0.0
      %503 = vmatpush1.msra.mxu0 0.0
      %504 = vmatprep.subr.mxu0 0.0
      %505 = vmatpush1.msra.mxu0 0.0
      %506 = vmatprep.mubr.f32.mxu0 0.0
      %507 = vmatmul.mubr.f32.gmra.mrb[0].mxu0 %v247
      %v508 = vpop.f32.mrb[0].mxu0
      %v509 = vadd.f32 %v244, %v508
      %v510 = vpop.f32.mrb[0].mxu0
      %511 = vmatprep.mubr.f32.mxu0 0.0
      %512 = vmatmul.mubr.f32.gmra.mrb[0].mxu0 %v250
      %v513 = vpop.f32.mrb[0].mxu0
      %v514 = vadd.f32 %v244, %v513
      %v515 = vpop.f32.mrb[0].mxu0
      %516 = vmatprep.mubr.f32.mxu0 0.0
      %517 = vmatmul.mubr.f32.gmra.mrb[0].mxu0 %v253
      %v518 = vpop.f32.mrb[0].mxu0
      %v519 = vadd.f32 %v244, %v518
      %v520 = vpop.f32.mrb[0].mxu0
      %521 = vmatprep.mubr.f32.mxu0 0.0
      %522 = vmatmul.mubr.f32.gmra.mrb[0].mxu0 %v256
      %v523 = vpop.f32.mrb[0].mxu0
      %v524 = vadd.f32 %v244, %v523
      %v525 = vpop.f32.mrb[0].mxu0
      %526 = vmatprep.mubr.f32.mxu0 0.0
      %527 = vmatmul.mubr.f32.gmra.mrb[0].mxu0 %v259
      %v528 = vpop.f32.mrb[0].mxu0
      %v529 = vadd.f32 %v244, %v528
      %v530 = vpop.f32.mrb[0].mxu0
      %531 = vmatprep.mubr.f32.mxu0 0.0
      %532 = vmatmul.mubr.f32.gmra.mrb[0].mxu0 %v262
      %v533 = vpop.f32.mrb[0].mxu0
      %v534 = vadd.f32 %v244, %v533
      %v535 = vpop.f32.mrb[0].mxu0
      %536 = vmatprep.mubr.f32.mxu0 0.0
      %537 = vmatmul.mubr.f32.gmra.mrb[0].mxu0 %v265
      %v538 = vpop.f32.mrb[0].mxu0
      %v539 = vadd.f32 %v244, %v538
      %v540 = vpop.f32.mrb[0].mxu0
      %541 = vmatprep.mubr.f32.mxu0 0.0
      %542 = vmatmul.mubr.f32.gmra.mrb[0].mxu0 %v268
      %v543 = vpop.f32.mrb[0].mxu0
      %v544 = vadd.f32 %v244, %v543
      %v545 = vpop.f32.mrb[0].mxu0
      %546 = vmatprep.mubr.f32.mxu0 0.0
      %547 = vmatmul.mubr.f32.gmra.mrb[0].mxu0 %v271
      %v548 = vpop.f32.mrb[0].mxu0
      %v549 = vadd.f32 %v244, %v548
      %v550 = vpop.f32.mrb[0].mxu0
      %551 = vmatprep.mubr.f32.mxu0 0.0
      %552 = vmatmul.mubr.f32.gmra.mrb[0].mxu0 %v274
      %v553 = vpop.f32.mrb[0].mxu0
      %v554 = vadd.f32 %v244, %v553
      %v555 = vpop.f32.mrb[0].mxu0
      %556 = vmatprep.mubr.f32.mxu0 0.0
      %557 = vmatmul.mubr.f32.gmra.mrb[0].mxu0 %v277
      %v558 = vpop.f32.mrb[0].mxu0
      %v559 = vadd.f32 %v244, %v558
      %v560 = vpop.f32.mrb[0].mxu0
      %561 = vmatprep.mubr.f32.mxu0 0.0
      %562 = vmatmul.mubr.f32.gmra.mrb[0].mxu0 %v280
      %v563 = vpop.f32.mrb[0].mxu0
      %v564 = vadd.f32 %v244, %v563
      %v565 = vpop.f32.mrb[0].mxu0
      %566 = vmatprep.mubr.f32.mxu0 0.0
      %567 = vmatmul.mubr.f32.gmra.mrb[0].mxu0 %v283
      %v568 = vpop.f32.mrb[0].mxu0
      %v569 = vadd.f32 %v244, %v568
      %v570 = vpop.f32.mrb[0].mxu0
      %571 = vmatprep.mubr.f32.mxu0 0.0
      %572 = vmatmul.mubr.f32.gmra.mrb[0].mxu0 %v286
      %v573 = vpop.f32.mrb[0].mxu0
      %v574 = vadd.f32 %v244, %v573
      %v575 = vpop.f32.mrb[0].mxu0
      %576 = vmatprep.mubr.f32.mxu0 0.0
      %577 = vmatmul.mubr.f32.gmra.mrb[0].mxu0 %v289
      %v578 = vpop.f32.mrb[0].mxu0
      %v579 = vadd.f32 %v244, %v578
      %v580 = vpop.f32.mrb[0].mxu0
      %581 = vmatprep.mubr.f32.mxu0 0.0
      %582 = vmatmul.mubr.f32.gmra.mrb[0].mxu0 %v292
      %v583 = vpop.f32.mrb[0].mxu0
      %v584 = vadd.f32 %v244, %v583
      %v585 = vpop.f32.mrb[0].mxu0
      %586 = vmatprep.mubr.f32.mxu0 0.0
      %587 = vmatmul.mubr.f32.gmra.mrb[0].mxu0 %v295
      %v588 = vpop.f32.mrb[0].mxu0
      %v589 = vadd.f32 %v244, %v588
      %v590 = vpop.f32.mrb[0].mxu0
      %591 = vmatprep.mubr.f32.mxu0 0.0
      %592 = vmatmul.mubr.f32.gmra.mrb[0].mxu0 %v298
      %v593 = vpop.f32.mrb[0].mxu0
      %v594 = vadd.f32 %v244, %v593
      %v595 = vpop.f32.mrb[0].mxu0
      %596 = vmatprep.mubr.f32.mxu0 0.0
      %597 = vmatmul.mubr.f32.gmra.mrb[0].mxu0 %v301
      %v598 = vpop.f32.mrb[0].mxu0
      %v599 = vadd.f32 %v244, %v598
      %v600 = vpop.f32.mrb[0].mxu0
      %601 = vmatprep.mubr.f32.mxu0 0.0
      %602 = vmatmul.mubr.f32.gmra.mrb[0].mxu0 %v304
      %v603 = vpop.f32.mrb[0].mxu0
      %v604 = vadd.f32 %v244, %v603
      %v605 = vpop.f32.mrb[0].mxu0
      %606 = vmatprep.mubr.f32.mxu0 0.0
      %607 = vmatmul.mubr.f32.gmra.mrb[0].mxu0 %v307
      %v608 = vpop.f32.mrb[0].mxu0
      %v609 = vadd.f32 %v244, %v608
      %v610 = vpop.f32.mrb[0].mxu0
      %611 = vmatprep.mubr.f32.mxu0 0.0
      %612 = vmatmul.mubr.f32.gmra.mrb[0].mxu0 %v310
      %v613 = vpop.f32.mrb[0].mxu0
      %v614 = vadd.f32 %v244, %v613
      %v615 = vpop.f32.mrb[0].mxu0
      %616 = vmatprep.mubr.f32.mxu0 0.0
      %617 = vmatmul.mubr.f32.gmra.mrb[0].mxu0 %v313
      %v618 = vpop.f32.mrb[0].mxu0
      %v619 = vadd.f32 %v244, %v618
      %v620 = vpop.f32.mrb[0].mxu0
      %621 = vmatprep.mubr.f32.mxu0 0.0
      %622 = vmatmul.mubr.f32.gmra.mrb[0].mxu0 %v316
      %v623 = vpop.f32.mrb[0].mxu0
      %v624 = vadd.f32 %v244, %v623
      %v625 = vpop.f32.mrb[0].mxu0
      %626 = vmatprep.mubr.f32.mxu0 0.0
      %627 = vmatmul.mubr.f32.gmra.mrb[0].mxu0 %v319
      %v628 = vpop.f32.mrb[0].mxu0
      %v629 = vadd.f32 %v244, %v628
      %v630 = vpop.f32.mrb[0].mxu0
      %631 = vmatprep.mubr.f32.mxu0 0.0
      %632 = vmatmul.mubr.f32.gmra.mrb[0].mxu0 %v322
      %v633 = vpop.f32.mrb[0].mxu0
      %v634 = vadd.f32 %v244, %v633
      %v635 = vpop.f32.mrb[0].mxu0
      %636 = vmatprep.mubr.f32.mxu0 0.0
      %637 = vmatmul.mubr.f32.gmra.mrb[0].mxu0 %v325
      %v638 = vpop.f32.mrb[0].mxu0
      %v639 = vadd.f32 %v244, %v638
      %v640 = vpop.f32.mrb[0].mxu0
      %641 = vmatprep.mubr.f32.mxu0 0.0
      %642 = vmatmul.mubr.f32.gmra.mrb[0].mxu0 %v328
      %v643 = vpop.f32.mrb[0].mxu0
      %v644 = vadd.f32 %v244, %v643
      %v645 = vpop.f32.mrb[0].mxu0
      %646 = vmatprep.mubr.f32.mxu0 0.0
      %647 = vmatmul.mubr.f32.gmra.mrb[0].mxu0 %v331
      %v648 = vpop.f32.mrb[0].mxu0
      %v649 = vadd.f32 %v244, %v648
      %v650 = vpop.f32.mrb[0].mxu0
      %651 = vmatprep.mubr.f32.mxu0 0.0
      %652 = vmatmul.mubr.f32.gmra.mrb[0].mxu0 %v334
      %v653 = vpop.f32.mrb[0].mxu0
      %v654 = vadd.f32 %v244, %v653
      %v655 = vpop.f32.mrb[0].mxu0
      %656 = vmatprep.mubr.f32.mxu0 0.0
      %657 = vmatmul.mubr.f32.gmra.mrb[0].mxu0 %v337
      %v658 = vpop.f32.mrb[0].mxu0
      %v659 = vadd.f32 %v244, %v658
      %v660 = vpop.f32.mrb[0].mxu0
      %661 = vmatprep.mubr.f32.mxu0 0.0
      %662 = vmatmul.mubr.f32.gmra.mrb[0].mxu0 %v340
      %v663 = vpop.f32.mrb[0].mxu0
      %v664 = vadd.f32 %v244, %v663
      %v665 = vpop.f32.mrb[0].mxu0
      %666 = vmatprep.mubr.f32.mxu0 0.0
      %667 = vmatmul.mubr.f32.gmra.mrb[0].mxu0 %v343
      %v668 = vpop.f32.mrb[0].mxu0
      %v669 = vadd.f32 %v244, %v668
      %v670 = vpop.f32.mrb[0].mxu0
      %671 = vmatprep.mubr.f32.mxu0 0.0
      %672 = vmatmul.mubr.f32.gmra.mrb[0].mxu0 %v346
      %v673 = vpop.f32.mrb[0].mxu0
      %v674 = vadd.f32 %v244, %v673
      %v675 = vpop.f32.mrb[0].mxu0
      %676 = vmatprep.mubr.f32.mxu0 0.0
      %677 = vmatmul.mubr.f32.gmra.mrb[0].mxu0 %v349
      %v678 = vpop.f32.mrb[0].mxu0
      %v679 = vadd.f32 %v244, %v678
      %v680 = vpop.f32.mrb[0].mxu0
      %681 = vmatprep.mubr.f32.mxu0 0.0
      %682 = vmatmul.mubr.f32.gmra.mrb[0].mxu0 %v352
      %v683 = vpop.f32.mrb[0].mxu0
      %v684 = vadd.f32 %v244, %v683
      %v685 = vpop.f32.mrb[0].mxu0
      %686 = vmatprep.mubr.f32.mxu0 0.0
      %687 = vmatmul.mubr.f32.gmra.mrb[0].mxu0 %v355
      %v688 = vpop.f32.mrb[0].mxu0
      %v689 = vadd.f32 %v244, %v688
      %v690 = vpop.f32.mrb[0].mxu0
      %691 = vmatprep.mubr.f32.mxu0 0.0
      %692 = vmatmul.mubr.f32.gmra.mrb[0].mxu0 %v358
      %v693 = vpop.f32.mrb[0].mxu0
      %v694 = vadd.f32 %v244, %v693
      %v695 = vpop.f32.mrb[0].mxu0
      %696 = vmatprep.mubr.f32.mxu0 0.0
      %697 = vmatmul.mubr.f32.gmra.mrb[0].mxu0 %v361
      %v698 = vpop.f32.mrb[0].mxu0
      %v699 = vadd.f32 %v244, %v698
      %v700 = vpop.f32.mrb[0].mxu0
      %701 = vmatprep.mubr.f32.mxu0 0.0
      %702 = vmatmul.mubr.f32.gmra.mrb[0].mxu0 %v364
      %v703 = vpop.f32.mrb[0].mxu0
      %v704 = vadd.f32 %v244, %v703
      %v705 = vpop.f32.mrb[0].mxu0
      %706 = vmatprep.mubr.f32.mxu0 0.0
      %707 = vmatmul.mubr.f32.gmra.mrb[0].mxu0 %v367
      %v708 = vpop.f32.mrb[0].mxu0
      %v709 = vadd.f32 %v244, %v708
      %v710 = vpop.f32.mrb[0].mxu0
      %711 = vmatprep.mubr.f32.mxu0 0.0
      %712 = vmatmul.mubr.f32.gmra.mrb[0].mxu0 %v370
      %v713 = vpop.f32.mrb[0].mxu0
      %v714 = vadd.f32 %v244, %v713
      %v715 = vpop.f32.mrb[0].mxu0
      %716 = vmatprep.mubr.f32.mxu0 0.0
      %717 = vmatmul.mubr.f32.gmra.mrb[0].mxu0 %v373
      %v718 = vpop.f32.mrb[0].mxu0
      %v719 = vadd.f32 %v244, %v718
      %v720 = vpop.f32.mrb[0].mxu0
      %721 = vmatprep.mubr.f32.mxu0 0.0
      %722 = vmatmul.mubr.f32.gmra.mrb[0].mxu0 %v376
      %v723 = vpop.f32.mrb[0].mxu0
      %v724 = vadd.f32 %v244, %v723
      %v725 = vpop.f32.mrb[0].mxu0
      %726 = vmatprep.mubr.f32.mxu0 0.0
      %727 = vmatmul.mubr.f32.gmra.mrb[0].mxu0 %v379
      %v728 = vpop.f32.mrb[0].mxu0
      %v729 = vadd.f32 %v244, %v728
      %v730 = vpop.f32.mrb[0].mxu0
      %731 = vmatprep.mubr.f32.mxu0 0.0
      %732 = vmatmul.mubr.f32.gmra.mrb[0].mxu0 %v382
      %v733 = vpop.f32.mrb[0].mxu0
      %v734 = vadd.f32 %v244, %v733
      %v735 = vpop.f32.mrb[0].mxu0
      %736 = vmatprep.mubr.f32.mxu0 0.0
      %737 = vmatmul.mubr.f32.gmra.mrb[0].mxu0 %v385
      %v738 = vpop.f32.mrb[0].mxu0
      %v739 = vadd.f32 %v244, %v738
      %v740 = vpop.f32.mrb[0].mxu0
      %741 = vmatprep.mubr.f32.mxu0 0.0
      %742 = vmatmul.mubr.f32.gmra.mrb[0].mxu0 %v388
      %v743 = vpop.f32.mrb[0].mxu0
      %v744 = vadd.f32 %v244, %v743
      %v745 = vpop.f32.mrb[0].mxu0
      %746 = vmatprep.mubr.f32.mxu0 0.0
      %747 = vmatmul.mubr.f32.gmra.mrb[0].mxu0 %v391
      %v748 = vpop.f32.mrb[0].mxu0
      %v749 = vadd.f32 %v244, %v748
      %v750 = vpop.f32.mrb[0].mxu0
      %751 = vmatprep.mubr.f32.mxu0 0.0
      %752 = vmatmul.mubr.f32.gmra.mrb[0].mxu0 %v394
      %v753 = vpop.f32.mrb[0].mxu0
      %v754 = vadd.f32 %v244, %v753
      %v755 = vpop.f32.mrb[0].mxu0
      %756 = vmatprep.mubr.f32.mxu0 0.0
      %757 = vmatmul.mubr.f32.gmra.mrb[0].mxu0 %v397
      %v758 = vpop.f32.mrb[0].mxu0
      %v759 = vadd.f32 %v244, %v758
      %v760 = vpop.f32.mrb[0].mxu0
      %761 = vmatprep.mubr.f32.mxu0 0.0
      %762 = vmatmul.mubr.f32.gmra.mrb[0].mxu0 %v400
      %v763 = vpop.f32.mrb[0].mxu0
      %v764 = vadd.f32 %v244, %v763
      %v765 = vpop.f32.mrb[0].mxu0
      %766 = vmatprep.mubr.f32.mxu0 0.0
      %767 = vmatmul.mubr.f32.gmra.mrb[0].mxu0 %v403
      %v768 = vpop.f32.mrb[0].mxu0
      %v769 = vadd.f32 %v244, %v768
      %v770 = vpop.f32.mrb[0].mxu0
      %771 = vmatprep.mubr.f32.mxu0 0.0
      %772 = vmatmul.mubr.f32.gmra.mrb[0].mxu0 %v406
      %v773 = vpop.f32.mrb[0].mxu0
      %v774 = vadd.f32 %v244, %v773
      %v775 = vpop.f32.mrb[0].mxu0
      %776 = vmatprep.mubr.f32.mxu0 0.0
      %777 = vmatmul.mubr.f32.gmra.mrb[0].mxu0 %v409
      %v778 = vpop.f32.mrb[0].mxu0
      %v779 = vadd.f32 %v244, %v778
      %v780 = vpop.f32.mrb[0].mxu0
      %781 = vmatprep.mubr.f32.mxu0 0.0
      %782 = vmatmul.mubr.f32.gmra.mrb[0].mxu0 %v412
      %v783 = vpop.f32.mrb[0].mxu0
      %v784 = vadd.f32 %v244, %v783
      %v785 = vpop.f32.mrb[0].mxu0
      %786 = vmatprep.mubr.f32.mxu0 0.0
      %787 = vmatmul.mubr.f32.gmra.mrb[0].mxu0 %v415
      %v788 = vpop.f32.mrb[0].mxu0
      %v789 = vadd.f32 %v244, %v788
      %v790 = vpop.f32.mrb[0].mxu0
      %791 = vmatprep.mubr.f32.mxu0 0.0
      %792 = vmatmul.mubr.f32.gmra.mrb[0].mxu0 %v418
      %v793 = vpop.f32.mrb[0].mxu0
      %v794 = vadd.f32 %v244, %v793
      %v795 = vpop.f32.mrb[0].mxu0
      %796 = vmatprep.mubr.f32.mxu0 0.0
      %797 = vmatmul.mubr.f32.gmra.mrb[0].mxu0 %v421
      %v798 = vpop.f32.mrb[0].mxu0
      %v799 = vadd.f32 %v244, %v798
      %v800 = vpop.f32.mrb[0].mxu0
      %801 = vmatprep.mubr.f32.mxu0 0.0
      %802 = vmatmul.mubr.f32.gmra.mrb[0].mxu0 %v424
      %v803 = vpop.f32.mrb[0].mxu0
      %v804 = vadd.f32 %v244, %v803
      %v805 = vpop.f32.mrb[0].mxu0
      %806 = vmatprep.mubr.f32.mxu0 0.0
      %807 = vmatmul.mubr.f32.gmra.mrb[0].mxu0 %v427
      %v808 = vpop.f32.mrb[0].mxu0
      %v809 = vadd.f32 %v244, %v808
      %v810 = vpop.f32.mrb[0].mxu0
      %811 = vmatprep.mubr.f32.mxu0 0.0
      %812 = vmatmul.mubr.f32.gmra.mrb[0].mxu0 %v430
      %v813 = vpop.f32.mrb[0].mxu0
      %v814 = vadd.f32 %v244, %v813
      %v815 = vpop.f32.mrb[0].mxu0
      %816 = vmatprep.mubr.f32.mxu0 0.0
      %817 = vmatmul.mubr.f32.gmra.mrb[0].mxu0 %v433
      %v818 = vpop.f32.mrb[0].mxu0
      %v819 = vadd.f32 %v244, %v818
      %v820 = vpop.f32.mrb[0].mxu0
      %821 = vmatprep.mubr.f32.mxu0 0.0
      %822 = vmatmul.mubr.f32.gmra.mrb[0].mxu0 %v436
      %v823 = vpop.f32.mrb[0].mxu0
      %v824 = vadd.f32 %v244, %v823
      %v825 = vpop.f32.mrb[0].mxu0
      %826 = vdwg.mxu0
      %v827 = vand.u32 2147483647, %v509
      %vm828 = vcmp.le.f32.partialorder %v827, 0.7853982
      %vm829 = vcmp.lt.s32.totalorder %v509, 0
      %v830 = vand.u32 %v509, 2139095040
      %v831 = vshrl.u32 %v830, 23
      %v832 = vsub.s32 %v831, 127
      %v833 = vand.u32 2147483647, %v509
      %v834 = vand.u32 %v833, 8388607
      %v835 = vor.u32 %v834, 8388608
      %v836 = vsub.s32 0, %v835
      %v837 = vadd.s32 %v832, 1
      %vm838 = vcmp.gt.s32.totalorder %v837, 0
      %v839 = vsel %vm838, %v837, 0
      %v840 = vshrl.u32 %v839, 5
      %v841 = vand.u32 %v839, 31
      %v842 = vsub.s32 32, %v841
      %v843 = vshrl.u32 683565275, %v842
      %v844 = vshll.u32 683565275, %v841
      %v845 = vshrl.u32 2475754826, %v842
      %v846 = vor.u32 %v844, %v845
      %v847 = vshll.u32 2475754826, %v841
      %v848 = vshrl.u32 2131351028, %v842
      %v849 = vor.u32 %v847, %v848
      %v850 = vshll.u32 2131351028, %v841
      %v851 = vshrl.u32 2102212464, %v842
      %v852 = vor.u32 %v850, %v851
      %v853 = vshll.u32 2102212464, %v841
      %v854 = vshrl.u32 920167782, %v842
      %v855 = vor.u32 %v853, %v854
      %v856 = vshll.u32 920167782, %v841
      %v857 = vshrl.u32 1326507024, %v842
      %v858 = vor.u32 %v856, %v857
      %vm859 = vcmp.lt.s32.totalorder %v840, 1
      %vm860 = vcmp.lt.s32.totalorder %v840, 2
      %vm861 = vcmp.lt.s32.totalorder %v840, 3
      %vm862 = vcmp.lt.s32.totalorder %v840, 4
      %v863 = vsel %vm859, %v843, %v846
      %v864 = vsel %vm862, %v852, 2102212464
      %v865 = vsel %vm861, %v849, %v864
      %v866 = vsel %vm860, %v863, %v865
      %v867 = vsel %vm859, %v846, %v849
      %v868 = vsel %vm862, %v855, 920167782
      %v869 = vsel %vm861, %v852, %v868
      %v870 = vsel %vm860, %v867, %v869
      %v871 = vsel %vm859, %v849, %v852
      %v872 = vsel %vm862, %v858, 1326507024
      %v873 = vsel %vm861, %v855, %v872
      %v874 = vsel %vm860, %v871, %v873
      %v875 = vshll.u32 %v835, 8
      %v876 = vmul.u32.u64.compose %v875, %v874
      %v877 = vextract.low.u32 %v876
      %v878 = vextract.high.u32 %v876
      %v879 = vmul.u32.u64.compose %v875, %v870
      %v880 = vextract.low.u32 %v879
      %v881 = vextract.high.u32 %v879
      %v882 = vmul.u32 %v875, %v866
      %v883 = vadd.s32 %v878, %v880
      %vm884 = vc.u32 %v878, %v880
      %v885 = vadd.s32 %v881, 1
      %v886 = vsel %vm884, %v885, %v881
      %v887 = vadd.s32 %v882, %v886
      %v888 = vadd.s32 %v887, 536870912
      %v889 = vshrl.u32 %v888, 30
      %v890 = vshll.u32 %v889, 30
      %v891 = vsub.s32 %v887, %v890
      %vm892 = vcmp.lt.s32.totalorder %v891, 0
      %v893 = vsub.s32 0, %v891
      %v894 = vsel %vm892, %v893, %v891
      %v895 = vclz %v894
      %v896 = vsub.s32 %v895, 2
      %vm897 = vcmp.gt.s32.totalorder 0, %v896
      %v898 = vsel %vm897, 0, %v896
      %v899 = vsub.s32 32, %v898
      %v900 = vshll.u32 %v891, %v898
      %v901 = vshrl.u32 %v883, %v899
      %v902 = vor.u32 %v900, %v901
      %v903 = vsub.s32 4294967266, %v898
      %v904 = vadd.s32 %v903, 127
      %v905 = vshll.u32 %v904, 23
      %v906 = vor.u32 4788187, %v905
      %v907 = vand.u32 2147483647, %v906
      %v909 = vcvt.s32.f32 %v902
      %v910 = vmul.f32 %v909, %v907
      %v911 = vxor.u32 %v910, 2147483648
      %v912 = vsel %vm829, %v911, %v910
      %v913 = vsub.s32 4, %v889
      %v914 = vsel %vm829, %v913, %v889
      %v915 = vsel %vm828, %v509, %v912
      %v916 = vsel %vm828, 0, %v914
      %v917 = vcosq.f32.pop %v915
      %v918 = vsinq.f32.pop %v915
      %vm919 = vweird.f32 %v509
      %v920 = vadd.s32 %v916, 3
      %v921 = vand.u32 %v920, 3
      %vm922 = vcmp.lt.s32.totalorder %v921, 2
      %vm923 = vcmp.eq.s32.totalorder %v921, 0
      %v924 = vxor.u32 %v918, 2147483648
      %v925 = vsel %vm923, %v917, %v924
      %vm926 = vcmp.eq.s32.totalorder %v921, 2
      %v927 = vxor.u32 %v917, 2147483648
      %v928 = vsel %vm926, %v927, %v918
      %v929 = vsel %vm922, %v925, %v928
      %v930 = vsel %vm919, nan, %v929
      %v931 = vand.u32 2147483647, %v514
      %vm932 = vcmp.le.f32.partialorder %v931, 0.7853982
      %vm933 = vcmp.lt.s32.totalorder %v514, 0
      %v934 = vand.u32 %v514, 2139095040
      %v935 = vshrl.u32 %v934, 23
      %v936 = vsub.s32 %v935, 127
      %v937 = vand.u32 2147483647, %v514
      %v938 = vand.u32 %v937, 8388607
      %v939 = vor.u32 %v938, 8388608
      %v940 = vsub.s32 0, %v939
      %v941 = vadd.s32 %v936, 1
      %vm942 = vcmp.gt.s32.totalorder %v941, 0
      %v943 = vsel %vm942, %v941, 0
      %v944 = vshrl.u32 %v943, 5
      %v945 = vand.u32 %v943, 31
      %v946 = vsub.s32 32, %v945
      %v947 = vshrl.u32 683565275, %v946
      %v948 = vshll.u32 683565275, %v945
      %v949 = vshrl.u32 2475754826, %v946
      %v950 = vor.u32 %v948, %v949
      %v951 = vshll.u32 2475754826, %v945
      %v952 = vshrl.u32 2131351028, %v946
      %v953 = vor.u32 %v951, %v952
      %v954 = vshll.u32 2131351028, %v945
      %v955 = vshrl.u32 2102212464, %v946
      %v956 = vor.u32 %v954, %v955
      %v957 = vshll.u32 2102212464, %v945
      %v958 = vshrl.u32 920167782, %v946
      %v959 = vor.u32 %v957, %v958
      %v960 = vshll.u32 920167782, %v945
      %v961 = vshrl.u32 1326507024, %v946
      %v962 = vor.u32 %v960, %v961
      %vm963 = vcmp.lt.s32.totalorder %v944, 1
      %vm964 = vcmp.lt.s32.totalorder %v944, 2
      %vm965 = vcmp.lt.s32.totalorder %v944, 3
      %vm966 = vcmp.lt.s32.totalorder %v944, 4
      %v967 = vsel %vm963, %v947, %v950
      %v968 = vsel %vm966, %v956, 2102212464
      %v969 = vsel %vm965, %v953, %v968
      %v970 = vsel %vm964, %v967, %v969
      %v971 = vsel %vm963, %v950, %v953
      %v972 = vsel %vm966, %v959, 920167782
      %v973 = vsel %vm965, %v956, %v972
      %v974 = vsel %vm964, %v971, %v973
      %v975 = vsel %vm963, %v953, %v956
      %v976 = vsel %vm966, %v962, 1326507024
      %v977 = vsel %vm965, %v959, %v976
      %v978 = vsel %vm964, %v975, %v977
      %v979 = vshll.u32 %v939, 8
      %v980 = vmul.u32.u64.compose %v979, %v978
      %v981 = vextract.low.u32 %v980
      %v982 = vextract.high.u32 %v980
      %v983 = vmul.u32.u64.compose %v979, %v974
      %v984 = vextract.low.u32 %v983
      %v985 = vextract.high.u32 %v983
      %v986 = vmul.u32 %v979, %v970
      %v987 = vadd.s32 %v982, %v984
      %vm988 = vc.u32 %v982, %v984
      %v989 = vadd.s32 %v985, 1
      %v990 = vsel %vm988, %v989, %v985
      %v991 = vadd.s32 %v986, %v990
      %v992 = vadd.s32 %v991, 536870912
      %v993 = vshrl.u32 %v992, 30
      %v994 = vshll.u32 %v993, 30
      %v995 = vsub.s32 %v991, %v994
      %vm996 = vcmp.lt.s32.totalorder %v995, 0
      %v997 = vsub.s32 0, %v995
      %v998 = vsel %vm996, %v997, %v995
      %v999 = vclz %v998
      %v1000 = vsub.s32 %v999, 2
      %vm1001 = vcmp.gt.s32.totalorder 0, %v1000
      %v1002 = vsel %vm1001, 0, %v1000
      %v1003 = vsub.s32 32, %v1002
      %v1004 = vshll.u32 %v995, %v1002
      %v1005 = vshrl.u32 %v987, %v1003
      %v1006 = vor.u32 %v1004, %v1005
      %v1007 = vsub.s32 4294967266, %v1002
      %v1008 = vadd.s32 %v1007, 127
      %v1009 = vshll.u32 %v1008, 23
      %v1010 = vor.u32 4788187, %v1009
      %v1011 = vand.u32 2147483647, %v1010
      %v1013 = vcvt.s32.f32 %v1006
      %v1014 = vmul.f32 %v1013, %v1011
      %v1015 = vxor.u32 %v1014, 2147483648
      %v1016 = vsel %vm933, %v1015, %v1014
      %v1017 = vsub.s32 4, %v993
      %v1018 = vsel %vm933, %v1017, %v993
      %v1019 = vsel %vm932, %v514, %v1016
      %v1020 = vsel %vm932, 0, %v1018
      %v1021 = vcosq.f32.pop %v1019
      %v1022 = vsinq.f32.pop %v1019
      %vm1023 = vweird.f32 %v514
      %v1024 = vadd.s32 %v1020, 3
      %v1025 = vand.u32 %v1024, 3
      %vm1026 = vcmp.lt.s32.totalorder %v1025, 2
      %vm1027 = vcmp.eq.s32.totalorder %v1025, 0
      %v1028 = vxor.u32 %v1022, 2147483648
      %v1029 = vsel %vm1027, %v1021, %v1028
      %vm1030 = vcmp.eq.s32.totalorder %v1025, 2
      %v1031 = vxor.u32 %v1021, 2147483648
      %v1032 = vsel %vm1030, %v1031, %v1022
      %v1033 = vsel %vm1026, %v1029, %v1032
      %v1034 = vsel %vm1023, nan, %v1033
      %v1035 = vand.u32 2147483647, %v519
      %vm1036 = vcmp.le.f32.partialorder %v1035, 0.7853982
      %vm1037 = vcmp.lt.s32.totalorder %v519, 0
      %v1038 = vand.u32 %v519, 2139095040
      %v1039 = vshrl.u32 %v1038, 23
      %v1040 = vsub.s32 %v1039, 127
      %v1041 = vand.u32 2147483647, %v519
      %v1042 = vand.u32 %v1041, 8388607
      %v1043 = vor.u32 %v1042, 8388608
      %v1044 = vsub.s32 0, %v1043
      %v1045 = vadd.s32 %v1040, 1
      %vm1046 = vcmp.gt.s32.totalorder %v1045, 0
      %v1047 = vsel %vm1046, %v1045, 0
      %v1048 = vshrl.u32 %v1047, 5
      %v1049 = vand.u32 %v1047, 31
      %v1050 = vsub.s32 32, %v1049
      %v1051 = vshrl.u32 683565275, %v1050
      %v1052 = vshll.u32 683565275, %v1049
      %v1053 = vshrl.u32 2475754826, %v1050
      %v1054 = vor.u32 %v1052, %v1053
      %v1055 = vshll.u32 2475754826, %v1049
      %v1056 = vshrl.u32 2131351028, %v1050
      %v1057 = vor.u32 %v1055, %v1056
      %v1058 = vshll.u32 2131351028, %v1049
      %v1059 = vshrl.u32 2102212464, %v1050
      %v1060 = vor.u32 %v1058, %v1059
      %v1061 = vshll.u32 2102212464, %v1049
      %v1062 = vshrl.u32 920167782, %v1050
      %v1063 = vor.u32 %v1061, %v1062
      %v1064 = vshll.u32 920167782, %v1049
      %v1065 = vshrl.u32 1326507024, %v1050
      %v1066 = vor.u32 %v1064, %v1065
      %vm1067 = vcmp.lt.s32.totalorder %v1048, 1
      %vm1068 = vcmp.lt.s32.totalorder %v1048, 2
      %vm1069 = vcmp.lt.s32.totalorder %v1048, 3
      %vm1070 = vcmp.lt.s32.totalorder %v1048, 4
      %v1071 = vsel %vm1067, %v1051, %v1054
      %v1072 = vsel %vm1070, %v1060, 2102212464
      %v1073 = vsel %vm1069, %v1057, %v1072
      %v1074 = vsel %vm1068, %v1071, %v1073
      %v1075 = vsel %vm1067, %v1054, %v1057
      %v1076 = vsel %vm1070, %v1063, 920167782
      %v1077 = vsel %vm1069, %v1060, %v1076
      %v1078 = vsel %vm1068, %v1075, %v1077
      %v1079 = vsel %vm1067, %v1057, %v1060
      %v1080 = vsel %vm1070, %v1066, 1326507024
      %v1081 = vsel %vm1069, %v1063, %v1080
      %v1082 = vsel %vm1068, %v1079, %v1081
      %v1083 = vshll.u32 %v1043, 8
      %v1084 = vmul.u32.u64.compose %v1083, %v1082
      %v1085 = vextract.low.u32 %v1084
      %v1086 = vextract.high.u32 %v1084
      %v1087 = vmul.u32.u64.compose %v1083, %v1078
      %v1088 = vextract.low.u32 %v1087
      %v1089 = vextract.high.u32 %v1087
      %v1090 = vmul.u32 %v1083, %v1074
      %v1091 = vadd.s32 %v1086, %v1088
      %vm1092 = vc.u32 %v1086, %v1088
      %v1093 = vadd.s32 %v1089, 1
      %v1094 = vsel %vm1092, %v1093, %v1089
      %v1095 = vadd.s32 %v1090, %v1094
      %v1096 = vadd.s32 %v1095, 536870912
      %v1097 = vshrl.u32 %v1096, 30
      %v1098 = vshll.u32 %v1097, 30
      %v1099 = vsub.s32 %v1095, %v1098
      %vm1100 = vcmp.lt.s32.totalorder %v1099, 0
      %v1101 = vsub.s32 0, %v1099
      %v1102 = vsel %vm1100, %v1101, %v1099
      %v1103 = vclz %v1102
      %v1104 = vsub.s32 %v1103, 2
      %vm1105 = vcmp.gt.s32.totalorder 0, %v1104
      %v1106 = vsel %vm1105, 0, %v1104
      %v1107 = vsub.s32 32, %v1106
      %v1108 = vshll.u32 %v1099, %v1106
      %v1109 = vshrl.u32 %v1091, %v1107
      %v1110 = vor.u32 %v1108, %v1109
      %v1111 = vsub.s32 4294967266, %v1106
      %v1112 = vadd.s32 %v1111, 127
      %v1113 = vshll.u32 %v1112, 23
      %v1114 = vor.u32 4788187, %v1113
      %v1115 = vand.u32 2147483647, %v1114
      %v1117 = vcvt.s32.f32 %v1110
      %v1118 = vmul.f32 %v1117, %v1115
      %v1119 = vxor.u32 %v1118, 2147483648
      %v1120 = vsel %vm1037, %v1119, %v1118
      %v1121 = vsub.s32 4, %v1097
      %v1122 = vsel %vm1037, %v1121, %v1097
      %v1123 = vsel %vm1036, %v519, %v1120
      %v1124 = vsel %vm1036, 0, %v1122
      %v1125 = vcosq.f32.pop %v1123
      %v1126 = vsinq.f32.pop %v1123
      %vm1127 = vweird.f32 %v519
      %v1128 = vadd.s32 %v1124, 3
      %v1129 = vand.u32 %v1128, 3
      %vm1130 = vcmp.lt.s32.totalorder %v1129, 2
      %vm1131 = vcmp.eq.s32.totalorder %v1129, 0
      %v1132 = vxor.u32 %v1126, 2147483648
      %v1133 = vsel %vm1131, %v1125, %v1132
      %vm1134 = vcmp.eq.s32.totalorder %v1129, 2
      %v1135 = vxor.u32 %v1125, 2147483648
      %v1136 = vsel %vm1134, %v1135, %v1126
      %v1137 = vsel %vm1130, %v1133, %v1136
      %v1138 = vsel %vm1127, nan, %v1137
      %v1139 = vand.u32 2147483647, %v524
      %vm1140 = vcmp.le.f32.partialorder %v1139, 0.7853982
      %vm1141 = vcmp.lt.s32.totalorder %v524, 0
      %v1142 = vand.u32 %v524, 2139095040
      %v1143 = vshrl.u32 %v1142, 23
      %v1144 = vsub.s32 %v1143, 127
      %v1145 = vand.u32 2147483647, %v524
      %v1146 = vand.u32 %v1145, 8388607
      %v1147 = vor.u32 %v1146, 8388608
      %v1148 = vsub.s32 0, %v1147
      %v1149 = vadd.s32 %v1144, 1
      %vm1150 = vcmp.gt.s32.totalorder %v1149, 0
      %v1151 = vsel %vm1150, %v1149, 0
      %v1152 = vshrl.u32 %v1151, 5
      %v1153 = vand.u32 %v1151, 31
      %v1154 = vsub.s32 32, %v1153
      %v1155 = vshrl.u32 683565275, %v1154
      %v1156 = vshll.u32 683565275, %v1153
      %v1157 = vshrl.u32 2475754826, %v1154
      %v1158 = vor.u32 %v1156, %v1157
      %v1159 = vshll.u32 2475754826, %v1153
      %v1160 = vshrl.u32 2131351028, %v1154
      %v1161 = vor.u32 %v1159, %v1160
      %v1162 = vshll.u32 2131351028, %v1153
      %v1163 = vshrl.u32 2102212464, %v1154
      %v1164 = vor.u32 %v1162, %v1163
      %v1165 = vshll.u32 2102212464, %v1153
      %v1166 = vshrl.u32 920167782, %v1154
      %v1167 = vor.u32 %v1165, %v1166
      %v1168 = vshll.u32 920167782, %v1153
      %v1169 = vshrl.u32 1326507024, %v1154
      %v1170 = vor.u32 %v1168, %v1169
      %vm1171 = vcmp.lt.s32.totalorder %v1152, 1
      %vm1172 = vcmp.lt.s32.totalorder %v1152, 2
      %vm1173 = vcmp.lt.s32.totalorder %v1152, 3
      %vm1174 = vcmp.lt.s32.totalorder %v1152, 4
      %v1175 = vsel %vm1171, %v1155, %v1158
      %v1176 = vsel %vm1174, %v1164, 2102212464
      %v1177 = vsel %vm1173, %v1161, %v1176
      %v1178 = vsel %vm1172, %v1175, %v1177
      %v1179 = vsel %vm1171, %v1158, %v1161
      %v1180 = vsel %vm1174, %v1167, 920167782
      %v1181 = vsel %vm1173, %v1164, %v1180
      %v1182 = vsel %vm1172, %v1179, %v1181
      %v1183 = vsel %vm1171, %v1161, %v1164
      %v1184 = vsel %vm1174, %v1170, 1326507024
      %v1185 = vsel %vm1173, %v1167, %v1184
      %v1186 = vsel %vm1172, %v1183, %v1185
      %v1187 = vshll.u32 %v1147, 8
      %v1188 = vmul.u32.u64.compose %v1187, %v1186
      %v1189 = vextract.low.u32 %v1188
      %v1190 = vextract.high.u32 %v1188
      %v1191 = vmul.u32.u64.compose %v1187, %v1182
      %v1192 = vextract.low.u32 %v1191
      %v1193 = vextract.high.u32 %v1191
      %v1194 = vmul.u32 %v1187, %v1178
      %v1195 = vadd.s32 %v1190, %v1192
      %vm1196 = vc.u32 %v1190, %v1192
      %v1197 = vadd.s32 %v1193, 1
      %v1198 = vsel %vm1196, %v1197, %v1193
      %v1199 = vadd.s32 %v1194, %v1198
      %v1200 = vadd.s32 %v1199, 536870912
      %v1201 = vshrl.u32 %v1200, 30
      %v1202 = vshll.u32 %v1201, 30
      %v1203 = vsub.s32 %v1199, %v1202
      %vm1204 = vcmp.lt.s32.totalorder %v1203, 0
      %v1205 = vsub.s32 0, %v1203
      %v1206 = vsel %vm1204, %v1205, %v1203
      %v1207 = vclz %v1206
      %v1208 = vsub.s32 %v1207, 2
      %vm1209 = vcmp.gt.s32.totalorder 0, %v1208
      %v1210 = vsel %vm1209, 0, %v1208
      %v1211 = vsub.s32 32, %v1210
      %v1212 = vshll.u32 %v1203, %v1210
      %v1213 = vshrl.u32 %v1195, %v1211
      %v1214 = vor.u32 %v1212, %v1213
      %v1215 = vsub.s32 4294967266, %v1210
      %v1216 = vadd.s32 %v1215, 127
      %v1217 = vshll.u32 %v1216, 23
      %v1218 = vor.u32 4788187, %v1217
      %v1219 = vand.u32 2147483647, %v1218
      %v1221 = vcvt.s32.f32 %v1214
      %v1222 = vmul.f32 %v1221, %v1219
      %v1223 = vxor.u32 %v1222, 2147483648
      %v1224 = vsel %vm1141, %v1223, %v1222
      %v1225 = vsub.s32 4, %v1201
      %v1226 = vsel %vm1141, %v1225, %v1201
      %v1227 = vsel %vm1140, %v524, %v1224
      %v1228 = vsel %vm1140, 0, %v1226
      %v1229 = vcosq.f32.pop %v1227
      %v1230 = vsinq.f32.pop %v1227
      %vm1231 = vweird.f32 %v524
      %v1232 = vadd.s32 %v1228, 3
      %v1233 = vand.u32 %v1232, 3
      %vm1234 = vcmp.lt.s32.totalorder %v1233, 2
      %vm1235 = vcmp.eq.s32.totalorder %v1233, 0
      %v1236 = vxor.u32 %v1230, 2147483648
      %v1237 = vsel %vm1235, %v1229, %v1236
      %vm1238 = vcmp.eq.s32.totalorder %v1233, 2
      %v1239 = vxor.u32 %v1229, 2147483648
      %v1240 = vsel %vm1238, %v1239, %v1230
      %v1241 = vsel %vm1234, %v1237, %v1240
      %v1242 = vsel %vm1231, nan, %v1241
      %v1243 = vand.u32 2147483647, %v529
      %vm1244 = vcmp.le.f32.partialorder %v1243, 0.7853982
      %vm1245 = vcmp.lt.s32.totalorder %v529, 0
      %v1246 = vand.u32 %v529, 2139095040
      %v1247 = vshrl.u32 %v1246, 23
      %v1248 = vsub.s32 %v1247, 127
      %v1249 = vand.u32 2147483647, %v529
      %v1250 = vand.u32 %v1249, 8388607
      %v1251 = vor.u32 %v1250, 8388608
      %v1252 = vsub.s32 0, %v1251
      %v1253 = vadd.s32 %v1248, 1
      %vm1254 = vcmp.gt.s32.totalorder %v1253, 0
      %v1255 = vsel %vm1254, %v1253, 0
      %v1256 = vshrl.u32 %v1255, 5
      %v1257 = vand.u32 %v1255, 31
      %v1258 = vsub.s32 32, %v1257
      %v1259 = vshrl.u32 683565275, %v1258
      %v1260 = vshll.u32 683565275, %v1257
      %v1261 = vshrl.u32 2475754826, %v1258
      %v1262 = vor.u32 %v1260, %v1261
      %v1263 = vshll.u32 2475754826, %v1257
      %v1264 = vshrl.u32 2131351028, %v1258
      %v1265 = vor.u32 %v1263, %v1264
      %v1266 = vshll.u32 2131351028, %v1257
      %v1267 = vshrl.u32 2102212464, %v1258
      %v1268 = vor.u32 %v1266, %v1267
      %v1269 = vshll.u32 2102212464, %v1257
      %v1270 = vshrl.u32 920167782, %v1258
      %v1271 = vor.u32 %v1269, %v1270
      %v1272 = vshll.u32 920167782, %v1257
      %v1273 = vshrl.u32 1326507024, %v1258
      %v1274 = vor.u32 %v1272, %v1273
      %vm1275 = vcmp.lt.s32.totalorder %v1256, 1
      %vm1276 = vcmp.lt.s32.totalorder %v1256, 2
      %vm1277 = vcmp.lt.s32.totalorder %v1256, 3
      %vm1278 = vcmp.lt.s32.totalorder %v1256, 4
      %v1279 = vsel %vm1275, %v1259, %v1262
      %v1280 = vsel %vm1278, %v1268, 2102212464
      %v1281 = vsel %vm1277, %v1265, %v1280
      %v1282 = vsel %vm1276, %v1279, %v1281
      %v1283 = vsel %vm1275, %v1262, %v1265
      %v1284 = vsel %vm1278, %v1271, 920167782
      %v1285 = vsel %vm1277, %v1268, %v1284
      %v1286 = vsel %vm1276, %v1283, %v1285
      %v1287 = vsel %vm1275, %v1265, %v1268
      %v1288 = vsel %vm1278, %v1274, 1326507024
      %v1289 = vsel %vm1277, %v1271, %v1288
      %v1290 = vsel %vm1276, %v1287, %v1289
      %v1291 = vshll.u32 %v1251, 8
      %v1292 = vmul.u32.u64.compose %v1291, %v1290
      %v1293 = vextract.low.u32 %v1292
      %v1294 = vextract.high.u32 %v1292
      %v1295 = vmul.u32.u64.compose %v1291, %v1286
      %v1296 = vextract.low.u32 %v1295
      %v1297 = vextract.high.u32 %v1295
      %v1298 = vmul.u32 %v1291, %v1282
      %v1299 = vadd.s32 %v1294, %v1296
      %vm1300 = vc.u32 %v1294, %v1296
      %v1301 = vadd.s32 %v1297, 1
      %v1302 = vsel %vm1300, %v1301, %v1297
      %v1303 = vadd.s32 %v1298, %v1302
      %v1304 = vadd.s32 %v1303, 536870912
      %v1305 = vshrl.u32 %v1304, 30
      %v1306 = vshll.u32 %v1305, 30
      %v1307 = vsub.s32 %v1303, %v1306
      %vm1308 = vcmp.lt.s32.totalorder %v1307, 0
      %v1309 = vsub.s32 0, %v1307
      %v1310 = vsel %vm1308, %v1309, %v1307
      %v1311 = vclz %v1310
      %v1312 = vsub.s32 %v1311, 2
      %vm1313 = vcmp.gt.s32.totalorder 0, %v1312
      %v1314 = vsel %vm1313, 0, %v1312
      %v1315 = vsub.s32 32, %v1314
      %v1316 = vshll.u32 %v1307, %v1314
      %v1317 = vshrl.u32 %v1299, %v1315
      %v1318 = vor.u32 %v1316, %v1317
      %v1319 = vsub.s32 4294967266, %v1314
      %v1320 = vadd.s32 %v1319, 127
      %v1321 = vshll.u32 %v1320, 23
      %v1322 = vor.u32 4788187, %v1321
      %v1323 = vand.u32 2147483647, %v1322
      %v1325 = vcvt.s32.f32 %v1318
      %v1326 = vmul.f32 %v1325, %v1323
      %v1327 = vxor.u32 %v1326, 2147483648
      %v1328 = vsel %vm1245, %v1327, %v1326
      %v1329 = vsub.s32 4, %v1305
      %v1330 = vsel %vm1245, %v1329, %v1305
      %v1331 = vsel %vm1244, %v529, %v1328
      %v1332 = vsel %vm1244, 0, %v1330
      %v1333 = vcosq.f32.pop %v1331
      %v1334 = vsinq.f32.pop %v1331
      %vm1335 = vweird.f32 %v529
      %v1336 = vadd.s32 %v1332, 3
      %v1337 = vand.u32 %v1336, 3
      %vm1338 = vcmp.lt.s32.totalorder %v1337, 2
      %vm1339 = vcmp.eq.s32.totalorder %v1337, 0
      %v1340 = vxor.u32 %v1334, 2147483648
      %v1341 = vsel %vm1339, %v1333, %v1340
      %vm1342 = vcmp.eq.s32.totalorder %v1337, 2
      %v1343 = vxor.u32 %v1333, 2147483648
      %v1344 = vsel %vm1342, %v1343, %v1334
      %v1345 = vsel %vm1338, %v1341, %v1344
      %v1346 = vsel %vm1335, nan, %v1345
      %v1347 = vand.u32 2147483647, %v534
      %vm1348 = vcmp.le.f32.partialorder %v1347, 0.7853982
      %vm1349 = vcmp.lt.s32.totalorder %v534, 0
      %v1350 = vand.u32 %v534, 2139095040
      %v1351 = vshrl.u32 %v1350, 23
      %v1352 = vsub.s32 %v1351, 127
      %v1353 = vand.u32 2147483647, %v534
      %v1354 = vand.u32 %v1353, 8388607
      %v1355 = vor.u32 %v1354, 8388608
      %v1356 = vsub.s32 0, %v1355
      %v1357 = vadd.s32 %v1352, 1
      %vm1358 = vcmp.gt.s32.totalorder %v1357, 0
      %v1359 = vsel %vm1358, %v1357, 0
      %v1360 = vshrl.u32 %v1359, 5
      %v1361 = vand.u32 %v1359, 31
      %v1362 = vsub.s32 32, %v1361
      %v1363 = vshrl.u32 683565275, %v1362
      %v1364 = vshll.u32 683565275, %v1361
      %v1365 = vshrl.u32 2475754826, %v1362
      %v1366 = vor.u32 %v1364, %v1365
      %v1367 = vshll.u32 2475754826, %v1361
      %v1368 = vshrl.u32 2131351028, %v1362
      %v1369 = vor.u32 %v1367, %v1368
      %v1370 = vshll.u32 2131351028, %v1361
      %v1371 = vshrl.u32 2102212464, %v1362
      %v1372 = vor.u32 %v1370, %v1371
      %v1373 = vshll.u32 2102212464, %v1361
      %v1374 = vshrl.u32 920167782, %v1362
      %v1375 = vor.u32 %v1373, %v1374
      %v1376 = vshll.u32 920167782, %v1361
      %v1377 = vshrl.u32 1326507024, %v1362
      %v1378 = vor.u32 %v1376, %v1377
      %vm1379 = vcmp.lt.s32.totalorder %v1360, 1
      %vm1380 = vcmp.lt.s32.totalorder %v1360, 2
      %vm1381 = vcmp.lt.s32.totalorder %v1360, 3
      %vm1382 = vcmp.lt.s32.totalorder %v1360, 4
      %v1383 = vsel %vm1379, %v1363, %v1366
      %v1384 = vsel %vm1382, %v1372, 2102212464
      %v1385 = vsel %vm1381, %v1369, %v1384
      %v1386 = vsel %vm1380, %v1383, %v1385
      %v1387 = vsel %vm1379, %v1366, %v1369
      %v1388 = vsel %vm1382, %v1375, 920167782
      %v1389 = vsel %vm1381, %v1372, %v1388
      %v1390 = vsel %vm1380, %v1387, %v1389
      %v1391 = vsel %vm1379, %v1369, %v1372
      %v1392 = vsel %vm1382, %v1378, 1326507024
      %v1393 = vsel %vm1381, %v1375, %v1392
      %v1394 = vsel %vm1380, %v1391, %v1393
      %v1395 = vshll.u32 %v1355, 8
      %v1396 = vmul.u32.u64.compose %v1395, %v1394
      %v1397 = vextract.low.u32 %v1396
      %v1398 = vextract.high.u32 %v1396
      %v1399 = vmul.u32.u64.compose %v1395, %v1390
      %v1400 = vextract.low.u32 %v1399
      %v1401 = vextract.high.u32 %v1399
      %v1402 = vmul.u32 %v1395, %v1386
      %v1403 = vadd.s32 %v1398, %v1400
      %vm1404 = vc.u32 %v1398, %v1400
      %v1405 = vadd.s32 %v1401, 1
      %v1406 = vsel %vm1404, %v1405, %v1401
      %v1407 = vadd.s32 %v1402, %v1406
      %v1408 = vadd.s32 %v1407, 536870912
      %v1409 = vshrl.u32 %v1408, 30
      %v1410 = vshll.u32 %v1409, 30
      %v1411 = vsub.s32 %v1407, %v1410
      %vm1412 = vcmp.lt.s32.totalorder %v1411, 0
      %v1413 = vsub.s32 0, %v1411
      %v1414 = vsel %vm1412, %v1413, %v1411
      %v1415 = vclz %v1414
      %v1416 = vsub.s32 %v1415, 2
      %vm1417 = vcmp.gt.s32.totalorder 0, %v1416
      %v1418 = vsel %vm1417, 0, %v1416
      %v1419 = vsub.s32 32, %v1418
      %v1420 = vshll.u32 %v1411, %v1418
      %v1421 = vshrl.u32 %v1403, %v1419
      %v1422 = vor.u32 %v1420, %v1421
      %v1423 = vsub.s32 4294967266, %v1418
      %v1424 = vadd.s32 %v1423, 127
      %v1425 = vshll.u32 %v1424, 23
      %v1426 = vor.u32 4788187, %v1425
      %v1427 = vand.u32 2147483647, %v1426
      %v1429 = vcvt.s32.f32 %v1422
      %v1430 = vmul.f32 %v1429, %v1427
      %v1431 = vxor.u32 %v1430, 2147483648
      %v1432 = vsel %vm1349, %v1431, %v1430
      %v1433 = vsub.s32 4, %v1409
      %v1434 = vsel %vm1349, %v1433, %v1409
      %v1435 = vsel %vm1348, %v534, %v1432
      %v1436 = vsel %vm1348, 0, %v1434
      %v1437 = vcosq.f32.pop %v1435
      %v1438 = vsinq.f32.pop %v1435
      %vm1439 = vweird.f32 %v534
      %v1440 = vadd.s32 %v1436, 3
      %v1441 = vand.u32 %v1440, 3
      %vm1442 = vcmp.lt.s32.totalorder %v1441, 2
      %vm1443 = vcmp.eq.s32.totalorder %v1441, 0
      %v1444 = vxor.u32 %v1438, 2147483648
      %v1445 = vsel %vm1443, %v1437, %v1444
      %vm1446 = vcmp.eq.s32.totalorder %v1441, 2
      %v1447 = vxor.u32 %v1437, 2147483648
      %v1448 = vsel %vm1446, %v1447, %v1438
      %v1449 = vsel %vm1442, %v1445, %v1448
      %v1450 = vsel %vm1439, nan, %v1449
      %v1451 = vand.u32 2147483647, %v539
      %vm1452 = vcmp.le.f32.partialorder %v1451, 0.7853982
      %vm1453 = vcmp.lt.s32.totalorder %v539, 0
      %v1454 = vand.u32 %v539, 2139095040
      %v1455 = vshrl.u32 %v1454, 23
      %v1456 = vsub.s32 %v1455, 127
      %v1457 = vand.u32 2147483647, %v539
      %v1458 = vand.u32 %v1457, 8388607
      %v1459 = vor.u32 %v1458, 8388608
      %v1460 = vsub.s32 0, %v1459
      %v1461 = vadd.s32 %v1456, 1
      %vm1462 = vcmp.gt.s32.totalorder %v1461, 0
      %v1463 = vsel %vm1462, %v1461, 0
      %v1464 = vshrl.u32 %v1463, 5
      %v1465 = vand.u32 %v1463, 31
      %v1466 = vsub.s32 32, %v1465
      %v1467 = vshrl.u32 683565275, %v1466
      %v1468 = vshll.u32 683565275, %v1465
      %v1469 = vshrl.u32 2475754826, %v1466
      %v1470 = vor.u32 %v1468, %v1469
      %v1471 = vshll.u32 2475754826, %v1465
      %v1472 = vshrl.u32 2131351028, %v1466
      %v1473 = vor.u32 %v1471, %v1472
      %v1474 = vshll.u32 2131351028, %v1465
      %v1475 = vshrl.u32 2102212464, %v1466
      %v1476 = vor.u32 %v1474, %v1475
      %v1477 = vshll.u32 2102212464, %v1465
      %v1478 = vshrl.u32 920167782, %v1466
      %v1479 = vor.u32 %v1477, %v1478
      %v1480 = vshll.u32 920167782, %v1465
      %v1481 = vshrl.u32 1326507024, %v1466
      %v1482 = vor.u32 %v1480, %v1481
      %vm1483 = vcmp.lt.s32.totalorder %v1464, 1
      %vm1484 = vcmp.lt.s32.totalorder %v1464, 2
      %vm1485 = vcmp.lt.s32.totalorder %v1464, 3
      %vm1486 = vcmp.lt.s32.totalorder %v1464, 4
      %v1487 = vsel %vm1483, %v1467, %v1470
      %v1488 = vsel %vm1486, %v1476, 2102212464
      %v1489 = vsel %vm1485, %v1473, %v1488
      %v1490 = vsel %vm1484, %v1487, %v1489
      %v1491 = vsel %vm1483, %v1470, %v1473
      %v1492 = vsel %vm1486, %v1479, 920167782
      %v1493 = vsel %vm1485, %v1476, %v1492
      %v1494 = vsel %vm1484, %v1491, %v1493
      %v1495 = vsel %vm1483, %v1473, %v1476
      %v1496 = vsel %vm1486, %v1482, 1326507024
      %v1497 = vsel %vm1485, %v1479, %v1496
      %v1498 = vsel %vm1484, %v1495, %v1497
      %v1499 = vshll.u32 %v1459, 8
      %v1500 = vmul.u32.u64.compose %v1499, %v1498
      %v1501 = vextract.low.u32 %v1500
      %v1502 = vextract.high.u32 %v1500
      %v1503 = vmul.u32.u64.compose %v1499, %v1494
      %v1504 = vextract.low.u32 %v1503
      %v1505 = vextract.high.u32 %v1503
      %v1506 = vmul.u32 %v1499, %v1490
      %v1507 = vadd.s32 %v1502, %v1504
      %vm1508 = vc.u32 %v1502, %v1504
      %v1509 = vadd.s32 %v1505, 1
      %v1510 = vsel %vm1508, %v1509, %v1505
      %v1511 = vadd.s32 %v1506, %v1510
      %v1512 = vadd.s32 %v1511, 536870912
      %v1513 = vshrl.u32 %v1512, 30
      %v1514 = vshll.u32 %v1513, 30
      %v1515 = vsub.s32 %v1511, %v1514
      %vm1516 = vcmp.lt.s32.totalorder %v1515, 0
      %v1517 = vsub.s32 0, %v1515
      %v1518 = vsel %vm1516, %v1517, %v1515
      %v1519 = vclz %v1518
      %v1520 = vsub.s32 %v1519, 2
      %vm1521 = vcmp.gt.s32.totalorder 0, %v1520
      %v1522 = vsel %vm1521, 0, %v1520
      %v1523 = vsub.s32 32, %v1522
      %v1524 = vshll.u32 %v1515, %v1522
      %v1525 = vshrl.u32 %v1507, %v1523
      %v1526 = vor.u32 %v1524, %v1525
      %v1527 = vsub.s32 4294967266, %v1522
      %v1528 = vadd.s32 %v1527, 127
      %v1529 = vshll.u32 %v1528, 23
      %v1530 = vor.u32 4788187, %v1529
      %v1531 = vand.u32 2147483647, %v1530
      %v1533 = vcvt.s32.f32 %v1526
      %v1534 = vmul.f32 %v1533, %v1531
      %v1535 = vxor.u32 %v1534, 2147483648
      %v1536 = vsel %vm1453, %v1535, %v1534
      %v1537 = vsub.s32 4, %v1513
      %v1538 = vsel %vm1453, %v1537, %v1513
      %v1539 = vsel %vm1452, %v539, %v1536
      %v1540 = vsel %vm1452, 0, %v1538
      %v1541 = vcosq.f32.pop %v1539
      %v1542 = vsinq.f32.pop %v1539
      %vm1543 = vweird.f32 %v539
      %v1544 = vadd.s32 %v1540, 3
      %v1545 = vand.u32 %v1544, 3
      %vm1546 = vcmp.lt.s32.totalorder %v1545, 2
      %vm1547 = vcmp.eq.s32.totalorder %v1545, 0
      %v1548 = vxor.u32 %v1542, 2147483648
      %v1549 = vsel %vm1547, %v1541, %v1548
      %vm1550 = vcmp.eq.s32.totalorder %v1545, 2
      %v1551 = vxor.u32 %v1541, 2147483648
      %v1552 = vsel %vm1550, %v1551, %v1542
      %v1553 = vsel %vm1546, %v1549, %v1552
      %v1554 = vsel %vm1543, nan, %v1553
      %v1555 = vand.u32 2147483647, %v544
      %vm1556 = vcmp.le.f32.partialorder %v1555, 0.7853982
      %vm1557 = vcmp.lt.s32.totalorder %v544, 0
      %v1558 = vand.u32 %v544, 2139095040
      %v1559 = vshrl.u32 %v1558, 23
      %v1560 = vsub.s32 %v1559, 127
      %v1561 = vand.u32 2147483647, %v544
      %v1562 = vand.u32 %v1561, 8388607
      %v1563 = vor.u32 %v1562, 8388608
      %v1564 = vsub.s32 0, %v1563
      %v1565 = vadd.s32 %v1560, 1
      %vm1566 = vcmp.gt.s32.totalorder %v1565, 0
      %v1567 = vsel %vm1566, %v1565, 0
      %v1568 = vshrl.u32 %v1567, 5
      %v1569 = vand.u32 %v1567, 31
      %v1570 = vsub.s32 32, %v1569
      %v1571 = vshrl.u32 683565275, %v1570
      %v1572 = vshll.u32 683565275, %v1569
      %v1573 = vshrl.u32 2475754826, %v1570
      %v1574 = vor.u32 %v1572, %v1573
      %v1575 = vshll.u32 2475754826, %v1569
      %v1576 = vshrl.u32 2131351028, %v1570
      %v1577 = vor.u32 %v1575, %v1576
      %v1578 = vshll.u32 2131351028, %v1569
      %v1579 = vshrl.u32 2102212464, %v1570
      %v1580 = vor.u32 %v1578, %v1579
      %v1581 = vshll.u32 2102212464, %v1569
      %v1582 = vshrl.u32 920167782, %v1570
      %v1583 = vor.u32 %v1581, %v1582
      %v1584 = vshll.u32 920167782, %v1569
      %v1585 = vshrl.u32 1326507024, %v1570
      %v1586 = vor.u32 %v1584, %v1585
      %vm1587 = vcmp.lt.s32.totalorder %v1568, 1
      %vm1588 = vcmp.lt.s32.totalorder %v1568, 2
      %vm1589 = vcmp.lt.s32.totalorder %v1568, 3
      %vm1590 = vcmp.lt.s32.totalorder %v1568, 4
      %v1591 = vsel %vm1587, %v1571, %v1574
      %v1592 = vsel %vm1590, %v1580, 2102212464
      %v1593 = vsel %vm1589, %v1577, %v1592
      %v1594 = vsel %vm1588, %v1591, %v1593
      %v1595 = vsel %vm1587, %v1574, %v1577
      %v1596 = vsel %vm1590, %v1583, 920167782
      %v1597 = vsel %vm1589, %v1580, %v1596
      %v1598 = vsel %vm1588, %v1595, %v1597
      %v1599 = vsel %vm1587, %v1577, %v1580
      %v1600 = vsel %vm1590, %v1586, 1326507024
      %v1601 = vsel %vm1589, %v1583, %v1600
      %v1602 = vsel %vm1588, %v1599, %v1601
      %v1603 = vshll.u32 %v1563, 8
      %v1604 = vmul.u32.u64.compose %v1603, %v1602
      %v1605 = vextract.low.u32 %v1604
      %v1606 = vextract.high.u32 %v1604
      %v1607 = vmul.u32.u64.compose %v1603, %v1598
      %v1608 = vextract.low.u32 %v1607
      %v1609 = vextract.high.u32 %v1607
      %v1610 = vmul.u32 %v1603, %v1594
      %v1611 = vadd.s32 %v1606, %v1608
      %vm1612 = vc.u32 %v1606, %v1608
      %v1613 = vadd.s32 %v1609, 1
      %v1614 = vsel %vm1612, %v1613, %v1609
      %v1615 = vadd.s32 %v1610, %v1614
      %v1616 = vadd.s32 %v1615, 536870912
      %v1617 = vshrl.u32 %v1616, 30
      %v1618 = vshll.u32 %v1617, 30
      %v1619 = vsub.s32 %v1615, %v1618
      %vm1620 = vcmp.lt.s32.totalorder %v1619, 0
      %v1621 = vsub.s32 0, %v1619
      %v1622 = vsel %vm1620, %v1621, %v1619
      %v1623 = vclz %v1622
      %v1624 = vsub.s32 %v1623, 2
      %vm1625 = vcmp.gt.s32.totalorder 0, %v1624
      %v1626 = vsel %vm1625, 0, %v1624
      %v1627 = vsub.s32 32, %v1626
      %v1628 = vshll.u32 %v1619, %v1626
      %v1629 = vshrl.u32 %v1611, %v1627
      %v1630 = vor.u32 %v1628, %v1629
      %v1631 = vsub.s32 4294967266, %v1626
      %v1632 = vadd.s32 %v1631, 127
      %v1633 = vshll.u32 %v1632, 23
      %v1634 = vor.u32 4788187, %v1633
      %v1635 = vand.u32 2147483647, %v1634
      %v1637 = vcvt.s32.f32 %v1630
      %v1638 = vmul.f32 %v1637, %v1635
      %v1639 = vxor.u32 %v1638, 2147483648
      %v1640 = vsel %vm1557, %v1639, %v1638
      %v1641 = vsub.s32 4, %v1617
      %v1642 = vsel %vm1557, %v1641, %v1617
      %v1643 = vsel %vm1556, %v544, %v1640
      %v1644 = vsel %vm1556, 0, %v1642
      %v1645 = vcosq.f32.pop %v1643
      %v1646 = vsinq.f32.pop %v1643
      %vm1647 = vweird.f32 %v544
      %v1648 = vadd.s32 %v1644, 3
      %v1649 = vand.u32 %v1648, 3
      %vm1650 = vcmp.lt.s32.totalorder %v1649, 2
      %vm1651 = vcmp.eq.s32.totalorder %v1649, 0
      %v1652 = vxor.u32 %v1646, 2147483648
      %v1653 = vsel %vm1651, %v1645, %v1652
      %vm1654 = vcmp.eq.s32.totalorder %v1649, 2
      %v1655 = vxor.u32 %v1645, 2147483648
      %v1656 = vsel %vm1654, %v1655, %v1646
      %v1657 = vsel %vm1650, %v1653, %v1656
      %v1658 = vsel %vm1647, nan, %v1657
      %v1659 = vand.u32 2147483647, %v549
      %vm1660 = vcmp.le.f32.partialorder %v1659, 0.7853982
      %vm1661 = vcmp.lt.s32.totalorder %v549, 0
      %v1662 = vand.u32 %v549, 2139095040
      %v1663 = vshrl.u32 %v1662, 23
      %v1664 = vsub.s32 %v1663, 127
      %v1665 = vand.u32 2147483647, %v549
      %v1666 = vand.u32 %v1665, 8388607
      %v1667 = vor.u32 %v1666, 8388608
      %v1668 = vsub.s32 0, %v1667
      %v1669 = vadd.s32 %v1664, 1
      %vm1670 = vcmp.gt.s32.totalorder %v1669, 0
      %v1671 = vsel %vm1670, %v1669, 0
      %v1672 = vshrl.u32 %v1671, 5
      %v1673 = vand.u32 %v1671, 31
      %v1674 = vsub.s32 32, %v1673
      %v1675 = vshrl.u32 683565275, %v1674
      %v1676 = vshll.u32 683565275, %v1673
      %v1677 = vshrl.u32 2475754826, %v1674
      %v1678 = vor.u32 %v1676, %v1677
      %v1679 = vshll.u32 2475754826, %v1673
      %v1680 = vshrl.u32 2131351028, %v1674
      %v1681 = vor.u32 %v1679, %v1680
      %v1682 = vshll.u32 2131351028, %v1673
      %v1683 = vshrl.u32 2102212464, %v1674
      %v1684 = vor.u32 %v1682, %v1683
      %v1685 = vshll.u32 2102212464, %v1673
      %v1686 = vshrl.u32 920167782, %v1674
      %v1687 = vor.u32 %v1685, %v1686
      %v1688 = vshll.u32 920167782, %v1673
      %v1689 = vshrl.u32 1326507024, %v1674
      %v1690 = vor.u32 %v1688, %v1689
      %vm1691 = vcmp.lt.s32.totalorder %v1672, 1
      %vm1692 = vcmp.lt.s32.totalorder %v1672, 2
      %vm1693 = vcmp.lt.s32.totalorder %v1672, 3
      %vm1694 = vcmp.lt.s32.totalorder %v1672, 4
      %v1695 = vsel %vm1691, %v1675, %v1678
      %v1696 = vsel %vm1694, %v1684, 2102212464
      %v1697 = vsel %vm1693, %v1681, %v1696
      %v1698 = vsel %vm1692, %v1695, %v1697
      %v1699 = vsel %vm1691, %v1678, %v1681
      %v1700 = vsel %vm1694, %v1687, 920167782
      %v1701 = vsel %vm1693, %v1684, %v1700
      %v1702 = vsel %vm1692, %v1699, %v1701
      %v1703 = vsel %vm1691, %v1681, %v1684
      %v1704 = vsel %vm1694, %v1690, 1326507024
      %v1705 = vsel %vm1693, %v1687, %v1704
      %v1706 = vsel %vm1692, %v1703, %v1705
      %v1707 = vshll.u32 %v1667, 8
      %v1708 = vmul.u32.u64.compose %v1707, %v1706
      %v1709 = vextract.low.u32 %v1708
      %v1710 = vextract.high.u32 %v1708
      %v1711 = vmul.u32.u64.compose %v1707, %v1702
      %v1712 = vextract.low.u32 %v1711
      %v1713 = vextract.high.u32 %v1711
      %v1714 = vmul.u32 %v1707, %v1698
      %v1715 = vadd.s32 %v1710, %v1712
      %vm1716 = vc.u32 %v1710, %v1712
      %v1717 = vadd.s32 %v1713, 1
      %v1718 = vsel %vm1716, %v1717, %v1713
      %v1719 = vadd.s32 %v1714, %v1718
      %v1720 = vadd.s32 %v1719, 536870912
      %v1721 = vshrl.u32 %v1720, 30
      %v1722 = vshll.u32 %v1721, 30
      %v1723 = vsub.s32 %v1719, %v1722
      %vm1724 = vcmp.lt.s32.totalorder %v1723, 0
      %v1725 = vsub.s32 0, %v1723
      %v1726 = vsel %vm1724, %v1725, %v1723
      %v1727 = vclz %v1726
      %v1728 = vsub.s32 %v1727, 2
      %vm1729 = vcmp.gt.s32.totalorder 0, %v1728
      %v1730 = vsel %vm1729, 0, %v1728
      %v1731 = vsub.s32 32, %v1730
      %v1732 = vshll.u32 %v1723, %v1730
      %v1733 = vshrl.u32 %v1715, %v1731
      %v1734 = vor.u32 %v1732, %v1733
      %v1735 = vsub.s32 4294967266, %v1730
      %v1736 = vadd.s32 %v1735, 127
      %v1737 = vshll.u32 %v1736, 23
      %v1738 = vor.u32 4788187, %v1737
      %v1739 = vand.u32 2147483647, %v1738
      %v1741 = vcvt.s32.f32 %v1734
      %v1742 = vmul.f32 %v1741, %v1739
      %v1743 = vxor.u32 %v1742, 2147483648
      %v1744 = vsel %vm1661, %v1743, %v1742
      %v1745 = vsub.s32 4, %v1721
      %v1746 = vsel %vm1661, %v1745, %v1721
      %v1747 = vsel %vm1660, %v549, %v1744
      %v1748 = vsel %vm1660, 0, %v1746
      %v1749 = vcosq.f32.pop %v1747
      %v1750 = vsinq.f32.pop %v1747
      %vm1751 = vweird.f32 %v549
      %v1752 = vadd.s32 %v1748, 3
      %v1753 = vand.u32 %v1752, 3
      %vm1754 = vcmp.lt.s32.totalorder %v1753, 2
      %vm1755 = vcmp.eq.s32.totalorder %v1753, 0
      %v1756 = vxor.u32 %v1750, 2147483648
      %v1757 = vsel %vm1755, %v1749, %v1756
      %vm1758 = vcmp.eq.s32.totalorder %v1753, 2
      %v1759 = vxor.u32 %v1749, 2147483648
      %v1760 = vsel %vm1758, %v1759, %v1750
      %v1761 = vsel %vm1754, %v1757, %v1760
      %v1762 = vsel %vm1751, nan, %v1761
      %v1763 = vand.u32 2147483647, %v554
      %vm1764 = vcmp.le.f32.partialorder %v1763, 0.7853982
      %vm1765 = vcmp.lt.s32.totalorder %v554, 0
      %v1766 = vand.u32 %v554, 2139095040
      %v1767 = vshrl.u32 %v1766, 23
      %v1768 = vsub.s32 %v1767, 127
      %v1769 = vand.u32 2147483647, %v554
      %v1770 = vand.u32 %v1769, 8388607
      %v1771 = vor.u32 %v1770, 8388608
      %v1772 = vsub.s32 0, %v1771
      %v1773 = vadd.s32 %v1768, 1
      %vm1774 = vcmp.gt.s32.totalorder %v1773, 0
      %v1775 = vsel %vm1774, %v1773, 0
      %v1776 = vshrl.u32 %v1775, 5
      %v1777 = vand.u32 %v1775, 31
      %v1778 = vsub.s32 32, %v1777
      %v1779 = vshrl.u32 683565275, %v1778
      %v1780 = vshll.u32 683565275, %v1777
      %v1781 = vshrl.u32 2475754826, %v1778
      %v1782 = vor.u32 %v1780, %v1781
      %v1783 = vshll.u32 2475754826, %v1777
      %v1784 = vshrl.u32 2131351028, %v1778
      %v1785 = vor.u32 %v1783, %v1784
      %v1786 = vshll.u32 2131351028, %v1777
      %v1787 = vshrl.u32 2102212464, %v1778
      %v1788 = vor.u32 %v1786, %v1787
      %v1789 = vshll.u32 2102212464, %v1777
      %v1790 = vshrl.u32 920167782, %v1778
      %v1791 = vor.u32 %v1789, %v1790
      %v1792 = vshll.u32 920167782, %v1777
      %v1793 = vshrl.u32 1326507024, %v1778
      %v1794 = vor.u32 %v1792, %v1793
      %vm1795 = vcmp.lt.s32.totalorder %v1776, 1
      %vm1796 = vcmp.lt.s32.totalorder %v1776, 2
      %vm1797 = vcmp.lt.s32.totalorder %v1776, 3
      %vm1798 = vcmp.lt.s32.totalorder %v1776, 4
      %v1799 = vsel %vm1795, %v1779, %v1782
      %v1800 = vsel %vm1798, %v1788, 2102212464
      %v1801 = vsel %vm1797, %v1785, %v1800
      %v1802 = vsel %vm1796, %v1799, %v1801
      %v1803 = vsel %vm1795, %v1782, %v1785
      %v1804 = vsel %vm1798, %v1791, 920167782
      %v1805 = vsel %vm1797, %v1788, %v1804
      %v1806 = vsel %vm1796, %v1803, %v1805
      %v1807 = vsel %vm1795, %v1785, %v1788
      %v1808 = vsel %vm1798, %v1794, 1326507024
      %v1809 = vsel %vm1797, %v1791, %v1808
      %v1810 = vsel %vm1796, %v1807, %v1809
      %v1811 = vshll.u32 %v1771, 8
      %v1812 = vmul.u32.u64.compose %v1811, %v1810
      %v1813 = vextract.low.u32 %v1812
      %v1814 = vextract.high.u32 %v1812
      %v1815 = vmul.u32.u64.compose %v1811, %v1806
      %v1816 = vextract.low.u32 %v1815
      %v1817 = vextract.high.u32 %v1815
      %v1818 = vmul.u32 %v1811, %v1802
      %v1819 = vadd.s32 %v1814, %v1816
      %vm1820 = vc.u32 %v1814, %v1816
      %v1821 = vadd.s32 %v1817, 1
      %v1822 = vsel %vm1820, %v1821, %v1817
      %v1823 = vadd.s32 %v1818, %v1822
      %v1824 = vadd.s32 %v1823, 536870912
      %v1825 = vshrl.u32 %v1824, 30
      %v1826 = vshll.u32 %v1825, 30
      %v1827 = vsub.s32 %v1823, %v1826
      %vm1828 = vcmp.lt.s32.totalorder %v1827, 0
      %v1829 = vsub.s32 0, %v1827
      %v1830 = vsel %vm1828, %v1829, %v1827
      %v1831 = vclz %v1830
      %v1832 = vsub.s32 %v1831, 2
      %vm1833 = vcmp.gt.s32.totalorder 0, %v1832
      %v1834 = vsel %vm1833, 0, %v1832
      %v1835 = vsub.s32 32, %v1834
      %v1836 = vshll.u32 %v1827, %v1834
      %v1837 = vshrl.u32 %v1819, %v1835
      %v1838 = vor.u32 %v1836, %v1837
      %v1839 = vsub.s32 4294967266, %v1834
      %v1840 = vadd.s32 %v1839, 127
      %v1841 = vshll.u32 %v1840, 23
      %v1842 = vor.u32 4788187, %v1841
      %v1843 = vand.u32 2147483647, %v1842
      %v1845 = vcvt.s32.f32 %v1838
      %v1846 = vmul.f32 %v1845, %v1843
      %v1847 = vxor.u32 %v1846, 2147483648
      %v1848 = vsel %vm1765, %v1847, %v1846
      %v1849 = vsub.s32 4, %v1825
      %v1850 = vsel %vm1765, %v1849, %v1825
      %v1851 = vsel %vm1764, %v554, %v1848
      %v1852 = vsel %vm1764, 0, %v1850
      %v1853 = vcosq.f32.pop %v1851
      %v1854 = vsinq.f32.pop %v1851
      %vm1855 = vweird.f32 %v554
      %v1856 = vadd.s32 %v1852, 3
      %v1857 = vand.u32 %v1856, 3
      %vm1858 = vcmp.lt.s32.totalorder %v1857, 2
      %vm1859 = vcmp.eq.s32.totalorder %v1857, 0
      %v1860 = vxor.u32 %v1854, 2147483648
      %v1861 = vsel %vm1859, %v1853, %v1860
      %vm1862 = vcmp.eq.s32.totalorder %v1857, 2
      %v1863 = vxor.u32 %v1853, 2147483648
      %v1864 = vsel %vm1862, %v1863, %v1854
      %v1865 = vsel %vm1858, %v1861, %v1864
      %v1866 = vsel %vm1855, nan, %v1865
      %v1867 = vand.u32 2147483647, %v559
      %vm1868 = vcmp.le.f32.partialorder %v1867, 0.7853982
      %vm1869 = vcmp.lt.s32.totalorder %v559, 0
      %v1870 = vand.u32 %v559, 2139095040
      %v1871 = vshrl.u32 %v1870, 23
      %v1872 = vsub.s32 %v1871, 127
      %v1873 = vand.u32 2147483647, %v559
      %v1874 = vand.u32 %v1873, 8388607
      %v1875 = vor.u32 %v1874, 8388608
      %v1876 = vsub.s32 0, %v1875
      %v1877 = vadd.s32 %v1872, 1
      %vm1878 = vcmp.gt.s32.totalorder %v1877, 0
      %v1879 = vsel %vm1878, %v1877, 0
      %v1880 = vshrl.u32 %v1879, 5
      %v1881 = vand.u32 %v1879, 31
      %v1882 = vsub.s32 32, %v1881
      %v1883 = vshrl.u32 683565275, %v1882
      %v1884 = vshll.u32 683565275, %v1881
      %v1885 = vshrl.u32 2475754826, %v1882
      %v1886 = vor.u32 %v1884, %v1885
      %v1887 = vshll.u32 2475754826, %v1881
      %v1888 = vshrl.u32 2131351028, %v1882
      %v1889 = vor.u32 %v1887, %v1888
      %v1890 = vshll.u32 2131351028, %v1881
      %v1891 = vshrl.u32 2102212464, %v1882
      %v1892 = vor.u32 %v1890, %v1891
      %v1893 = vshll.u32 2102212464, %v1881
      %v1894 = vshrl.u32 920167782, %v1882
      %v1895 = vor.u32 %v1893, %v1894
      %v1896 = vshll.u32 920167782, %v1881
      %v1897 = vshrl.u32 1326507024, %v1882
      %v1898 = vor.u32 %v1896, %v1897
      %vm1899 = vcmp.lt.s32.totalorder %v1880, 1
      %vm1900 = vcmp.lt.s32.totalorder %v1880, 2
      %vm1901 = vcmp.lt.s32.totalorder %v1880, 3
      %vm1902 = vcmp.lt.s32.totalorder %v1880, 4
      %v1903 = vsel %vm1899, %v1883, %v1886
      %v1904 = vsel %vm1902, %v1892, 2102212464
      %v1905 = vsel %vm1901, %v1889, %v1904
      %v1906 = vsel %vm1900, %v1903, %v1905
      %v1907 = vsel %vm1899, %v1886, %v1889
      %v1908 = vsel %vm1902, %v1895, 920167782
      %v1909 = vsel %vm1901, %v1892, %v1908
      %v1910 = vsel %vm1900, %v1907, %v1909
      %v1911 = vsel %vm1899, %v1889, %v1892
      %v1912 = vsel %vm1902, %v1898, 1326507024
      %v1913 = vsel %vm1901, %v1895, %v1912
      %v1914 = vsel %vm1900, %v1911, %v1913
      %v1915 = vshll.u32 %v1875, 8
      %v1916 = vmul.u32.u64.compose %v1915, %v1914
      %v1917 = vextract.low.u32 %v1916
      %v1918 = vextract.high.u32 %v1916
      %v1919 = vmul.u32.u64.compose %v1915, %v1910
      %v1920 = vextract.low.u32 %v1919
      %v1921 = vextract.high.u32 %v1919
      %v1922 = vmul.u32 %v1915, %v1906
      %v1923 = vadd.s32 %v1918, %v1920
      %vm1924 = vc.u32 %v1918, %v1920
      %v1925 = vadd.s32 %v1921, 1
      %v1926 = vsel %vm1924, %v1925, %v1921
      %v1927 = vadd.s32 %v1922, %v1926
      %v1928 = vadd.s32 %v1927, 536870912
      %v1929 = vshrl.u32 %v1928, 30
      %v1930 = vshll.u32 %v1929, 30
      %v1931 = vsub.s32 %v1927, %v1930
      %vm1932 = vcmp.lt.s32.totalorder %v1931, 0
      %v1933 = vsub.s32 0, %v1931
      %v1934 = vsel %vm1932, %v1933, %v1931
      %v1935 = vclz %v1934
      %v1936 = vsub.s32 %v1935, 2
      %vm1937 = vcmp.gt.s32.totalorder 0, %v1936
      %v1938 = vsel %vm1937, 0, %v1936
      %v1939 = vsub.s32 32, %v1938
      %v1940 = vshll.u32 %v1931, %v1938
      %v1941 = vshrl.u32 %v1923, %v1939
      %v1942 = vor.u32 %v1940, %v1941
      %v1943 = vsub.s32 4294967266, %v1938
      %v1944 = vadd.s32 %v1943, 127
      %v1945 = vshll.u32 %v1944, 23
      %v1946 = vor.u32 4788187, %v1945
      %v1947 = vand.u32 2147483647, %v1946
      %v1949 = vcvt.s32.f32 %v1942
      %v1950 = vmul.f32 %v1949, %v1947
      %v1951 = vxor.u32 %v1950, 2147483648
      %v1952 = vsel %vm1869, %v1951, %v1950
      %v1953 = vsub.s32 4, %v1929
      %v1954 = vsel %vm1869, %v1953, %v1929
      %v1955 = vsel %vm1868, %v559, %v1952
      %v1956 = vsel %vm1868, 0, %v1954
      %v1957 = vcosq.f32.pop %v1955
      %v1958 = vsinq.f32.pop %v1955
      %vm1959 = vweird.f32 %v559
      %v1960 = vadd.s32 %v1956, 3
      %v1961 = vand.u32 %v1960, 3
      %vm1962 = vcmp.lt.s32.totalorder %v1961, 2
      %vm1963 = vcmp.eq.s32.totalorder %v1961, 0
      %v1964 = vxor.u32 %v1958, 2147483648
      %v1965 = vsel %vm1963, %v1957, %v1964
      %vm1966 = vcmp.eq.s32.totalorder %v1961, 2
      %v1967 = vxor.u32 %v1957, 2147483648
      %v1968 = vsel %vm1966, %v1967, %v1958
      %v1969 = vsel %vm1962, %v1965, %v1968
      %v1970 = vsel %vm1959, nan, %v1969
      %v1971 = vand.u32 2147483647, %v564
      %vm1972 = vcmp.le.f32.partialorder %v1971, 0.7853982
      %vm1973 = vcmp.lt.s32.totalorder %v564, 0
      %v1974 = vand.u32 %v564, 2139095040
      %v1975 = vshrl.u32 %v1974, 23
      %v1976 = vsub.s32 %v1975, 127
      %v1977 = vand.u32 2147483647, %v564
      %v1978 = vand.u32 %v1977, 8388607
      %v1979 = vor.u32 %v1978, 8388608
      %v1980 = vsub.s32 0, %v1979
      %v1981 = vadd.s32 %v1976, 1
      %vm1982 = vcmp.gt.s32.totalorder %v1981, 0
      %v1983 = vsel %vm1982, %v1981, 0
      %v1984 = vshrl.u32 %v1983, 5
      %v1985 = vand.u32 %v1983, 31
      %v1986 = vsub.s32 32, %v1985
      %v1987 = vshrl.u32 683565275, %v1986
      %v1988 = vshll.u32 683565275, %v1985
      %v1989 = vshrl.u32 2475754826, %v1986
      %v1990 = vor.u32 %v1988, %v1989
      %v1991 = vshll.u32 2475754826, %v1985
      %v1992 = vshrl.u32 2131351028, %v1986
      %v1993 = vor.u32 %v1991, %v1992
      %v1994 = vshll.u32 2131351028, %v1985
      %v1995 = vshrl.u32 2102212464, %v1986
      %v1996 = vor.u32 %v1994, %v1995
      %v1997 = vshll.u32 2102212464, %v1985
      %v1998 = vshrl.u32 920167782, %v1986
      %v1999 = vor.u32 %v1997, %v1998
      %v2000 = vshll.u32 920167782, %v1985
      %v2001 = vshrl.u32 1326507024, %v1986
      %v2002 = vor.u32 %v2000, %v2001
      %vm2003 = vcmp.lt.s32.totalorder %v1984, 1
      %vm2004 = vcmp.lt.s32.totalorder %v1984, 2
      %vm2005 = vcmp.lt.s32.totalorder %v1984, 3
      %vm2006 = vcmp.lt.s32.totalorder %v1984, 4
      %v2007 = vsel %vm2003, %v1987, %v1990
      %v2008 = vsel %vm2006, %v1996, 2102212464
      %v2009 = vsel %vm2005, %v1993, %v2008
      %v2010 = vsel %vm2004, %v2007, %v2009
      %v2011 = vsel %vm2003, %v1990, %v1993
      %v2012 = vsel %vm2006, %v1999, 920167782
      %v2013 = vsel %vm2005, %v1996, %v2012
      %v2014 = vsel %vm2004, %v2011, %v2013
      %v2015 = vsel %vm2003, %v1993, %v1996
      %v2016 = vsel %vm2006, %v2002, 1326507024
      %v2017 = vsel %vm2005, %v1999, %v2016
      %v2018 = vsel %vm2004, %v2015, %v2017
      %v2019 = vshll.u32 %v1979, 8
      %v2020 = vmul.u32.u64.compose %v2019, %v2018
      %v2021 = vextract.low.u32 %v2020
      %v2022 = vextract.high.u32 %v2020
      %v2023 = vmul.u32.u64.compose %v2019, %v2014
      %v2024 = vextract.low.u32 %v2023
      %v2025 = vextract.high.u32 %v2023
      %v2026 = vmul.u32 %v2019, %v2010
      %v2027 = vadd.s32 %v2022, %v2024
      %vm2028 = vc.u32 %v2022, %v2024
      %v2029 = vadd.s32 %v2025, 1
      %v2030 = vsel %vm2028, %v2029, %v2025
      %v2031 = vadd.s32 %v2026, %v2030
      %v2032 = vadd.s32 %v2031, 536870912
      %v2033 = vshrl.u32 %v2032, 30
      %v2034 = vshll.u32 %v2033, 30
      %v2035 = vsub.s32 %v2031, %v2034
      %vm2036 = vcmp.lt.s32.totalorder %v2035, 0
      %v2037 = vsub.s32 0, %v2035
      %v2038 = vsel %vm2036, %v2037, %v2035
      %v2039 = vclz %v2038
      %v2040 = vsub.s32 %v2039, 2
      %vm2041 = vcmp.gt.s32.totalorder 0, %v2040
      %v2042 = vsel %vm2041, 0, %v2040
      %v2043 = vsub.s32 32, %v2042
      %v2044 = vshll.u32 %v2035, %v2042
      %v2045 = vshrl.u32 %v2027, %v2043
      %v2046 = vor.u32 %v2044, %v2045
      %v2047 = vsub.s32 4294967266, %v2042
      %v2048 = vadd.s32 %v2047, 127
      %v2049 = vshll.u32 %v2048, 23
      %v2050 = vor.u32 4788187, %v2049
      %v2051 = vand.u32 2147483647, %v2050
      %v2053 = vcvt.s32.f32 %v2046
      %v2054 = vmul.f32 %v2053, %v2051
      %v2055 = vxor.u32 %v2054, 2147483648
      %v2056 = vsel %vm1973, %v2055, %v2054
      %v2057 = vsub.s32 4, %v2033
      %v2058 = vsel %vm1973, %v2057, %v2033
      %v2059 = vsel %vm1972, %v564, %v2056
      %v2060 = vsel %vm1972, 0, %v2058
      %v2061 = vcosq.f32.pop %v2059
      %v2062 = vsinq.f32.pop %v2059
      %vm2063 = vweird.f32 %v564
      %v2064 = vadd.s32 %v2060, 3
      %v2065 = vand.u32 %v2064, 3
      %vm2066 = vcmp.lt.s32.totalorder %v2065, 2
      %vm2067 = vcmp.eq.s32.totalorder %v2065, 0
      %v2068 = vxor.u32 %v2062, 2147483648
      %v2069 = vsel %vm2067, %v2061, %v2068
      %vm2070 = vcmp.eq.s32.totalorder %v2065, 2
      %v2071 = vxor.u32 %v2061, 2147483648
      %v2072 = vsel %vm2070, %v2071, %v2062
      %v2073 = vsel %vm2066, %v2069, %v2072
      %v2074 = vsel %vm2063, nan, %v2073
      %v2075 = vand.u32 2147483647, %v569
      %vm2076 = vcmp.le.f32.partialorder %v2075, 0.7853982
      %vm2077 = vcmp.lt.s32.totalorder %v569, 0
      %v2078 = vand.u32 %v569, 2139095040
      %v2079 = vshrl.u32 %v2078, 23
      %v2080 = vsub.s32 %v2079, 127
      %v2081 = vand.u32 2147483647, %v569
      %v2082 = vand.u32 %v2081, 8388607
      %v2083 = vor.u32 %v2082, 8388608
      %v2084 = vsub.s32 0, %v2083
      %v2085 = vadd.s32 %v2080, 1
      %vm2086 = vcmp.gt.s32.totalorder %v2085, 0
      %v2087 = vsel %vm2086, %v2085, 0
      %v2088 = vshrl.u32 %v2087, 5
      %v2089 = vand.u32 %v2087, 31
      %v2090 = vsub.s32 32, %v2089
      %v2091 = vshrl.u32 683565275, %v2090
      %v2092 = vshll.u32 683565275, %v2089
      %v2093 = vshrl.u32 2475754826, %v2090
      %v2094 = vor.u32 %v2092, %v2093
      %v2095 = vshll.u32 2475754826, %v2089
      %v2096 = vshrl.u32 2131351028, %v2090
      %v2097 = vor.u32 %v2095, %v2096
      %v2098 = vshll.u32 2131351028, %v2089
      %v2099 = vshrl.u32 2102212464, %v2090
      %v2100 = vor.u32 %v2098, %v2099
      %v2101 = vshll.u32 2102212464, %v2089
      %v2102 = vshrl.u32 920167782, %v2090
      %v2103 = vor.u32 %v2101, %v2102
      %v2104 = vshll.u32 920167782, %v2089
      %v2105 = vshrl.u32 1326507024, %v2090
      %v2106 = vor.u32 %v2104, %v2105
      %vm2107 = vcmp.lt.s32.totalorder %v2088, 1
      %vm2108 = vcmp.lt.s32.totalorder %v2088, 2
      %vm2109 = vcmp.lt.s32.totalorder %v2088, 3
      %vm2110 = vcmp.lt.s32.totalorder %v2088, 4
      %v2111 = vsel %vm2107, %v2091, %v2094
      %v2112 = vsel %vm2110, %v2100, 2102212464
      %v2113 = vsel %vm2109, %v2097, %v2112
      %v2114 = vsel %vm2108, %v2111, %v2113
      %v2115 = vsel %vm2107, %v2094, %v2097
      %v2116 = vsel %vm2110, %v2103, 920167782
      %v2117 = vsel %vm2109, %v2100, %v2116
      %v2118 = vsel %vm2108, %v2115, %v2117
      %v2119 = vsel %vm2107, %v2097, %v2100
      %v2120 = vsel %vm2110, %v2106, 1326507024
      %v2121 = vsel %vm2109, %v2103, %v2120
      %v2122 = vsel %vm2108, %v2119, %v2121
      %v2123 = vshll.u32 %v2083, 8
      %v2124 = vmul.u32.u64.compose %v2123, %v2122
      %v2125 = vextract.low.u32 %v2124
      %v2126 = vextract.high.u32 %v2124
      %v2127 = vmul.u32.u64.compose %v2123, %v2118
      %v2128 = vextract.low.u32 %v2127
      %v2129 = vextract.high.u32 %v2127
      %v2130 = vmul.u32 %v2123, %v2114
      %v2131 = vadd.s32 %v2126, %v2128
      %vm2132 = vc.u32 %v2126, %v2128
      %v2133 = vadd.s32 %v2129, 1
      %v2134 = vsel %vm2132, %v2133, %v2129
      %v2135 = vadd.s32 %v2130, %v2134
      %v2136 = vadd.s32 %v2135, 536870912
      %v2137 = vshrl.u32 %v2136, 30
      %v2138 = vshll.u32 %v2137, 30
      %v2139 = vsub.s32 %v2135, %v2138
      %vm2140 = vcmp.lt.s32.totalorder %v2139, 0
      %v2141 = vsub.s32 0, %v2139
      %v2142 = vsel %vm2140, %v2141, %v2139
      %v2143 = vclz %v2142
      %v2144 = vsub.s32 %v2143, 2
      %vm2145 = vcmp.gt.s32.totalorder 0, %v2144
      %v2146 = vsel %vm2145, 0, %v2144
      %v2147 = vsub.s32 32, %v2146
      %v2148 = vshll.u32 %v2139, %v2146
      %v2149 = vshrl.u32 %v2131, %v2147
      %v2150 = vor.u32 %v2148, %v2149
      %v2151 = vsub.s32 4294967266, %v2146
      %v2152 = vadd.s32 %v2151, 127
      %v2153 = vshll.u32 %v2152, 23
      %v2154 = vor.u32 4788187, %v2153
      %v2155 = vand.u32 2147483647, %v2154
      %v2157 = vcvt.s32.f32 %v2150
      %v2158 = vmul.f32 %v2157, %v2155
      %v2159 = vxor.u32 %v2158, 2147483648
      %v2160 = vsel %vm2077, %v2159, %v2158
      %v2161 = vsub.s32 4, %v2137
      %v2162 = vsel %vm2077, %v2161, %v2137
      %v2163 = vsel %vm2076, %v569, %v2160
      %v2164 = vsel %vm2076, 0, %v2162
      %v2165 = vcosq.f32.pop %v2163
      %v2166 = vsinq.f32.pop %v2163
      %vm2167 = vweird.f32 %v569
      %v2168 = vadd.s32 %v2164, 3
      %v2169 = vand.u32 %v2168, 3
      %vm2170 = vcmp.lt.s32.totalorder %v2169, 2
      %vm2171 = vcmp.eq.s32.totalorder %v2169, 0
      %v2172 = vxor.u32 %v2166, 2147483648
      %v2173 = vsel %vm2171, %v2165, %v2172
      %vm2174 = vcmp.eq.s32.totalorder %v2169, 2
      %v2175 = vxor.u32 %v2165, 2147483648
      %v2176 = vsel %vm2174, %v2175, %v2166
      %v2177 = vsel %vm2170, %v2173, %v2176
      %v2178 = vsel %vm2167, nan, %v2177
      %v2179 = vand.u32 2147483647, %v574
      %vm2180 = vcmp.le.f32.partialorder %v2179, 0.7853982
      %vm2181 = vcmp.lt.s32.totalorder %v574, 0
      %v2182 = vand.u32 %v574, 2139095040
      %v2183 = vshrl.u32 %v2182, 23
      %v2184 = vsub.s32 %v2183, 127
      %v2185 = vand.u32 2147483647, %v574
      %v2186 = vand.u32 %v2185, 8388607
      %v2187 = vor.u32 %v2186, 8388608
      %v2188 = vsub.s32 0, %v2187
      %v2189 = vadd.s32 %v2184, 1
      %vm2190 = vcmp.gt.s32.totalorder %v2189, 0
      %v2191 = vsel %vm2190, %v2189, 0
      %v2192 = vshrl.u32 %v2191, 5
      %v2193 = vand.u32 %v2191, 31
      %v2194 = vsub.s32 32, %v2193
      %v2195 = vshrl.u32 683565275, %v2194
      %v2196 = vshll.u32 683565275, %v2193
      %v2197 = vshrl.u32 2475754826, %v2194
      %v2198 = vor.u32 %v2196, %v2197
      %v2199 = vshll.u32 2475754826, %v2193
      %v2200 = vshrl.u32 2131351028, %v2194
      %v2201 = vor.u32 %v2199, %v2200
      %v2202 = vshll.u32 2131351028, %v2193
      %v2203 = vshrl.u32 2102212464, %v2194
      %v2204 = vor.u32 %v2202, %v2203
      %v2205 = vshll.u32 2102212464, %v2193
      %v2206 = vshrl.u32 920167782, %v2194
      %v2207 = vor.u32 %v2205, %v2206
      %v2208 = vshll.u32 920167782, %v2193
      %v2209 = vshrl.u32 1326507024, %v2194
      %v2210 = vor.u32 %v2208, %v2209
      %vm2211 = vcmp.lt.s32.totalorder %v2192, 1
      %vm2212 = vcmp.lt.s32.totalorder %v2192, 2
      %vm2213 = vcmp.lt.s32.totalorder %v2192, 3
      %vm2214 = vcmp.lt.s32.totalorder %v2192, 4
      %v2215 = vsel %vm2211, %v2195, %v2198
      %v2216 = vsel %vm2214, %v2204, 2102212464
      %v2217 = vsel %vm2213, %v2201, %v2216
      %v2218 = vsel %vm2212, %v2215, %v2217
      %v2219 = vsel %vm2211, %v2198, %v2201
      %v2220 = vsel %vm2214, %v2207, 920167782
      %v2221 = vsel %vm2213, %v2204, %v2220
      %v2222 = vsel %vm2212, %v2219, %v2221
      %v2223 = vsel %vm2211, %v2201, %v2204
      %v2224 = vsel %vm2214, %v2210, 1326507024
      %v2225 = vsel %vm2213, %v2207, %v2224
      %v2226 = vsel %vm2212, %v2223, %v2225
      %v2227 = vshll.u32 %v2187, 8
      %v2228 = vmul.u32.u64.compose %v2227, %v2226
      %v2229 = vextract.low.u32 %v2228
      %v2230 = vextract.high.u32 %v2228
      %v2231 = vmul.u32.u64.compose %v2227, %v2222
      %v2232 = vextract.low.u32 %v2231
      %v2233 = vextract.high.u32 %v2231
      %v2234 = vmul.u32 %v2227, %v2218
      %v2235 = vadd.s32 %v2230, %v2232
      %vm2236 = vc.u32 %v2230, %v2232
      %v2237 = vadd.s32 %v2233, 1
      %v2238 = vsel %vm2236, %v2237, %v2233
      %v2239 = vadd.s32 %v2234, %v2238
      %v2240 = vadd.s32 %v2239, 536870912
      %v2241 = vshrl.u32 %v2240, 30
      %v2242 = vshll.u32 %v2241, 30
      %v2243 = vsub.s32 %v2239, %v2242
      %vm2244 = vcmp.lt.s32.totalorder %v2243, 0
      %v2245 = vsub.s32 0, %v2243
      %v2246 = vsel %vm2244, %v2245, %v2243
      %v2247 = vclz %v2246
      %v2248 = vsub.s32 %v2247, 2
      %vm2249 = vcmp.gt.s32.totalorder 0, %v2248
      %v2250 = vsel %vm2249, 0, %v2248
      %v2251 = vsub.s32 32, %v2250
      %v2252 = vshll.u32 %v2243, %v2250
      %v2253 = vshrl.u32 %v2235, %v2251
      %v2254 = vor.u32 %v2252, %v2253
      %v2255 = vsub.s32 4294967266, %v2250
      %v2256 = vadd.s32 %v2255, 127
      %v2257 = vshll.u32 %v2256, 23
      %v2258 = vor.u32 4788187, %v2257
      %v2259 = vand.u32 2147483647, %v2258
      %v2261 = vcvt.s32.f32 %v2254
      %v2262 = vmul.f32 %v2261, %v2259
      %v2263 = vxor.u32 %v2262, 2147483648
      %v2264 = vsel %vm2181, %v2263, %v2262
      %v2265 = vsub.s32 4, %v2241
      %v2266 = vsel %vm2181, %v2265, %v2241
      %v2267 = vsel %vm2180, %v574, %v2264
      %v2268 = vsel %vm2180, 0, %v2266
      %v2269 = vcosq.f32.pop %v2267
      %v2270 = vsinq.f32.pop %v2267
      %vm2271 = vweird.f32 %v574
      %v2272 = vadd.s32 %v2268, 3
      %v2273 = vand.u32 %v2272, 3
      %vm2274 = vcmp.lt.s32.totalorder %v2273, 2
      %vm2275 = vcmp.eq.s32.totalorder %v2273, 0
      %v2276 = vxor.u32 %v2270, 2147483648
      %v2277 = vsel %vm2275, %v2269, %v2276
      %vm2278 = vcmp.eq.s32.totalorder %v2273, 2
      %v2279 = vxor.u32 %v2269, 2147483648
      %v2280 = vsel %vm2278, %v2279, %v2270
      %v2281 = vsel %vm2274, %v2277, %v2280
      %v2282 = vsel %vm2271, nan, %v2281
      %v2283 = vand.u32 2147483647, %v579
      %vm2284 = vcmp.le.f32.partialorder %v2283, 0.7853982
      %vm2285 = vcmp.lt.s32.totalorder %v579, 0
      %v2286 = vand.u32 %v579, 2139095040
      %v2287 = vshrl.u32 %v2286, 23
      %v2288 = vsub.s32 %v2287, 127
      %v2289 = vand.u32 2147483647, %v579
      %v2290 = vand.u32 %v2289, 8388607
      %v2291 = vor.u32 %v2290, 8388608
      %v2292 = vsub.s32 0, %v2291
      %v2293 = vadd.s32 %v2288, 1
      %vm2294 = vcmp.gt.s32.totalorder %v2293, 0
      %v2295 = vsel %vm2294, %v2293, 0
      %v2296 = vshrl.u32 %v2295, 5
      %v2297 = vand.u32 %v2295, 31
      %v2298 = vsub.s32 32, %v2297
      %v2299 = vshrl.u32 683565275, %v2298
      %v2300 = vshll.u32 683565275, %v2297
      %v2301 = vshrl.u32 2475754826, %v2298
      %v2302 = vor.u32 %v2300, %v2301
      %v2303 = vshll.u32 2475754826, %v2297
      %v2304 = vshrl.u32 2131351028, %v2298
      %v2305 = vor.u32 %v2303, %v2304
      %v2306 = vshll.u32 2131351028, %v2297
      %v2307 = vshrl.u32 2102212464, %v2298
      %v2308 = vor.u32 %v2306, %v2307
      %v2309 = vshll.u32 2102212464, %v2297
      %v2310 = vshrl.u32 920167782, %v2298
      %v2311 = vor.u32 %v2309, %v2310
      %v2312 = vshll.u32 920167782, %v2297
      %v2313 = vshrl.u32 1326507024, %v2298
      %v2314 = vor.u32 %v2312, %v2313
      %vm2315 = vcmp.lt.s32.totalorder %v2296, 1
      %vm2316 = vcmp.lt.s32.totalorder %v2296, 2
      %vm2317 = vcmp.lt.s32.totalorder %v2296, 3
      %vm2318 = vcmp.lt.s32.totalorder %v2296, 4
      %v2319 = vsel %vm2315, %v2299, %v2302
      %v2320 = vsel %vm2318, %v2308, 2102212464
      %v2321 = vsel %vm2317, %v2305, %v2320
      %v2322 = vsel %vm2316, %v2319, %v2321
      %v2323 = vsel %vm2315, %v2302, %v2305
      %v2324 = vsel %vm2318, %v2311, 920167782
      %v2325 = vsel %vm2317, %v2308, %v2324
      %v2326 = vsel %vm2316, %v2323, %v2325
      %v2327 = vsel %vm2315, %v2305, %v2308
      %v2328 = vsel %vm2318, %v2314, 1326507024
      %v2329 = vsel %vm2317, %v2311, %v2328
      %v2330 = vsel %vm2316, %v2327, %v2329
      %v2331 = vshll.u32 %v2291, 8
      %v2332 = vmul.u32.u64.compose %v2331, %v2330
      %v2333 = vextract.low.u32 %v2332
      %v2334 = vextract.high.u32 %v2332
      %v2335 = vmul.u32.u64.compose %v2331, %v2326
      %v2336 = vextract.low.u32 %v2335
      %v2337 = vextract.high.u32 %v2335
      %v2338 = vmul.u32 %v2331, %v2322
      %v2339 = vadd.s32 %v2334, %v2336
      %vm2340 = vc.u32 %v2334, %v2336
      %v2341 = vadd.s32 %v2337, 1
      %v2342 = vsel %vm2340, %v2341, %v2337
      %v2343 = vadd.s32 %v2338, %v2342
      %v2344 = vadd.s32 %v2343, 536870912
      %v2345 = vshrl.u32 %v2344, 30
      %v2346 = vshll.u32 %v2345, 30
      %v2347 = vsub.s32 %v2343, %v2346
      %vm2348 = vcmp.lt.s32.totalorder %v2347, 0
      %v2349 = vsub.s32 0, %v2347
      %v2350 = vsel %vm2348, %v2349, %v2347
      %v2351 = vclz %v2350
      %v2352 = vsub.s32 %v2351, 2
      %vm2353 = vcmp.gt.s32.totalorder 0, %v2352
      %v2354 = vsel %vm2353, 0, %v2352
      %v2355 = vsub.s32 32, %v2354
      %v2356 = vshll.u32 %v2347, %v2354
      %v2357 = vshrl.u32 %v2339, %v2355
      %v2358 = vor.u32 %v2356, %v2357
      %v2359 = vsub.s32 4294967266, %v2354
      %v2360 = vadd.s32 %v2359, 127
      %v2361 = vshll.u32 %v2360, 23
      %v2362 = vor.u32 4788187, %v2361
      %v2363 = vand.u32 2147483647, %v2362
      %v2365 = vcvt.s32.f32 %v2358
      %v2366 = vmul.f32 %v2365, %v2363
      %v2367 = vxor.u32 %v2366, 2147483648
      %v2368 = vsel %vm2285, %v2367, %v2366
      %v2369 = vsub.s32 4, %v2345
      %v2370 = vsel %vm2285, %v2369, %v2345
      %v2371 = vsel %vm2284, %v579, %v2368
      %v2372 = vsel %vm2284, 0, %v2370
      %v2373 = vcosq.f32.pop %v2371
      %v2374 = vsinq.f32.pop %v2371
      %vm2375 = vweird.f32 %v579
      %v2376 = vadd.s32 %v2372, 3
      %v2377 = vand.u32 %v2376, 3
      %vm2378 = vcmp.lt.s32.totalorder %v2377, 2
      %vm2379 = vcmp.eq.s32.totalorder %v2377, 0
      %v2380 = vxor.u32 %v2374, 2147483648
      %v2381 = vsel %vm2379, %v2373, %v2380
      %vm2382 = vcmp.eq.s32.totalorder %v2377, 2
      %v2383 = vxor.u32 %v2373, 2147483648
      %v2384 = vsel %vm2382, %v2383, %v2374
      %v2385 = vsel %vm2378, %v2381, %v2384
      %v2386 = vsel %vm2375, nan, %v2385
      %v2387 = vand.u32 2147483647, %v584
      %vm2388 = vcmp.le.f32.partialorder %v2387, 0.7853982
      %vm2389 = vcmp.lt.s32.totalorder %v584, 0
      %v2390 = vand.u32 %v584, 2139095040
      %v2391 = vshrl.u32 %v2390, 23
      %v2392 = vsub.s32 %v2391, 127
      %v2393 = vand.u32 2147483647, %v584
      %v2394 = vand.u32 %v2393, 8388607
      %v2395 = vor.u32 %v2394, 8388608
      %v2396 = vsub.s32 0, %v2395
      %v2397 = vadd.s32 %v2392, 1
      %vm2398 = vcmp.gt.s32.totalorder %v2397, 0
      %v2399 = vsel %vm2398, %v2397, 0
      %v2400 = vshrl.u32 %v2399, 5
      %v2401 = vand.u32 %v2399, 31
      %v2402 = vsub.s32 32, %v2401
      %v2403 = vshrl.u32 683565275, %v2402
      %v2404 = vshll.u32 683565275, %v2401
      %v2405 = vshrl.u32 2475754826, %v2402
      %v2406 = vor.u32 %v2404, %v2405
      %v2407 = vshll.u32 2475754826, %v2401
      %v2408 = vshrl.u32 2131351028, %v2402
      %v2409 = vor.u32 %v2407, %v2408
      %v2410 = vshll.u32 2131351028, %v2401
      %v2411 = vshrl.u32 2102212464, %v2402
      %v2412 = vor.u32 %v2410, %v2411
      %v2413 = vshll.u32 2102212464, %v2401
      %v2414 = vshrl.u32 920167782, %v2402
      %v2415 = vor.u32 %v2413, %v2414
      %v2416 = vshll.u32 920167782, %v2401
      %v2417 = vshrl.u32 1326507024, %v2402
      %v2418 = vor.u32 %v2416, %v2417
      %vm2419 = vcmp.lt.s32.totalorder %v2400, 1
      %vm2420 = vcmp.lt.s32.totalorder %v2400, 2
      %vm2421 = vcmp.lt.s32.totalorder %v2400, 3
      %vm2422 = vcmp.lt.s32.totalorder %v2400, 4
      %v2423 = vsel %vm2419, %v2403, %v2406
      %v2424 = vsel %vm2422, %v2412, 2102212464
      %v2425 = vsel %vm2421, %v2409, %v2424
      %v2426 = vsel %vm2420, %v2423, %v2425
      %v2427 = vsel %vm2419, %v2406, %v2409
      %v2428 = vsel %vm2422, %v2415, 920167782
      %v2429 = vsel %vm2421, %v2412, %v2428
      %v2430 = vsel %vm2420, %v2427, %v2429
      %v2431 = vsel %vm2419, %v2409, %v2412
      %v2432 = vsel %vm2422, %v2418, 1326507024
      %v2433 = vsel %vm2421, %v2415, %v2432
      %v2434 = vsel %vm2420, %v2431, %v2433
      %v2435 = vshll.u32 %v2395, 8
      %v2436 = vmul.u32.u64.compose %v2435, %v2434
      %v2437 = vextract.low.u32 %v2436
      %v2438 = vextract.high.u32 %v2436
      %v2439 = vmul.u32.u64.compose %v2435, %v2430
      %v2440 = vextract.low.u32 %v2439
      %v2441 = vextract.high.u32 %v2439
      %v2442 = vmul.u32 %v2435, %v2426
      %v2443 = vadd.s32 %v2438, %v2440
      %vm2444 = vc.u32 %v2438, %v2440
      %v2445 = vadd.s32 %v2441, 1
      %v2446 = vsel %vm2444, %v2445, %v2441
      %v2447 = vadd.s32 %v2442, %v2446
      %v2448 = vadd.s32 %v2447, 536870912
      %v2449 = vshrl.u32 %v2448, 30
      %v2450 = vshll.u32 %v2449, 30
      %v2451 = vsub.s32 %v2447, %v2450
      %vm2452 = vcmp.lt.s32.totalorder %v2451, 0
      %v2453 = vsub.s32 0, %v2451
      %v2454 = vsel %vm2452, %v2453, %v2451
      %v2455 = vclz %v2454
      %v2456 = vsub.s32 %v2455, 2
      %vm2457 = vcmp.gt.s32.totalorder 0, %v2456
      %v2458 = vsel %vm2457, 0, %v2456
      %v2459 = vsub.s32 32, %v2458
      %v2460 = vshll.u32 %v2451, %v2458
      %v2461 = vshrl.u32 %v2443, %v2459
      %v2462 = vor.u32 %v2460, %v2461
      %v2463 = vsub.s32 4294967266, %v2458
      %v2464 = vadd.s32 %v2463, 127
      %v2465 = vshll.u32 %v2464, 23
      %v2466 = vor.u32 4788187, %v2465
      %v2467 = vand.u32 2147483647, %v2466
      %v2469 = vcvt.s32.f32 %v2462
      %v2470 = vmul.f32 %v2469, %v2467
      %v2471 = vxor.u32 %v2470, 2147483648
      %v2472 = vsel %vm2389, %v2471, %v2470
      %v2473 = vsub.s32 4, %v2449
      %v2474 = vsel %vm2389, %v2473, %v2449
      %v2475 = vsel %vm2388, %v584, %v2472
      %v2476 = vsel %vm2388, 0, %v2474
      %v2477 = vcosq.f32.pop %v2475
      %v2478 = vsinq.f32.pop %v2475
      %vm2479 = vweird.f32 %v584
      %v2480 = vadd.s32 %v2476, 3
      %v2481 = vand.u32 %v2480, 3
      %vm2482 = vcmp.lt.s32.totalorder %v2481, 2
      %vm2483 = vcmp.eq.s32.totalorder %v2481, 0
      %v2484 = vxor.u32 %v2478, 2147483648
      %v2485 = vsel %vm2483, %v2477, %v2484
      %vm2486 = vcmp.eq.s32.totalorder %v2481, 2
      %v2487 = vxor.u32 %v2477, 2147483648
      %v2488 = vsel %vm2486, %v2487, %v2478
      %v2489 = vsel %vm2482, %v2485, %v2488
      %v2490 = vsel %vm2479, nan, %v2489
      %v2491 = vand.u32 2147483647, %v589
      %vm2492 = vcmp.le.f32.partialorder %v2491, 0.7853982
      %vm2493 = vcmp.lt.s32.totalorder %v589, 0
      %v2494 = vand.u32 %v589, 2139095040
      %v2495 = vshrl.u32 %v2494, 23
      %v2496 = vsub.s32 %v2495, 127
      %v2497 = vand.u32 2147483647, %v589
      %v2498 = vand.u32 %v2497, 8388607
      %v2499 = vor.u32 %v2498, 8388608
      %v2500 = vsub.s32 0, %v2499
      %v2501 = vadd.s32 %v2496, 1
      %vm2502 = vcmp.gt.s32.totalorder %v2501, 0
      %v2503 = vsel %vm2502, %v2501, 0
      %v2504 = vshrl.u32 %v2503, 5
      %v2505 = vand.u32 %v2503, 31
      %v2506 = vsub.s32 32, %v2505
      %v2507 = vshrl.u32 683565275, %v2506
      %v2508 = vshll.u32 683565275, %v2505
      %v2509 = vshrl.u32 2475754826, %v2506
      %v2510 = vor.u32 %v2508, %v2509
      %v2511 = vshll.u32 2475754826, %v2505
      %v2512 = vshrl.u32 2131351028, %v2506
      %v2513 = vor.u32 %v2511, %v2512
      %v2514 = vshll.u32 2131351028, %v2505
      %v2515 = vshrl.u32 2102212464, %v2506
      %v2516 = vor.u32 %v2514, %v2515
      %v2517 = vshll.u32 2102212464, %v2505
      %v2518 = vshrl.u32 920167782, %v2506
      %v2519 = vor.u32 %v2517, %v2518
      %v2520 = vshll.u32 920167782, %v2505
      %v2521 = vshrl.u32 1326507024, %v2506
      %v2522 = vor.u32 %v2520, %v2521
      %vm2523 = vcmp.lt.s32.totalorder %v2504, 1
      %vm2524 = vcmp.lt.s32.totalorder %v2504, 2
      %vm2525 = vcmp.lt.s32.totalorder %v2504, 3
      %vm2526 = vcmp.lt.s32.totalorder %v2504, 4
      %v2527 = vsel %vm2523, %v2507, %v2510
      %v2528 = vsel %vm2526, %v2516, 2102212464
      %v2529 = vsel %vm2525, %v2513, %v2528
      %v2530 = vsel %vm2524, %v2527, %v2529
      %v2531 = vsel %vm2523, %v2510, %v2513
      %v2532 = vsel %vm2526, %v2519, 920167782
      %v2533 = vsel %vm2525, %v2516, %v2532
      %v2534 = vsel %vm2524, %v2531, %v2533
      %v2535 = vsel %vm2523, %v2513, %v2516
      %v2536 = vsel %vm2526, %v2522, 1326507024
      %v2537 = vsel %vm2525, %v2519, %v2536
      %v2538 = vsel %vm2524, %v2535, %v2537
      %v2539 = vshll.u32 %v2499, 8
      %v2540 = vmul.u32.u64.compose %v2539, %v2538
      %v2541 = vextract.low.u32 %v2540
      %v2542 = vextract.high.u32 %v2540
      %v2543 = vmul.u32.u64.compose %v2539, %v2534
      %v2544 = vextract.low.u32 %v2543
      %v2545 = vextract.high.u32 %v2543
      %v2546 = vmul.u32 %v2539, %v2530
      %v2547 = vadd.s32 %v2542, %v2544
      %vm2548 = vc.u32 %v2542, %v2544
      %v2549 = vadd.s32 %v2545, 1
      %v2550 = vsel %vm2548, %v2549, %v2545
      %v2551 = vadd.s32 %v2546, %v2550
      %v2552 = vadd.s32 %v2551, 536870912
      %v2553 = vshrl.u32 %v2552, 30
      %v2554 = vshll.u32 %v2553, 30
      %v2555 = vsub.s32 %v2551, %v2554
      %vm2556 = vcmp.lt.s32.totalorder %v2555, 0
      %v2557 = vsub.s32 0, %v2555
      %v2558 = vsel %vm2556, %v2557, %v2555
      %v2559 = vclz %v2558
      %v2560 = vsub.s32 %v2559, 2
      %vm2561 = vcmp.gt.s32.totalorder 0, %v2560
      %v2562 = vsel %vm2561, 0, %v2560
      %v2563 = vsub.s32 32, %v2562
      %v2564 = vshll.u32 %v2555, %v2562
      %v2565 = vshrl.u32 %v2547, %v2563
      %v2566 = vor.u32 %v2564, %v2565
      %v2567 = vsub.s32 4294967266, %v2562
      %v2568 = vadd.s32 %v2567, 127
      %v2569 = vshll.u32 %v2568, 23
      %v2570 = vor.u32 4788187, %v2569
      %v2571 = vand.u32 2147483647, %v2570
      %v2573 = vcvt.s32.f32 %v2566
      %v2574 = vmul.f32 %v2573, %v2571
      %v2575 = vxor.u32 %v2574, 2147483648
      %v2576 = vsel %vm2493, %v2575, %v2574
      %v2577 = vsub.s32 4, %v2553
      %v2578 = vsel %vm2493, %v2577, %v2553
      %v2579 = vsel %vm2492, %v589, %v2576
      %v2580 = vsel %vm2492, 0, %v2578
      %v2581 = vcosq.f32.pop %v2579
      %v2582 = vsinq.f32.pop %v2579
      %vm2583 = vweird.f32 %v589
      %v2584 = vadd.s32 %v2580, 3
      %v2585 = vand.u32 %v2584, 3
      %vm2586 = vcmp.lt.s32.totalorder %v2585, 2
      %vm2587 = vcmp.eq.s32.totalorder %v2585, 0
      %v2588 = vxor.u32 %v2582, 2147483648
      %v2589 = vsel %vm2587, %v2581, %v2588
      %vm2590 = vcmp.eq.s32.totalorder %v2585, 2
      %v2591 = vxor.u32 %v2581, 2147483648
      %v2592 = vsel %vm2590, %v2591, %v2582
      %v2593 = vsel %vm2586, %v2589, %v2592
      %v2594 = vsel %vm2583, nan, %v2593
      %v2595 = vand.u32 2147483647, %v594
      %vm2596 = vcmp.le.f32.partialorder %v2595, 0.7853982
      %vm2597 = vcmp.lt.s32.totalorder %v594, 0
      %v2598 = vand.u32 %v594, 2139095040
      %v2599 = vshrl.u32 %v2598, 23
      %v2600 = vsub.s32 %v2599, 127
      %v2601 = vand.u32 2147483647, %v594
      %v2602 = vand.u32 %v2601, 8388607
      %v2603 = vor.u32 %v2602, 8388608
      %v2604 = vsub.s32 0, %v2603
      %v2605 = vadd.s32 %v2600, 1
      %vm2606 = vcmp.gt.s32.totalorder %v2605, 0
      %v2607 = vsel %vm2606, %v2605, 0
      %v2608 = vshrl.u32 %v2607, 5
      %v2609 = vand.u32 %v2607, 31
      %v2610 = vsub.s32 32, %v2609
      %v2611 = vshrl.u32 683565275, %v2610
      %v2612 = vshll.u32 683565275, %v2609
      %v2613 = vshrl.u32 2475754826, %v2610
      %v2614 = vor.u32 %v2612, %v2613
      %v2615 = vshll.u32 2475754826, %v2609
      %v2616 = vshrl.u32 2131351028, %v2610
      %v2617 = vor.u32 %v2615, %v2616
      %v2618 = vshll.u32 2131351028, %v2609
      %v2619 = vshrl.u32 2102212464, %v2610
      %v2620 = vor.u32 %v2618, %v2619
      %v2621 = vshll.u32 2102212464, %v2609
      %v2622 = vshrl.u32 920167782, %v2610
      %v2623 = vor.u32 %v2621, %v2622
      %v2624 = vshll.u32 920167782, %v2609
      %v2625 = vshrl.u32 1326507024, %v2610
      %v2626 = vor.u32 %v2624, %v2625
      %vm2627 = vcmp.lt.s32.totalorder %v2608, 1
      %vm2628 = vcmp.lt.s32.totalorder %v2608, 2
      %vm2629 = vcmp.lt.s32.totalorder %v2608, 3
      %vm2630 = vcmp.lt.s32.totalorder %v2608, 4
      %v2631 = vsel %vm2627, %v2611, %v2614
      %v2632 = vsel %vm2630, %v2620, 2102212464
      %v2633 = vsel %vm2629, %v2617, %v2632
      %v2634 = vsel %vm2628, %v2631, %v2633
      %v2635 = vsel %vm2627, %v2614, %v2617
      %v2636 = vsel %vm2630, %v2623, 920167782
      %v2637 = vsel %vm2629, %v2620, %v2636
      %v2638 = vsel %vm2628, %v2635, %v2637
      %v2639 = vsel %vm2627, %v2617, %v2620
      %v2640 = vsel %vm2630, %v2626, 1326507024
      %v2641 = vsel %vm2629, %v2623, %v2640
      %v2642 = vsel %vm2628, %v2639, %v2641
      %v2643 = vshll.u32 %v2603, 8
      %v2644 = vmul.u32.u64.compose %v2643, %v2642
      %v2645 = vextract.low.u32 %v2644
      %v2646 = vextract.high.u32 %v2644
      %v2647 = vmul.u32.u64.compose %v2643, %v2638
      %v2648 = vextract.low.u32 %v2647
      %v2649 = vextract.high.u32 %v2647
      %v2650 = vmul.u32 %v2643, %v2634
      %v2651 = vadd.s32 %v2646, %v2648
      %vm2652 = vc.u32 %v2646, %v2648
      %v2653 = vadd.s32 %v2649, 1
      %v2654 = vsel %vm2652, %v2653, %v2649
      %v2655 = vadd.s32 %v2650, %v2654
      %v2656 = vadd.s32 %v2655, 536870912
      %v2657 = vshrl.u32 %v2656, 30
      %v2658 = vshll.u32 %v2657, 30
      %v2659 = vsub.s32 %v2655, %v2658
      %vm2660 = vcmp.lt.s32.totalorder %v2659, 0
      %v2661 = vsub.s32 0, %v2659
      %v2662 = vsel %vm2660, %v2661, %v2659
      %v2663 = vclz %v2662
      %v2664 = vsub.s32 %v2663, 2
      %vm2665 = vcmp.gt.s32.totalorder 0, %v2664
      %v2666 = vsel %vm2665, 0, %v2664
      %v2667 = vsub.s32 32, %v2666
      %v2668 = vshll.u32 %v2659, %v2666
      %v2669 = vshrl.u32 %v2651, %v2667
      %v2670 = vor.u32 %v2668, %v2669
      %v2671 = vsub.s32 4294967266, %v2666
      %v2672 = vadd.s32 %v2671, 127
      %v2673 = vshll.u32 %v2672, 23
      %v2674 = vor.u32 4788187, %v2673
      %v2675 = vand.u32 2147483647, %v2674
      %v2677 = vcvt.s32.f32 %v2670
      %v2678 = vmul.f32 %v2677, %v2675
      %v2679 = vxor.u32 %v2678, 2147483648
      %v2680 = vsel %vm2597, %v2679, %v2678
      %v2681 = vsub.s32 4, %v2657
      %v2682 = vsel %vm2597, %v2681, %v2657
      %v2683 = vsel %vm2596, %v594, %v2680
      %v2684 = vsel %vm2596, 0, %v2682
      %v2685 = vcosq.f32.pop %v2683
      %v2686 = vsinq.f32.pop %v2683
      %vm2687 = vweird.f32 %v594
      %v2688 = vadd.s32 %v2684, 3
      %v2689 = vand.u32 %v2688, 3
      %vm2690 = vcmp.lt.s32.totalorder %v2689, 2
      %vm2691 = vcmp.eq.s32.totalorder %v2689, 0
      %v2692 = vxor.u32 %v2686, 2147483648
      %v2693 = vsel %vm2691, %v2685, %v2692
      %vm2694 = vcmp.eq.s32.totalorder %v2689, 2
      %v2695 = vxor.u32 %v2685, 2147483648
      %v2696 = vsel %vm2694, %v2695, %v2686
      %v2697 = vsel %vm2690, %v2693, %v2696
      %v2698 = vsel %vm2687, nan, %v2697
      %v2699 = vand.u32 2147483647, %v599
      %vm2700 = vcmp.le.f32.partialorder %v2699, 0.7853982
      %vm2701 = vcmp.lt.s32.totalorder %v599, 0
      %v2702 = vand.u32 %v599, 2139095040
      %v2703 = vshrl.u32 %v2702, 23
      %v2704 = vsub.s32 %v2703, 127
      %v2705 = vand.u32 2147483647, %v599
      %v2706 = vand.u32 %v2705, 8388607
      %v2707 = vor.u32 %v2706, 8388608
      %v2708 = vsub.s32 0, %v2707
      %v2709 = vadd.s32 %v2704, 1
      %vm2710 = vcmp.gt.s32.totalorder %v2709, 0
      %v2711 = vsel %vm2710, %v2709, 0
      %v2712 = vshrl.u32 %v2711, 5
      %v2713 = vand.u32 %v2711, 31
      %v2714 = vsub.s32 32, %v2713
      %v2715 = vshrl.u32 683565275, %v2714
      %v2716 = vshll.u32 683565275, %v2713
      %v2717 = vshrl.u32 2475754826, %v2714
      %v2718 = vor.u32 %v2716, %v2717
      %v2719 = vshll.u32 2475754826, %v2713
      %v2720 = vshrl.u32 2131351028, %v2714
      %v2721 = vor.u32 %v2719, %v2720
      %v2722 = vshll.u32 2131351028, %v2713
      %v2723 = vshrl.u32 2102212464, %v2714
      %v2724 = vor.u32 %v2722, %v2723
      %v2725 = vshll.u32 2102212464, %v2713
      %v2726 = vshrl.u32 920167782, %v2714
      %v2727 = vor.u32 %v2725, %v2726
      %v2728 = vshll.u32 920167782, %v2713
      %v2729 = vshrl.u32 1326507024, %v2714
      %v2730 = vor.u32 %v2728, %v2729
      %vm2731 = vcmp.lt.s32.totalorder %v2712, 1
      %vm2732 = vcmp.lt.s32.totalorder %v2712, 2
      %vm2733 = vcmp.lt.s32.totalorder %v2712, 3
      %vm2734 = vcmp.lt.s32.totalorder %v2712, 4
      %v2735 = vsel %vm2731, %v2715, %v2718
      %v2736 = vsel %vm2734, %v2724, 2102212464
      %v2737 = vsel %vm2733, %v2721, %v2736
      %v2738 = vsel %vm2732, %v2735, %v2737
      %v2739 = vsel %vm2731, %v2718, %v2721
      %v2740 = vsel %vm2734, %v2727, 920167782
      %v2741 = vsel %vm2733, %v2724, %v2740
      %v2742 = vsel %vm2732, %v2739, %v2741
      %v2743 = vsel %vm2731, %v2721, %v2724
      %v2744 = vsel %vm2734, %v2730, 1326507024
      %v2745 = vsel %vm2733, %v2727, %v2744
      %v2746 = vsel %vm2732, %v2743, %v2745
      %v2747 = vshll.u32 %v2707, 8
      %v2748 = vmul.u32.u64.compose %v2747, %v2746
      %v2749 = vextract.low.u32 %v2748
      %v2750 = vextract.high.u32 %v2748
      %v2751 = vmul.u32.u64.compose %v2747, %v2742
      %v2752 = vextract.low.u32 %v2751
      %v2753 = vextract.high.u32 %v2751
      %v2754 = vmul.u32 %v2747, %v2738
      %v2755 = vadd.s32 %v2750, %v2752
      %vm2756 = vc.u32 %v2750, %v2752
      %v2757 = vadd.s32 %v2753, 1
      %v2758 = vsel %vm2756, %v2757, %v2753
      %v2759 = vadd.s32 %v2754, %v2758
      %v2760 = vadd.s32 %v2759, 536870912
      %v2761 = vshrl.u32 %v2760, 30
      %v2762 = vshll.u32 %v2761, 30
      %v2763 = vsub.s32 %v2759, %v2762
      %vm2764 = vcmp.lt.s32.totalorder %v2763, 0
      %v2765 = vsub.s32 0, %v2763
      %v2766 = vsel %vm2764, %v2765, %v2763
      %v2767 = vclz %v2766
      %v2768 = vsub.s32 %v2767, 2
      %vm2769 = vcmp.gt.s32.totalorder 0, %v2768
      %v2770 = vsel %vm2769, 0, %v2768
      %v2771 = vsub.s32 32, %v2770
      %v2772 = vshll.u32 %v2763, %v2770
      %v2773 = vshrl.u32 %v2755, %v2771
      %v2774 = vor.u32 %v2772, %v2773
      %v2775 = vsub.s32 4294967266, %v2770
      %v2776 = vadd.s32 %v2775, 127
      %v2777 = vshll.u32 %v2776, 23
      %v2778 = vor.u32 4788187, %v2777
      %v2779 = vand.u32 2147483647, %v2778
      %v2781 = vcvt.s32.f32 %v2774
      %v2782 = vmul.f32 %v2781, %v2779
      %v2783 = vxor.u32 %v2782, 2147483648
      %v2784 = vsel %vm2701, %v2783, %v2782
      %v2785 = vsub.s32 4, %v2761
      %v2786 = vsel %vm2701, %v2785, %v2761
      %v2787 = vsel %vm2700, %v599, %v2784
      %v2788 = vsel %vm2700, 0, %v2786
      %v2789 = vcosq.f32.pop %v2787
      %v2790 = vsinq.f32.pop %v2787
      %vm2791 = vweird.f32 %v599
      %v2792 = vadd.s32 %v2788, 3
      %v2793 = vand.u32 %v2792, 3
      %vm2794 = vcmp.lt.s32.totalorder %v2793, 2
      %vm2795 = vcmp.eq.s32.totalorder %v2793, 0
      %v2796 = vxor.u32 %v2790, 2147483648
      %v2797 = vsel %vm2795, %v2789, %v2796
      %vm2798 = vcmp.eq.s32.totalorder %v2793, 2
      %v2799 = vxor.u32 %v2789, 2147483648
      %v2800 = vsel %vm2798, %v2799, %v2790
      %v2801 = vsel %vm2794, %v2797, %v2800
      %v2802 = vsel %vm2791, nan, %v2801
      %v2803 = vand.u32 2147483647, %v604
      %vm2804 = vcmp.le.f32.partialorder %v2803, 0.7853982
      %vm2805 = vcmp.lt.s32.totalorder %v604, 0
      %v2806 = vand.u32 %v604, 2139095040
      %v2807 = vshrl.u32 %v2806, 23
      %v2808 = vsub.s32 %v2807, 127
      %v2809 = vand.u32 2147483647, %v604
      %v2810 = vand.u32 %v2809, 8388607
      %v2811 = vor.u32 %v2810, 8388608
      %v2812 = vsub.s32 0, %v2811
      %v2813 = vadd.s32 %v2808, 1
      %vm2814 = vcmp.gt.s32.totalorder %v2813, 0
      %v2815 = vsel %vm2814, %v2813, 0
      %v2816 = vshrl.u32 %v2815, 5
      %v2817 = vand.u32 %v2815, 31
      %v2818 = vsub.s32 32, %v2817
      %v2819 = vshrl.u32 683565275, %v2818
      %v2820 = vshll.u32 683565275, %v2817
      %v2821 = vshrl.u32 2475754826, %v2818
      %v2822 = vor.u32 %v2820, %v2821
      %v2823 = vshll.u32 2475754826, %v2817
      %v2824 = vshrl.u32 2131351028, %v2818
      %v2825 = vor.u32 %v2823, %v2824
      %v2826 = vshll.u32 2131351028, %v2817
      %v2827 = vshrl.u32 2102212464, %v2818
      %v2828 = vor.u32 %v2826, %v2827
      %v2829 = vshll.u32 2102212464, %v2817
      %v2830 = vshrl.u32 920167782, %v2818
      %v2831 = vor.u32 %v2829, %v2830
      %v2832 = vshll.u32 920167782, %v2817
      %v2833 = vshrl.u32 1326507024, %v2818
      %v2834 = vor.u32 %v2832, %v2833
      %vm2835 = vcmp.lt.s32.totalorder %v2816, 1
      %vm2836 = vcmp.lt.s32.totalorder %v2816, 2
      %vm2837 = vcmp.lt.s32.totalorder %v2816, 3
      %vm2838 = vcmp.lt.s32.totalorder %v2816, 4
      %v2839 = vsel %vm2835, %v2819, %v2822
      %v2840 = vsel %vm2838, %v2828, 2102212464
      %v2841 = vsel %vm2837, %v2825, %v2840
      %v2842 = vsel %vm2836, %v2839, %v2841
      %v2843 = vsel %vm2835, %v2822, %v2825
      %v2844 = vsel %vm2838, %v2831, 920167782
      %v2845 = vsel %vm2837, %v2828, %v2844
      %v2846 = vsel %vm2836, %v2843, %v2845
      %v2847 = vsel %vm2835, %v2825, %v2828
      %v2848 = vsel %vm2838, %v2834, 1326507024
      %v2849 = vsel %vm2837, %v2831, %v2848
      %v2850 = vsel %vm2836, %v2847, %v2849
      %v2851 = vshll.u32 %v2811, 8
      %v2852 = vmul.u32.u64.compose %v2851, %v2850
      %v2853 = vextract.low.u32 %v2852
      %v2854 = vextract.high.u32 %v2852
      %v2855 = vmul.u32.u64.compose %v2851, %v2846
      %v2856 = vextract.low.u32 %v2855
      %v2857 = vextract.high.u32 %v2855
      %v2858 = vmul.u32 %v2851, %v2842
      %v2859 = vadd.s32 %v2854, %v2856
      %vm2860 = vc.u32 %v2854, %v2856
      %v2861 = vadd.s32 %v2857, 1
      %v2862 = vsel %vm2860, %v2861, %v2857
      %v2863 = vadd.s32 %v2858, %v2862
      %v2864 = vadd.s32 %v2863, 536870912
      %v2865 = vshrl.u32 %v2864, 30
      %v2866 = vshll.u32 %v2865, 30
      %v2867 = vsub.s32 %v2863, %v2866
      %vm2868 = vcmp.lt.s32.totalorder %v2867, 0
      %v2869 = vsub.s32 0, %v2867
      %v2870 = vsel %vm2868, %v2869, %v2867
      %v2871 = vclz %v2870
      %v2872 = vsub.s32 %v2871, 2
      %vm2873 = vcmp.gt.s32.totalorder 0, %v2872
      %v2874 = vsel %vm2873, 0, %v2872
      %v2875 = vsub.s32 32, %v2874
      %v2876 = vshll.u32 %v2867, %v2874
      %v2877 = vshrl.u32 %v2859, %v2875
      %v2878 = vor.u32 %v2876, %v2877
      %v2879 = vsub.s32 4294967266, %v2874
      %v2880 = vadd.s32 %v2879, 127
      %v2881 = vshll.u32 %v2880, 23
      %v2882 = vor.u32 4788187, %v2881
      %v2883 = vand.u32 2147483647, %v2882
      %v2885 = vcvt.s32.f32 %v2878
      %v2886 = vmul.f32 %v2885, %v2883
      %v2887 = vxor.u32 %v2886, 2147483648
      %v2888 = vsel %vm2805, %v2887, %v2886
      %v2889 = vsub.s32 4, %v2865
      %v2890 = vsel %vm2805, %v2889, %v2865
      %v2891 = vsel %vm2804, %v604, %v2888
      %v2892 = vsel %vm2804, 0, %v2890
      %v2893 = vcosq.f32.pop %v2891
      %v2894 = vsinq.f32.pop %v2891
      %vm2895 = vweird.f32 %v604
      %v2896 = vadd.s32 %v2892, 3
      %v2897 = vand.u32 %v2896, 3
      %vm2898 = vcmp.lt.s32.totalorder %v2897, 2
      %vm2899 = vcmp.eq.s32.totalorder %v2897, 0
      %v2900 = vxor.u32 %v2894, 2147483648
      %v2901 = vsel %vm2899, %v2893, %v2900
      %vm2902 = vcmp.eq.s32.totalorder %v2897, 2
      %v2903 = vxor.u32 %v2893, 2147483648
      %v2904 = vsel %vm2902, %v2903, %v2894
      %v2905 = vsel %vm2898, %v2901, %v2904
      %v2906 = vsel %vm2895, nan, %v2905
      %v2907 = vand.u32 2147483647, %v609
      %vm2908 = vcmp.le.f32.partialorder %v2907, 0.7853982
      %vm2909 = vcmp.lt.s32.totalorder %v609, 0
      %v2910 = vand.u32 %v609, 2139095040
      %v2911 = vshrl.u32 %v2910, 23
      %v2912 = vsub.s32 %v2911, 127
      %v2913 = vand.u32 2147483647, %v609
      %v2914 = vand.u32 %v2913, 8388607
      %v2915 = vor.u32 %v2914, 8388608
      %v2916 = vsub.s32 0, %v2915
      %v2917 = vadd.s32 %v2912, 1
      %vm2918 = vcmp.gt.s32.totalorder %v2917, 0
      %v2919 = vsel %vm2918, %v2917, 0
      %v2920 = vshrl.u32 %v2919, 5
      %v2921 = vand.u32 %v2919, 31
      %v2922 = vsub.s32 32, %v2921
      %v2923 = vshrl.u32 683565275, %v2922
      %v2924 = vshll.u32 683565275, %v2921
      %v2925 = vshrl.u32 2475754826, %v2922
      %v2926 = vor.u32 %v2924, %v2925
      %v2927 = vshll.u32 2475754826, %v2921
      %v2928 = vshrl.u32 2131351028, %v2922
      %v2929 = vor.u32 %v2927, %v2928
      %v2930 = vshll.u32 2131351028, %v2921
      %v2931 = vshrl.u32 2102212464, %v2922
      %v2932 = vor.u32 %v2930, %v2931
      %v2933 = vshll.u32 2102212464, %v2921
      %v2934 = vshrl.u32 920167782, %v2922
      %v2935 = vor.u32 %v2933, %v2934
      %v2936 = vshll.u32 920167782, %v2921
      %v2937 = vshrl.u32 1326507024, %v2922
      %v2938 = vor.u32 %v2936, %v2937
      %vm2939 = vcmp.lt.s32.totalorder %v2920, 1
      %vm2940 = vcmp.lt.s32.totalorder %v2920, 2
      %vm2941 = vcmp.lt.s32.totalorder %v2920, 3
      %vm2942 = vcmp.lt.s32.totalorder %v2920, 4
      %v2943 = vsel %vm2939, %v2923, %v2926
      %v2944 = vsel %vm2942, %v2932, 2102212464
      %v2945 = vsel %vm2941, %v2929, %v2944
      %v2946 = vsel %vm2940, %v2943, %v2945
      %v2947 = vsel %vm2939, %v2926, %v2929
      %v2948 = vsel %vm2942, %v2935, 920167782
      %v2949 = vsel %vm2941, %v2932, %v2948
      %v2950 = vsel %vm2940, %v2947, %v2949
      %v2951 = vsel %vm2939, %v2929, %v2932
      %v2952 = vsel %vm2942, %v2938, 1326507024
      %v2953 = vsel %vm2941, %v2935, %v2952
      %v2954 = vsel %vm2940, %v2951, %v2953
      %v2955 = vshll.u32 %v2915, 8
      %v2956 = vmul.u32.u64.compose %v2955, %v2954
      %v2957 = vextract.low.u32 %v2956
      %v2958 = vextract.high.u32 %v2956
      %v2959 = vmul.u32.u64.compose %v2955, %v2950
      %v2960 = vextract.low.u32 %v2959
      %v2961 = vextract.high.u32 %v2959
      %v2962 = vmul.u32 %v2955, %v2946
      %v2963 = vadd.s32 %v2958, %v2960
      %vm2964 = vc.u32 %v2958, %v2960
      %v2965 = vadd.s32 %v2961, 1
      %v2966 = vsel %vm2964, %v2965, %v2961
      %v2967 = vadd.s32 %v2962, %v2966
      %v2968 = vadd.s32 %v2967, 536870912
      %v2969 = vshrl.u32 %v2968, 30
      %v2970 = vshll.u32 %v2969, 30
      %v2971 = vsub.s32 %v2967, %v2970
      %vm2972 = vcmp.lt.s32.totalorder %v2971, 0
      %v2973 = vsub.s32 0, %v2971
      %v2974 = vsel %vm2972, %v2973, %v2971
      %v2975 = vclz %v2974
      %v2976 = vsub.s32 %v2975, 2
      %vm2977 = vcmp.gt.s32.totalorder 0, %v2976
      %v2978 = vsel %vm2977, 0, %v2976
      %v2979 = vsub.s32 32, %v2978
      %v2980 = vshll.u32 %v2971, %v2978
      %v2981 = vshrl.u32 %v2963, %v2979
      %v2982 = vor.u32 %v2980, %v2981
      %v2983 = vsub.s32 4294967266, %v2978
      %v2984 = vadd.s32 %v2983, 127
      %v2985 = vshll.u32 %v2984, 23
      %v2986 = vor.u32 4788187, %v2985
      %v2987 = vand.u32 2147483647, %v2986
      %v2989 = vcvt.s32.f32 %v2982
      %v2990 = vmul.f32 %v2989, %v2987
      %v2991 = vxor.u32 %v2990, 2147483648
      %v2992 = vsel %vm2909, %v2991, %v2990
      %v2993 = vsub.s32 4, %v2969
      %v2994 = vsel %vm2909, %v2993, %v2969
      %v2995 = vsel %vm2908, %v609, %v2992
      %v2996 = vsel %vm2908, 0, %v2994
      %v2997 = vcosq.f32.pop %v2995
      %v2998 = vsinq.f32.pop %v2995
      %vm2999 = vweird.f32 %v609
      %v3000 = vadd.s32 %v2996, 3
      %v3001 = vand.u32 %v3000, 3
      %vm3002 = vcmp.lt.s32.totalorder %v3001, 2
      %vm3003 = vcmp.eq.s32.totalorder %v3001, 0
      %v3004 = vxor.u32 %v2998, 2147483648
      %v3005 = vsel %vm3003, %v2997, %v3004
      %vm3006 = vcmp.eq.s32.totalorder %v3001, 2
      %v3007 = vxor.u32 %v2997, 2147483648
      %v3008 = vsel %vm3006, %v3007, %v2998
      %v3009 = vsel %vm3002, %v3005, %v3008
      %v3010 = vsel %vm2999, nan, %v3009
      %v3011 = vand.u32 2147483647, %v614
      %vm3012 = vcmp.le.f32.partialorder %v3011, 0.7853982
      %vm3013 = vcmp.lt.s32.totalorder %v614, 0
      %v3014 = vand.u32 %v614, 2139095040
      %v3015 = vshrl.u32 %v3014, 23
      %v3016 = vsub.s32 %v3015, 127
      %v3017 = vand.u32 2147483647, %v614
      %v3018 = vand.u32 %v3017, 8388607
      %v3019 = vor.u32 %v3018, 8388608
      %v3020 = vsub.s32 0, %v3019
      %v3021 = vadd.s32 %v3016, 1
      %vm3022 = vcmp.gt.s32.totalorder %v3021, 0
      %v3023 = vsel %vm3022, %v3021, 0
      %v3024 = vshrl.u32 %v3023, 5
      %v3025 = vand.u32 %v3023, 31
      %v3026 = vsub.s32 32, %v3025
      %v3027 = vshrl.u32 683565275, %v3026
      %v3028 = vshll.u32 683565275, %v3025
      %v3029 = vshrl.u32 2475754826, %v3026
      %v3030 = vor.u32 %v3028, %v3029
      %v3031 = vshll.u32 2475754826, %v3025
      %v3032 = vshrl.u32 2131351028, %v3026
      %v3033 = vor.u32 %v3031, %v3032
      %v3034 = vshll.u32 2131351028, %v3025
      %v3035 = vshrl.u32 2102212464, %v3026
      %v3036 = vor.u32 %v3034, %v3035
      %v3037 = vshll.u32 2102212464, %v3025
      %v3038 = vshrl.u32 920167782, %v3026
      %v3039 = vor.u32 %v3037, %v3038
      %v3040 = vshll.u32 920167782, %v3025
      %v3041 = vshrl.u32 1326507024, %v3026
      %v3042 = vor.u32 %v3040, %v3041
      %vm3043 = vcmp.lt.s32.totalorder %v3024, 1
      %vm3044 = vcmp.lt.s32.totalorder %v3024, 2
      %vm3045 = vcmp.lt.s32.totalorder %v3024, 3
      %vm3046 = vcmp.lt.s32.totalorder %v3024, 4
      %v3047 = vsel %vm3043, %v3027, %v3030
      %v3048 = vsel %vm3046, %v3036, 2102212464
      %v3049 = vsel %vm3045, %v3033, %v3048
      %v3050 = vsel %vm3044, %v3047, %v3049
      %v3051 = vsel %vm3043, %v3030, %v3033
      %v3052 = vsel %vm3046, %v3039, 920167782
      %v3053 = vsel %vm3045, %v3036, %v3052
      %v3054 = vsel %vm3044, %v3051, %v3053
      %v3055 = vsel %vm3043, %v3033, %v3036
      %v3056 = vsel %vm3046, %v3042, 1326507024
      %v3057 = vsel %vm3045, %v3039, %v3056
      %v3058 = vsel %vm3044, %v3055, %v3057
      %v3059 = vshll.u32 %v3019, 8
      %v3060 = vmul.u32.u64.compose %v3059, %v3058
      %v3061 = vextract.low.u32 %v3060
      %v3062 = vextract.high.u32 %v3060
      %v3063 = vmul.u32.u64.compose %v3059, %v3054
      %v3064 = vextract.low.u32 %v3063
      %v3065 = vextract.high.u32 %v3063
      %v3066 = vmul.u32 %v3059, %v3050
      %v3067 = vadd.s32 %v3062, %v3064
      %vm3068 = vc.u32 %v3062, %v3064
      %v3069 = vadd.s32 %v3065, 1
      %v3070 = vsel %vm3068, %v3069, %v3065
      %v3071 = vadd.s32 %v3066, %v3070
      %v3072 = vadd.s32 %v3071, 536870912
      %v3073 = vshrl.u32 %v3072, 30
      %v3074 = vshll.u32 %v3073, 30
      %v3075 = vsub.s32 %v3071, %v3074
      %vm3076 = vcmp.lt.s32.totalorder %v3075, 0
      %v3077 = vsub.s32 0, %v3075
      %v3078 = vsel %vm3076, %v3077, %v3075
      %v3079 = vclz %v3078
      %v3080 = vsub.s32 %v3079, 2
      %vm3081 = vcmp.gt.s32.totalorder 0, %v3080
      %v3082 = vsel %vm3081, 0, %v3080
      %v3083 = vsub.s32 32, %v3082
      %v3084 = vshll.u32 %v3075, %v3082
      %v3085 = vshrl.u32 %v3067, %v3083
      %v3086 = vor.u32 %v3084, %v3085
      %v3087 = vsub.s32 4294967266, %v3082
      %v3088 = vadd.s32 %v3087, 127
      %v3089 = vshll.u32 %v3088, 23
      %v3090 = vor.u32 4788187, %v3089
      %v3091 = vand.u32 2147483647, %v3090
      %v3093 = vcvt.s32.f32 %v3086
      %v3094 = vmul.f32 %v3093, %v3091
      %v3095 = vxor.u32 %v3094, 2147483648
      %v3096 = vsel %vm3013, %v3095, %v3094
      %v3097 = vsub.s32 4, %v3073
      %v3098 = vsel %vm3013, %v3097, %v3073
      %v3099 = vsel %vm3012, %v614, %v3096
      %v3100 = vsel %vm3012, 0, %v3098
      %v3101 = vcosq.f32.pop %v3099
      %v3102 = vsinq.f32.pop %v3099
      %vm3103 = vweird.f32 %v614
      %v3104 = vadd.s32 %v3100, 3
      %v3105 = vand.u32 %v3104, 3
      %vm3106 = vcmp.lt.s32.totalorder %v3105, 2
      %vm3107 = vcmp.eq.s32.totalorder %v3105, 0
      %v3108 = vxor.u32 %v3102, 2147483648
      %v3109 = vsel %vm3107, %v3101, %v3108
      %vm3110 = vcmp.eq.s32.totalorder %v3105, 2
      %v3111 = vxor.u32 %v3101, 2147483648
      %v3112 = vsel %vm3110, %v3111, %v3102
      %v3113 = vsel %vm3106, %v3109, %v3112
      %v3114 = vsel %vm3103, nan, %v3113
      %v3115 = vand.u32 2147483647, %v619
      %vm3116 = vcmp.le.f32.partialorder %v3115, 0.7853982
      %vm3117 = vcmp.lt.s32.totalorder %v619, 0
      %v3118 = vand.u32 %v619, 2139095040
      %v3119 = vshrl.u32 %v3118, 23
      %v3120 = vsub.s32 %v3119, 127
      %v3121 = vand.u32 2147483647, %v619
      %v3122 = vand.u32 %v3121, 8388607
      %v3123 = vor.u32 %v3122, 8388608
      %v3124 = vsub.s32 0, %v3123
      %v3125 = vadd.s32 %v3120, 1
      %vm3126 = vcmp.gt.s32.totalorder %v3125, 0
      %v3127 = vsel %vm3126, %v3125, 0
      %v3128 = vshrl.u32 %v3127, 5
      %v3129 = vand.u32 %v3127, 31
      %v3130 = vsub.s32 32, %v3129
      %v3131 = vshrl.u32 683565275, %v3130
      %v3132 = vshll.u32 683565275, %v3129
      %v3133 = vshrl.u32 2475754826, %v3130
      %v3134 = vor.u32 %v3132, %v3133
      %v3135 = vshll.u32 2475754826, %v3129
      %v3136 = vshrl.u32 2131351028, %v3130
      %v3137 = vor.u32 %v3135, %v3136
      %v3138 = vshll.u32 2131351028, %v3129
      %v3139 = vshrl.u32 2102212464, %v3130
      %v3140 = vor.u32 %v3138, %v3139
      %v3141 = vshll.u32 2102212464, %v3129
      %v3142 = vshrl.u32 920167782, %v3130
      %v3143 = vor.u32 %v3141, %v3142
      %v3144 = vshll.u32 920167782, %v3129
      %v3145 = vshrl.u32 1326507024, %v3130
      %v3146 = vor.u32 %v3144, %v3145
      %vm3147 = vcmp.lt.s32.totalorder %v3128, 1
      %vm3148 = vcmp.lt.s32.totalorder %v3128, 2
      %vm3149 = vcmp.lt.s32.totalorder %v3128, 3
      %vm3150 = vcmp.lt.s32.totalorder %v3128, 4
      %v3151 = vsel %vm3147, %v3131, %v3134
      %v3152 = vsel %vm3150, %v3140, 2102212464
      %v3153 = vsel %vm3149, %v3137, %v3152
      %v3154 = vsel %vm3148, %v3151, %v3153
      %v3155 = vsel %vm3147, %v3134, %v3137
      %v3156 = vsel %vm3150, %v3143, 920167782
      %v3157 = vsel %vm3149, %v3140, %v3156
      %v3158 = vsel %vm3148, %v3155, %v3157
      %v3159 = vsel %vm3147, %v3137, %v3140
      %v3160 = vsel %vm3150, %v3146, 1326507024
      %v3161 = vsel %vm3149, %v3143, %v3160
      %v3162 = vsel %vm3148, %v3159, %v3161
      %v3163 = vshll.u32 %v3123, 8
      %v3164 = vmul.u32.u64.compose %v3163, %v3162
      %v3165 = vextract.low.u32 %v3164
      %v3166 = vextract.high.u32 %v3164
      %v3167 = vmul.u32.u64.compose %v3163, %v3158
      %v3168 = vextract.low.u32 %v3167
      %v3169 = vextract.high.u32 %v3167
      %v3170 = vmul.u32 %v3163, %v3154
      %v3171 = vadd.s32 %v3166, %v3168
      %vm3172 = vc.u32 %v3166, %v3168
      %v3173 = vadd.s32 %v3169, 1
      %v3174 = vsel %vm3172, %v3173, %v3169
      %v3175 = vadd.s32 %v3170, %v3174
      %v3176 = vadd.s32 %v3175, 536870912
      %v3177 = vshrl.u32 %v3176, 30
      %v3178 = vshll.u32 %v3177, 30
      %v3179 = vsub.s32 %v3175, %v3178
      %vm3180 = vcmp.lt.s32.totalorder %v3179, 0
      %v3181 = vsub.s32 0, %v3179
      %v3182 = vsel %vm3180, %v3181, %v3179
      %v3183 = vclz %v3182
      %v3184 = vsub.s32 %v3183, 2
      %vm3185 = vcmp.gt.s32.totalorder 0, %v3184
      %v3186 = vsel %vm3185, 0, %v3184
      %v3187 = vsub.s32 32, %v3186
      %v3188 = vshll.u32 %v3179, %v3186
      %v3189 = vshrl.u32 %v3171, %v3187
      %v3190 = vor.u32 %v3188, %v3189
      %v3191 = vsub.s32 4294967266, %v3186
      %v3192 = vadd.s32 %v3191, 127
      %v3193 = vshll.u32 %v3192, 23
      %v3194 = vor.u32 4788187, %v3193
      %v3195 = vand.u32 2147483647, %v3194
      %v3197 = vcvt.s32.f32 %v3190
      %v3198 = vmul.f32 %v3197, %v3195
      %v3199 = vxor.u32 %v3198, 2147483648
      %v3200 = vsel %vm3117, %v3199, %v3198
      %v3201 = vsub.s32 4, %v3177
      %v3202 = vsel %vm3117, %v3201, %v3177
      %v3203 = vsel %vm3116, %v619, %v3200
      %v3204 = vsel %vm3116, 0, %v3202
      %v3205 = vcosq.f32.pop %v3203
      %v3206 = vsinq.f32.pop %v3203
      %vm3207 = vweird.f32 %v619
      %v3208 = vadd.s32 %v3204, 3
      %v3209 = vand.u32 %v3208, 3
      %vm3210 = vcmp.lt.s32.totalorder %v3209, 2
      %vm3211 = vcmp.eq.s32.totalorder %v3209, 0
      %v3212 = vxor.u32 %v3206, 2147483648
      %v3213 = vsel %vm3211, %v3205, %v3212
      %vm3214 = vcmp.eq.s32.totalorder %v3209, 2
      %v3215 = vxor.u32 %v3205, 2147483648
      %v3216 = vsel %vm3214, %v3215, %v3206
      %v3217 = vsel %vm3210, %v3213, %v3216
      %v3218 = vsel %vm3207, nan, %v3217
      %v3219 = vand.u32 2147483647, %v624
      %vm3220 = vcmp.le.f32.partialorder %v3219, 0.7853982
      %vm3221 = vcmp.lt.s32.totalorder %v624, 0
      %v3222 = vand.u32 %v624, 2139095040
      %v3223 = vshrl.u32 %v3222, 23
      %v3224 = vsub.s32 %v3223, 127
      %v3225 = vand.u32 2147483647, %v624
      %v3226 = vand.u32 %v3225, 8388607
      %v3227 = vor.u32 %v3226, 8388608
      %v3228 = vsub.s32 0, %v3227
      %v3229 = vadd.s32 %v3224, 1
      %vm3230 = vcmp.gt.s32.totalorder %v3229, 0
      %v3231 = vsel %vm3230, %v3229, 0
      %v3232 = vshrl.u32 %v3231, 5
      %v3233 = vand.u32 %v3231, 31
      %v3234 = vsub.s32 32, %v3233
      %v3235 = vshrl.u32 683565275, %v3234
      %v3236 = vshll.u32 683565275, %v3233
      %v3237 = vshrl.u32 2475754826, %v3234
      %v3238 = vor.u32 %v3236, %v3237
      %v3239 = vshll.u32 2475754826, %v3233
      %v3240 = vshrl.u32 2131351028, %v3234
      %v3241 = vor.u32 %v3239, %v3240
      %v3242 = vshll.u32 2131351028, %v3233
      %v3243 = vshrl.u32 2102212464, %v3234
      %v3244 = vor.u32 %v3242, %v3243
      %v3245 = vshll.u32 2102212464, %v3233
      %v3246 = vshrl.u32 920167782, %v3234
      %v3247 = vor.u32 %v3245, %v3246
      %v3248 = vshll.u32 920167782, %v3233
      %v3249 = vshrl.u32 1326507024, %v3234
      %v3250 = vor.u32 %v3248, %v3249
      %vm3251 = vcmp.lt.s32.totalorder %v3232, 1
      %vm3252 = vcmp.lt.s32.totalorder %v3232, 2
      %vm3253 = vcmp.lt.s32.totalorder %v3232, 3
      %vm3254 = vcmp.lt.s32.totalorder %v3232, 4
      %v3255 = vsel %vm3251, %v3235, %v3238
      %v3256 = vsel %vm3254, %v3244, 2102212464
      %v3257 = vsel %vm3253, %v3241, %v3256
      %v3258 = vsel %vm3252, %v3255, %v3257
      %v3259 = vsel %vm3251, %v3238, %v3241
      %v3260 = vsel %vm3254, %v3247, 920167782
      %v3261 = vsel %vm3253, %v3244, %v3260
      %v3262 = vsel %vm3252, %v3259, %v3261
      %v3263 = vsel %vm3251, %v3241, %v3244
      %v3264 = vsel %vm3254, %v3250, 1326507024
      %v3265 = vsel %vm3253, %v3247, %v3264
      %v3266 = vsel %vm3252, %v3263, %v3265
      %v3267 = vshll.u32 %v3227, 8
      %v3268 = vmul.u32.u64.compose %v3267, %v3266
      %v3269 = vextract.low.u32 %v3268
      %v3270 = vextract.high.u32 %v3268
      %v3271 = vmul.u32.u64.compose %v3267, %v3262
      %v3272 = vextract.low.u32 %v3271
      %v3273 = vextract.high.u32 %v3271
      %v3274 = vmul.u32 %v3267, %v3258
      %v3275 = vadd.s32 %v3270, %v3272
      %vm3276 = vc.u32 %v3270, %v3272
      %v3277 = vadd.s32 %v3273, 1
      %v3278 = vsel %vm3276, %v3277, %v3273
      %v3279 = vadd.s32 %v3274, %v3278
      %v3280 = vadd.s32 %v3279, 536870912
      %v3281 = vshrl.u32 %v3280, 30
      %v3282 = vshll.u32 %v3281, 30
      %v3283 = vsub.s32 %v3279, %v3282
      %vm3284 = vcmp.lt.s32.totalorder %v3283, 0
      %v3285 = vsub.s32 0, %v3283
      %v3286 = vsel %vm3284, %v3285, %v3283
      %v3287 = vclz %v3286
      %v3288 = vsub.s32 %v3287, 2
      %vm3289 = vcmp.gt.s32.totalorder 0, %v3288
      %v3290 = vsel %vm3289, 0, %v3288
      %v3291 = vsub.s32 32, %v3290
      %v3292 = vshll.u32 %v3283, %v3290
      %v3293 = vshrl.u32 %v3275, %v3291
      %v3294 = vor.u32 %v3292, %v3293
      %v3295 = vsub.s32 4294967266, %v3290
      %v3296 = vadd.s32 %v3295, 127
      %v3297 = vshll.u32 %v3296, 23
      %v3298 = vor.u32 4788187, %v3297
      %v3299 = vand.u32 2147483647, %v3298
      %v3301 = vcvt.s32.f32 %v3294
      %v3302 = vmul.f32 %v3301, %v3299
      %v3303 = vxor.u32 %v3302, 2147483648
      %v3304 = vsel %vm3221, %v3303, %v3302
      %v3305 = vsub.s32 4, %v3281
      %v3306 = vsel %vm3221, %v3305, %v3281
      %v3307 = vsel %vm3220, %v624, %v3304
      %v3308 = vsel %vm3220, 0, %v3306
      %v3309 = vcosq.f32.pop %v3307
      %v3310 = vsinq.f32.pop %v3307
      %vm3311 = vweird.f32 %v624
      %v3312 = vadd.s32 %v3308, 3
      %v3313 = vand.u32 %v3312, 3
      %vm3314 = vcmp.lt.s32.totalorder %v3313, 2
      %vm3315 = vcmp.eq.s32.totalorder %v3313, 0
      %v3316 = vxor.u32 %v3310, 2147483648
      %v3317 = vsel %vm3315, %v3309, %v3316
      %vm3318 = vcmp.eq.s32.totalorder %v3313, 2
      %v3319 = vxor.u32 %v3309, 2147483648
      %v3320 = vsel %vm3318, %v3319, %v3310
      %v3321 = vsel %vm3314, %v3317, %v3320
      %v3322 = vsel %vm3311, nan, %v3321
      %v3323 = vand.u32 2147483647, %v629
      %vm3324 = vcmp.le.f32.partialorder %v3323, 0.7853982
      %vm3325 = vcmp.lt.s32.totalorder %v629, 0
      %v3326 = vand.u32 %v629, 2139095040
      %v3327 = vshrl.u32 %v3326, 23
      %v3328 = vsub.s32 %v3327, 127
      %v3329 = vand.u32 2147483647, %v629
      %v3330 = vand.u32 %v3329, 8388607
      %v3331 = vor.u32 %v3330, 8388608
      %v3332 = vsub.s32 0, %v3331
      %v3333 = vadd.s32 %v3328, 1
      %vm3334 = vcmp.gt.s32.totalorder %v3333, 0
      %v3335 = vsel %vm3334, %v3333, 0
      %v3336 = vshrl.u32 %v3335, 5
      %v3337 = vand.u32 %v3335, 31
      %v3338 = vsub.s32 32, %v3337
      %v3339 = vshrl.u32 683565275, %v3338
      %v3340 = vshll.u32 683565275, %v3337
      %v3341 = vshrl.u32 2475754826, %v3338
      %v3342 = vor.u32 %v3340, %v3341
      %v3343 = vshll.u32 2475754826, %v3337
      %v3344 = vshrl.u32 2131351028, %v3338
      %v3345 = vor.u32 %v3343, %v3344
      %v3346 = vshll.u32 2131351028, %v3337
      %v3347 = vshrl.u32 2102212464, %v3338
      %v3348 = vor.u32 %v3346, %v3347
      %v3349 = vshll.u32 2102212464, %v3337
      %v3350 = vshrl.u32 920167782, %v3338
      %v3351 = vor.u32 %v3349, %v3350
      %v3352 = vshll.u32 920167782, %v3337
      %v3353 = vshrl.u32 1326507024, %v3338
      %v3354 = vor.u32 %v3352, %v3353
      %vm3355 = vcmp.lt.s32.totalorder %v3336, 1
      %vm3356 = vcmp.lt.s32.totalorder %v3336, 2
      %vm3357 = vcmp.lt.s32.totalorder %v3336, 3
      %vm3358 = vcmp.lt.s32.totalorder %v3336, 4
      %v3359 = vsel %vm3355, %v3339, %v3342
      %v3360 = vsel %vm3358, %v3348, 2102212464
      %v3361 = vsel %vm3357, %v3345, %v3360
      %v3362 = vsel %vm3356, %v3359, %v3361
      %v3363 = vsel %vm3355, %v3342, %v3345
      %v3364 = vsel %vm3358, %v3351, 920167782
      %v3365 = vsel %vm3357, %v3348, %v3364
      %v3366 = vsel %vm3356, %v3363, %v3365
      %v3367 = vsel %vm3355, %v3345, %v3348
      %v3368 = vsel %vm3358, %v3354, 1326507024
      %v3369 = vsel %vm3357, %v3351, %v3368
      %v3370 = vsel %vm3356, %v3367, %v3369
      %v3371 = vshll.u32 %v3331, 8
      %v3372 = vmul.u32.u64.compose %v3371, %v3370
      %v3373 = vextract.low.u32 %v3372
      %v3374 = vextract.high.u32 %v3372
      %v3375 = vmul.u32.u64.compose %v3371, %v3366
      %v3376 = vextract.low.u32 %v3375
      %v3377 = vextract.high.u32 %v3375
      %v3378 = vmul.u32 %v3371, %v3362
      %v3379 = vadd.s32 %v3374, %v3376
      %vm3380 = vc.u32 %v3374, %v3376
      %v3381 = vadd.s32 %v3377, 1
      %v3382 = vsel %vm3380, %v3381, %v3377
      %v3383 = vadd.s32 %v3378, %v3382
      %v3384 = vadd.s32 %v3383, 536870912
      %v3385 = vshrl.u32 %v3384, 30
      %v3386 = vshll.u32 %v3385, 30
      %v3387 = vsub.s32 %v3383, %v3386
      %vm3388 = vcmp.lt.s32.totalorder %v3387, 0
      %v3389 = vsub.s32 0, %v3387
      %v3390 = vsel %vm3388, %v3389, %v3387
      %v3391 = vclz %v3390
      %v3392 = vsub.s32 %v3391, 2
      %vm3393 = vcmp.gt.s32.totalorder 0, %v3392
      %v3394 = vsel %vm3393, 0, %v3392
      %v3395 = vsub.s32 32, %v3394
      %v3396 = vshll.u32 %v3387, %v3394
      %v3397 = vshrl.u32 %v3379, %v3395
      %v3398 = vor.u32 %v3396, %v3397
      %v3399 = vsub.s32 4294967266, %v3394
      %v3400 = vadd.s32 %v3399, 127
      %v3401 = vshll.u32 %v3400, 23
      %v3402 = vor.u32 4788187, %v3401
      %v3403 = vand.u32 2147483647, %v3402
      %v3405 = vcvt.s32.f32 %v3398
      %v3406 = vmul.f32 %v3405, %v3403
      %v3407 = vxor.u32 %v3406, 2147483648
      %v3408 = vsel %vm3325, %v3407, %v3406
      %v3409 = vsub.s32 4, %v3385
      %v3410 = vsel %vm3325, %v3409, %v3385
      %v3411 = vsel %vm3324, %v629, %v3408
      %v3412 = vsel %vm3324, 0, %v3410
      %v3413 = vcosq.f32.pop %v3411
      %v3414 = vsinq.f32.pop %v3411
      %vm3415 = vweird.f32 %v629
      %v3416 = vadd.s32 %v3412, 3
      %v3417 = vand.u32 %v3416, 3
      %vm3418 = vcmp.lt.s32.totalorder %v3417, 2
      %vm3419 = vcmp.eq.s32.totalorder %v3417, 0
      %v3420 = vxor.u32 %v3414, 2147483648
      %v3421 = vsel %vm3419, %v3413, %v3420
      %vm3422 = vcmp.eq.s32.totalorder %v3417, 2
      %v3423 = vxor.u32 %v3413, 2147483648
      %v3424 = vsel %vm3422, %v3423, %v3414
      %v3425 = vsel %vm3418, %v3421, %v3424
      %v3426 = vsel %vm3415, nan, %v3425
      %v3427 = vand.u32 2147483647, %v634
      %vm3428 = vcmp.le.f32.partialorder %v3427, 0.7853982
      %vm3429 = vcmp.lt.s32.totalorder %v634, 0
      %v3430 = vand.u32 %v634, 2139095040
      %v3431 = vshrl.u32 %v3430, 23
      %v3432 = vsub.s32 %v3431, 127
      %v3433 = vand.u32 2147483647, %v634
      %v3434 = vand.u32 %v3433, 8388607
      %v3435 = vor.u32 %v3434, 8388608
      %v3436 = vsub.s32 0, %v3435
      %v3437 = vadd.s32 %v3432, 1
      %vm3438 = vcmp.gt.s32.totalorder %v3437, 0
      %v3439 = vsel %vm3438, %v3437, 0
      %v3440 = vshrl.u32 %v3439, 5
      %v3441 = vand.u32 %v3439, 31
      %v3442 = vsub.s32 32, %v3441
      %v3443 = vshrl.u32 683565275, %v3442
      %v3444 = vshll.u32 683565275, %v3441
      %v3445 = vshrl.u32 2475754826, %v3442
      %v3446 = vor.u32 %v3444, %v3445
      %v3447 = vshll.u32 2475754826, %v3441
      %v3448 = vshrl.u32 2131351028, %v3442
      %v3449 = vor.u32 %v3447, %v3448
      %v3450 = vshll.u32 2131351028, %v3441
      %v3451 = vshrl.u32 2102212464, %v3442
      %v3452 = vor.u32 %v3450, %v3451
      %v3453 = vshll.u32 2102212464, %v3441
      %v3454 = vshrl.u32 920167782, %v3442
      %v3455 = vor.u32 %v3453, %v3454
      %v3456 = vshll.u32 920167782, %v3441
      %v3457 = vshrl.u32 1326507024, %v3442
      %v3458 = vor.u32 %v3456, %v3457
      %vm3459 = vcmp.lt.s32.totalorder %v3440, 1
      %vm3460 = vcmp.lt.s32.totalorder %v3440, 2
      %vm3461 = vcmp.lt.s32.totalorder %v3440, 3
      %vm3462 = vcmp.lt.s32.totalorder %v3440, 4
      %v3463 = vsel %vm3459, %v3443, %v3446
      %v3464 = vsel %vm3462, %v3452, 2102212464
      %v3465 = vsel %vm3461, %v3449, %v3464
      %v3466 = vsel %vm3460, %v3463, %v3465
      %v3467 = vsel %vm3459, %v3446, %v3449
      %v3468 = vsel %vm3462, %v3455, 920167782
      %v3469 = vsel %vm3461, %v3452, %v3468
      %v3470 = vsel %vm3460, %v3467, %v3469
      %v3471 = vsel %vm3459, %v3449, %v3452
      %v3472 = vsel %vm3462, %v3458, 1326507024
      %v3473 = vsel %vm3461, %v3455, %v3472
      %v3474 = vsel %vm3460, %v3471, %v3473
      %v3475 = vshll.u32 %v3435, 8
      %v3476 = vmul.u32.u64.compose %v3475, %v3474
      %v3477 = vextract.low.u32 %v3476
      %v3478 = vextract.high.u32 %v3476
      %v3479 = vmul.u32.u64.compose %v3475, %v3470
      %v3480 = vextract.low.u32 %v3479
      %v3481 = vextract.high.u32 %v3479
      %v3482 = vmul.u32 %v3475, %v3466
      %v3483 = vadd.s32 %v3478, %v3480
      %vm3484 = vc.u32 %v3478, %v3480
      %v3485 = vadd.s32 %v3481, 1
      %v3486 = vsel %vm3484, %v3485, %v3481
      %v3487 = vadd.s32 %v3482, %v3486
      %v3488 = vadd.s32 %v3487, 536870912
      %v3489 = vshrl.u32 %v3488, 30
      %v3490 = vshll.u32 %v3489, 30
      %v3491 = vsub.s32 %v3487, %v3490
      %vm3492 = vcmp.lt.s32.totalorder %v3491, 0
      %v3493 = vsub.s32 0, %v3491
      %v3494 = vsel %vm3492, %v3493, %v3491
      %v3495 = vclz %v3494
      %v3496 = vsub.s32 %v3495, 2
      %vm3497 = vcmp.gt.s32.totalorder 0, %v3496
      %v3498 = vsel %vm3497, 0, %v3496
      %v3499 = vsub.s32 32, %v3498
      %v3500 = vshll.u32 %v3491, %v3498
      %v3501 = vshrl.u32 %v3483, %v3499
      %v3502 = vor.u32 %v3500, %v3501
      %v3503 = vsub.s32 4294967266, %v3498
      %v3504 = vadd.s32 %v3503, 127
      %v3505 = vshll.u32 %v3504, 23
      %v3506 = vor.u32 4788187, %v3505
      %v3507 = vand.u32 2147483647, %v3506
      %v3509 = vcvt.s32.f32 %v3502
      %v3510 = vmul.f32 %v3509, %v3507
      %v3511 = vxor.u32 %v3510, 2147483648
      %v3512 = vsel %vm3429, %v3511, %v3510
      %v3513 = vsub.s32 4, %v3489
      %v3514 = vsel %vm3429, %v3513, %v3489
      %v3515 = vsel %vm3428, %v634, %v3512
      %v3516 = vsel %vm3428, 0, %v3514
      %v3517 = vcosq.f32.pop %v3515
      %v3518 = vsinq.f32.pop %v3515
      %vm3519 = vweird.f32 %v634
      %v3520 = vadd.s32 %v3516, 3
      %v3521 = vand.u32 %v3520, 3
      %vm3522 = vcmp.lt.s32.totalorder %v3521, 2
      %vm3523 = vcmp.eq.s32.totalorder %v3521, 0
      %v3524 = vxor.u32 %v3518, 2147483648
      %v3525 = vsel %vm3523, %v3517, %v3524
      %vm3526 = vcmp.eq.s32.totalorder %v3521, 2
      %v3527 = vxor.u32 %v3517, 2147483648
      %v3528 = vsel %vm3526, %v3527, %v3518
      %v3529 = vsel %vm3522, %v3525, %v3528
      %v3530 = vsel %vm3519, nan, %v3529
      %v3531 = vand.u32 2147483647, %v639
      %vm3532 = vcmp.le.f32.partialorder %v3531, 0.7853982
      %vm3533 = vcmp.lt.s32.totalorder %v639, 0
      %v3534 = vand.u32 %v639, 2139095040
      %v3535 = vshrl.u32 %v3534, 23
      %v3536 = vsub.s32 %v3535, 127
      %v3537 = vand.u32 2147483647, %v639
      %v3538 = vand.u32 %v3537, 8388607
      %v3539 = vor.u32 %v3538, 8388608
      %v3540 = vsub.s32 0, %v3539
      %v3541 = vadd.s32 %v3536, 1
      %vm3542 = vcmp.gt.s32.totalorder %v3541, 0
      %v3543 = vsel %vm3542, %v3541, 0
      %v3544 = vshrl.u32 %v3543, 5
      %v3545 = vand.u32 %v3543, 31
      %v3546 = vsub.s32 32, %v3545
      %v3547 = vshrl.u32 683565275, %v3546
      %v3548 = vshll.u32 683565275, %v3545
      %v3549 = vshrl.u32 2475754826, %v3546
      %v3550 = vor.u32 %v3548, %v3549
      %v3551 = vshll.u32 2475754826, %v3545
      %v3552 = vshrl.u32 2131351028, %v3546
      %v3553 = vor.u32 %v3551, %v3552
      %v3554 = vshll.u32 2131351028, %v3545
      %v3555 = vshrl.u32 2102212464, %v3546
      %v3556 = vor.u32 %v3554, %v3555
      %v3557 = vshll.u32 2102212464, %v3545
      %v3558 = vshrl.u32 920167782, %v3546
      %v3559 = vor.u32 %v3557, %v3558
      %v3560 = vshll.u32 920167782, %v3545
      %v3561 = vshrl.u32 1326507024, %v3546
      %v3562 = vor.u32 %v3560, %v3561
      %vm3563 = vcmp.lt.s32.totalorder %v3544, 1
      %vm3564 = vcmp.lt.s32.totalorder %v3544, 2
      %vm3565 = vcmp.lt.s32.totalorder %v3544, 3
      %vm3566 = vcmp.lt.s32.totalorder %v3544, 4
      %v3567 = vsel %vm3563, %v3547, %v3550
      %v3568 = vsel %vm3566, %v3556, 2102212464
      %v3569 = vsel %vm3565, %v3553, %v3568
      %v3570 = vsel %vm3564, %v3567, %v3569
      %v3571 = vsel %vm3563, %v3550, %v3553
      %v3572 = vsel %vm3566, %v3559, 920167782
      %v3573 = vsel %vm3565, %v3556, %v3572
      %v3574 = vsel %vm3564, %v3571, %v3573
      %v3575 = vsel %vm3563, %v3553, %v3556
      %v3576 = vsel %vm3566, %v3562, 1326507024
      %v3577 = vsel %vm3565, %v3559, %v3576
      %v3578 = vsel %vm3564, %v3575, %v3577
      %v3579 = vshll.u32 %v3539, 8
      %v3580 = vmul.u32.u64.compose %v3579, %v3578
      %v3581 = vextract.low.u32 %v3580
      %v3582 = vextract.high.u32 %v3580
      %v3583 = vmul.u32.u64.compose %v3579, %v3574
      %v3584 = vextract.low.u32 %v3583
      %v3585 = vextract.high.u32 %v3583
      %v3586 = vmul.u32 %v3579, %v3570
      %v3587 = vadd.s32 %v3582, %v3584
      %vm3588 = vc.u32 %v3582, %v3584
      %v3589 = vadd.s32 %v3585, 1
      %v3590 = vsel %vm3588, %v3589, %v3585
      %v3591 = vadd.s32 %v3586, %v3590
      %v3592 = vadd.s32 %v3591, 536870912
      %v3593 = vshrl.u32 %v3592, 30
      %v3594 = vshll.u32 %v3593, 30
      %v3595 = vsub.s32 %v3591, %v3594
      %vm3596 = vcmp.lt.s32.totalorder %v3595, 0
      %v3597 = vsub.s32 0, %v3595
      %v3598 = vsel %vm3596, %v3597, %v3595
      %v3599 = vclz %v3598
      %v3600 = vsub.s32 %v3599, 2
      %vm3601 = vcmp.gt.s32.totalorder 0, %v3600
      %v3602 = vsel %vm3601, 0, %v3600
      %v3603 = vsub.s32 32, %v3602
      %v3604 = vshll.u32 %v3595, %v3602
      %v3605 = vshrl.u32 %v3587, %v3603
      %v3606 = vor.u32 %v3604, %v3605
      %v3607 = vsub.s32 4294967266, %v3602
      %v3608 = vadd.s32 %v3607, 127
      %v3609 = vshll.u32 %v3608, 23
      %v3610 = vor.u32 4788187, %v3609
      %v3611 = vand.u32 2147483647, %v3610
      %v3613 = vcvt.s32.f32 %v3606
      %v3614 = vmul.f32 %v3613, %v3611
      %v3615 = vxor.u32 %v3614, 2147483648
      %v3616 = vsel %vm3533, %v3615, %v3614
      %v3617 = vsub.s32 4, %v3593
      %v3618 = vsel %vm3533, %v3617, %v3593
      %v3619 = vsel %vm3532, %v639, %v3616
      %v3620 = vsel %vm3532, 0, %v3618
      %v3621 = vcosq.f32.pop %v3619
      %v3622 = vsinq.f32.pop %v3619
      %vm3623 = vweird.f32 %v639
      %v3624 = vadd.s32 %v3620, 3
      %v3625 = vand.u32 %v3624, 3
      %vm3626 = vcmp.lt.s32.totalorder %v3625, 2
      %vm3627 = vcmp.eq.s32.totalorder %v3625, 0
      %v3628 = vxor.u32 %v3622, 2147483648
      %v3629 = vsel %vm3627, %v3621, %v3628
      %vm3630 = vcmp.eq.s32.totalorder %v3625, 2
      %v3631 = vxor.u32 %v3621, 2147483648
      %v3632 = vsel %vm3630, %v3631, %v3622
      %v3633 = vsel %vm3626, %v3629, %v3632
      %v3634 = vsel %vm3623, nan, %v3633
      %v3635 = vand.u32 2147483647, %v644
      %vm3636 = vcmp.le.f32.partialorder %v3635, 0.7853982
      %vm3637 = vcmp.lt.s32.totalorder %v644, 0
      %v3638 = vand.u32 %v644, 2139095040
      %v3639 = vshrl.u32 %v3638, 23
      %v3640 = vsub.s32 %v3639, 127
      %v3641 = vand.u32 2147483647, %v644
      %v3642 = vand.u32 %v3641, 8388607
      %v3643 = vor.u32 %v3642, 8388608
      %v3644 = vsub.s32 0, %v3643
      %v3645 = vadd.s32 %v3640, 1
      %vm3646 = vcmp.gt.s32.totalorder %v3645, 0
      %v3647 = vsel %vm3646, %v3645, 0
      %v3648 = vshrl.u32 %v3647, 5
      %v3649 = vand.u32 %v3647, 31
      %v3650 = vsub.s32 32, %v3649
      %v3651 = vshrl.u32 683565275, %v3650
      %v3652 = vshll.u32 683565275, %v3649
      %v3653 = vshrl.u32 2475754826, %v3650
      %v3654 = vor.u32 %v3652, %v3653
      %v3655 = vshll.u32 2475754826, %v3649
      %v3656 = vshrl.u32 2131351028, %v3650
      %v3657 = vor.u32 %v3655, %v3656
      %v3658 = vshll.u32 2131351028, %v3649
      %v3659 = vshrl.u32 2102212464, %v3650
      %v3660 = vor.u32 %v3658, %v3659
      %v3661 = vshll.u32 2102212464, %v3649
      %v3662 = vshrl.u32 920167782, %v3650
      %v3663 = vor.u32 %v3661, %v3662
      %v3664 = vshll.u32 920167782, %v3649
      %v3665 = vshrl.u32 1326507024, %v3650
      %v3666 = vor.u32 %v3664, %v3665
      %vm3667 = vcmp.lt.s32.totalorder %v3648, 1
      %vm3668 = vcmp.lt.s32.totalorder %v3648, 2
      %vm3669 = vcmp.lt.s32.totalorder %v3648, 3
      %vm3670 = vcmp.lt.s32.totalorder %v3648, 4
      %v3671 = vsel %vm3667, %v3651, %v3654
      %v3672 = vsel %vm3670, %v3660, 2102212464
      %v3673 = vsel %vm3669, %v3657, %v3672
      %v3674 = vsel %vm3668, %v3671, %v3673
      %v3675 = vsel %vm3667, %v3654, %v3657
      %v3676 = vsel %vm3670, %v3663, 920167782
      %v3677 = vsel %vm3669, %v3660, %v3676
      %v3678 = vsel %vm3668, %v3675, %v3677
      %v3679 = vsel %vm3667, %v3657, %v3660
      %v3680 = vsel %vm3670, %v3666, 1326507024
      %v3681 = vsel %vm3669, %v3663, %v3680
      %v3682 = vsel %vm3668, %v3679, %v3681
      %v3683 = vshll.u32 %v3643, 8
      %v3684 = vmul.u32.u64.compose %v3683, %v3682
      %v3685 = vextract.low.u32 %v3684
      %v3686 = vextract.high.u32 %v3684
      %v3687 = vmul.u32.u64.compose %v3683, %v3678
      %v3688 = vextract.low.u32 %v3687
      %v3689 = vextract.high.u32 %v3687
      %v3690 = vmul.u32 %v3683, %v3674
      %v3691 = vadd.s32 %v3686, %v3688
      %vm3692 = vc.u32 %v3686, %v3688
      %v3693 = vadd.s32 %v3689, 1
      %v3694 = vsel %vm3692, %v3693, %v3689
      %v3695 = vadd.s32 %v3690, %v3694
      %v3696 = vadd.s32 %v3695, 536870912
      %v3697 = vshrl.u32 %v3696, 30
      %v3698 = vshll.u32 %v3697, 30
      %v3699 = vsub.s32 %v3695, %v3698
      %vm3700 = vcmp.lt.s32.totalorder %v3699, 0
      %v3701 = vsub.s32 0, %v3699
      %v3702 = vsel %vm3700, %v3701, %v3699
      %v3703 = vclz %v3702
      %v3704 = vsub.s32 %v3703, 2
      %vm3705 = vcmp.gt.s32.totalorder 0, %v3704
      %v3706 = vsel %vm3705, 0, %v3704
      %v3707 = vsub.s32 32, %v3706
      %v3708 = vshll.u32 %v3699, %v3706
      %v3709 = vshrl.u32 %v3691, %v3707
      %v3710 = vor.u32 %v3708, %v3709
      %v3711 = vsub.s32 4294967266, %v3706
      %v3712 = vadd.s32 %v3711, 127
      %v3713 = vshll.u32 %v3712, 23
      %v3714 = vor.u32 4788187, %v3713
      %v3715 = vand.u32 2147483647, %v3714
      %v3717 = vcvt.s32.f32 %v3710
      %v3718 = vmul.f32 %v3717, %v3715
      %v3719 = vxor.u32 %v3718, 2147483648
      %v3720 = vsel %vm3637, %v3719, %v3718
      %v3721 = vsub.s32 4, %v3697
      %v3722 = vsel %vm3637, %v3721, %v3697
      %v3723 = vsel %vm3636, %v644, %v3720
      %v3724 = vsel %vm3636, 0, %v3722
      %v3725 = vcosq.f32.pop %v3723
      %v3726 = vsinq.f32.pop %v3723
      %vm3727 = vweird.f32 %v644
      %v3728 = vadd.s32 %v3724, 3
      %v3729 = vand.u32 %v3728, 3
      %vm3730 = vcmp.lt.s32.totalorder %v3729, 2
      %vm3731 = vcmp.eq.s32.totalorder %v3729, 0
      %v3732 = vxor.u32 %v3726, 2147483648
      %v3733 = vsel %vm3731, %v3725, %v3732
      %vm3734 = vcmp.eq.s32.totalorder %v3729, 2
      %v3735 = vxor.u32 %v3725, 2147483648
      %v3736 = vsel %vm3734, %v3735, %v3726
      %v3737 = vsel %vm3730, %v3733, %v3736
      %v3738 = vsel %vm3727, nan, %v3737
      %v3739 = vand.u32 2147483647, %v649
      %vm3740 = vcmp.le.f32.partialorder %v3739, 0.7853982
      %vm3741 = vcmp.lt.s32.totalorder %v649, 0
      %v3742 = vand.u32 %v649, 2139095040
      %v3743 = vshrl.u32 %v3742, 23
      %v3744 = vsub.s32 %v3743, 127
      %v3745 = vand.u32 2147483647, %v649
      %v3746 = vand.u32 %v3745, 8388607
      %v3747 = vor.u32 %v3746, 8388608
      %v3748 = vsub.s32 0, %v3747
      %v3749 = vadd.s32 %v3744, 1
      %vm3750 = vcmp.gt.s32.totalorder %v3749, 0
      %v3751 = vsel %vm3750, %v3749, 0
      %v3752 = vshrl.u32 %v3751, 5
      %v3753 = vand.u32 %v3751, 31
      %v3754 = vsub.s32 32, %v3753
      %v3755 = vshrl.u32 683565275, %v3754
      %v3756 = vshll.u32 683565275, %v3753
      %v3757 = vshrl.u32 2475754826, %v3754
      %v3758 = vor.u32 %v3756, %v3757
      %v3759 = vshll.u32 2475754826, %v3753
      %v3760 = vshrl.u32 2131351028, %v3754
      %v3761 = vor.u32 %v3759, %v3760
      %v3762 = vshll.u32 2131351028, %v3753
      %v3763 = vshrl.u32 2102212464, %v3754
      %v3764 = vor.u32 %v3762, %v3763
      %v3765 = vshll.u32 2102212464, %v3753
      %v3766 = vshrl.u32 920167782, %v3754
      %v3767 = vor.u32 %v3765, %v3766
      %v3768 = vshll.u32 920167782, %v3753
      %v3769 = vshrl.u32 1326507024, %v3754
      %v3770 = vor.u32 %v3768, %v3769
      %vm3771 = vcmp.lt.s32.totalorder %v3752, 1
      %vm3772 = vcmp.lt.s32.totalorder %v3752, 2
      %vm3773 = vcmp.lt.s32.totalorder %v3752, 3
      %vm3774 = vcmp.lt.s32.totalorder %v3752, 4
      %v3775 = vsel %vm3771, %v3755, %v3758
      %v3776 = vsel %vm3774, %v3764, 2102212464
      %v3777 = vsel %vm3773, %v3761, %v3776
      %v3778 = vsel %vm3772, %v3775, %v3777
      %v3779 = vsel %vm3771, %v3758, %v3761
      %v3780 = vsel %vm3774, %v3767, 920167782
      %v3781 = vsel %vm3773, %v3764, %v3780
      %v3782 = vsel %vm3772, %v3779, %v3781
      %v3783 = vsel %vm3771, %v3761, %v3764
      %v3784 = vsel %vm3774, %v3770, 1326507024
      %v3785 = vsel %vm3773, %v3767, %v3784
      %v3786 = vsel %vm3772, %v3783, %v3785
      %v3787 = vshll.u32 %v3747, 8
      %v3788 = vmul.u32.u64.compose %v3787, %v3786
      %v3789 = vextract.low.u32 %v3788
      %v3790 = vextract.high.u32 %v3788
      %v3791 = vmul.u32.u64.compose %v3787, %v3782
      %v3792 = vextract.low.u32 %v3791
      %v3793 = vextract.high.u32 %v3791
      %v3794 = vmul.u32 %v3787, %v3778
      %v3795 = vadd.s32 %v3790, %v3792
      %vm3796 = vc.u32 %v3790, %v3792
      %v3797 = vadd.s32 %v3793, 1
      %v3798 = vsel %vm3796, %v3797, %v3793
      %v3799 = vadd.s32 %v3794, %v3798
      %v3800 = vadd.s32 %v3799, 536870912
      %v3801 = vshrl.u32 %v3800, 30
      %v3802 = vshll.u32 %v3801, 30
      %v3803 = vsub.s32 %v3799, %v3802
      %vm3804 = vcmp.lt.s32.totalorder %v3803, 0
      %v3805 = vsub.s32 0, %v3803
      %v3806 = vsel %vm3804, %v3805, %v3803
      %v3807 = vclz %v3806
      %v3808 = vsub.s32 %v3807, 2
      %vm3809 = vcmp.gt.s32.totalorder 0, %v3808
      %v3810 = vsel %vm3809, 0, %v3808
      %v3811 = vsub.s32 32, %v3810
      %v3812 = vshll.u32 %v3803, %v3810
      %v3813 = vshrl.u32 %v3795, %v3811
      %v3814 = vor.u32 %v3812, %v3813
      %v3815 = vsub.s32 4294967266, %v3810
      %v3816 = vadd.s32 %v3815, 127
      %v3817 = vshll.u32 %v3816, 23
      %v3818 = vor.u32 4788187, %v3817
      %v3819 = vand.u32 2147483647, %v3818
      %v3821 = vcvt.s32.f32 %v3814
      %v3822 = vmul.f32 %v3821, %v3819
      %v3823 = vxor.u32 %v3822, 2147483648
      %v3824 = vsel %vm3741, %v3823, %v3822
      %v3825 = vsub.s32 4, %v3801
      %v3826 = vsel %vm3741, %v3825, %v3801
      %v3827 = vsel %vm3740, %v649, %v3824
      %v3828 = vsel %vm3740, 0, %v3826
      %v3829 = vcosq.f32.pop %v3827
      %v3830 = vsinq.f32.pop %v3827
      %vm3831 = vweird.f32 %v649
      %v3832 = vadd.s32 %v3828, 3
      %v3833 = vand.u32 %v3832, 3
      %vm3834 = vcmp.lt.s32.totalorder %v3833, 2
      %vm3835 = vcmp.eq.s32.totalorder %v3833, 0
      %v3836 = vxor.u32 %v3830, 2147483648
      %v3837 = vsel %vm3835, %v3829, %v3836
      %vm3838 = vcmp.eq.s32.totalorder %v3833, 2
      %v3839 = vxor.u32 %v3829, 2147483648
      %v3840 = vsel %vm3838, %v3839, %v3830
      %v3841 = vsel %vm3834, %v3837, %v3840
      %v3842 = vsel %vm3831, nan, %v3841
      %v3843 = vand.u32 2147483647, %v654
      %vm3844 = vcmp.le.f32.partialorder %v3843, 0.7853982
      %vm3845 = vcmp.lt.s32.totalorder %v654, 0
      %v3846 = vand.u32 %v654, 2139095040
      %v3847 = vshrl.u32 %v3846, 23
      %v3848 = vsub.s32 %v3847, 127
      %v3849 = vand.u32 2147483647, %v654
      %v3850 = vand.u32 %v3849, 8388607
      %v3851 = vor.u32 %v3850, 8388608
      %v3852 = vsub.s32 0, %v3851
      %v3853 = vadd.s32 %v3848, 1
      %vm3854 = vcmp.gt.s32.totalorder %v3853, 0
      %v3855 = vsel %vm3854, %v3853, 0
      %v3856 = vshrl.u32 %v3855, 5
      %v3857 = vand.u32 %v3855, 31
      %v3858 = vsub.s32 32, %v3857
      %v3859 = vshrl.u32 683565275, %v3858
      %v3860 = vshll.u32 683565275, %v3857
      %v3861 = vshrl.u32 2475754826, %v3858
      %v3862 = vor.u32 %v3860, %v3861
      %v3863 = vshll.u32 2475754826, %v3857
      %v3864 = vshrl.u32 2131351028, %v3858
      %v3865 = vor.u32 %v3863, %v3864
      %v3866 = vshll.u32 2131351028, %v3857
      %v3867 = vshrl.u32 2102212464, %v3858
      %v3868 = vor.u32 %v3866, %v3867
      %v3869 = vshll.u32 2102212464, %v3857
      %v3870 = vshrl.u32 920167782, %v3858
      %v3871 = vor.u32 %v3869, %v3870
      %v3872 = vshll.u32 920167782, %v3857
      %v3873 = vshrl.u32 1326507024, %v3858
      %v3874 = vor.u32 %v3872, %v3873
      %vm3875 = vcmp.lt.s32.totalorder %v3856, 1
      %vm3876 = vcmp.lt.s32.totalorder %v3856, 2
      %vm3877 = vcmp.lt.s32.totalorder %v3856, 3
      %vm3878 = vcmp.lt.s32.totalorder %v3856, 4
      %v3879 = vsel %vm3875, %v3859, %v3862
      %v3880 = vsel %vm3878, %v3868, 2102212464
      %v3881 = vsel %vm3877, %v3865, %v3880
      %v3882 = vsel %vm3876, %v3879, %v3881
      %v3883 = vsel %vm3875, %v3862, %v3865
      %v3884 = vsel %vm3878, %v3871, 920167782
      %v3885 = vsel %vm3877, %v3868, %v3884
      %v3886 = vsel %vm3876, %v3883, %v3885
      %v3887 = vsel %vm3875, %v3865, %v3868
      %v3888 = vsel %vm3878, %v3874, 1326507024
      %v3889 = vsel %vm3877, %v3871, %v3888
      %v3890 = vsel %vm3876, %v3887, %v3889
      %v3891 = vshll.u32 %v3851, 8
      %v3892 = vmul.u32.u64.compose %v3891, %v3890
      %v3893 = vextract.low.u32 %v3892
      %v3894 = vextract.high.u32 %v3892
      %v3895 = vmul.u32.u64.compose %v3891, %v3886
      %v3896 = vextract.low.u32 %v3895
      %v3897 = vextract.high.u32 %v3895
      %v3898 = vmul.u32 %v3891, %v3882
      %v3899 = vadd.s32 %v3894, %v3896
      %vm3900 = vc.u32 %v3894, %v3896
      %v3901 = vadd.s32 %v3897, 1
      %v3902 = vsel %vm3900, %v3901, %v3897
      %v3903 = vadd.s32 %v3898, %v3902
      %v3904 = vadd.s32 %v3903, 536870912
      %v3905 = vshrl.u32 %v3904, 30
      %v3906 = vshll.u32 %v3905, 30
      %v3907 = vsub.s32 %v3903, %v3906
      %vm3908 = vcmp.lt.s32.totalorder %v3907, 0
      %v3909 = vsub.s32 0, %v3907
      %v3910 = vsel %vm3908, %v3909, %v3907
      %v3911 = vclz %v3910
      %v3912 = vsub.s32 %v3911, 2
      %vm3913 = vcmp.gt.s32.totalorder 0, %v3912
      %v3914 = vsel %vm3913, 0, %v3912
      %v3915 = vsub.s32 32, %v3914
      %v3916 = vshll.u32 %v3907, %v3914
      %v3917 = vshrl.u32 %v3899, %v3915
      %v3918 = vor.u32 %v3916, %v3917
      %v3919 = vsub.s32 4294967266, %v3914
      %v3920 = vadd.s32 %v3919, 127
      %v3921 = vshll.u32 %v3920, 23
      %v3922 = vor.u32 4788187, %v3921
      %v3923 = vand.u32 2147483647, %v3922
      %v3925 = vcvt.s32.f32 %v3918
      %v3926 = vmul.f32 %v3925, %v3923
      %v3927 = vxor.u32 %v3926, 2147483648
      %v3928 = vsel %vm3845, %v3927, %v3926
      %v3929 = vsub.s32 4, %v3905
      %v3930 = vsel %vm3845, %v3929, %v3905
      %v3931 = vsel %vm3844, %v654, %v3928
      %v3932 = vsel %vm3844, 0, %v3930
      %v3933 = vcosq.f32.pop %v3931
      %v3934 = vsinq.f32.pop %v3931
      %vm3935 = vweird.f32 %v654
      %v3936 = vadd.s32 %v3932, 3
      %v3937 = vand.u32 %v3936, 3
      %vm3938 = vcmp.lt.s32.totalorder %v3937, 2
      %vm3939 = vcmp.eq.s32.totalorder %v3937, 0
      %v3940 = vxor.u32 %v3934, 2147483648
      %v3941 = vsel %vm3939, %v3933, %v3940
      %vm3942 = vcmp.eq.s32.totalorder %v3937, 2
      %v3943 = vxor.u32 %v3933, 2147483648
      %v3944 = vsel %vm3942, %v3943, %v3934
      %v3945 = vsel %vm3938, %v3941, %v3944
      %v3946 = vsel %vm3935, nan, %v3945
      %v3947 = vand.u32 2147483647, %v659
      %vm3948 = vcmp.le.f32.partialorder %v3947, 0.7853982
      %vm3949 = vcmp.lt.s32.totalorder %v659, 0
      %v3950 = vand.u32 %v659, 2139095040
      %v3951 = vshrl.u32 %v3950, 23
      %v3952 = vsub.s32 %v3951, 127
      %v3953 = vand.u32 2147483647, %v659
      %v3954 = vand.u32 %v3953, 8388607
      %v3955 = vor.u32 %v3954, 8388608
      %v3956 = vsub.s32 0, %v3955
      %v3957 = vadd.s32 %v3952, 1
      %vm3958 = vcmp.gt.s32.totalorder %v3957, 0
      %v3959 = vsel %vm3958, %v3957, 0
      %v3960 = vshrl.u32 %v3959, 5
      %v3961 = vand.u32 %v3959, 31
      %v3962 = vsub.s32 32, %v3961
      %v3963 = vshrl.u32 683565275, %v3962
      %v3964 = vshll.u32 683565275, %v3961
      %v3965 = vshrl.u32 2475754826, %v3962
      %v3966 = vor.u32 %v3964, %v3965
      %v3967 = vshll.u32 2475754826, %v3961
      %v3968 = vshrl.u32 2131351028, %v3962
      %v3969 = vor.u32 %v3967, %v3968
      %v3970 = vshll.u32 2131351028, %v3961
      %v3971 = vshrl.u32 2102212464, %v3962
      %v3972 = vor.u32 %v3970, %v3971
      %v3973 = vshll.u32 2102212464, %v3961
      %v3974 = vshrl.u32 920167782, %v3962
      %v3975 = vor.u32 %v3973, %v3974
      %v3976 = vshll.u32 920167782, %v3961
      %v3977 = vshrl.u32 1326507024, %v3962
      %v3978 = vor.u32 %v3976, %v3977
      %vm3979 = vcmp.lt.s32.totalorder %v3960, 1
      %vm3980 = vcmp.lt.s32.totalorder %v3960, 2
      %vm3981 = vcmp.lt.s32.totalorder %v3960, 3
      %vm3982 = vcmp.lt.s32.totalorder %v3960, 4
      %v3983 = vsel %vm3979, %v3963, %v3966
      %v3984 = vsel %vm3982, %v3972, 2102212464
      %v3985 = vsel %vm3981, %v3969, %v3984
      %v3986 = vsel %vm3980, %v3983, %v3985
      %v3987 = vsel %vm3979, %v3966, %v3969
      %v3988 = vsel %vm3982, %v3975, 920167782
      %v3989 = vsel %vm3981, %v3972, %v3988
      %v3990 = vsel %vm3980, %v3987, %v3989
      %v3991 = vsel %vm3979, %v3969, %v3972
      %v3992 = vsel %vm3982, %v3978, 1326507024
      %v3993 = vsel %vm3981, %v3975, %v3992
      %v3994 = vsel %vm3980, %v3991, %v3993
      %v3995 = vshll.u32 %v3955, 8
      %v3996 = vmul.u32.u64.compose %v3995, %v3994
      %v3997 = vextract.low.u32 %v3996
      %v3998 = vextract.high.u32 %v3996
      %v3999 = vmul.u32.u64.compose %v3995, %v3990
      %v4000 = vextract.low.u32 %v3999
      %v4001 = vextract.high.u32 %v3999
      %v4002 = vmul.u32 %v3995, %v3986
      %v4003 = vadd.s32 %v3998, %v4000
      %vm4004 = vc.u32 %v3998, %v4000
      %v4005 = vadd.s32 %v4001, 1
      %v4006 = vsel %vm4004, %v4005, %v4001
      %v4007 = vadd.s32 %v4002, %v4006
      %v4008 = vadd.s32 %v4007, 536870912
      %v4009 = vshrl.u32 %v4008, 30
      %v4010 = vshll.u32 %v4009, 30
      %v4011 = vsub.s32 %v4007, %v4010
      %vm4012 = vcmp.lt.s32.totalorder %v4011, 0
      %v4013 = vsub.s32 0, %v4011
      %v4014 = vsel %vm4012, %v4013, %v4011
      %v4015 = vclz %v4014
      %v4016 = vsub.s32 %v4015, 2
      %vm4017 = vcmp.gt.s32.totalorder 0, %v4016
      %v4018 = vsel %vm4017, 0, %v4016
      %v4019 = vsub.s32 32, %v4018
      %v4020 = vshll.u32 %v4011, %v4018
      %v4021 = vshrl.u32 %v4003, %v4019
      %v4022 = vor.u32 %v4020, %v4021
      %v4023 = vsub.s32 4294967266, %v4018
      %v4024 = vadd.s32 %v4023, 127
      %v4025 = vshll.u32 %v4024, 23
      %v4026 = vor.u32 4788187, %v4025
      %v4027 = vand.u32 2147483647, %v4026
      %v4029 = vcvt.s32.f32 %v4022
      %v4030 = vmul.f32 %v4029, %v4027
      %v4031 = vxor.u32 %v4030, 2147483648
      %v4032 = vsel %vm3949, %v4031, %v4030
      %v4033 = vsub.s32 4, %v4009
      %v4034 = vsel %vm3949, %v4033, %v4009
      %v4035 = vsel %vm3948, %v659, %v4032
      %v4036 = vsel %vm3948, 0, %v4034
      %v4037 = vcosq.f32.pop %v4035
      %v4038 = vsinq.f32.pop %v4035
      %vm4039 = vweird.f32 %v659
      %v4040 = vadd.s32 %v4036, 3
      %v4041 = vand.u32 %v4040, 3
      %vm4042 = vcmp.lt.s32.totalorder %v4041, 2
      %vm4043 = vcmp.eq.s32.totalorder %v4041, 0
      %v4044 = vxor.u32 %v4038, 2147483648
      %v4045 = vsel %vm4043, %v4037, %v4044
      %vm4046 = vcmp.eq.s32.totalorder %v4041, 2
      %v4047 = vxor.u32 %v4037, 2147483648
      %v4048 = vsel %vm4046, %v4047, %v4038
      %v4049 = vsel %vm4042, %v4045, %v4048
      %v4050 = vsel %vm4039, nan, %v4049
      %v4051 = vand.u32 2147483647, %v664
      %vm4052 = vcmp.le.f32.partialorder %v4051, 0.7853982
      %vm4053 = vcmp.lt.s32.totalorder %v664, 0
      %v4054 = vand.u32 %v664, 2139095040
      %v4055 = vshrl.u32 %v4054, 23
      %v4056 = vsub.s32 %v4055, 127
      %v4057 = vand.u32 2147483647, %v664
      %v4058 = vand.u32 %v4057, 8388607
      %v4059 = vor.u32 %v4058, 8388608
      %v4060 = vsub.s32 0, %v4059
      %v4061 = vadd.s32 %v4056, 1
      %vm4062 = vcmp.gt.s32.totalorder %v4061, 0
      %v4063 = vsel %vm4062, %v4061, 0
      %v4064 = vshrl.u32 %v4063, 5
      %v4065 = vand.u32 %v4063, 31
      %v4066 = vsub.s32 32, %v4065
      %v4067 = vshrl.u32 683565275, %v4066
      %v4068 = vshll.u32 683565275, %v4065
      %v4069 = vshrl.u32 2475754826, %v4066
      %v4070 = vor.u32 %v4068, %v4069
      %v4071 = vshll.u32 2475754826, %v4065
      %v4072 = vshrl.u32 2131351028, %v4066
      %v4073 = vor.u32 %v4071, %v4072
      %v4074 = vshll.u32 2131351028, %v4065
      %v4075 = vshrl.u32 2102212464, %v4066
      %v4076 = vor.u32 %v4074, %v4075
      %v4077 = vshll.u32 2102212464, %v4065
      %v4078 = vshrl.u32 920167782, %v4066
      %v4079 = vor.u32 %v4077, %v4078
      %v4080 = vshll.u32 920167782, %v4065
      %v4081 = vshrl.u32 1326507024, %v4066
      %v4082 = vor.u32 %v4080, %v4081
      %vm4083 = vcmp.lt.s32.totalorder %v4064, 1
      %vm4084 = vcmp.lt.s32.totalorder %v4064, 2
      %vm4085 = vcmp.lt.s32.totalorder %v4064, 3
      %vm4086 = vcmp.lt.s32.totalorder %v4064, 4
      %v4087 = vsel %vm4083, %v4067, %v4070
      %v4088 = vsel %vm4086, %v4076, 2102212464
      %v4089 = vsel %vm4085, %v4073, %v4088
      %v4090 = vsel %vm4084, %v4087, %v4089
      %v4091 = vsel %vm4083, %v4070, %v4073
      %v4092 = vsel %vm4086, %v4079, 920167782
      %v4093 = vsel %vm4085, %v4076, %v4092
      %v4094 = vsel %vm4084, %v4091, %v4093
      %v4095 = vsel %vm4083, %v4073, %v4076
      %v4096 = vsel %vm4086, %v4082, 1326507024
      %v4097 = vsel %vm4085, %v4079, %v4096
      %v4098 = vsel %vm4084, %v4095, %v4097
      %v4099 = vshll.u32 %v4059, 8
      %v4100 = vmul.u32.u64.compose %v4099, %v4098
      %v4101 = vextract.low.u32 %v4100
      %v4102 = vextract.high.u32 %v4100
      %v4103 = vmul.u32.u64.compose %v4099, %v4094
      %v4104 = vextract.low.u32 %v4103
      %v4105 = vextract.high.u32 %v4103
      %v4106 = vmul.u32 %v4099, %v4090
      %v4107 = vadd.s32 %v4102, %v4104
      %vm4108 = vc.u32 %v4102, %v4104
      %v4109 = vadd.s32 %v4105, 1
      %v4110 = vsel %vm4108, %v4109, %v4105
      %v4111 = vadd.s32 %v4106, %v4110
      %v4112 = vadd.s32 %v4111, 536870912
      %v4113 = vshrl.u32 %v4112, 30
      %v4114 = vshll.u32 %v4113, 30
      %v4115 = vsub.s32 %v4111, %v4114
      %vm4116 = vcmp.lt.s32.totalorder %v4115, 0
      %v4117 = vsub.s32 0, %v4115
      %v4118 = vsel %vm4116, %v4117, %v4115
      %v4119 = vclz %v4118
      %v4120 = vsub.s32 %v4119, 2
      %vm4121 = vcmp.gt.s32.totalorder 0, %v4120
      %v4122 = vsel %vm4121, 0, %v4120
      %v4123 = vsub.s32 32, %v4122
      %v4124 = vshll.u32 %v4115, %v4122
      %v4125 = vshrl.u32 %v4107, %v4123
      %v4126 = vor.u32 %v4124, %v4125
      %v4127 = vsub.s32 4294967266, %v4122
      %v4128 = vadd.s32 %v4127, 127
      %v4129 = vshll.u32 %v4128, 23
      %v4130 = vor.u32 4788187, %v4129
      %v4131 = vand.u32 2147483647, %v4130
      %v4133 = vcvt.s32.f32 %v4126
      %v4134 = vmul.f32 %v4133, %v4131
      %v4135 = vxor.u32 %v4134, 2147483648
      %v4136 = vsel %vm4053, %v4135, %v4134
      %v4137 = vsub.s32 4, %v4113
      %v4138 = vsel %vm4053, %v4137, %v4113
      %v4139 = vsel %vm4052, %v664, %v4136
      %v4140 = vsel %vm4052, 0, %v4138
      %v4141 = vcosq.f32.pop %v4139
      %v4142 = vsinq.f32.pop %v4139
      %vm4143 = vweird.f32 %v664
      %v4144 = vadd.s32 %v4140, 3
      %v4145 = vand.u32 %v4144, 3
      %vm4146 = vcmp.lt.s32.totalorder %v4145, 2
      %vm4147 = vcmp.eq.s32.totalorder %v4145, 0
      %v4148 = vxor.u32 %v4142, 2147483648
      %v4149 = vsel %vm4147, %v4141, %v4148
      %vm4150 = vcmp.eq.s32.totalorder %v4145, 2
      %v4151 = vxor.u32 %v4141, 2147483648
      %v4152 = vsel %vm4150, %v4151, %v4142
      %v4153 = vsel %vm4146, %v4149, %v4152
      %v4154 = vsel %vm4143, nan, %v4153
      %v4155 = vand.u32 2147483647, %v669
      %vm4156 = vcmp.le.f32.partialorder %v4155, 0.7853982
      %vm4157 = vcmp.lt.s32.totalorder %v669, 0
      %v4158 = vand.u32 %v669, 2139095040
      %v4159 = vshrl.u32 %v4158, 23
      %v4160 = vsub.s32 %v4159, 127
      %v4161 = vand.u32 2147483647, %v669
      %v4162 = vand.u32 %v4161, 8388607
      %v4163 = vor.u32 %v4162, 8388608
      %v4164 = vsub.s32 0, %v4163
      %v4165 = vadd.s32 %v4160, 1
      %vm4166 = vcmp.gt.s32.totalorder %v4165, 0
      %v4167 = vsel %vm4166, %v4165, 0
      %v4168 = vshrl.u32 %v4167, 5
      %v4169 = vand.u32 %v4167, 31
      %v4170 = vsub.s32 32, %v4169
      %v4171 = vshrl.u32 683565275, %v4170
      %v4172 = vshll.u32 683565275, %v4169
      %v4173 = vshrl.u32 2475754826, %v4170
      %v4174 = vor.u32 %v4172, %v4173
      %v4175 = vshll.u32 2475754826, %v4169
      %v4176 = vshrl.u32 2131351028, %v4170
      %v4177 = vor.u32 %v4175, %v4176
      %v4178 = vshll.u32 2131351028, %v4169
      %v4179 = vshrl.u32 2102212464, %v4170
      %v4180 = vor.u32 %v4178, %v4179
      %v4181 = vshll.u32 2102212464, %v4169
      %v4182 = vshrl.u32 920167782, %v4170
      %v4183 = vor.u32 %v4181, %v4182
      %v4184 = vshll.u32 920167782, %v4169
      %v4185 = vshrl.u32 1326507024, %v4170
      %v4186 = vor.u32 %v4184, %v4185
      %vm4187 = vcmp.lt.s32.totalorder %v4168, 1
      %vm4188 = vcmp.lt.s32.totalorder %v4168, 2
      %vm4189 = vcmp.lt.s32.totalorder %v4168, 3
      %vm4190 = vcmp.lt.s32.totalorder %v4168, 4
      %v4191 = vsel %vm4187, %v4171, %v4174
      %v4192 = vsel %vm4190, %v4180, 2102212464
      %v4193 = vsel %vm4189, %v4177, %v4192
      %v4194 = vsel %vm4188, %v4191, %v4193
      %v4195 = vsel %vm4187, %v4174, %v4177
      %v4196 = vsel %vm4190, %v4183, 920167782
      %v4197 = vsel %vm4189, %v4180, %v4196
      %v4198 = vsel %vm4188, %v4195, %v4197
      %v4199 = vsel %vm4187, %v4177, %v4180
      %v4200 = vsel %vm4190, %v4186, 1326507024
      %v4201 = vsel %vm4189, %v4183, %v4200
      %v4202 = vsel %vm4188, %v4199, %v4201
      %v4203 = vshll.u32 %v4163, 8
      %v4204 = vmul.u32.u64.compose %v4203, %v4202
      %v4205 = vextract.low.u32 %v4204
      %v4206 = vextract.high.u32 %v4204
      %v4207 = vmul.u32.u64.compose %v4203, %v4198
      %v4208 = vextract.low.u32 %v4207
      %v4209 = vextract.high.u32 %v4207
      %v4210 = vmul.u32 %v4203, %v4194
      %v4211 = vadd.s32 %v4206, %v4208
      %vm4212 = vc.u32 %v4206, %v4208
      %v4213 = vadd.s32 %v4209, 1
      %v4214 = vsel %vm4212, %v4213, %v4209
      %v4215 = vadd.s32 %v4210, %v4214
      %v4216 = vadd.s32 %v4215, 536870912
      %v4217 = vshrl.u32 %v4216, 30
      %v4218 = vshll.u32 %v4217, 30
      %v4219 = vsub.s32 %v4215, %v4218
      %vm4220 = vcmp.lt.s32.totalorder %v4219, 0
      %v4221 = vsub.s32 0, %v4219
      %v4222 = vsel %vm4220, %v4221, %v4219
      %v4223 = vclz %v4222
      %v4224 = vsub.s32 %v4223, 2
      %vm4225 = vcmp.gt.s32.totalorder 0, %v4224
      %v4226 = vsel %vm4225, 0, %v4224
      %v4227 = vsub.s32 32, %v4226
      %v4228 = vshll.u32 %v4219, %v4226
      %v4229 = vshrl.u32 %v4211, %v4227
      %v4230 = vor.u32 %v4228, %v4229
      %v4231 = vsub.s32 4294967266, %v4226
      %v4232 = vadd.s32 %v4231, 127
      %v4233 = vshll.u32 %v4232, 23
      %v4234 = vor.u32 4788187, %v4233
      %v4235 = vand.u32 2147483647, %v4234
      %v4237 = vcvt.s32.f32 %v4230
      %v4238 = vmul.f32 %v4237, %v4235
      %v4239 = vxor.u32 %v4238, 2147483648
      %v4240 = vsel %vm4157, %v4239, %v4238
      %v4241 = vsub.s32 4, %v4217
      %v4242 = vsel %vm4157, %v4241, %v4217
      %v4243 = vsel %vm4156, %v669, %v4240
      %v4244 = vsel %vm4156, 0, %v4242
      %v4245 = vcosq.f32.pop %v4243
      %v4246 = vsinq.f32.pop %v4243
      %vm4247 = vweird.f32 %v669
      %v4248 = vadd.s32 %v4244, 3
      %v4249 = vand.u32 %v4248, 3
      %vm4250 = vcmp.lt.s32.totalorder %v4249, 2
      %vm4251 = vcmp.eq.s32.totalorder %v4249, 0
      %v4252 = vxor.u32 %v4246, 2147483648
      %v4253 = vsel %vm4251, %v4245, %v4252
      %vm4254 = vcmp.eq.s32.totalorder %v4249, 2
      %v4255 = vxor.u32 %v4245, 2147483648
      %v4256 = vsel %vm4254, %v4255, %v4246
      %v4257 = vsel %vm4250, %v4253, %v4256
      %v4258 = vsel %vm4247, nan, %v4257
      %v4259 = vand.u32 2147483647, %v674
      %vm4260 = vcmp.le.f32.partialorder %v4259, 0.7853982
      %vm4261 = vcmp.lt.s32.totalorder %v674, 0
      %v4262 = vand.u32 %v674, 2139095040
      %v4263 = vshrl.u32 %v4262, 23
      %v4264 = vsub.s32 %v4263, 127
      %v4265 = vand.u32 2147483647, %v674
      %v4266 = vand.u32 %v4265, 8388607
      %v4267 = vor.u32 %v4266, 8388608
      %v4268 = vsub.s32 0, %v4267
      %v4269 = vadd.s32 %v4264, 1
      %vm4270 = vcmp.gt.s32.totalorder %v4269, 0
      %v4271 = vsel %vm4270, %v4269, 0
      %v4272 = vshrl.u32 %v4271, 5
      %v4273 = vand.u32 %v4271, 31
      %v4274 = vsub.s32 32, %v4273
      %v4275 = vshrl.u32 683565275, %v4274
      %v4276 = vshll.u32 683565275, %v4273
      %v4277 = vshrl.u32 2475754826, %v4274
      %v4278 = vor.u32 %v4276, %v4277
      %v4279 = vshll.u32 2475754826, %v4273
      %v4280 = vshrl.u32 2131351028, %v4274
      %v4281 = vor.u32 %v4279, %v4280
      %v4282 = vshll.u32 2131351028, %v4273
      %v4283 = vshrl.u32 2102212464, %v4274
      %v4284 = vor.u32 %v4282, %v4283
      %v4285 = vshll.u32 2102212464, %v4273
      %v4286 = vshrl.u32 920167782, %v4274
      %v4287 = vor.u32 %v4285, %v4286
      %v4288 = vshll.u32 920167782, %v4273
      %v4289 = vshrl.u32 1326507024, %v4274
      %v4290 = vor.u32 %v4288, %v4289
      %vm4291 = vcmp.lt.s32.totalorder %v4272, 1
      %vm4292 = vcmp.lt.s32.totalorder %v4272, 2
      %vm4293 = vcmp.lt.s32.totalorder %v4272, 3
      %vm4294 = vcmp.lt.s32.totalorder %v4272, 4
      %v4295 = vsel %vm4291, %v4275, %v4278
      %v4296 = vsel %vm4294, %v4284, 2102212464
      %v4297 = vsel %vm4293, %v4281, %v4296
      %v4298 = vsel %vm4292, %v4295, %v4297
      %v4299 = vsel %vm4291, %v4278, %v4281
      %v4300 = vsel %vm4294, %v4287, 920167782
      %v4301 = vsel %vm4293, %v4284, %v4300
      %v4302 = vsel %vm4292, %v4299, %v4301
      %v4303 = vsel %vm4291, %v4281, %v4284
      %v4304 = vsel %vm4294, %v4290, 1326507024
      %v4305 = vsel %vm4293, %v4287, %v4304
      %v4306 = vsel %vm4292, %v4303, %v4305
      %v4307 = vshll.u32 %v4267, 8
      %v4308 = vmul.u32.u64.compose %v4307, %v4306
      %v4309 = vextract.low.u32 %v4308
      %v4310 = vextract.high.u32 %v4308
      %v4311 = vmul.u32.u64.compose %v4307, %v4302
      %v4312 = vextract.low.u32 %v4311
      %v4313 = vextract.high.u32 %v4311
      %v4314 = vmul.u32 %v4307, %v4298
      %v4315 = vadd.s32 %v4310, %v4312
      %vm4316 = vc.u32 %v4310, %v4312
      %v4317 = vadd.s32 %v4313, 1
      %v4318 = vsel %vm4316, %v4317, %v4313
      %v4319 = vadd.s32 %v4314, %v4318
      %v4320 = vadd.s32 %v4319, 536870912
      %v4321 = vshrl.u32 %v4320, 30
      %v4322 = vshll.u32 %v4321, 30
      %v4323 = vsub.s32 %v4319, %v4322
      %vm4324 = vcmp.lt.s32.totalorder %v4323, 0
      %v4325 = vsub.s32 0, %v4323
      %v4326 = vsel %vm4324, %v4325, %v4323
      %v4327 = vclz %v4326
      %v4328 = vsub.s32 %v4327, 2
      %vm4329 = vcmp.gt.s32.totalorder 0, %v4328
      %v4330 = vsel %vm4329, 0, %v4328
      %v4331 = vsub.s32 32, %v4330
      %v4332 = vshll.u32 %v4323, %v4330
      %v4333 = vshrl.u32 %v4315, %v4331
      %v4334 = vor.u32 %v4332, %v4333
      %v4335 = vsub.s32 4294967266, %v4330
      %v4336 = vadd.s32 %v4335, 127
      %v4337 = vshll.u32 %v4336, 23
      %v4338 = vor.u32 4788187, %v4337
      %v4339 = vand.u32 2147483647, %v4338
      %v4341 = vcvt.s32.f32 %v4334
      %v4342 = vmul.f32 %v4341, %v4339
      %v4343 = vxor.u32 %v4342, 2147483648
      %v4344 = vsel %vm4261, %v4343, %v4342
      %v4345 = vsub.s32 4, %v4321
      %v4346 = vsel %vm4261, %v4345, %v4321
      %v4347 = vsel %vm4260, %v674, %v4344
      %v4348 = vsel %vm4260, 0, %v4346
      %v4349 = vcosq.f32.pop %v4347
      %v4350 = vsinq.f32.pop %v4347
      %vm4351 = vweird.f32 %v674
      %v4352 = vadd.s32 %v4348, 3
      %v4353 = vand.u32 %v4352, 3
      %vm4354 = vcmp.lt.s32.totalorder %v4353, 2
      %vm4355 = vcmp.eq.s32.totalorder %v4353, 0
      %v4356 = vxor.u32 %v4350, 2147483648
      %v4357 = vsel %vm4355, %v4349, %v4356
      %vm4358 = vcmp.eq.s32.totalorder %v4353, 2
      %v4359 = vxor.u32 %v4349, 2147483648
      %v4360 = vsel %vm4358, %v4359, %v4350
      %v4361 = vsel %vm4354, %v4357, %v4360
      %v4362 = vsel %vm4351, nan, %v4361
      %v4363 = vand.u32 2147483647, %v679
      %vm4364 = vcmp.le.f32.partialorder %v4363, 0.7853982
      %vm4365 = vcmp.lt.s32.totalorder %v679, 0
      %v4366 = vand.u32 %v679, 2139095040
      %v4367 = vshrl.u32 %v4366, 23
      %v4368 = vsub.s32 %v4367, 127
      %v4369 = vand.u32 2147483647, %v679
      %v4370 = vand.u32 %v4369, 8388607
      %v4371 = vor.u32 %v4370, 8388608
      %v4372 = vsub.s32 0, %v4371
      %v4373 = vadd.s32 %v4368, 1
      %vm4374 = vcmp.gt.s32.totalorder %v4373, 0
      %v4375 = vsel %vm4374, %v4373, 0
      %v4376 = vshrl.u32 %v4375, 5
      %v4377 = vand.u32 %v4375, 31
      %v4378 = vsub.s32 32, %v4377
      %v4379 = vshrl.u32 683565275, %v4378
      %v4380 = vshll.u32 683565275, %v4377
      %v4381 = vshrl.u32 2475754826, %v4378
      %v4382 = vor.u32 %v4380, %v4381
      %v4383 = vshll.u32 2475754826, %v4377
      %v4384 = vshrl.u32 2131351028, %v4378
      %v4385 = vor.u32 %v4383, %v4384
      %v4386 = vshll.u32 2131351028, %v4377
      %v4387 = vshrl.u32 2102212464, %v4378
      %v4388 = vor.u32 %v4386, %v4387
      %v4389 = vshll.u32 2102212464, %v4377
      %v4390 = vshrl.u32 920167782, %v4378
      %v4391 = vor.u32 %v4389, %v4390
      %v4392 = vshll.u32 920167782, %v4377
      %v4393 = vshrl.u32 1326507024, %v4378
      %v4394 = vor.u32 %v4392, %v4393
      %vm4395 = vcmp.lt.s32.totalorder %v4376, 1
      %vm4396 = vcmp.lt.s32.totalorder %v4376, 2
      %vm4397 = vcmp.lt.s32.totalorder %v4376, 3
      %vm4398 = vcmp.lt.s32.totalorder %v4376, 4
      %v4399 = vsel %vm4395, %v4379, %v4382
      %v4400 = vsel %vm4398, %v4388, 2102212464
      %v4401 = vsel %vm4397, %v4385, %v4400
      %v4402 = vsel %vm4396, %v4399, %v4401
      %v4403 = vsel %vm4395, %v4382, %v4385
      %v4404 = vsel %vm4398, %v4391, 920167782
      %v4405 = vsel %vm4397, %v4388, %v4404
      %v4406 = vsel %vm4396, %v4403, %v4405
      %v4407 = vsel %vm4395, %v4385, %v4388
      %v4408 = vsel %vm4398, %v4394, 1326507024
      %v4409 = vsel %vm4397, %v4391, %v4408
      %v4410 = vsel %vm4396, %v4407, %v4409
      %v4411 = vshll.u32 %v4371, 8
      %v4412 = vmul.u32.u64.compose %v4411, %v4410
      %v4413 = vextract.low.u32 %v4412
      %v4414 = vextract.high.u32 %v4412
      %v4415 = vmul.u32.u64.compose %v4411, %v4406
      %v4416 = vextract.low.u32 %v4415
      %v4417 = vextract.high.u32 %v4415
      %v4418 = vmul.u32 %v4411, %v4402
      %v4419 = vadd.s32 %v4414, %v4416
      %vm4420 = vc.u32 %v4414, %v4416
      %v4421 = vadd.s32 %v4417, 1
      %v4422 = vsel %vm4420, %v4421, %v4417
      %v4423 = vadd.s32 %v4418, %v4422
      %v4424 = vadd.s32 %v4423, 536870912
      %v4425 = vshrl.u32 %v4424, 30
      %v4426 = vshll.u32 %v4425, 30
      %v4427 = vsub.s32 %v4423, %v4426
      %vm4428 = vcmp.lt.s32.totalorder %v4427, 0
      %v4429 = vsub.s32 0, %v4427
      %v4430 = vsel %vm4428, %v4429, %v4427
      %v4431 = vclz %v4430
      %v4432 = vsub.s32 %v4431, 2
      %vm4433 = vcmp.gt.s32.totalorder 0, %v4432
      %v4434 = vsel %vm4433, 0, %v4432
      %v4435 = vsub.s32 32, %v4434
      %v4436 = vshll.u32 %v4427, %v4434
      %v4437 = vshrl.u32 %v4419, %v4435
      %v4438 = vor.u32 %v4436, %v4437
      %v4439 = vsub.s32 4294967266, %v4434
      %v4440 = vadd.s32 %v4439, 127
      %v4441 = vshll.u32 %v4440, 23
      %v4442 = vor.u32 4788187, %v4441
      %v4443 = vand.u32 2147483647, %v4442
      %v4445 = vcvt.s32.f32 %v4438
      %v4446 = vmul.f32 %v4445, %v4443
      %v4447 = vxor.u32 %v4446, 2147483648
      %v4448 = vsel %vm4365, %v4447, %v4446
      %v4449 = vsub.s32 4, %v4425
      %v4450 = vsel %vm4365, %v4449, %v4425
      %v4451 = vsel %vm4364, %v679, %v4448
      %v4452 = vsel %vm4364, 0, %v4450
      %v4453 = vcosq.f32.pop %v4451
      %v4454 = vsinq.f32.pop %v4451
      %vm4455 = vweird.f32 %v679
      %v4456 = vadd.s32 %v4452, 3
      %v4457 = vand.u32 %v4456, 3
      %vm4458 = vcmp.lt.s32.totalorder %v4457, 2
      %vm4459 = vcmp.eq.s32.totalorder %v4457, 0
      %v4460 = vxor.u32 %v4454, 2147483648
      %v4461 = vsel %vm4459, %v4453, %v4460
      %vm4462 = vcmp.eq.s32.totalorder %v4457, 2
      %v4463 = vxor.u32 %v4453, 2147483648
      %v4464 = vsel %vm4462, %v4463, %v4454
      %v4465 = vsel %vm4458, %v4461, %v4464
      %v4466 = vsel %vm4455, nan, %v4465
      %v4467 = vand.u32 2147483647, %v684
      %vm4468 = vcmp.le.f32.partialorder %v4467, 0.7853982
      %vm4469 = vcmp.lt.s32.totalorder %v684, 0
      %v4470 = vand.u32 %v684, 2139095040
      %v4471 = vshrl.u32 %v4470, 23
      %v4472 = vsub.s32 %v4471, 127
      %v4473 = vand.u32 2147483647, %v684
      %v4474 = vand.u32 %v4473, 8388607
      %v4475 = vor.u32 %v4474, 8388608
      %v4476 = vsub.s32 0, %v4475
      %v4477 = vadd.s32 %v4472, 1
      %vm4478 = vcmp.gt.s32.totalorder %v4477, 0
      %v4479 = vsel %vm4478, %v4477, 0
      %v4480 = vshrl.u32 %v4479, 5
      %v4481 = vand.u32 %v4479, 31
      %v4482 = vsub.s32 32, %v4481
      %v4483 = vshrl.u32 683565275, %v4482
      %v4484 = vshll.u32 683565275, %v4481
      %v4485 = vshrl.u32 2475754826, %v4482
      %v4486 = vor.u32 %v4484, %v4485
      %v4487 = vshll.u32 2475754826, %v4481
      %v4488 = vshrl.u32 2131351028, %v4482
      %v4489 = vor.u32 %v4487, %v4488
      %v4490 = vshll.u32 2131351028, %v4481
      %v4491 = vshrl.u32 2102212464, %v4482
      %v4492 = vor.u32 %v4490, %v4491
      %v4493 = vshll.u32 2102212464, %v4481
      %v4494 = vshrl.u32 920167782, %v4482
      %v4495 = vor.u32 %v4493, %v4494
      %v4496 = vshll.u32 920167782, %v4481
      %v4497 = vshrl.u32 1326507024, %v4482
      %v4498 = vor.u32 %v4496, %v4497
      %vm4499 = vcmp.lt.s32.totalorder %v4480, 1
      %vm4500 = vcmp.lt.s32.totalorder %v4480, 2
      %vm4501 = vcmp.lt.s32.totalorder %v4480, 3
      %vm4502 = vcmp.lt.s32.totalorder %v4480, 4
      %v4503 = vsel %vm4499, %v4483, %v4486
      %v4504 = vsel %vm4502, %v4492, 2102212464
      %v4505 = vsel %vm4501, %v4489, %v4504
      %v4506 = vsel %vm4500, %v4503, %v4505
      %v4507 = vsel %vm4499, %v4486, %v4489
      %v4508 = vsel %vm4502, %v4495, 920167782
      %v4509 = vsel %vm4501, %v4492, %v4508
      %v4510 = vsel %vm4500, %v4507, %v4509
      %v4511 = vsel %vm4499, %v4489, %v4492
      %v4512 = vsel %vm4502, %v4498, 1326507024
      %v4513 = vsel %vm4501, %v4495, %v4512
      %v4514 = vsel %vm4500, %v4511, %v4513
      %v4515 = vshll.u32 %v4475, 8
      %v4516 = vmul.u32.u64.compose %v4515, %v4514
      %v4517 = vextract.low.u32 %v4516
      %v4518 = vextract.high.u32 %v4516
      %v4519 = vmul.u32.u64.compose %v4515, %v4510
      %v4520 = vextract.low.u32 %v4519
      %v4521 = vextract.high.u32 %v4519
      %v4522 = vmul.u32 %v4515, %v4506
      %v4523 = vadd.s32 %v4518, %v4520
      %vm4524 = vc.u32 %v4518, %v4520
      %v4525 = vadd.s32 %v4521, 1
      %v4526 = vsel %vm4524, %v4525, %v4521
      %v4527 = vadd.s32 %v4522, %v4526
      %v4528 = vadd.s32 %v4527, 536870912
      %v4529 = vshrl.u32 %v4528, 30
      %v4530 = vshll.u32 %v4529, 30
      %v4531 = vsub.s32 %v4527, %v4530
      %vm4532 = vcmp.lt.s32.totalorder %v4531, 0
      %v4533 = vsub.s32 0, %v4531
      %v4534 = vsel %vm4532, %v4533, %v4531
      %v4535 = vclz %v4534
      %v4536 = vsub.s32 %v4535, 2
      %vm4537 = vcmp.gt.s32.totalorder 0, %v4536
      %v4538 = vsel %vm4537, 0, %v4536
      %v4539 = vsub.s32 32, %v4538
      %v4540 = vshll.u32 %v4531, %v4538
      %v4541 = vshrl.u32 %v4523, %v4539
      %v4542 = vor.u32 %v4540, %v4541
      %v4543 = vsub.s32 4294967266, %v4538
      %v4544 = vadd.s32 %v4543, 127
      %v4545 = vshll.u32 %v4544, 23
      %v4546 = vor.u32 4788187, %v4545
      %v4547 = vand.u32 2147483647, %v4546
      %v4549 = vcvt.s32.f32 %v4542
      %v4550 = vmul.f32 %v4549, %v4547
      %v4551 = vxor.u32 %v4550, 2147483648
      %v4552 = vsel %vm4469, %v4551, %v4550
      %v4553 = vsub.s32 4, %v4529
      %v4554 = vsel %vm4469, %v4553, %v4529
      %v4555 = vsel %vm4468, %v684, %v4552
      %v4556 = vsel %vm4468, 0, %v4554
      %v4557 = vcosq.f32.pop %v4555
      %v4558 = vsinq.f32.pop %v4555
      %vm4559 = vweird.f32 %v684
      %v4560 = vadd.s32 %v4556, 3
      %v4561 = vand.u32 %v4560, 3
      %vm4562 = vcmp.lt.s32.totalorder %v4561, 2
      %vm4563 = vcmp.eq.s32.totalorder %v4561, 0
      %v4564 = vxor.u32 %v4558, 2147483648
      %v4565 = vsel %vm4563, %v4557, %v4564
      %vm4566 = vcmp.eq.s32.totalorder %v4561, 2
      %v4567 = vxor.u32 %v4557, 2147483648
      %v4568 = vsel %vm4566, %v4567, %v4558
      %v4569 = vsel %vm4562, %v4565, %v4568
      %v4570 = vsel %vm4559, nan, %v4569
      %v4571 = vand.u32 2147483647, %v689
      %vm4572 = vcmp.le.f32.partialorder %v4571, 0.7853982
      %vm4573 = vcmp.lt.s32.totalorder %v689, 0
      %v4574 = vand.u32 %v689, 2139095040
      %v4575 = vshrl.u32 %v4574, 23
      %v4576 = vsub.s32 %v4575, 127
      %v4577 = vand.u32 2147483647, %v689
      %v4578 = vand.u32 %v4577, 8388607
      %v4579 = vor.u32 %v4578, 8388608
      %v4580 = vsub.s32 0, %v4579
      %v4581 = vadd.s32 %v4576, 1
      %vm4582 = vcmp.gt.s32.totalorder %v4581, 0
      %v4583 = vsel %vm4582, %v4581, 0
      %v4584 = vshrl.u32 %v4583, 5
      %v4585 = vand.u32 %v4583, 31
      %v4586 = vsub.s32 32, %v4585
      %v4587 = vshrl.u32 683565275, %v4586
      %v4588 = vshll.u32 683565275, %v4585
      %v4589 = vshrl.u32 2475754826, %v4586
      %v4590 = vor.u32 %v4588, %v4589
      %v4591 = vshll.u32 2475754826, %v4585
      %v4592 = vshrl.u32 2131351028, %v4586
      %v4593 = vor.u32 %v4591, %v4592
      %v4594 = vshll.u32 2131351028, %v4585
      %v4595 = vshrl.u32 2102212464, %v4586
      %v4596 = vor.u32 %v4594, %v4595
      %v4597 = vshll.u32 2102212464, %v4585
      %v4598 = vshrl.u32 920167782, %v4586
      %v4599 = vor.u32 %v4597, %v4598
      %v4600 = vshll.u32 920167782, %v4585
      %v4601 = vshrl.u32 1326507024, %v4586
      %v4602 = vor.u32 %v4600, %v4601
      %vm4603 = vcmp.lt.s32.totalorder %v4584, 1
      %vm4604 = vcmp.lt.s32.totalorder %v4584, 2
      %vm4605 = vcmp.lt.s32.totalorder %v4584, 3
      %vm4606 = vcmp.lt.s32.totalorder %v4584, 4
      %v4607 = vsel %vm4603, %v4587, %v4590
      %v4608 = vsel %vm4606, %v4596, 2102212464
      %v4609 = vsel %vm4605, %v4593, %v4608
      %v4610 = vsel %vm4604, %v4607, %v4609
      %v4611 = vsel %vm4603, %v4590, %v4593
      %v4612 = vsel %vm4606, %v4599, 920167782
      %v4613 = vsel %vm4605, %v4596, %v4612
      %v4614 = vsel %vm4604, %v4611, %v4613
      %v4615 = vsel %vm4603, %v4593, %v4596
      %v4616 = vsel %vm4606, %v4602, 1326507024
      %v4617 = vsel %vm4605, %v4599, %v4616
      %v4618 = vsel %vm4604, %v4615, %v4617
      %v4619 = vshll.u32 %v4579, 8
      %v4620 = vmul.u32.u64.compose %v4619, %v4618
      %v4621 = vextract.low.u32 %v4620
      %v4622 = vextract.high.u32 %v4620
      %v4623 = vmul.u32.u64.compose %v4619, %v4614
      %v4624 = vextract.low.u32 %v4623
      %v4625 = vextract.high.u32 %v4623
      %v4626 = vmul.u32 %v4619, %v4610
      %v4627 = vadd.s32 %v4622, %v4624
      %vm4628 = vc.u32 %v4622, %v4624
      %v4629 = vadd.s32 %v4625, 1
      %v4630 = vsel %vm4628, %v4629, %v4625
      %v4631 = vadd.s32 %v4626, %v4630
      %v4632 = vadd.s32 %v4631, 536870912
      %v4633 = vshrl.u32 %v4632, 30
      %v4634 = vshll.u32 %v4633, 30
      %v4635 = vsub.s32 %v4631, %v4634
      %vm4636 = vcmp.lt.s32.totalorder %v4635, 0
      %v4637 = vsub.s32 0, %v4635
      %v4638 = vsel %vm4636, %v4637, %v4635
      %v4639 = vclz %v4638
      %v4640 = vsub.s32 %v4639, 2
      %vm4641 = vcmp.gt.s32.totalorder 0, %v4640
      %v4642 = vsel %vm4641, 0, %v4640
      %v4643 = vsub.s32 32, %v4642
      %v4644 = vshll.u32 %v4635, %v4642
      %v4645 = vshrl.u32 %v4627, %v4643
      %v4646 = vor.u32 %v4644, %v4645
      %v4647 = vsub.s32 4294967266, %v4642
      %v4648 = vadd.s32 %v4647, 127
      %v4649 = vshll.u32 %v4648, 23
      %v4650 = vor.u32 4788187, %v4649
      %v4651 = vand.u32 2147483647, %v4650
      %v4653 = vcvt.s32.f32 %v4646
      %v4654 = vmul.f32 %v4653, %v4651
      %v4655 = vxor.u32 %v4654, 2147483648
      %v4656 = vsel %vm4573, %v4655, %v4654
      %v4657 = vsub.s32 4, %v4633
      %v4658 = vsel %vm4573, %v4657, %v4633
      %v4659 = vsel %vm4572, %v689, %v4656
      %v4660 = vsel %vm4572, 0, %v4658
      %v4661 = vcosq.f32.pop %v4659
      %v4662 = vsinq.f32.pop %v4659
      %vm4663 = vweird.f32 %v689
      %v4664 = vadd.s32 %v4660, 3
      %v4665 = vand.u32 %v4664, 3
      %vm4666 = vcmp.lt.s32.totalorder %v4665, 2
      %vm4667 = vcmp.eq.s32.totalorder %v4665, 0
      %v4668 = vxor.u32 %v4662, 2147483648
      %v4669 = vsel %vm4667, %v4661, %v4668
      %vm4670 = vcmp.eq.s32.totalorder %v4665, 2
      %v4671 = vxor.u32 %v4661, 2147483648
      %v4672 = vsel %vm4670, %v4671, %v4662
      %v4673 = vsel %vm4666, %v4669, %v4672
      %v4674 = vsel %vm4663, nan, %v4673
      %v4675 = vand.u32 2147483647, %v694
      %vm4676 = vcmp.le.f32.partialorder %v4675, 0.7853982
      %vm4677 = vcmp.lt.s32.totalorder %v694, 0
      %v4678 = vand.u32 %v694, 2139095040
      %v4679 = vshrl.u32 %v4678, 23
      %v4680 = vsub.s32 %v4679, 127
      %v4681 = vand.u32 2147483647, %v694
      %v4682 = vand.u32 %v4681, 8388607
      %v4683 = vor.u32 %v4682, 8388608
      %v4684 = vsub.s32 0, %v4683
      %v4685 = vadd.s32 %v4680, 1
      %vm4686 = vcmp.gt.s32.totalorder %v4685, 0
      %v4687 = vsel %vm4686, %v4685, 0
      %v4688 = vshrl.u32 %v4687, 5
      %v4689 = vand.u32 %v4687, 31
      %v4690 = vsub.s32 32, %v4689
      %v4691 = vshrl.u32 683565275, %v4690
      %v4692 = vshll.u32 683565275, %v4689
      %v4693 = vshrl.u32 2475754826, %v4690
      %v4694 = vor.u32 %v4692, %v4693
      %v4695 = vshll.u32 2475754826, %v4689
      %v4696 = vshrl.u32 2131351028, %v4690
      %v4697 = vor.u32 %v4695, %v4696
      %v4698 = vshll.u32 2131351028, %v4689
      %v4699 = vshrl.u32 2102212464, %v4690
      %v4700 = vor.u32 %v4698, %v4699
      %v4701 = vshll.u32 2102212464, %v4689
      %v4702 = vshrl.u32 920167782, %v4690
      %v4703 = vor.u32 %v4701, %v4702
      %v4704 = vshll.u32 920167782, %v4689
      %v4705 = vshrl.u32 1326507024, %v4690
      %v4706 = vor.u32 %v4704, %v4705
      %vm4707 = vcmp.lt.s32.totalorder %v4688, 1
      %vm4708 = vcmp.lt.s32.totalorder %v4688, 2
      %vm4709 = vcmp.lt.s32.totalorder %v4688, 3
      %vm4710 = vcmp.lt.s32.totalorder %v4688, 4
      %v4711 = vsel %vm4707, %v4691, %v4694
      %v4712 = vsel %vm4710, %v4700, 2102212464
      %v4713 = vsel %vm4709, %v4697, %v4712
      %v4714 = vsel %vm4708, %v4711, %v4713
      %v4715 = vsel %vm4707, %v4694, %v4697
      %v4716 = vsel %vm4710, %v4703, 920167782
      %v4717 = vsel %vm4709, %v4700, %v4716
      %v4718 = vsel %vm4708, %v4715, %v4717
      %v4719 = vsel %vm4707, %v4697, %v4700
      %v4720 = vsel %vm4710, %v4706, 1326507024
      %v4721 = vsel %vm4709, %v4703, %v4720
      %v4722 = vsel %vm4708, %v4719, %v4721
      %v4723 = vshll.u32 %v4683, 8
      %v4724 = vmul.u32.u64.compose %v4723, %v4722
      %v4725 = vextract.low.u32 %v4724
      %v4726 = vextract.high.u32 %v4724
      %v4727 = vmul.u32.u64.compose %v4723, %v4718
      %v4728 = vextract.low.u32 %v4727
      %v4729 = vextract.high.u32 %v4727
      %v4730 = vmul.u32 %v4723, %v4714
      %v4731 = vadd.s32 %v4726, %v4728
      %vm4732 = vc.u32 %v4726, %v4728
      %v4733 = vadd.s32 %v4729, 1
      %v4734 = vsel %vm4732, %v4733, %v4729
      %v4735 = vadd.s32 %v4730, %v4734
      %v4736 = vadd.s32 %v4735, 536870912
      %v4737 = vshrl.u32 %v4736, 30
      %v4738 = vshll.u32 %v4737, 30
      %v4739 = vsub.s32 %v4735, %v4738
      %vm4740 = vcmp.lt.s32.totalorder %v4739, 0
      %v4741 = vsub.s32 0, %v4739
      %v4742 = vsel %vm4740, %v4741, %v4739
      %v4743 = vclz %v4742
      %v4744 = vsub.s32 %v4743, 2
      %vm4745 = vcmp.gt.s32.totalorder 0, %v4744
      %v4746 = vsel %vm4745, 0, %v4744
      %v4747 = vsub.s32 32, %v4746
      %v4748 = vshll.u32 %v4739, %v4746
      %v4749 = vshrl.u32 %v4731, %v4747
      %v4750 = vor.u32 %v4748, %v4749
      %v4751 = vsub.s32 4294967266, %v4746
      %v4752 = vadd.s32 %v4751, 127
      %v4753 = vshll.u32 %v4752, 23
      %v4754 = vor.u32 4788187, %v4753
      %v4755 = vand.u32 2147483647, %v4754
      %v4757 = vcvt.s32.f32 %v4750
      %v4758 = vmul.f32 %v4757, %v4755
      %v4759 = vxor.u32 %v4758, 2147483648
      %v4760 = vsel %vm4677, %v4759, %v4758
      %v4761 = vsub.s32 4, %v4737
      %v4762 = vsel %vm4677, %v4761, %v4737
      %v4763 = vsel %vm4676, %v694, %v4760
      %v4764 = vsel %vm4676, 0, %v4762
      %v4765 = vcosq.f32.pop %v4763
      %v4766 = vsinq.f32.pop %v4763
      %vm4767 = vweird.f32 %v694
      %v4768 = vadd.s32 %v4764, 3
      %v4769 = vand.u32 %v4768, 3
      %vm4770 = vcmp.lt.s32.totalorder %v4769, 2
      %vm4771 = vcmp.eq.s32.totalorder %v4769, 0
      %v4772 = vxor.u32 %v4766, 2147483648
      %v4773 = vsel %vm4771, %v4765, %v4772
      %vm4774 = vcmp.eq.s32.totalorder %v4769, 2
      %v4775 = vxor.u32 %v4765, 2147483648
      %v4776 = vsel %vm4774, %v4775, %v4766
      %v4777 = vsel %vm4770, %v4773, %v4776
      %v4778 = vsel %vm4767, nan, %v4777
      %v4779 = vand.u32 2147483647, %v699
      %vm4780 = vcmp.le.f32.partialorder %v4779, 0.7853982
      %vm4781 = vcmp.lt.s32.totalorder %v699, 0
      %v4782 = vand.u32 %v699, 2139095040
      %v4783 = vshrl.u32 %v4782, 23
      %v4784 = vsub.s32 %v4783, 127
      %v4785 = vand.u32 2147483647, %v699
      %v4786 = vand.u32 %v4785, 8388607
      %v4787 = vor.u32 %v4786, 8388608
      %v4788 = vsub.s32 0, %v4787
      %v4789 = vadd.s32 %v4784, 1
      %vm4790 = vcmp.gt.s32.totalorder %v4789, 0
      %v4791 = vsel %vm4790, %v4789, 0
      %v4792 = vshrl.u32 %v4791, 5
      %v4793 = vand.u32 %v4791, 31
      %v4794 = vsub.s32 32, %v4793
      %v4795 = vshrl.u32 683565275, %v4794
      %v4796 = vshll.u32 683565275, %v4793
      %v4797 = vshrl.u32 2475754826, %v4794
      %v4798 = vor.u32 %v4796, %v4797
      %v4799 = vshll.u32 2475754826, %v4793
      %v4800 = vshrl.u32 2131351028, %v4794
      %v4801 = vor.u32 %v4799, %v4800
      %v4802 = vshll.u32 2131351028, %v4793
      %v4803 = vshrl.u32 2102212464, %v4794
      %v4804 = vor.u32 %v4802, %v4803
      %v4805 = vshll.u32 2102212464, %v4793
      %v4806 = vshrl.u32 920167782, %v4794
      %v4807 = vor.u32 %v4805, %v4806
      %v4808 = vshll.u32 920167782, %v4793
      %v4809 = vshrl.u32 1326507024, %v4794
      %v4810 = vor.u32 %v4808, %v4809
      %vm4811 = vcmp.lt.s32.totalorder %v4792, 1
      %vm4812 = vcmp.lt.s32.totalorder %v4792, 2
      %vm4813 = vcmp.lt.s32.totalorder %v4792, 3
      %vm4814 = vcmp.lt.s32.totalorder %v4792, 4
      %v4815 = vsel %vm4811, %v4795, %v4798
      %v4816 = vsel %vm4814, %v4804, 2102212464
      %v4817 = vsel %vm4813, %v4801, %v4816
      %v4818 = vsel %vm4812, %v4815, %v4817
      %v4819 = vsel %vm4811, %v4798, %v4801
      %v4820 = vsel %vm4814, %v4807, 920167782
      %v4821 = vsel %vm4813, %v4804, %v4820
      %v4822 = vsel %vm4812, %v4819, %v4821
      %v4823 = vsel %vm4811, %v4801, %v4804
      %v4824 = vsel %vm4814, %v4810, 1326507024
      %v4825 = vsel %vm4813, %v4807, %v4824
      %v4826 = vsel %vm4812, %v4823, %v4825
      %v4827 = vshll.u32 %v4787, 8
      %v4828 = vmul.u32.u64.compose %v4827, %v4826
      %v4829 = vextract.low.u32 %v4828
      %v4830 = vextract.high.u32 %v4828
      %v4831 = vmul.u32.u64.compose %v4827, %v4822
      %v4832 = vextract.low.u32 %v4831
      %v4833 = vextract.high.u32 %v4831
      %v4834 = vmul.u32 %v4827, %v4818
      %v4835 = vadd.s32 %v4830, %v4832
      %vm4836 = vc.u32 %v4830, %v4832
      %v4837 = vadd.s32 %v4833, 1
      %v4838 = vsel %vm4836, %v4837, %v4833
      %v4839 = vadd.s32 %v4834, %v4838
      %v4840 = vadd.s32 %v4839, 536870912
      %v4841 = vshrl.u32 %v4840, 30
      %v4842 = vshll.u32 %v4841, 30
      %v4843 = vsub.s32 %v4839, %v4842
      %vm4844 = vcmp.lt.s32.totalorder %v4843, 0
      %v4845 = vsub.s32 0, %v4843
      %v4846 = vsel %vm4844, %v4845, %v4843
      %v4847 = vclz %v4846
      %v4848 = vsub.s32 %v4847, 2
      %vm4849 = vcmp.gt.s32.totalorder 0, %v4848
      %v4850 = vsel %vm4849, 0, %v4848
      %v4851 = vsub.s32 32, %v4850
      %v4852 = vshll.u32 %v4843, %v4850
      %v4853 = vshrl.u32 %v4835, %v4851
      %v4854 = vor.u32 %v4852, %v4853
      %v4855 = vsub.s32 4294967266, %v4850
      %v4856 = vadd.s32 %v4855, 127
      %v4857 = vshll.u32 %v4856, 23
      %v4858 = vor.u32 4788187, %v4857
      %v4859 = vand.u32 2147483647, %v4858
      %v4861 = vcvt.s32.f32 %v4854
      %v4862 = vmul.f32 %v4861, %v4859
      %v4863 = vxor.u32 %v4862, 2147483648
      %v4864 = vsel %vm4781, %v4863, %v4862
      %v4865 = vsub.s32 4, %v4841
      %v4866 = vsel %vm4781, %v4865, %v4841
      %v4867 = vsel %vm4780, %v699, %v4864
      %v4868 = vsel %vm4780, 0, %v4866
      %v4869 = vcosq.f32.pop %v4867
      %v4870 = vsinq.f32.pop %v4867
      %vm4871 = vweird.f32 %v699
      %v4872 = vadd.s32 %v4868, 3
      %v4873 = vand.u32 %v4872, 3
      %vm4874 = vcmp.lt.s32.totalorder %v4873, 2
      %vm4875 = vcmp.eq.s32.totalorder %v4873, 0
      %v4876 = vxor.u32 %v4870, 2147483648
      %v4877 = vsel %vm4875, %v4869, %v4876
      %vm4878 = vcmp.eq.s32.totalorder %v4873, 2
      %v4879 = vxor.u32 %v4869, 2147483648
      %v4880 = vsel %vm4878, %v4879, %v4870
      %v4881 = vsel %vm4874, %v4877, %v4880
      %v4882 = vsel %vm4871, nan, %v4881
      %v4883 = vand.u32 2147483647, %v704
      %vm4884 = vcmp.le.f32.partialorder %v4883, 0.7853982
      %vm4885 = vcmp.lt.s32.totalorder %v704, 0
      %v4886 = vand.u32 %v704, 2139095040
      %v4887 = vshrl.u32 %v4886, 23
      %v4888 = vsub.s32 %v4887, 127
      %v4889 = vand.u32 2147483647, %v704
      %v4890 = vand.u32 %v4889, 8388607
      %v4891 = vor.u32 %v4890, 8388608
      %v4892 = vsub.s32 0, %v4891
      %v4893 = vadd.s32 %v4888, 1
      %vm4894 = vcmp.gt.s32.totalorder %v4893, 0
      %v4895 = vsel %vm4894, %v4893, 0
      %v4896 = vshrl.u32 %v4895, 5
      %v4897 = vand.u32 %v4895, 31
      %v4898 = vsub.s32 32, %v4897
      %v4899 = vshrl.u32 683565275, %v4898
      %v4900 = vshll.u32 683565275, %v4897
      %v4901 = vshrl.u32 2475754826, %v4898
      %v4902 = vor.u32 %v4900, %v4901
      %v4903 = vshll.u32 2475754826, %v4897
      %v4904 = vshrl.u32 2131351028, %v4898
      %v4905 = vor.u32 %v4903, %v4904
      %v4906 = vshll.u32 2131351028, %v4897
      %v4907 = vshrl.u32 2102212464, %v4898
      %v4908 = vor.u32 %v4906, %v4907
      %v4909 = vshll.u32 2102212464, %v4897
      %v4910 = vshrl.u32 920167782, %v4898
      %v4911 = vor.u32 %v4909, %v4910
      %v4912 = vshll.u32 920167782, %v4897
      %v4913 = vshrl.u32 1326507024, %v4898
      %v4914 = vor.u32 %v4912, %v4913
      %vm4915 = vcmp.lt.s32.totalorder %v4896, 1
      %vm4916 = vcmp.lt.s32.totalorder %v4896, 2
      %vm4917 = vcmp.lt.s32.totalorder %v4896, 3
      %vm4918 = vcmp.lt.s32.totalorder %v4896, 4
      %v4919 = vsel %vm4915, %v4899, %v4902
      %v4920 = vsel %vm4918, %v4908, 2102212464
      %v4921 = vsel %vm4917, %v4905, %v4920
      %v4922 = vsel %vm4916, %v4919, %v4921
      %v4923 = vsel %vm4915, %v4902, %v4905
      %v4924 = vsel %vm4918, %v4911, 920167782
      %v4925 = vsel %vm4917, %v4908, %v4924
      %v4926 = vsel %vm4916, %v4923, %v4925
      %v4927 = vsel %vm4915, %v4905, %v4908
      %v4928 = vsel %vm4918, %v4914, 1326507024
      %v4929 = vsel %vm4917, %v4911, %v4928
      %v4930 = vsel %vm4916, %v4927, %v4929
      %v4931 = vshll.u32 %v4891, 8
      %v4932 = vmul.u32.u64.compose %v4931, %v4930
      %v4933 = vextract.low.u32 %v4932
      %v4934 = vextract.high.u32 %v4932
      %v4935 = vmul.u32.u64.compose %v4931, %v4926
      %v4936 = vextract.low.u32 %v4935
      %v4937 = vextract.high.u32 %v4935
      %v4938 = vmul.u32 %v4931, %v4922
      %v4939 = vadd.s32 %v4934, %v4936
      %vm4940 = vc.u32 %v4934, %v4936
      %v4941 = vadd.s32 %v4937, 1
      %v4942 = vsel %vm4940, %v4941, %v4937
      %v4943 = vadd.s32 %v4938, %v4942
      %v4944 = vadd.s32 %v4943, 536870912
      %v4945 = vshrl.u32 %v4944, 30
      %v4946 = vshll.u32 %v4945, 30
      %v4947 = vsub.s32 %v4943, %v4946
      %vm4948 = vcmp.lt.s32.totalorder %v4947, 0
      %v4949 = vsub.s32 0, %v4947
      %v4950 = vsel %vm4948, %v4949, %v4947
      %v4951 = vclz %v4950
      %v4952 = vsub.s32 %v4951, 2
      %vm4953 = vcmp.gt.s32.totalorder 0, %v4952
      %v4954 = vsel %vm4953, 0, %v4952
      %v4955 = vsub.s32 32, %v4954
      %v4956 = vshll.u32 %v4947, %v4954
      %v4957 = vshrl.u32 %v4939, %v4955
      %v4958 = vor.u32 %v4956, %v4957
      %v4959 = vsub.s32 4294967266, %v4954
      %v4960 = vadd.s32 %v4959, 127
      %v4961 = vshll.u32 %v4960, 23
      %v4962 = vor.u32 4788187, %v4961
      %v4963 = vand.u32 2147483647, %v4962
      %v4965 = vcvt.s32.f32 %v4958
      %v4966 = vmul.f32 %v4965, %v4963
      %v4967 = vxor.u32 %v4966, 2147483648
      %v4968 = vsel %vm4885, %v4967, %v4966
      %v4969 = vsub.s32 4, %v4945
      %v4970 = vsel %vm4885, %v4969, %v4945
      %v4971 = vsel %vm4884, %v704, %v4968
      %v4972 = vsel %vm4884, 0, %v4970
      %v4973 = vcosq.f32.pop %v4971
      %v4974 = vsinq.f32.pop %v4971
      %vm4975 = vweird.f32 %v704
      %v4976 = vadd.s32 %v4972, 3
      %v4977 = vand.u32 %v4976, 3
      %vm4978 = vcmp.lt.s32.totalorder %v4977, 2
      %vm4979 = vcmp.eq.s32.totalorder %v4977, 0
      %v4980 = vxor.u32 %v4974, 2147483648
      %v4981 = vsel %vm4979, %v4973, %v4980
      %vm4982 = vcmp.eq.s32.totalorder %v4977, 2
      %v4983 = vxor.u32 %v4973, 2147483648
      %v4984 = vsel %vm4982, %v4983, %v4974
      %v4985 = vsel %vm4978, %v4981, %v4984
      %v4986 = vsel %vm4975, nan, %v4985
      %v4987 = vand.u32 2147483647, %v709
      %vm4988 = vcmp.le.f32.partialorder %v4987, 0.7853982
      %vm4989 = vcmp.lt.s32.totalorder %v709, 0
      %v4990 = vand.u32 %v709, 2139095040
      %v4991 = vshrl.u32 %v4990, 23
      %v4992 = vsub.s32 %v4991, 127
      %v4993 = vand.u32 2147483647, %v709
      %v4994 = vand.u32 %v4993, 8388607
      %v4995 = vor.u32 %v4994, 8388608
      %v4996 = vsub.s32 0, %v4995
      %v4997 = vadd.s32 %v4992, 1
      %vm4998 = vcmp.gt.s32.totalorder %v4997, 0
      %v4999 = vsel %vm4998, %v4997, 0
      %v5000 = vshrl.u32 %v4999, 5
      %v5001 = vand.u32 %v4999, 31
      %v5002 = vsub.s32 32, %v5001
      %v5003 = vshrl.u32 683565275, %v5002
      %v5004 = vshll.u32 683565275, %v5001
      %v5005 = vshrl.u32 2475754826, %v5002
      %v5006 = vor.u32 %v5004, %v5005
      %v5007 = vshll.u32 2475754826, %v5001
      %v5008 = vshrl.u32 2131351028, %v5002
      %v5009 = vor.u32 %v5007, %v5008
      %v5010 = vshll.u32 2131351028, %v5001
      %v5011 = vshrl.u32 2102212464, %v5002
      %v5012 = vor.u32 %v5010, %v5011
      %v5013 = vshll.u32 2102212464, %v5001
      %v5014 = vshrl.u32 920167782, %v5002
      %v5015 = vor.u32 %v5013, %v5014
      %v5016 = vshll.u32 920167782, %v5001
      %v5017 = vshrl.u32 1326507024, %v5002
      %v5018 = vor.u32 %v5016, %v5017
      %vm5019 = vcmp.lt.s32.totalorder %v5000, 1
      %vm5020 = vcmp.lt.s32.totalorder %v5000, 2
      %vm5021 = vcmp.lt.s32.totalorder %v5000, 3
      %vm5022 = vcmp.lt.s32.totalorder %v5000, 4
      %v5023 = vsel %vm5019, %v5003, %v5006
      %v5024 = vsel %vm5022, %v5012, 2102212464
      %v5025 = vsel %vm5021, %v5009, %v5024
      %v5026 = vsel %vm5020, %v5023, %v5025
      %v5027 = vsel %vm5019, %v5006, %v5009
      %v5028 = vsel %vm5022, %v5015, 920167782
      %v5029 = vsel %vm5021, %v5012, %v5028
      %v5030 = vsel %vm5020, %v5027, %v5029
      %v5031 = vsel %vm5019, %v5009, %v5012
      %v5032 = vsel %vm5022, %v5018, 1326507024
      %v5033 = vsel %vm5021, %v5015, %v5032
      %v5034 = vsel %vm5020, %v5031, %v5033
      %v5035 = vshll.u32 %v4995, 8
      %v5036 = vmul.u32.u64.compose %v5035, %v5034
      %v5037 = vextract.low.u32 %v5036
      %v5038 = vextract.high.u32 %v5036
      %v5039 = vmul.u32.u64.compose %v5035, %v5030
      %v5040 = vextract.low.u32 %v5039
      %v5041 = vextract.high.u32 %v5039
      %v5042 = vmul.u32 %v5035, %v5026
      %v5043 = vadd.s32 %v5038, %v5040
      %vm5044 = vc.u32 %v5038, %v5040
      %v5045 = vadd.s32 %v5041, 1
      %v5046 = vsel %vm5044, %v5045, %v5041
      %v5047 = vadd.s32 %v5042, %v5046
      %v5048 = vadd.s32 %v5047, 536870912
      %v5049 = vshrl.u32 %v5048, 30
      %v5050 = vshll.u32 %v5049, 30
      %v5051 = vsub.s32 %v5047, %v5050
      %vm5052 = vcmp.lt.s32.totalorder %v5051, 0
      %v5053 = vsub.s32 0, %v5051
      %v5054 = vsel %vm5052, %v5053, %v5051
      %v5055 = vclz %v5054
      %v5056 = vsub.s32 %v5055, 2
      %vm5057 = vcmp.gt.s32.totalorder 0, %v5056
      %v5058 = vsel %vm5057, 0, %v5056
      %v5059 = vsub.s32 32, %v5058
      %v5060 = vshll.u32 %v5051, %v5058
      %v5061 = vshrl.u32 %v5043, %v5059
      %v5062 = vor.u32 %v5060, %v5061
      %v5063 = vsub.s32 4294967266, %v5058
      %v5064 = vadd.s32 %v5063, 127
      %v5065 = vshll.u32 %v5064, 23
      %v5066 = vor.u32 4788187, %v5065
      %v5067 = vand.u32 2147483647, %v5066
      %v5069 = vcvt.s32.f32 %v5062
      %v5070 = vmul.f32 %v5069, %v5067
      %v5071 = vxor.u32 %v5070, 2147483648
      %v5072 = vsel %vm4989, %v5071, %v5070
      %v5073 = vsub.s32 4, %v5049
      %v5074 = vsel %vm4989, %v5073, %v5049
      %v5075 = vsel %vm4988, %v709, %v5072
      %v5076 = vsel %vm4988, 0, %v5074
      %v5077 = vcosq.f32.pop %v5075
      %v5078 = vsinq.f32.pop %v5075
      %vm5079 = vweird.f32 %v709
      %v5080 = vadd.s32 %v5076, 3
      %v5081 = vand.u32 %v5080, 3
      %vm5082 = vcmp.lt.s32.totalorder %v5081, 2
      %vm5083 = vcmp.eq.s32.totalorder %v5081, 0
      %v5084 = vxor.u32 %v5078, 2147483648
      %v5085 = vsel %vm5083, %v5077, %v5084
      %vm5086 = vcmp.eq.s32.totalorder %v5081, 2
      %v5087 = vxor.u32 %v5077, 2147483648
      %v5088 = vsel %vm5086, %v5087, %v5078
      %v5089 = vsel %vm5082, %v5085, %v5088
      %v5090 = vsel %vm5079, nan, %v5089
      %v5091 = vand.u32 2147483647, %v714
      %vm5092 = vcmp.le.f32.partialorder %v5091, 0.7853982
      %vm5093 = vcmp.lt.s32.totalorder %v714, 0
      %v5094 = vand.u32 %v714, 2139095040
      %v5095 = vshrl.u32 %v5094, 23
      %v5096 = vsub.s32 %v5095, 127
      %v5097 = vand.u32 2147483647, %v714
      %v5098 = vand.u32 %v5097, 8388607
      %v5099 = vor.u32 %v5098, 8388608
      %v5100 = vsub.s32 0, %v5099
      %v5101 = vadd.s32 %v5096, 1
      %vm5102 = vcmp.gt.s32.totalorder %v5101, 0
      %v5103 = vsel %vm5102, %v5101, 0
      %v5104 = vshrl.u32 %v5103, 5
      %v5105 = vand.u32 %v5103, 31
      %v5106 = vsub.s32 32, %v5105
      %v5107 = vshrl.u32 683565275, %v5106
      %v5108 = vshll.u32 683565275, %v5105
      %v5109 = vshrl.u32 2475754826, %v5106
      %v5110 = vor.u32 %v5108, %v5109
      %v5111 = vshll.u32 2475754826, %v5105
      %v5112 = vshrl.u32 2131351028, %v5106
      %v5113 = vor.u32 %v5111, %v5112
      %v5114 = vshll.u32 2131351028, %v5105
      %v5115 = vshrl.u32 2102212464, %v5106
      %v5116 = vor.u32 %v5114, %v5115
      %v5117 = vshll.u32 2102212464, %v5105
      %v5118 = vshrl.u32 920167782, %v5106
      %v5119 = vor.u32 %v5117, %v5118
      %v5120 = vshll.u32 920167782, %v5105
      %v5121 = vshrl.u32 1326507024, %v5106
      %v5122 = vor.u32 %v5120, %v5121
      %vm5123 = vcmp.lt.s32.totalorder %v5104, 1
      %vm5124 = vcmp.lt.s32.totalorder %v5104, 2
      %vm5125 = vcmp.lt.s32.totalorder %v5104, 3
      %vm5126 = vcmp.lt.s32.totalorder %v5104, 4
      %v5127 = vsel %vm5123, %v5107, %v5110
      %v5128 = vsel %vm5126, %v5116, 2102212464
      %v5129 = vsel %vm5125, %v5113, %v5128
      %v5130 = vsel %vm5124, %v5127, %v5129
      %v5131 = vsel %vm5123, %v5110, %v5113
      %v5132 = vsel %vm5126, %v5119, 920167782
      %v5133 = vsel %vm5125, %v5116, %v5132
      %v5134 = vsel %vm5124, %v5131, %v5133
      %v5135 = vsel %vm5123, %v5113, %v5116
      %v5136 = vsel %vm5126, %v5122, 1326507024
      %v5137 = vsel %vm5125, %v5119, %v5136
      %v5138 = vsel %vm5124, %v5135, %v5137
      %v5139 = vshll.u32 %v5099, 8
      %v5140 = vmul.u32.u64.compose %v5139, %v5138
      %v5141 = vextract.low.u32 %v5140
      %v5142 = vextract.high.u32 %v5140
      %v5143 = vmul.u32.u64.compose %v5139, %v5134
      %v5144 = vextract.low.u32 %v5143
      %v5145 = vextract.high.u32 %v5143
      %v5146 = vmul.u32 %v5139, %v5130
      %v5147 = vadd.s32 %v5142, %v5144
      %vm5148 = vc.u32 %v5142, %v5144
      %v5149 = vadd.s32 %v5145, 1
      %v5150 = vsel %vm5148, %v5149, %v5145
      %v5151 = vadd.s32 %v5146, %v5150
      %v5152 = vadd.s32 %v5151, 536870912
      %v5153 = vshrl.u32 %v5152, 30
      %v5154 = vshll.u32 %v5153, 30
      %v5155 = vsub.s32 %v5151, %v5154
      %vm5156 = vcmp.lt.s32.totalorder %v5155, 0
      %v5157 = vsub.s32 0, %v5155
      %v5158 = vsel %vm5156, %v5157, %v5155
      %v5159 = vclz %v5158
      %v5160 = vsub.s32 %v5159, 2
      %vm5161 = vcmp.gt.s32.totalorder 0, %v5160
      %v5162 = vsel %vm5161, 0, %v5160
      %v5163 = vsub.s32 32, %v5162
      %v5164 = vshll.u32 %v5155, %v5162
      %v5165 = vshrl.u32 %v5147, %v5163
      %v5166 = vor.u32 %v5164, %v5165
      %v5167 = vsub.s32 4294967266, %v5162
      %v5168 = vadd.s32 %v5167, 127
      %v5169 = vshll.u32 %v5168, 23
      %v5170 = vor.u32 4788187, %v5169
      %v5171 = vand.u32 2147483647, %v5170
      %v5173 = vcvt.s32.f32 %v5166
      %v5174 = vmul.f32 %v5173, %v5171
      %v5175 = vxor.u32 %v5174, 2147483648
      %v5176 = vsel %vm5093, %v5175, %v5174
      %v5177 = vsub.s32 4, %v5153
      %v5178 = vsel %vm5093, %v5177, %v5153
      %v5179 = vsel %vm5092, %v714, %v5176
      %v5180 = vsel %vm5092, 0, %v5178
      %v5181 = vcosq.f32.pop %v5179
      %v5182 = vsinq.f32.pop %v5179
      %vm5183 = vweird.f32 %v714
      %v5184 = vadd.s32 %v5180, 3
      %v5185 = vand.u32 %v5184, 3
      %vm5186 = vcmp.lt.s32.totalorder %v5185, 2
      %vm5187 = vcmp.eq.s32.totalorder %v5185, 0
      %v5188 = vxor.u32 %v5182, 2147483648
      %v5189 = vsel %vm5187, %v5181, %v5188
      %vm5190 = vcmp.eq.s32.totalorder %v5185, 2
      %v5191 = vxor.u32 %v5181, 2147483648
      %v5192 = vsel %vm5190, %v5191, %v5182
      %v5193 = vsel %vm5186, %v5189, %v5192
      %v5194 = vsel %vm5183, nan, %v5193
      %v5195 = vand.u32 2147483647, %v719
      %vm5196 = vcmp.le.f32.partialorder %v5195, 0.7853982
      %vm5197 = vcmp.lt.s32.totalorder %v719, 0
      %v5198 = vand.u32 %v719, 2139095040
      %v5199 = vshrl.u32 %v5198, 23
      %v5200 = vsub.s32 %v5199, 127
      %v5201 = vand.u32 2147483647, %v719
      %v5202 = vand.u32 %v5201, 8388607
      %v5203 = vor.u32 %v5202, 8388608
      %v5204 = vsub.s32 0, %v5203
      %v5205 = vadd.s32 %v5200, 1
      %vm5206 = vcmp.gt.s32.totalorder %v5205, 0
      %v5207 = vsel %vm5206, %v5205, 0
      %v5208 = vshrl.u32 %v5207, 5
      %v5209 = vand.u32 %v5207, 31
      %v5210 = vsub.s32 32, %v5209
      %v5211 = vshrl.u32 683565275, %v5210
      %v5212 = vshll.u32 683565275, %v5209
      %v5213 = vshrl.u32 2475754826, %v5210
      %v5214 = vor.u32 %v5212, %v5213
      %v5215 = vshll.u32 2475754826, %v5209
      %v5216 = vshrl.u32 2131351028, %v5210
      %v5217 = vor.u32 %v5215, %v5216
      %v5218 = vshll.u32 2131351028, %v5209
      %v5219 = vshrl.u32 2102212464, %v5210
      %v5220 = vor.u32 %v5218, %v5219
      %v5221 = vshll.u32 2102212464, %v5209
      %v5222 = vshrl.u32 920167782, %v5210
      %v5223 = vor.u32 %v5221, %v5222
      %v5224 = vshll.u32 920167782, %v5209
      %v5225 = vshrl.u32 1326507024, %v5210
      %v5226 = vor.u32 %v5224, %v5225
      %vm5227 = vcmp.lt.s32.totalorder %v5208, 1
      %vm5228 = vcmp.lt.s32.totalorder %v5208, 2
      %vm5229 = vcmp.lt.s32.totalorder %v5208, 3
      %vm5230 = vcmp.lt.s32.totalorder %v5208, 4
      %v5231 = vsel %vm5227, %v5211, %v5214
      %v5232 = vsel %vm5230, %v5220, 2102212464
      %v5233 = vsel %vm5229, %v5217, %v5232
      %v5234 = vsel %vm5228, %v5231, %v5233
      %v5235 = vsel %vm5227, %v5214, %v5217
      %v5236 = vsel %vm5230, %v5223, 920167782
      %v5237 = vsel %vm5229, %v5220, %v5236
      %v5238 = vsel %vm5228, %v5235, %v5237
      %v5239 = vsel %vm5227, %v5217, %v5220
      %v5240 = vsel %vm5230, %v5226, 1326507024
      %v5241 = vsel %vm5229, %v5223, %v5240
      %v5242 = vsel %vm5228, %v5239, %v5241
      %v5243 = vshll.u32 %v5203, 8
      %v5244 = vmul.u32.u64.compose %v5243, %v5242
      %v5245 = vextract.low.u32 %v5244
      %v5246 = vextract.high.u32 %v5244
      %v5247 = vmul.u32.u64.compose %v5243, %v5238
      %v5248 = vextract.low.u32 %v5247
      %v5249 = vextract.high.u32 %v5247
      %v5250 = vmul.u32 %v5243, %v5234
      %v5251 = vadd.s32 %v5246, %v5248
      %vm5252 = vc.u32 %v5246, %v5248
      %v5253 = vadd.s32 %v5249, 1
      %v5254 = vsel %vm5252, %v5253, %v5249
      %v5255 = vadd.s32 %v5250, %v5254
      %v5256 = vadd.s32 %v5255, 536870912
      %v5257 = vshrl.u32 %v5256, 30
      %v5258 = vshll.u32 %v5257, 30
      %v5259 = vsub.s32 %v5255, %v5258
      %vm5260 = vcmp.lt.s32.totalorder %v5259, 0
      %v5261 = vsub.s32 0, %v5259
      %v5262 = vsel %vm5260, %v5261, %v5259
      %v5263 = vclz %v5262
      %v5264 = vsub.s32 %v5263, 2
      %vm5265 = vcmp.gt.s32.totalorder 0, %v5264
      %v5266 = vsel %vm5265, 0, %v5264
      %v5267 = vsub.s32 32, %v5266
      %v5268 = vshll.u32 %v5259, %v5266
      %v5269 = vshrl.u32 %v5251, %v5267
      %v5270 = vor.u32 %v5268, %v5269
      %v5271 = vsub.s32 4294967266, %v5266
      %v5272 = vadd.s32 %v5271, 127
      %v5273 = vshll.u32 %v5272, 23
      %v5274 = vor.u32 4788187, %v5273
      %v5275 = vand.u32 2147483647, %v5274
      %v5277 = vcvt.s32.f32 %v5270
      %v5278 = vmul.f32 %v5277, %v5275
      %v5279 = vxor.u32 %v5278, 2147483648
      %v5280 = vsel %vm5197, %v5279, %v5278
      %v5281 = vsub.s32 4, %v5257
      %v5282 = vsel %vm5197, %v5281, %v5257
      %v5283 = vsel %vm5196, %v719, %v5280
      %v5284 = vsel %vm5196, 0, %v5282
      %v5285 = vcosq.f32.pop %v5283
      %v5286 = vsinq.f32.pop %v5283
      %vm5287 = vweird.f32 %v719
      %v5288 = vadd.s32 %v5284, 3
      %v5289 = vand.u32 %v5288, 3
      %vm5290 = vcmp.lt.s32.totalorder %v5289, 2
      %vm5291 = vcmp.eq.s32.totalorder %v5289, 0
      %v5292 = vxor.u32 %v5286, 2147483648
      %v5293 = vsel %vm5291, %v5285, %v5292
      %vm5294 = vcmp.eq.s32.totalorder %v5289, 2
      %v5295 = vxor.u32 %v5285, 2147483648
      %v5296 = vsel %vm5294, %v5295, %v5286
      %v5297 = vsel %vm5290, %v5293, %v5296
      %v5298 = vsel %vm5287, nan, %v5297
      %v5299 = vand.u32 2147483647, %v724
      %vm5300 = vcmp.le.f32.partialorder %v5299, 0.7853982
      %vm5301 = vcmp.lt.s32.totalorder %v724, 0
      %v5302 = vand.u32 %v724, 2139095040
      %v5303 = vshrl.u32 %v5302, 23
      %v5304 = vsub.s32 %v5303, 127
      %v5305 = vand.u32 2147483647, %v724
      %v5306 = vand.u32 %v5305, 8388607
      %v5307 = vor.u32 %v5306, 8388608
      %v5308 = vsub.s32 0, %v5307
      %v5309 = vadd.s32 %v5304, 1
      %vm5310 = vcmp.gt.s32.totalorder %v5309, 0
      %v5311 = vsel %vm5310, %v5309, 0
      %v5312 = vshrl.u32 %v5311, 5
      %v5313 = vand.u32 %v5311, 31
      %v5314 = vsub.s32 32, %v5313
      %v5315 = vshrl.u32 683565275, %v5314
      %v5316 = vshll.u32 683565275, %v5313
      %v5317 = vshrl.u32 2475754826, %v5314
      %v5318 = vor.u32 %v5316, %v5317
      %v5319 = vshll.u32 2475754826, %v5313
      %v5320 = vshrl.u32 2131351028, %v5314
      %v5321 = vor.u32 %v5319, %v5320
      %v5322 = vshll.u32 2131351028, %v5313
      %v5323 = vshrl.u32 2102212464, %v5314
      %v5324 = vor.u32 %v5322, %v5323
      %v5325 = vshll.u32 2102212464, %v5313
      %v5326 = vshrl.u32 920167782, %v5314
      %v5327 = vor.u32 %v5325, %v5326
      %v5328 = vshll.u32 920167782, %v5313
      %v5329 = vshrl.u32 1326507024, %v5314
      %v5330 = vor.u32 %v5328, %v5329
      %vm5331 = vcmp.lt.s32.totalorder %v5312, 1
      %vm5332 = vcmp.lt.s32.totalorder %v5312, 2
      %vm5333 = vcmp.lt.s32.totalorder %v5312, 3
      %vm5334 = vcmp.lt.s32.totalorder %v5312, 4
      %v5335 = vsel %vm5331, %v5315, %v5318
      %v5336 = vsel %vm5334, %v5324, 2102212464
      %v5337 = vsel %vm5333, %v5321, %v5336
      %v5338 = vsel %vm5332, %v5335, %v5337
      %v5339 = vsel %vm5331, %v5318, %v5321
      %v5340 = vsel %vm5334, %v5327, 920167782
      %v5341 = vsel %vm5333, %v5324, %v5340
      %v5342 = vsel %vm5332, %v5339, %v5341
      %v5343 = vsel %vm5331, %v5321, %v5324
      %v5344 = vsel %vm5334, %v5330, 1326507024
      %v5345 = vsel %vm5333, %v5327, %v5344
      %v5346 = vsel %vm5332, %v5343, %v5345
      %v5347 = vshll.u32 %v5307, 8
      %v5348 = vmul.u32.u64.compose %v5347, %v5346
      %v5349 = vextract.low.u32 %v5348
      %v5350 = vextract.high.u32 %v5348
      %v5351 = vmul.u32.u64.compose %v5347, %v5342
      %v5352 = vextract.low.u32 %v5351
      %v5353 = vextract.high.u32 %v5351
      %v5354 = vmul.u32 %v5347, %v5338
      %v5355 = vadd.s32 %v5350, %v5352
      %vm5356 = vc.u32 %v5350, %v5352
      %v5357 = vadd.s32 %v5353, 1
      %v5358 = vsel %vm5356, %v5357, %v5353
      %v5359 = vadd.s32 %v5354, %v5358
      %v5360 = vadd.s32 %v5359, 536870912
      %v5361 = vshrl.u32 %v5360, 30
      %v5362 = vshll.u32 %v5361, 30
      %v5363 = vsub.s32 %v5359, %v5362
      %vm5364 = vcmp.lt.s32.totalorder %v5363, 0
      %v5365 = vsub.s32 0, %v5363
      %v5366 = vsel %vm5364, %v5365, %v5363
      %v5367 = vclz %v5366
      %v5368 = vsub.s32 %v5367, 2
      %vm5369 = vcmp.gt.s32.totalorder 0, %v5368
      %v5370 = vsel %vm5369, 0, %v5368
      %v5371 = vsub.s32 32, %v5370
      %v5372 = vshll.u32 %v5363, %v5370
      %v5373 = vshrl.u32 %v5355, %v5371
      %v5374 = vor.u32 %v5372, %v5373
      %v5375 = vsub.s32 4294967266, %v5370
      %v5376 = vadd.s32 %v5375, 127
      %v5377 = vshll.u32 %v5376, 23
      %v5378 = vor.u32 4788187, %v5377
      %v5379 = vand.u32 2147483647, %v5378
      %v5381 = vcvt.s32.f32 %v5374
      %v5382 = vmul.f32 %v5381, %v5379
      %v5383 = vxor.u32 %v5382, 2147483648
      %v5384 = vsel %vm5301, %v5383, %v5382
      %v5385 = vsub.s32 4, %v5361
      %v5386 = vsel %vm5301, %v5385, %v5361
      %v5387 = vsel %vm5300, %v724, %v5384
      %v5388 = vsel %vm5300, 0, %v5386
      %v5389 = vcosq.f32.pop %v5387
      %v5390 = vsinq.f32.pop %v5387
      %vm5391 = vweird.f32 %v724
      %v5392 = vadd.s32 %v5388, 3
      %v5393 = vand.u32 %v5392, 3
      %vm5394 = vcmp.lt.s32.totalorder %v5393, 2
      %vm5395 = vcmp.eq.s32.totalorder %v5393, 0
      %v5396 = vxor.u32 %v5390, 2147483648
      %v5397 = vsel %vm5395, %v5389, %v5396
      %vm5398 = vcmp.eq.s32.totalorder %v5393, 2
      %v5399 = vxor.u32 %v5389, 2147483648
      %v5400 = vsel %vm5398, %v5399, %v5390
      %v5401 = vsel %vm5394, %v5397, %v5400
      %v5402 = vsel %vm5391, nan, %v5401
      %v5403 = vand.u32 2147483647, %v729
      %vm5404 = vcmp.le.f32.partialorder %v5403, 0.7853982
      %vm5405 = vcmp.lt.s32.totalorder %v729, 0
      %v5406 = vand.u32 %v729, 2139095040
      %v5407 = vshrl.u32 %v5406, 23
      %v5408 = vsub.s32 %v5407, 127
      %v5409 = vand.u32 2147483647, %v729
      %v5410 = vand.u32 %v5409, 8388607
      %v5411 = vor.u32 %v5410, 8388608
      %v5412 = vsub.s32 0, %v5411
      %v5413 = vadd.s32 %v5408, 1
      %vm5414 = vcmp.gt.s32.totalorder %v5413, 0
      %v5415 = vsel %vm5414, %v5413, 0
      %v5416 = vshrl.u32 %v5415, 5
      %v5417 = vand.u32 %v5415, 31
      %v5418 = vsub.s32 32, %v5417
      %v5419 = vshrl.u32 683565275, %v5418
      %v5420 = vshll.u32 683565275, %v5417
      %v5421 = vshrl.u32 2475754826, %v5418
      %v5422 = vor.u32 %v5420, %v5421
      %v5423 = vshll.u32 2475754826, %v5417
      %v5424 = vshrl.u32 2131351028, %v5418
      %v5425 = vor.u32 %v5423, %v5424
      %v5426 = vshll.u32 2131351028, %v5417
      %v5427 = vshrl.u32 2102212464, %v5418
      %v5428 = vor.u32 %v5426, %v5427
      %v5429 = vshll.u32 2102212464, %v5417
      %v5430 = vshrl.u32 920167782, %v5418
      %v5431 = vor.u32 %v5429, %v5430
      %v5432 = vshll.u32 920167782, %v5417
      %v5433 = vshrl.u32 1326507024, %v5418
      %v5434 = vor.u32 %v5432, %v5433
      %vm5435 = vcmp.lt.s32.totalorder %v5416, 1
      %vm5436 = vcmp.lt.s32.totalorder %v5416, 2
      %vm5437 = vcmp.lt.s32.totalorder %v5416, 3
      %vm5438 = vcmp.lt.s32.totalorder %v5416, 4
      %v5439 = vsel %vm5435, %v5419, %v5422
      %v5440 = vsel %vm5438, %v5428, 2102212464
      %v5441 = vsel %vm5437, %v5425, %v5440
      %v5442 = vsel %vm5436, %v5439, %v5441
      %v5443 = vsel %vm5435, %v5422, %v5425
      %v5444 = vsel %vm5438, %v5431, 920167782
      %v5445 = vsel %vm5437, %v5428, %v5444
      %v5446 = vsel %vm5436, %v5443, %v5445
      %v5447 = vsel %vm5435, %v5425, %v5428
      %v5448 = vsel %vm5438, %v5434, 1326507024
      %v5449 = vsel %vm5437, %v5431, %v5448
      %v5450 = vsel %vm5436, %v5447, %v5449
      %v5451 = vshll.u32 %v5411, 8
      %v5452 = vmul.u32.u64.compose %v5451, %v5450
      %v5453 = vextract.low.u32 %v5452
      %v5454 = vextract.high.u32 %v5452
      %v5455 = vmul.u32.u64.compose %v5451, %v5446
      %v5456 = vextract.low.u32 %v5455
      %v5457 = vextract.high.u32 %v5455
      %v5458 = vmul.u32 %v5451, %v5442
      %v5459 = vadd.s32 %v5454, %v5456
      %vm5460 = vc.u32 %v5454, %v5456
      %v5461 = vadd.s32 %v5457, 1
      %v5462 = vsel %vm5460, %v5461, %v5457
      %v5463 = vadd.s32 %v5458, %v5462
      %v5464 = vadd.s32 %v5463, 536870912
      %v5465 = vshrl.u32 %v5464, 30
      %v5466 = vshll.u32 %v5465, 30
      %v5467 = vsub.s32 %v5463, %v5466
      %vm5468 = vcmp.lt.s32.totalorder %v5467, 0
      %v5469 = vsub.s32 0, %v5467
      %v5470 = vsel %vm5468, %v5469, %v5467
      %v5471 = vclz %v5470
      %v5472 = vsub.s32 %v5471, 2
      %vm5473 = vcmp.gt.s32.totalorder 0, %v5472
      %v5474 = vsel %vm5473, 0, %v5472
      %v5475 = vsub.s32 32, %v5474
      %v5476 = vshll.u32 %v5467, %v5474
      %v5477 = vshrl.u32 %v5459, %v5475
      %v5478 = vor.u32 %v5476, %v5477
      %v5479 = vsub.s32 4294967266, %v5474
      %v5480 = vadd.s32 %v5479, 127
      %v5481 = vshll.u32 %v5480, 23
      %v5482 = vor.u32 4788187, %v5481
      %v5483 = vand.u32 2147483647, %v5482
      %v5485 = vcvt.s32.f32 %v5478
      %v5486 = vmul.f32 %v5485, %v5483
      %v5487 = vxor.u32 %v5486, 2147483648
      %v5488 = vsel %vm5405, %v5487, %v5486
      %v5489 = vsub.s32 4, %v5465
      %v5490 = vsel %vm5405, %v5489, %v5465
      %v5491 = vsel %vm5404, %v729, %v5488
      %v5492 = vsel %vm5404, 0, %v5490
      %v5493 = vcosq.f32.pop %v5491
      %v5494 = vsinq.f32.pop %v5491
      %vm5495 = vweird.f32 %v729
      %v5496 = vadd.s32 %v5492, 3
      %v5497 = vand.u32 %v5496, 3
      %vm5498 = vcmp.lt.s32.totalorder %v5497, 2
      %vm5499 = vcmp.eq.s32.totalorder %v5497, 0
      %v5500 = vxor.u32 %v5494, 2147483648
      %v5501 = vsel %vm5499, %v5493, %v5500
      %vm5502 = vcmp.eq.s32.totalorder %v5497, 2
      %v5503 = vxor.u32 %v5493, 2147483648
      %v5504 = vsel %vm5502, %v5503, %v5494
      %v5505 = vsel %vm5498, %v5501, %v5504
      %v5506 = vsel %vm5495, nan, %v5505
      %v5507 = vand.u32 2147483647, %v734
      %vm5508 = vcmp.le.f32.partialorder %v5507, 0.7853982
      %vm5509 = vcmp.lt.s32.totalorder %v734, 0
      %v5510 = vand.u32 %v734, 2139095040
      %v5511 = vshrl.u32 %v5510, 23
      %v5512 = vsub.s32 %v5511, 127
      %v5513 = vand.u32 2147483647, %v734
      %v5514 = vand.u32 %v5513, 8388607
      %v5515 = vor.u32 %v5514, 8388608
      %v5516 = vsub.s32 0, %v5515
      %v5517 = vadd.s32 %v5512, 1
      %vm5518 = vcmp.gt.s32.totalorder %v5517, 0
      %v5519 = vsel %vm5518, %v5517, 0
      %v5520 = vshrl.u32 %v5519, 5
      %v5521 = vand.u32 %v5519, 31
      %v5522 = vsub.s32 32, %v5521
      %v5523 = vshrl.u32 683565275, %v5522
      %v5524 = vshll.u32 683565275, %v5521
      %v5525 = vshrl.u32 2475754826, %v5522
      %v5526 = vor.u32 %v5524, %v5525
      %v5527 = vshll.u32 2475754826, %v5521
      %v5528 = vshrl.u32 2131351028, %v5522
      %v5529 = vor.u32 %v5527, %v5528
      %v5530 = vshll.u32 2131351028, %v5521
      %v5531 = vshrl.u32 2102212464, %v5522
      %v5532 = vor.u32 %v5530, %v5531
      %v5533 = vshll.u32 2102212464, %v5521
      %v5534 = vshrl.u32 920167782, %v5522
      %v5535 = vor.u32 %v5533, %v5534
      %v5536 = vshll.u32 920167782, %v5521
      %v5537 = vshrl.u32 1326507024, %v5522
      %v5538 = vor.u32 %v5536, %v5537
      %vm5539 = vcmp.lt.s32.totalorder %v5520, 1
      %vm5540 = vcmp.lt.s32.totalorder %v5520, 2
      %vm5541 = vcmp.lt.s32.totalorder %v5520, 3
      %vm5542 = vcmp.lt.s32.totalorder %v5520, 4
      %v5543 = vsel %vm5539, %v5523, %v5526
      %v5544 = vsel %vm5542, %v5532, 2102212464
      %v5545 = vsel %vm5541, %v5529, %v5544
      %v5546 = vsel %vm5540, %v5543, %v5545
      %v5547 = vsel %vm5539, %v5526, %v5529
      %v5548 = vsel %vm5542, %v5535, 920167782
      %v5549 = vsel %vm5541, %v5532, %v5548
      %v5550 = vsel %vm5540, %v5547, %v5549
      %v5551 = vsel %vm5539, %v5529, %v5532
      %v5552 = vsel %vm5542, %v5538, 1326507024
      %v5553 = vsel %vm5541, %v5535, %v5552
      %v5554 = vsel %vm5540, %v5551, %v5553
      %v5555 = vshll.u32 %v5515, 8
      %v5556 = vmul.u32.u64.compose %v5555, %v5554
      %v5557 = vextract.low.u32 %v5556
      %v5558 = vextract.high.u32 %v5556
      %v5559 = vmul.u32.u64.compose %v5555, %v5550
      %v5560 = vextract.low.u32 %v5559
      %v5561 = vextract.high.u32 %v5559
      %v5562 = vmul.u32 %v5555, %v5546
      %v5563 = vadd.s32 %v5558, %v5560
      %vm5564 = vc.u32 %v5558, %v5560
      %v5565 = vadd.s32 %v5561, 1
      %v5566 = vsel %vm5564, %v5565, %v5561
      %v5567 = vadd.s32 %v5562, %v5566
      %v5568 = vadd.s32 %v5567, 536870912
      %v5569 = vshrl.u32 %v5568, 30
      %v5570 = vshll.u32 %v5569, 30
      %v5571 = vsub.s32 %v5567, %v5570
      %vm5572 = vcmp.lt.s32.totalorder %v5571, 0
      %v5573 = vsub.s32 0, %v5571
      %v5574 = vsel %vm5572, %v5573, %v5571
      %v5575 = vclz %v5574
      %v5576 = vsub.s32 %v5575, 2
      %vm5577 = vcmp.gt.s32.totalorder 0, %v5576
      %v5578 = vsel %vm5577, 0, %v5576
      %v5579 = vsub.s32 32, %v5578
      %v5580 = vshll.u32 %v5571, %v5578
      %v5581 = vshrl.u32 %v5563, %v5579
      %v5582 = vor.u32 %v5580, %v5581
      %v5583 = vsub.s32 4294967266, %v5578
      %v5584 = vadd.s32 %v5583, 127
      %v5585 = vshll.u32 %v5584, 23
      %v5586 = vor.u32 4788187, %v5585
      %v5587 = vand.u32 2147483647, %v5586
      %v5589 = vcvt.s32.f32 %v5582
      %v5590 = vmul.f32 %v5589, %v5587
      %v5591 = vxor.u32 %v5590, 2147483648
      %v5592 = vsel %vm5509, %v5591, %v5590
      %v5593 = vsub.s32 4, %v5569
      %v5594 = vsel %vm5509, %v5593, %v5569
      %v5595 = vsel %vm5508, %v734, %v5592
      %v5596 = vsel %vm5508, 0, %v5594
      %v5597 = vcosq.f32.pop %v5595
      %v5598 = vsinq.f32.pop %v5595
      %vm5599 = vweird.f32 %v734
      %v5600 = vadd.s32 %v5596, 3
      %v5601 = vand.u32 %v5600, 3
      %vm5602 = vcmp.lt.s32.totalorder %v5601, 2
      %vm5603 = vcmp.eq.s32.totalorder %v5601, 0
      %v5604 = vxor.u32 %v5598, 2147483648
      %v5605 = vsel %vm5603, %v5597, %v5604
      %vm5606 = vcmp.eq.s32.totalorder %v5601, 2
      %v5607 = vxor.u32 %v5597, 2147483648
      %v5608 = vsel %vm5606, %v5607, %v5598
      %v5609 = vsel %vm5602, %v5605, %v5608
      %v5610 = vsel %vm5599, nan, %v5609
      %v5611 = vand.u32 2147483647, %v739
      %vm5612 = vcmp.le.f32.partialorder %v5611, 0.7853982
      %vm5613 = vcmp.lt.s32.totalorder %v739, 0
      %v5614 = vand.u32 %v739, 2139095040
      %v5615 = vshrl.u32 %v5614, 23
      %v5616 = vsub.s32 %v5615, 127
      %v5617 = vand.u32 2147483647, %v739
      %v5618 = vand.u32 %v5617, 8388607
      %v5619 = vor.u32 %v5618, 8388608
      %v5620 = vsub.s32 0, %v5619
      %v5621 = vadd.s32 %v5616, 1
      %vm5622 = vcmp.gt.s32.totalorder %v5621, 0
      %v5623 = vsel %vm5622, %v5621, 0
      %v5624 = vshrl.u32 %v5623, 5
      %v5625 = vand.u32 %v5623, 31
      %v5626 = vsub.s32 32, %v5625
      %v5627 = vshrl.u32 683565275, %v5626
      %v5628 = vshll.u32 683565275, %v5625
      %v5629 = vshrl.u32 2475754826, %v5626
      %v5630 = vor.u32 %v5628, %v5629
      %v5631 = vshll.u32 2475754826, %v5625
      %v5632 = vshrl.u32 2131351028, %v5626
      %v5633 = vor.u32 %v5631, %v5632
      %v5634 = vshll.u32 2131351028, %v5625
      %v5635 = vshrl.u32 2102212464, %v5626
      %v5636 = vor.u32 %v5634, %v5635
      %v5637 = vshll.u32 2102212464, %v5625
      %v5638 = vshrl.u32 920167782, %v5626
      %v5639 = vor.u32 %v5637, %v5638
      %v5640 = vshll.u32 920167782, %v5625
      %v5641 = vshrl.u32 1326507024, %v5626
      %v5642 = vor.u32 %v5640, %v5641
      %vm5643 = vcmp.lt.s32.totalorder %v5624, 1
      %vm5644 = vcmp.lt.s32.totalorder %v5624, 2
      %vm5645 = vcmp.lt.s32.totalorder %v5624, 3
      %vm5646 = vcmp.lt.s32.totalorder %v5624, 4
      %v5647 = vsel %vm5643, %v5627, %v5630
      %v5648 = vsel %vm5646, %v5636, 2102212464
      %v5649 = vsel %vm5645, %v5633, %v5648
      %v5650 = vsel %vm5644, %v5647, %v5649
      %v5651 = vsel %vm5643, %v5630, %v5633
      %v5652 = vsel %vm5646, %v5639, 920167782
      %v5653 = vsel %vm5645, %v5636, %v5652
      %v5654 = vsel %vm5644, %v5651, %v5653
      %v5655 = vsel %vm5643, %v5633, %v5636
      %v5656 = vsel %vm5646, %v5642, 1326507024
      %v5657 = vsel %vm5645, %v5639, %v5656
      %v5658 = vsel %vm5644, %v5655, %v5657
      %v5659 = vshll.u32 %v5619, 8
      %v5660 = vmul.u32.u64.compose %v5659, %v5658
      %v5661 = vextract.low.u32 %v5660
      %v5662 = vextract.high.u32 %v5660
      %v5663 = vmul.u32.u64.compose %v5659, %v5654
      %v5664 = vextract.low.u32 %v5663
      %v5665 = vextract.high.u32 %v5663
      %v5666 = vmul.u32 %v5659, %v5650
      %v5667 = vadd.s32 %v5662, %v5664
      %vm5668 = vc.u32 %v5662, %v5664
      %v5669 = vadd.s32 %v5665, 1
      %v5670 = vsel %vm5668, %v5669, %v5665
      %v5671 = vadd.s32 %v5666, %v5670
      %v5672 = vadd.s32 %v5671, 536870912
      %v5673 = vshrl.u32 %v5672, 30
      %v5674 = vshll.u32 %v5673, 30
      %v5675 = vsub.s32 %v5671, %v5674
      %vm5676 = vcmp.lt.s32.totalorder %v5675, 0
      %v5677 = vsub.s32 0, %v5675
      %v5678 = vsel %vm5676, %v5677, %v5675
      %v5679 = vclz %v5678
      %v5680 = vsub.s32 %v5679, 2
      %vm5681 = vcmp.gt.s32.totalorder 0, %v5680
      %v5682 = vsel %vm5681, 0, %v5680
      %v5683 = vsub.s32 32, %v5682
      %v5684 = vshll.u32 %v5675, %v5682
      %v5685 = vshrl.u32 %v5667, %v5683
      %v5686 = vor.u32 %v5684, %v5685
      %v5687 = vsub.s32 4294967266, %v5682
      %v5688 = vadd.s32 %v5687, 127
      %v5689 = vshll.u32 %v5688, 23
      %v5690 = vor.u32 4788187, %v5689
      %v5691 = vand.u32 2147483647, %v5690
      %v5693 = vcvt.s32.f32 %v5686
      %v5694 = vmul.f32 %v5693, %v5691
      %v5695 = vxor.u32 %v5694, 2147483648
      %v5696 = vsel %vm5613, %v5695, %v5694
      %v5697 = vsub.s32 4, %v5673
      %v5698 = vsel %vm5613, %v5697, %v5673
      %v5699 = vsel %vm5612, %v739, %v5696
      %v5700 = vsel %vm5612, 0, %v5698
      %v5701 = vcosq.f32.pop %v5699
      %v5702 = vsinq.f32.pop %v5699
      %vm5703 = vweird.f32 %v739
      %v5704 = vadd.s32 %v5700, 3
      %v5705 = vand.u32 %v5704, 3
      %vm5706 = vcmp.lt.s32.totalorder %v5705, 2
      %vm5707 = vcmp.eq.s32.totalorder %v5705, 0
      %v5708 = vxor.u32 %v5702, 2147483648
      %v5709 = vsel %vm5707, %v5701, %v5708
      %vm5710 = vcmp.eq.s32.totalorder %v5705, 2
      %v5711 = vxor.u32 %v5701, 2147483648
      %v5712 = vsel %vm5710, %v5711, %v5702
      %v5713 = vsel %vm5706, %v5709, %v5712
      %v5714 = vsel %vm5703, nan, %v5713
      %v5715 = vand.u32 2147483647, %v744
      %vm5716 = vcmp.le.f32.partialorder %v5715, 0.7853982
      %vm5717 = vcmp.lt.s32.totalorder %v744, 0
      %v5718 = vand.u32 %v744, 2139095040
      %v5719 = vshrl.u32 %v5718, 23
      %v5720 = vsub.s32 %v5719, 127
      %v5721 = vand.u32 2147483647, %v744
      %v5722 = vand.u32 %v5721, 8388607
      %v5723 = vor.u32 %v5722, 8388608
      %v5724 = vsub.s32 0, %v5723
      %v5725 = vadd.s32 %v5720, 1
      %vm5726 = vcmp.gt.s32.totalorder %v5725, 0
      %v5727 = vsel %vm5726, %v5725, 0
      %v5728 = vshrl.u32 %v5727, 5
      %v5729 = vand.u32 %v5727, 31
      %v5730 = vsub.s32 32, %v5729
      %v5731 = vshrl.u32 683565275, %v5730
      %v5732 = vshll.u32 683565275, %v5729
      %v5733 = vshrl.u32 2475754826, %v5730
      %v5734 = vor.u32 %v5732, %v5733
      %v5735 = vshll.u32 2475754826, %v5729
      %v5736 = vshrl.u32 2131351028, %v5730
      %v5737 = vor.u32 %v5735, %v5736
      %v5738 = vshll.u32 2131351028, %v5729
      %v5739 = vshrl.u32 2102212464, %v5730
      %v5740 = vor.u32 %v5738, %v5739
      %v5741 = vshll.u32 2102212464, %v5729
      %v5742 = vshrl.u32 920167782, %v5730
      %v5743 = vor.u32 %v5741, %v5742
      %v5744 = vshll.u32 920167782, %v5729
      %v5745 = vshrl.u32 1326507024, %v5730
      %v5746 = vor.u32 %v5744, %v5745
      %vm5747 = vcmp.lt.s32.totalorder %v5728, 1
      %vm5748 = vcmp.lt.s32.totalorder %v5728, 2
      %vm5749 = vcmp.lt.s32.totalorder %v5728, 3
      %vm5750 = vcmp.lt.s32.totalorder %v5728, 4
      %v5751 = vsel %vm5747, %v5731, %v5734
      %v5752 = vsel %vm5750, %v5740, 2102212464
      %v5753 = vsel %vm5749, %v5737, %v5752
      %v5754 = vsel %vm5748, %v5751, %v5753
      %v5755 = vsel %vm5747, %v5734, %v5737
      %v5756 = vsel %vm5750, %v5743, 920167782
      %v5757 = vsel %vm5749, %v5740, %v5756
      %v5758 = vsel %vm5748, %v5755, %v5757
      %v5759 = vsel %vm5747, %v5737, %v5740
      %v5760 = vsel %vm5750, %v5746, 1326507024
      %v5761 = vsel %vm5749, %v5743, %v5760
      %v5762 = vsel %vm5748, %v5759, %v5761
      %v5763 = vshll.u32 %v5723, 8
      %v5764 = vmul.u32.u64.compose %v5763, %v5762
      %v5765 = vextract.low.u32 %v5764
      %v5766 = vextract.high.u32 %v5764
      %v5767 = vmul.u32.u64.compose %v5763, %v5758
      %v5768 = vextract.low.u32 %v5767
      %v5769 = vextract.high.u32 %v5767
      %v5770 = vmul.u32 %v5763, %v5754
      %v5771 = vadd.s32 %v5766, %v5768
      %vm5772 = vc.u32 %v5766, %v5768
      %v5773 = vadd.s32 %v5769, 1
      %v5774 = vsel %vm5772, %v5773, %v5769
      %v5775 = vadd.s32 %v5770, %v5774
      %v5776 = vadd.s32 %v5775, 536870912
      %v5777 = vshrl.u32 %v5776, 30
      %v5778 = vshll.u32 %v5777, 30
      %v5779 = vsub.s32 %v5775, %v5778
      %vm5780 = vcmp.lt.s32.totalorder %v5779, 0
      %v5781 = vsub.s32 0, %v5779
      %v5782 = vsel %vm5780, %v5781, %v5779
      %v5783 = vclz %v5782
      %v5784 = vsub.s32 %v5783, 2
      %vm5785 = vcmp.gt.s32.totalorder 0, %v5784
      %v5786 = vsel %vm5785, 0, %v5784
      %v5787 = vsub.s32 32, %v5786
      %v5788 = vshll.u32 %v5779, %v5786
      %v5789 = vshrl.u32 %v5771, %v5787
      %v5790 = vor.u32 %v5788, %v5789
      %v5791 = vsub.s32 4294967266, %v5786
      %v5792 = vadd.s32 %v5791, 127
      %v5793 = vshll.u32 %v5792, 23
      %v5794 = vor.u32 4788187, %v5793
      %v5795 = vand.u32 2147483647, %v5794
      %v5797 = vcvt.s32.f32 %v5790
      %v5798 = vmul.f32 %v5797, %v5795
      %v5799 = vxor.u32 %v5798, 2147483648
      %v5800 = vsel %vm5717, %v5799, %v5798
      %v5801 = vsub.s32 4, %v5777
      %v5802 = vsel %vm5717, %v5801, %v5777
      %v5803 = vsel %vm5716, %v744, %v5800
      %v5804 = vsel %vm5716, 0, %v5802
      %v5805 = vcosq.f32.pop %v5803
      %v5806 = vsinq.f32.pop %v5803
      %vm5807 = vweird.f32 %v744
      %v5808 = vadd.s32 %v5804, 3
      %v5809 = vand.u32 %v5808, 3
      %vm5810 = vcmp.lt.s32.totalorder %v5809, 2
      %vm5811 = vcmp.eq.s32.totalorder %v5809, 0
      %v5812 = vxor.u32 %v5806, 2147483648
      %v5813 = vsel %vm5811, %v5805, %v5812
      %vm5814 = vcmp.eq.s32.totalorder %v5809, 2
      %v5815 = vxor.u32 %v5805, 2147483648
      %v5816 = vsel %vm5814, %v5815, %v5806
      %v5817 = vsel %vm5810, %v5813, %v5816
      %v5818 = vsel %vm5807, nan, %v5817
      %v5819 = vand.u32 2147483647, %v749
      %vm5820 = vcmp.le.f32.partialorder %v5819, 0.7853982
      %vm5821 = vcmp.lt.s32.totalorder %v749, 0
      %v5822 = vand.u32 %v749, 2139095040
      %v5823 = vshrl.u32 %v5822, 23
      %v5824 = vsub.s32 %v5823, 127
      %v5825 = vand.u32 2147483647, %v749
      %v5826 = vand.u32 %v5825, 8388607
      %v5827 = vor.u32 %v5826, 8388608
      %v5828 = vsub.s32 0, %v5827
      %v5829 = vadd.s32 %v5824, 1
      %vm5830 = vcmp.gt.s32.totalorder %v5829, 0
      %v5831 = vsel %vm5830, %v5829, 0
      %v5832 = vshrl.u32 %v5831, 5
      %v5833 = vand.u32 %v5831, 31
      %v5834 = vsub.s32 32, %v5833
      %v5835 = vshrl.u32 683565275, %v5834
      %v5836 = vshll.u32 683565275, %v5833
      %v5837 = vshrl.u32 2475754826, %v5834
      %v5838 = vor.u32 %v5836, %v5837
      %v5839 = vshll.u32 2475754826, %v5833
      %v5840 = vshrl.u32 2131351028, %v5834
      %v5841 = vor.u32 %v5839, %v5840
      %v5842 = vshll.u32 2131351028, %v5833
      %v5843 = vshrl.u32 2102212464, %v5834
      %v5844 = vor.u32 %v5842, %v5843
      %v5845 = vshll.u32 2102212464, %v5833
      %v5846 = vshrl.u32 920167782, %v5834
      %v5847 = vor.u32 %v5845, %v5846
      %v5848 = vshll.u32 920167782, %v5833
      %v5849 = vshrl.u32 1326507024, %v5834
      %v5850 = vor.u32 %v5848, %v5849
      %vm5851 = vcmp.lt.s32.totalorder %v5832, 1
      %vm5852 = vcmp.lt.s32.totalorder %v5832, 2
      %vm5853 = vcmp.lt.s32.totalorder %v5832, 3
      %vm5854 = vcmp.lt.s32.totalorder %v5832, 4
      %v5855 = vsel %vm5851, %v5835, %v5838
      %v5856 = vsel %vm5854, %v5844, 2102212464
      %v5857 = vsel %vm5853, %v5841, %v5856
      %v5858 = vsel %vm5852, %v5855, %v5857
      %v5859 = vsel %vm5851, %v5838, %v5841
      %v5860 = vsel %vm5854, %v5847, 920167782
      %v5861 = vsel %vm5853, %v5844, %v5860
      %v5862 = vsel %vm5852, %v5859, %v5861
      %v5863 = vsel %vm5851, %v5841, %v5844
      %v5864 = vsel %vm5854, %v5850, 1326507024
      %v5865 = vsel %vm5853, %v5847, %v5864
      %v5866 = vsel %vm5852, %v5863, %v5865
      %v5867 = vshll.u32 %v5827, 8
      %v5868 = vmul.u32.u64.compose %v5867, %v5866
      %v5869 = vextract.low.u32 %v5868
      %v5870 = vextract.high.u32 %v5868
      %v5871 = vmul.u32.u64.compose %v5867, %v5862
      %v5872 = vextract.low.u32 %v5871
      %v5873 = vextract.high.u32 %v5871
      %v5874 = vmul.u32 %v5867, %v5858
      %v5875 = vadd.s32 %v5870, %v5872
      %vm5876 = vc.u32 %v5870, %v5872
      %v5877 = vadd.s32 %v5873, 1
      %v5878 = vsel %vm5876, %v5877, %v5873
      %v5879 = vadd.s32 %v5874, %v5878
      %v5880 = vadd.s32 %v5879, 536870912
      %v5881 = vshrl.u32 %v5880, 30
      %v5882 = vshll.u32 %v5881, 30
      %v5883 = vsub.s32 %v5879, %v5882
      %vm5884 = vcmp.lt.s32.totalorder %v5883, 0
      %v5885 = vsub.s32 0, %v5883
      %v5886 = vsel %vm5884, %v5885, %v5883
      %v5887 = vclz %v5886
      %v5888 = vsub.s32 %v5887, 2
      %vm5889 = vcmp.gt.s32.totalorder 0, %v5888
      %v5890 = vsel %vm5889, 0, %v5888
      %v5891 = vsub.s32 32, %v5890
      %v5892 = vshll.u32 %v5883, %v5890
      %v5893 = vshrl.u32 %v5875, %v5891
      %v5894 = vor.u32 %v5892, %v5893
      %v5895 = vsub.s32 4294967266, %v5890
      %v5896 = vadd.s32 %v5895, 127
      %v5897 = vshll.u32 %v5896, 23
      %v5898 = vor.u32 4788187, %v5897
      %v5899 = vand.u32 2147483647, %v5898
      %v5901 = vcvt.s32.f32 %v5894
      %v5902 = vmul.f32 %v5901, %v5899
      %v5903 = vxor.u32 %v5902, 2147483648
      %v5904 = vsel %vm5821, %v5903, %v5902
      %v5905 = vsub.s32 4, %v5881
      %v5906 = vsel %vm5821, %v5905, %v5881
      %v5907 = vsel %vm5820, %v749, %v5904
      %v5908 = vsel %vm5820, 0, %v5906
      %v5909 = vcosq.f32.pop %v5907
      %v5910 = vsinq.f32.pop %v5907
      %vm5911 = vweird.f32 %v749
      %v5912 = vadd.s32 %v5908, 3
      %v5913 = vand.u32 %v5912, 3
      %vm5914 = vcmp.lt.s32.totalorder %v5913, 2
      %vm5915 = vcmp.eq.s32.totalorder %v5913, 0
      %v5916 = vxor.u32 %v5910, 2147483648
      %v5917 = vsel %vm5915, %v5909, %v5916
      %vm5918 = vcmp.eq.s32.totalorder %v5913, 2
      %v5919 = vxor.u32 %v5909, 2147483648
      %v5920 = vsel %vm5918, %v5919, %v5910
      %v5921 = vsel %vm5914, %v5917, %v5920
      %v5922 = vsel %vm5911, nan, %v5921
      %v5923 = vand.u32 2147483647, %v754
      %vm5924 = vcmp.le.f32.partialorder %v5923, 0.7853982
      %vm5925 = vcmp.lt.s32.totalorder %v754, 0
      %v5926 = vand.u32 %v754, 2139095040
      %v5927 = vshrl.u32 %v5926, 23
      %v5928 = vsub.s32 %v5927, 127
      %v5929 = vand.u32 2147483647, %v754
      %v5930 = vand.u32 %v5929, 8388607
      %v5931 = vor.u32 %v5930, 8388608
      %v5932 = vsub.s32 0, %v5931
      %v5933 = vadd.s32 %v5928, 1
      %vm5934 = vcmp.gt.s32.totalorder %v5933, 0
      %v5935 = vsel %vm5934, %v5933, 0
      %v5936 = vshrl.u32 %v5935, 5
      %v5937 = vand.u32 %v5935, 31
      %v5938 = vsub.s32 32, %v5937
      %v5939 = vshrl.u32 683565275, %v5938
      %v5940 = vshll.u32 683565275, %v5937
      %v5941 = vshrl.u32 2475754826, %v5938
      %v5942 = vor.u32 %v5940, %v5941
      %v5943 = vshll.u32 2475754826, %v5937
      %v5944 = vshrl.u32 2131351028, %v5938
      %v5945 = vor.u32 %v5943, %v5944
      %v5946 = vshll.u32 2131351028, %v5937
      %v5947 = vshrl.u32 2102212464, %v5938
      %v5948 = vor.u32 %v5946, %v5947
      %v5949 = vshll.u32 2102212464, %v5937
      %v5950 = vshrl.u32 920167782, %v5938
      %v5951 = vor.u32 %v5949, %v5950
      %v5952 = vshll.u32 920167782, %v5937
      %v5953 = vshrl.u32 1326507024, %v5938
      %v5954 = vor.u32 %v5952, %v5953
      %vm5955 = vcmp.lt.s32.totalorder %v5936, 1
      %vm5956 = vcmp.lt.s32.totalorder %v5936, 2
      %vm5957 = vcmp.lt.s32.totalorder %v5936, 3
      %vm5958 = vcmp.lt.s32.totalorder %v5936, 4
      %v5959 = vsel %vm5955, %v5939, %v5942
      %v5960 = vsel %vm5958, %v5948, 2102212464
      %v5961 = vsel %vm5957, %v5945, %v5960
      %v5962 = vsel %vm5956, %v5959, %v5961
      %v5963 = vsel %vm5955, %v5942, %v5945
      %v5964 = vsel %vm5958, %v5951, 920167782
      %v5965 = vsel %vm5957, %v5948, %v5964
      %v5966 = vsel %vm5956, %v5963, %v5965
      %v5967 = vsel %vm5955, %v5945, %v5948
      %v5968 = vsel %vm5958, %v5954, 1326507024
      %v5969 = vsel %vm5957, %v5951, %v5968
      %v5970 = vsel %vm5956, %v5967, %v5969
      %v5971 = vshll.u32 %v5931, 8
      %v5972 = vmul.u32.u64.compose %v5971, %v5970
      %v5973 = vextract.low.u32 %v5972
      %v5974 = vextract.high.u32 %v5972
      %v5975 = vmul.u32.u64.compose %v5971, %v5966
      %v5976 = vextract.low.u32 %v5975
      %v5977 = vextract.high.u32 %v5975
      %v5978 = vmul.u32 %v5971, %v5962
      %v5979 = vadd.s32 %v5974, %v5976
      %vm5980 = vc.u32 %v5974, %v5976
      %v5981 = vadd.s32 %v5977, 1
      %v5982 = vsel %vm5980, %v5981, %v5977
      %v5983 = vadd.s32 %v5978, %v5982
      %v5984 = vadd.s32 %v5983, 536870912
      %v5985 = vshrl.u32 %v5984, 30
      %v5986 = vshll.u32 %v5985, 30
      %v5987 = vsub.s32 %v5983, %v5986
      %vm5988 = vcmp.lt.s32.totalorder %v5987, 0
      %v5989 = vsub.s32 0, %v5987
      %v5990 = vsel %vm5988, %v5989, %v5987
      %v5991 = vclz %v5990
      %v5992 = vsub.s32 %v5991, 2
      %vm5993 = vcmp.gt.s32.totalorder 0, %v5992
      %v5994 = vsel %vm5993, 0, %v5992
      %v5995 = vsub.s32 32, %v5994
      %v5996 = vshll.u32 %v5987, %v5994
      %v5997 = vshrl.u32 %v5979, %v5995
      %v5998 = vor.u32 %v5996, %v5997
      %v5999 = vsub.s32 4294967266, %v5994
      %v6000 = vadd.s32 %v5999, 127
      %v6001 = vshll.u32 %v6000, 23
      %v6002 = vor.u32 4788187, %v6001
      %v6003 = vand.u32 2147483647, %v6002
      %v6005 = vcvt.s32.f32 %v5998
      %v6006 = vmul.f32 %v6005, %v6003
      %v6007 = vxor.u32 %v6006, 2147483648
      %v6008 = vsel %vm5925, %v6007, %v6006
      %v6009 = vsub.s32 4, %v5985
      %v6010 = vsel %vm5925, %v6009, %v5985
      %v6011 = vsel %vm5924, %v754, %v6008
      %v6012 = vsel %vm5924, 0, %v6010
      %v6013 = vcosq.f32.pop %v6011
      %v6014 = vsinq.f32.pop %v6011
      %vm6015 = vweird.f32 %v754
      %v6016 = vadd.s32 %v6012, 3
      %v6017 = vand.u32 %v6016, 3
      %vm6018 = vcmp.lt.s32.totalorder %v6017, 2
      %vm6019 = vcmp.eq.s32.totalorder %v6017, 0
      %v6020 = vxor.u32 %v6014, 2147483648
      %v6021 = vsel %vm6019, %v6013, %v6020
      %vm6022 = vcmp.eq.s32.totalorder %v6017, 2
      %v6023 = vxor.u32 %v6013, 2147483648
      %v6024 = vsel %vm6022, %v6023, %v6014
      %v6025 = vsel %vm6018, %v6021, %v6024
      %v6026 = vsel %vm6015, nan, %v6025
      %v6027 = vand.u32 2147483647, %v759
      %vm6028 = vcmp.le.f32.partialorder %v6027, 0.7853982
      %vm6029 = vcmp.lt.s32.totalorder %v759, 0
      %v6030 = vand.u32 %v759, 2139095040
      %v6031 = vshrl.u32 %v6030, 23
      %v6032 = vsub.s32 %v6031, 127
      %v6033 = vand.u32 2147483647, %v759
      %v6034 = vand.u32 %v6033, 8388607
      %v6035 = vor.u32 %v6034, 8388608
      %v6036 = vsub.s32 0, %v6035
      %v6037 = vadd.s32 %v6032, 1
      %vm6038 = vcmp.gt.s32.totalorder %v6037, 0
      %v6039 = vsel %vm6038, %v6037, 0
      %v6040 = vshrl.u32 %v6039, 5
      %v6041 = vand.u32 %v6039, 31
      %v6042 = vsub.s32 32, %v6041
      %v6043 = vshrl.u32 683565275, %v6042
      %v6044 = vshll.u32 683565275, %v6041
      %v6045 = vshrl.u32 2475754826, %v6042
      %v6046 = vor.u32 %v6044, %v6045
      %v6047 = vshll.u32 2475754826, %v6041
      %v6048 = vshrl.u32 2131351028, %v6042
      %v6049 = vor.u32 %v6047, %v6048
      %v6050 = vshll.u32 2131351028, %v6041
      %v6051 = vshrl.u32 2102212464, %v6042
      %v6052 = vor.u32 %v6050, %v6051
      %v6053 = vshll.u32 2102212464, %v6041
      %v6054 = vshrl.u32 920167782, %v6042
      %v6055 = vor.u32 %v6053, %v6054
      %v6056 = vshll.u32 920167782, %v6041
      %v6057 = vshrl.u32 1326507024, %v6042
      %v6058 = vor.u32 %v6056, %v6057
      %vm6059 = vcmp.lt.s32.totalorder %v6040, 1
      %vm6060 = vcmp.lt.s32.totalorder %v6040, 2
      %vm6061 = vcmp.lt.s32.totalorder %v6040, 3
      %vm6062 = vcmp.lt.s32.totalorder %v6040, 4
      %v6063 = vsel %vm6059, %v6043, %v6046
      %v6064 = vsel %vm6062, %v6052, 2102212464
      %v6065 = vsel %vm6061, %v6049, %v6064
      %v6066 = vsel %vm6060, %v6063, %v6065
      %v6067 = vsel %vm6059, %v6046, %v6049
      %v6068 = vsel %vm6062, %v6055, 920167782
      %v6069 = vsel %vm6061, %v6052, %v6068
      %v6070 = vsel %vm6060, %v6067, %v6069
      %v6071 = vsel %vm6059, %v6049, %v6052
      %v6072 = vsel %vm6062, %v6058, 1326507024
      %v6073 = vsel %vm6061, %v6055, %v6072
      %v6074 = vsel %vm6060, %v6071, %v6073
      %v6075 = vshll.u32 %v6035, 8
      %v6076 = vmul.u32.u64.compose %v6075, %v6074
      %v6077 = vextract.low.u32 %v6076
      %v6078 = vextract.high.u32 %v6076
      %v6079 = vmul.u32.u64.compose %v6075, %v6070
      %v6080 = vextract.low.u32 %v6079
      %v6081 = vextract.high.u32 %v6079
      %v6082 = vmul.u32 %v6075, %v6066
      %v6083 = vadd.s32 %v6078, %v6080
      %vm6084 = vc.u32 %v6078, %v6080
      %v6085 = vadd.s32 %v6081, 1
      %v6086 = vsel %vm6084, %v6085, %v6081
      %v6087 = vadd.s32 %v6082, %v6086
      %v6088 = vadd.s32 %v6087, 536870912
      %v6089 = vshrl.u32 %v6088, 30
      %v6090 = vshll.u32 %v6089, 30
      %v6091 = vsub.s32 %v6087, %v6090
      %vm6092 = vcmp.lt.s32.totalorder %v6091, 0
      %v6093 = vsub.s32 0, %v6091
      %v6094 = vsel %vm6092, %v6093, %v6091
      %v6095 = vclz %v6094
      %v6096 = vsub.s32 %v6095, 2
      %vm6097 = vcmp.gt.s32.totalorder 0, %v6096
      %v6098 = vsel %vm6097, 0, %v6096
      %v6099 = vsub.s32 32, %v6098
      %v6100 = vshll.u32 %v6091, %v6098
      %v6101 = vshrl.u32 %v6083, %v6099
      %v6102 = vor.u32 %v6100, %v6101
      %v6103 = vsub.s32 4294967266, %v6098
      %v6104 = vadd.s32 %v6103, 127
      %v6105 = vshll.u32 %v6104, 23
      %v6106 = vor.u32 4788187, %v6105
      %v6107 = vand.u32 2147483647, %v6106
      %v6109 = vcvt.s32.f32 %v6102
      %v6110 = vmul.f32 %v6109, %v6107
      %v6111 = vxor.u32 %v6110, 2147483648
      %v6112 = vsel %vm6029, %v6111, %v6110
      %v6113 = vsub.s32 4, %v6089
      %v6114 = vsel %vm6029, %v6113, %v6089
      %v6115 = vsel %vm6028, %v759, %v6112
      %v6116 = vsel %vm6028, 0, %v6114
      %v6117 = vcosq.f32.pop %v6115
      %v6118 = vsinq.f32.pop %v6115
      %vm6119 = vweird.f32 %v759
      %v6120 = vadd.s32 %v6116, 3
      %v6121 = vand.u32 %v6120, 3
      %vm6122 = vcmp.lt.s32.totalorder %v6121, 2
      %vm6123 = vcmp.eq.s32.totalorder %v6121, 0
      %v6124 = vxor.u32 %v6118, 2147483648
      %v6125 = vsel %vm6123, %v6117, %v6124
      %vm6126 = vcmp.eq.s32.totalorder %v6121, 2
      %v6127 = vxor.u32 %v6117, 2147483648
      %v6128 = vsel %vm6126, %v6127, %v6118
      %v6129 = vsel %vm6122, %v6125, %v6128
      %v6130 = vsel %vm6119, nan, %v6129
      %v6131 = vand.u32 2147483647, %v764
      %vm6132 = vcmp.le.f32.partialorder %v6131, 0.7853982
      %vm6133 = vcmp.lt.s32.totalorder %v764, 0
      %v6134 = vand.u32 %v764, 2139095040
      %v6135 = vshrl.u32 %v6134, 23
      %v6136 = vsub.s32 %v6135, 127
      %v6137 = vand.u32 2147483647, %v764
      %v6138 = vand.u32 %v6137, 8388607
      %v6139 = vor.u32 %v6138, 8388608
      %v6140 = vsub.s32 0, %v6139
      %v6141 = vadd.s32 %v6136, 1
      %vm6142 = vcmp.gt.s32.totalorder %v6141, 0
      %v6143 = vsel %vm6142, %v6141, 0
      %v6144 = vshrl.u32 %v6143, 5
      %v6145 = vand.u32 %v6143, 31
      %v6146 = vsub.s32 32, %v6145
      %v6147 = vshrl.u32 683565275, %v6146
      %v6148 = vshll.u32 683565275, %v6145
      %v6149 = vshrl.u32 2475754826, %v6146
      %v6150 = vor.u32 %v6148, %v6149
      %v6151 = vshll.u32 2475754826, %v6145
      %v6152 = vshrl.u32 2131351028, %v6146
      %v6153 = vor.u32 %v6151, %v6152
      %v6154 = vshll.u32 2131351028, %v6145
      %v6155 = vshrl.u32 2102212464, %v6146
      %v6156 = vor.u32 %v6154, %v6155
      %v6157 = vshll.u32 2102212464, %v6145
      %v6158 = vshrl.u32 920167782, %v6146
      %v6159 = vor.u32 %v6157, %v6158
      %v6160 = vshll.u32 920167782, %v6145
      %v6161 = vshrl.u32 1326507024, %v6146
      %v6162 = vor.u32 %v6160, %v6161
      %vm6163 = vcmp.lt.s32.totalorder %v6144, 1
      %vm6164 = vcmp.lt.s32.totalorder %v6144, 2
      %vm6165 = vcmp.lt.s32.totalorder %v6144, 3
      %vm6166 = vcmp.lt.s32.totalorder %v6144, 4
      %v6167 = vsel %vm6163, %v6147, %v6150
      %v6168 = vsel %vm6166, %v6156, 2102212464
      %v6169 = vsel %vm6165, %v6153, %v6168
      %v6170 = vsel %vm6164, %v6167, %v6169
      %v6171 = vsel %vm6163, %v6150, %v6153
      %v6172 = vsel %vm6166, %v6159, 920167782
      %v6173 = vsel %vm6165, %v6156, %v6172
      %v6174 = vsel %vm6164, %v6171, %v6173
      %v6175 = vsel %vm6163, %v6153, %v6156
      %v6176 = vsel %vm6166, %v6162, 1326507024
      %v6177 = vsel %vm6165, %v6159, %v6176
      %v6178 = vsel %vm6164, %v6175, %v6177
      %v6179 = vshll.u32 %v6139, 8
      %v6180 = vmul.u32.u64.compose %v6179, %v6178
      %v6181 = vextract.low.u32 %v6180
      %v6182 = vextract.high.u32 %v6180
      %v6183 = vmul.u32.u64.compose %v6179, %v6174
      %v6184 = vextract.low.u32 %v6183
      %v6185 = vextract.high.u32 %v6183
      %v6186 = vmul.u32 %v6179, %v6170
      %v6187 = vadd.s32 %v6182, %v6184
      %vm6188 = vc.u32 %v6182, %v6184
      %v6189 = vadd.s32 %v6185, 1
      %v6190 = vsel %vm6188, %v6189, %v6185
      %v6191 = vadd.s32 %v6186, %v6190
      %v6192 = vadd.s32 %v6191, 536870912
      %v6193 = vshrl.u32 %v6192, 30
      %v6194 = vshll.u32 %v6193, 30
      %v6195 = vsub.s32 %v6191, %v6194
      %vm6196 = vcmp.lt.s32.totalorder %v6195, 0
      %v6197 = vsub.s32 0, %v6195
      %v6198 = vsel %vm6196, %v6197, %v6195
      %v6199 = vclz %v6198
      %v6200 = vsub.s32 %v6199, 2
      %vm6201 = vcmp.gt.s32.totalorder 0, %v6200
      %v6202 = vsel %vm6201, 0, %v6200
      %v6203 = vsub.s32 32, %v6202
      %v6204 = vshll.u32 %v6195, %v6202
      %v6205 = vshrl.u32 %v6187, %v6203
      %v6206 = vor.u32 %v6204, %v6205
      %v6207 = vsub.s32 4294967266, %v6202
      %v6208 = vadd.s32 %v6207, 127
      %v6209 = vshll.u32 %v6208, 23
      %v6210 = vor.u32 4788187, %v6209
      %v6211 = vand.u32 2147483647, %v6210
      %v6213 = vcvt.s32.f32 %v6206
      %v6214 = vmul.f32 %v6213, %v6211
      %v6215 = vxor.u32 %v6214, 2147483648
      %v6216 = vsel %vm6133, %v6215, %v6214
      %v6217 = vsub.s32 4, %v6193
      %v6218 = vsel %vm6133, %v6217, %v6193
      %v6219 = vsel %vm6132, %v764, %v6216
      %v6220 = vsel %vm6132, 0, %v6218
      %v6221 = vcosq.f32.pop %v6219
      %v6222 = vsinq.f32.pop %v6219
      %vm6223 = vweird.f32 %v764
      %v6224 = vadd.s32 %v6220, 3
      %v6225 = vand.u32 %v6224, 3
      %vm6226 = vcmp.lt.s32.totalorder %v6225, 2
      %vm6227 = vcmp.eq.s32.totalorder %v6225, 0
      %v6228 = vxor.u32 %v6222, 2147483648
      %v6229 = vsel %vm6227, %v6221, %v6228
      %vm6230 = vcmp.eq.s32.totalorder %v6225, 2
      %v6231 = vxor.u32 %v6221, 2147483648
      %v6232 = vsel %vm6230, %v6231, %v6222
      %v6233 = vsel %vm6226, %v6229, %v6232
      %v6234 = vsel %vm6223, nan, %v6233
      %v6235 = vand.u32 2147483647, %v769
      %vm6236 = vcmp.le.f32.partialorder %v6235, 0.7853982
      %vm6237 = vcmp.lt.s32.totalorder %v769, 0
      %v6238 = vand.u32 %v769, 2139095040
      %v6239 = vshrl.u32 %v6238, 23
      %v6240 = vsub.s32 %v6239, 127
      %v6241 = vand.u32 2147483647, %v769
      %v6242 = vand.u32 %v6241, 8388607
      %v6243 = vor.u32 %v6242, 8388608
      %v6244 = vsub.s32 0, %v6243
      %v6245 = vadd.s32 %v6240, 1
      %vm6246 = vcmp.gt.s32.totalorder %v6245, 0
      %v6247 = vsel %vm6246, %v6245, 0
      %v6248 = vshrl.u32 %v6247, 5
      %v6249 = vand.u32 %v6247, 31
      %v6250 = vsub.s32 32, %v6249
      %v6251 = vshrl.u32 683565275, %v6250
      %v6252 = vshll.u32 683565275, %v6249
      %v6253 = vshrl.u32 2475754826, %v6250
      %v6254 = vor.u32 %v6252, %v6253
      %v6255 = vshll.u32 2475754826, %v6249
      %v6256 = vshrl.u32 2131351028, %v6250
      %v6257 = vor.u32 %v6255, %v6256
      %v6258 = vshll.u32 2131351028, %v6249
      %v6259 = vshrl.u32 2102212464, %v6250
      %v6260 = vor.u32 %v6258, %v6259
      %v6261 = vshll.u32 2102212464, %v6249
      %v6262 = vshrl.u32 920167782, %v6250
      %v6263 = vor.u32 %v6261, %v6262
      %v6264 = vshll.u32 920167782, %v6249
      %v6265 = vshrl.u32 1326507024, %v6250
      %v6266 = vor.u32 %v6264, %v6265
      %vm6267 = vcmp.lt.s32.totalorder %v6248, 1
      %vm6268 = vcmp.lt.s32.totalorder %v6248, 2
      %vm6269 = vcmp.lt.s32.totalorder %v6248, 3
      %vm6270 = vcmp.lt.s32.totalorder %v6248, 4
      %v6271 = vsel %vm6267, %v6251, %v6254
      %v6272 = vsel %vm6270, %v6260, 2102212464
      %v6273 = vsel %vm6269, %v6257, %v6272
      %v6274 = vsel %vm6268, %v6271, %v6273
      %v6275 = vsel %vm6267, %v6254, %v6257
      %v6276 = vsel %vm6270, %v6263, 920167782
      %v6277 = vsel %vm6269, %v6260, %v6276
      %v6278 = vsel %vm6268, %v6275, %v6277
      %v6279 = vsel %vm6267, %v6257, %v6260
      %v6280 = vsel %vm6270, %v6266, 1326507024
      %v6281 = vsel %vm6269, %v6263, %v6280
      %v6282 = vsel %vm6268, %v6279, %v6281
      %v6283 = vshll.u32 %v6243, 8
      %v6284 = vmul.u32.u64.compose %v6283, %v6282
      %v6285 = vextract.low.u32 %v6284
      %v6286 = vextract.high.u32 %v6284
      %v6287 = vmul.u32.u64.compose %v6283, %v6278
      %v6288 = vextract.low.u32 %v6287
      %v6289 = vextract.high.u32 %v6287
      %v6290 = vmul.u32 %v6283, %v6274
      %v6291 = vadd.s32 %v6286, %v6288
      %vm6292 = vc.u32 %v6286, %v6288
      %v6293 = vadd.s32 %v6289, 1
      %v6294 = vsel %vm6292, %v6293, %v6289
      %v6295 = vadd.s32 %v6290, %v6294
      %v6296 = vadd.s32 %v6295, 536870912
      %v6297 = vshrl.u32 %v6296, 30
      %v6298 = vshll.u32 %v6297, 30
      %v6299 = vsub.s32 %v6295, %v6298
      %vm6300 = vcmp.lt.s32.totalorder %v6299, 0
      %v6301 = vsub.s32 0, %v6299
      %v6302 = vsel %vm6300, %v6301, %v6299
      %v6303 = vclz %v6302
      %v6304 = vsub.s32 %v6303, 2
      %vm6305 = vcmp.gt.s32.totalorder 0, %v6304
      %v6306 = vsel %vm6305, 0, %v6304
      %v6307 = vsub.s32 32, %v6306
      %v6308 = vshll.u32 %v6299, %v6306
      %v6309 = vshrl.u32 %v6291, %v6307
      %v6310 = vor.u32 %v6308, %v6309
      %v6311 = vsub.s32 4294967266, %v6306
      %v6312 = vadd.s32 %v6311, 127
      %v6313 = vshll.u32 %v6312, 23
      %v6314 = vor.u32 4788187, %v6313
      %v6315 = vand.u32 2147483647, %v6314
      %v6317 = vcvt.s32.f32 %v6310
      %v6318 = vmul.f32 %v6317, %v6315
      %v6319 = vxor.u32 %v6318, 2147483648
      %v6320 = vsel %vm6237, %v6319, %v6318
      %v6321 = vsub.s32 4, %v6297
      %v6322 = vsel %vm6237, %v6321, %v6297
      %v6323 = vsel %vm6236, %v769, %v6320
      %v6324 = vsel %vm6236, 0, %v6322
      %v6325 = vcosq.f32.pop %v6323
      %v6326 = vsinq.f32.pop %v6323
      %vm6327 = vweird.f32 %v769
      %v6328 = vadd.s32 %v6324, 3
      %v6329 = vand.u32 %v6328, 3
      %vm6330 = vcmp.lt.s32.totalorder %v6329, 2
      %vm6331 = vcmp.eq.s32.totalorder %v6329, 0
      %v6332 = vxor.u32 %v6326, 2147483648
      %v6333 = vsel %vm6331, %v6325, %v6332
      %vm6334 = vcmp.eq.s32.totalorder %v6329, 2
      %v6335 = vxor.u32 %v6325, 2147483648
      %v6336 = vsel %vm6334, %v6335, %v6326
      %v6337 = vsel %vm6330, %v6333, %v6336
      %v6338 = vsel %vm6327, nan, %v6337
      %v6339 = vand.u32 2147483647, %v774
      %vm6340 = vcmp.le.f32.partialorder %v6339, 0.7853982
      %vm6341 = vcmp.lt.s32.totalorder %v774, 0
      %v6342 = vand.u32 %v774, 2139095040
      %v6343 = vshrl.u32 %v6342, 23
      %v6344 = vsub.s32 %v6343, 127
      %v6345 = vand.u32 2147483647, %v774
      %v6346 = vand.u32 %v6345, 8388607
      %v6347 = vor.u32 %v6346, 8388608
      %v6348 = vsub.s32 0, %v6347
      %v6349 = vadd.s32 %v6344, 1
      %vm6350 = vcmp.gt.s32.totalorder %v6349, 0
      %v6351 = vsel %vm6350, %v6349, 0
      %v6352 = vshrl.u32 %v6351, 5
      %v6353 = vand.u32 %v6351, 31
      %v6354 = vsub.s32 32, %v6353
      %v6355 = vshrl.u32 683565275, %v6354
      %v6356 = vshll.u32 683565275, %v6353
      %v6357 = vshrl.u32 2475754826, %v6354
      %v6358 = vor.u32 %v6356, %v6357
      %v6359 = vshll.u32 2475754826, %v6353
      %v6360 = vshrl.u32 2131351028, %v6354
      %v6361 = vor.u32 %v6359, %v6360
      %v6362 = vshll.u32 2131351028, %v6353
      %v6363 = vshrl.u32 2102212464, %v6354
      %v6364 = vor.u32 %v6362, %v6363
      %v6365 = vshll.u32 2102212464, %v6353
      %v6366 = vshrl.u32 920167782, %v6354
      %v6367 = vor.u32 %v6365, %v6366
      %v6368 = vshll.u32 920167782, %v6353
      %v6369 = vshrl.u32 1326507024, %v6354
      %v6370 = vor.u32 %v6368, %v6369
      %vm6371 = vcmp.lt.s32.totalorder %v6352, 1
      %vm6372 = vcmp.lt.s32.totalorder %v6352, 2
      %vm6373 = vcmp.lt.s32.totalorder %v6352, 3
      %vm6374 = vcmp.lt.s32.totalorder %v6352, 4
      %v6375 = vsel %vm6371, %v6355, %v6358
      %v6376 = vsel %vm6374, %v6364, 2102212464
      %v6377 = vsel %vm6373, %v6361, %v6376
      %v6378 = vsel %vm6372, %v6375, %v6377
      %v6379 = vsel %vm6371, %v6358, %v6361
      %v6380 = vsel %vm6374, %v6367, 920167782
      %v6381 = vsel %vm6373, %v6364, %v6380
      %v6382 = vsel %vm6372, %v6379, %v6381
      %v6383 = vsel %vm6371, %v6361, %v6364
      %v6384 = vsel %vm6374, %v6370, 1326507024
      %v6385 = vsel %vm6373, %v6367, %v6384
      %v6386 = vsel %vm6372, %v6383, %v6385
      %v6387 = vshll.u32 %v6347, 8
      %v6388 = vmul.u32.u64.compose %v6387, %v6386
      %v6389 = vextract.low.u32 %v6388
      %v6390 = vextract.high.u32 %v6388
      %v6391 = vmul.u32.u64.compose %v6387, %v6382
      %v6392 = vextract.low.u32 %v6391
      %v6393 = vextract.high.u32 %v6391
      %v6394 = vmul.u32 %v6387, %v6378
      %v6395 = vadd.s32 %v6390, %v6392
      %vm6396 = vc.u32 %v6390, %v6392
      %v6397 = vadd.s32 %v6393, 1
      %v6398 = vsel %vm6396, %v6397, %v6393
      %v6399 = vadd.s32 %v6394, %v6398
      %v6400 = vadd.s32 %v6399, 536870912
      %v6401 = vshrl.u32 %v6400, 30
      %v6402 = vshll.u32 %v6401, 30
      %v6403 = vsub.s32 %v6399, %v6402
      %vm6404 = vcmp.lt.s32.totalorder %v6403, 0
      %v6405 = vsub.s32 0, %v6403
      %v6406 = vsel %vm6404, %v6405, %v6403
      %v6407 = vclz %v6406
      %v6408 = vsub.s32 %v6407, 2
      %vm6409 = vcmp.gt.s32.totalorder 0, %v6408
      %v6410 = vsel %vm6409, 0, %v6408
      %v6411 = vsub.s32 32, %v6410
      %v6412 = vshll.u32 %v6403, %v6410
      %v6413 = vshrl.u32 %v6395, %v6411
      %v6414 = vor.u32 %v6412, %v6413
      %v6415 = vsub.s32 4294967266, %v6410
      %v6416 = vadd.s32 %v6415, 127
      %v6417 = vshll.u32 %v6416, 23
      %v6418 = vor.u32 4788187, %v6417
      %v6419 = vand.u32 2147483647, %v6418
      %v6421 = vcvt.s32.f32 %v6414
      %v6422 = vmul.f32 %v6421, %v6419
      %v6423 = vxor.u32 %v6422, 2147483648
      %v6424 = vsel %vm6341, %v6423, %v6422
      %v6425 = vsub.s32 4, %v6401
      %v6426 = vsel %vm6341, %v6425, %v6401
      %v6427 = vsel %vm6340, %v774, %v6424
      %v6428 = vsel %vm6340, 0, %v6426
      %v6429 = vcosq.f32.pop %v6427
      %v6430 = vsinq.f32.pop %v6427
      %vm6431 = vweird.f32 %v774
      %v6432 = vadd.s32 %v6428, 3
      %v6433 = vand.u32 %v6432, 3
      %vm6434 = vcmp.lt.s32.totalorder %v6433, 2
      %vm6435 = vcmp.eq.s32.totalorder %v6433, 0
      %v6436 = vxor.u32 %v6430, 2147483648
      %v6437 = vsel %vm6435, %v6429, %v6436
      %vm6438 = vcmp.eq.s32.totalorder %v6433, 2
      %v6439 = vxor.u32 %v6429, 2147483648
      %v6440 = vsel %vm6438, %v6439, %v6430
      %v6441 = vsel %vm6434, %v6437, %v6440
      %v6442 = vsel %vm6431, nan, %v6441
      %v6443 = vand.u32 2147483647, %v779
      %vm6444 = vcmp.le.f32.partialorder %v6443, 0.7853982
      %vm6445 = vcmp.lt.s32.totalorder %v779, 0
      %v6446 = vand.u32 %v779, 2139095040
      %v6447 = vshrl.u32 %v6446, 23
      %v6448 = vsub.s32 %v6447, 127
      %v6449 = vand.u32 2147483647, %v779
      %v6450 = vand.u32 %v6449, 8388607
      %v6451 = vor.u32 %v6450, 8388608
      %v6452 = vsub.s32 0, %v6451
      %v6453 = vadd.s32 %v6448, 1
      %vm6454 = vcmp.gt.s32.totalorder %v6453, 0
      %v6455 = vsel %vm6454, %v6453, 0
      %v6456 = vshrl.u32 %v6455, 5
      %v6457 = vand.u32 %v6455, 31
      %v6458 = vsub.s32 32, %v6457
      %v6459 = vshrl.u32 683565275, %v6458
      %v6460 = vshll.u32 683565275, %v6457
      %v6461 = vshrl.u32 2475754826, %v6458
      %v6462 = vor.u32 %v6460, %v6461
      %v6463 = vshll.u32 2475754826, %v6457
      %v6464 = vshrl.u32 2131351028, %v6458
      %v6465 = vor.u32 %v6463, %v6464
      %v6466 = vshll.u32 2131351028, %v6457
      %v6467 = vshrl.u32 2102212464, %v6458
      %v6468 = vor.u32 %v6466, %v6467
      %v6469 = vshll.u32 2102212464, %v6457
      %v6470 = vshrl.u32 920167782, %v6458
      %v6471 = vor.u32 %v6469, %v6470
      %v6472 = vshll.u32 920167782, %v6457
      %v6473 = vshrl.u32 1326507024, %v6458
      %v6474 = vor.u32 %v6472, %v6473
      %vm6475 = vcmp.lt.s32.totalorder %v6456, 1
      %vm6476 = vcmp.lt.s32.totalorder %v6456, 2
      %vm6477 = vcmp.lt.s32.totalorder %v6456, 3
      %vm6478 = vcmp.lt.s32.totalorder %v6456, 4
      %v6479 = vsel %vm6475, %v6459, %v6462
      %v6480 = vsel %vm6478, %v6468, 2102212464
      %v6481 = vsel %vm6477, %v6465, %v6480
      %v6482 = vsel %vm6476, %v6479, %v6481
      %v6483 = vsel %vm6475, %v6462, %v6465
      %v6484 = vsel %vm6478, %v6471, 920167782
      %v6485 = vsel %vm6477, %v6468, %v6484
      %v6486 = vsel %vm6476, %v6483, %v6485
      %v6487 = vsel %vm6475, %v6465, %v6468
      %v6488 = vsel %vm6478, %v6474, 1326507024
      %v6489 = vsel %vm6477, %v6471, %v6488
      %v6490 = vsel %vm6476, %v6487, %v6489
      %v6491 = vshll.u32 %v6451, 8
      %v6492 = vmul.u32.u64.compose %v6491, %v6490
      %v6493 = vextract.low.u32 %v6492
      %v6494 = vextract.high.u32 %v6492
      %v6495 = vmul.u32.u64.compose %v6491, %v6486
      %v6496 = vextract.low.u32 %v6495
      %v6497 = vextract.high.u32 %v6495
      %v6498 = vmul.u32 %v6491, %v6482
      %v6499 = vadd.s32 %v6494, %v6496
      %vm6500 = vc.u32 %v6494, %v6496
      %v6501 = vadd.s32 %v6497, 1
      %v6502 = vsel %vm6500, %v6501, %v6497
      %v6503 = vadd.s32 %v6498, %v6502
      %v6504 = vadd.s32 %v6503, 536870912
      %v6505 = vshrl.u32 %v6504, 30
      %v6506 = vshll.u32 %v6505, 30
      %v6507 = vsub.s32 %v6503, %v6506
      %vm6508 = vcmp.lt.s32.totalorder %v6507, 0
      %v6509 = vsub.s32 0, %v6507
      %v6510 = vsel %vm6508, %v6509, %v6507
      %v6511 = vclz %v6510
      %v6512 = vsub.s32 %v6511, 2
      %vm6513 = vcmp.gt.s32.totalorder 0, %v6512
      %v6514 = vsel %vm6513, 0, %v6512
      %v6515 = vsub.s32 32, %v6514
      %v6516 = vshll.u32 %v6507, %v6514
      %v6517 = vshrl.u32 %v6499, %v6515
      %v6518 = vor.u32 %v6516, %v6517
      %v6519 = vsub.s32 4294967266, %v6514
      %v6520 = vadd.s32 %v6519, 127
      %v6521 = vshll.u32 %v6520, 23
      %v6522 = vor.u32 4788187, %v6521
      %v6523 = vand.u32 2147483647, %v6522
      %v6525 = vcvt.s32.f32 %v6518
      %v6526 = vmul.f32 %v6525, %v6523
      %v6527 = vxor.u32 %v6526, 2147483648
      %v6528 = vsel %vm6445, %v6527, %v6526
      %v6529 = vsub.s32 4, %v6505
      %v6530 = vsel %vm6445, %v6529, %v6505
      %v6531 = vsel %vm6444, %v779, %v6528
      %v6532 = vsel %vm6444, 0, %v6530
      %v6533 = vcosq.f32.pop %v6531
      %v6534 = vsinq.f32.pop %v6531
      %vm6535 = vweird.f32 %v779
      %v6536 = vadd.s32 %v6532, 3
      %v6537 = vand.u32 %v6536, 3
      %vm6538 = vcmp.lt.s32.totalorder %v6537, 2
      %vm6539 = vcmp.eq.s32.totalorder %v6537, 0
      %v6540 = vxor.u32 %v6534, 2147483648
      %v6541 = vsel %vm6539, %v6533, %v6540
      %vm6542 = vcmp.eq.s32.totalorder %v6537, 2
      %v6543 = vxor.u32 %v6533, 2147483648
      %v6544 = vsel %vm6542, %v6543, %v6534
      %v6545 = vsel %vm6538, %v6541, %v6544
      %v6546 = vsel %vm6535, nan, %v6545
      %v6547 = vand.u32 2147483647, %v784
      %vm6548 = vcmp.le.f32.partialorder %v6547, 0.7853982
      %vm6549 = vcmp.lt.s32.totalorder %v784, 0
      %v6550 = vand.u32 %v784, 2139095040
      %v6551 = vshrl.u32 %v6550, 23
      %v6552 = vsub.s32 %v6551, 127
      %v6553 = vand.u32 2147483647, %v784
      %v6554 = vand.u32 %v6553, 8388607
      %v6555 = vor.u32 %v6554, 8388608
      %v6556 = vsub.s32 0, %v6555
      %v6557 = vadd.s32 %v6552, 1
      %vm6558 = vcmp.gt.s32.totalorder %v6557, 0
      %v6559 = vsel %vm6558, %v6557, 0
      %v6560 = vshrl.u32 %v6559, 5
      %v6561 = vand.u32 %v6559, 31
      %v6562 = vsub.s32 32, %v6561
      %v6563 = vshrl.u32 683565275, %v6562
      %v6564 = vshll.u32 683565275, %v6561
      %v6565 = vshrl.u32 2475754826, %v6562
      %v6566 = vor.u32 %v6564, %v6565
      %v6567 = vshll.u32 2475754826, %v6561
      %v6568 = vshrl.u32 2131351028, %v6562
      %v6569 = vor.u32 %v6567, %v6568
      %v6570 = vshll.u32 2131351028, %v6561
      %v6571 = vshrl.u32 2102212464, %v6562
      %v6572 = vor.u32 %v6570, %v6571
      %v6573 = vshll.u32 2102212464, %v6561
      %v6574 = vshrl.u32 920167782, %v6562
      %v6575 = vor.u32 %v6573, %v6574
      %v6576 = vshll.u32 920167782, %v6561
      %v6577 = vshrl.u32 1326507024, %v6562
      %v6578 = vor.u32 %v6576, %v6577
      %vm6579 = vcmp.lt.s32.totalorder %v6560, 1
      %vm6580 = vcmp.lt.s32.totalorder %v6560, 2
      %vm6581 = vcmp.lt.s32.totalorder %v6560, 3
      %vm6582 = vcmp.lt.s32.totalorder %v6560, 4
      %v6583 = vsel %vm6579, %v6563, %v6566
      %v6584 = vsel %vm6582, %v6572, 2102212464
      %v6585 = vsel %vm6581, %v6569, %v6584
      %v6586 = vsel %vm6580, %v6583, %v6585
      %v6587 = vsel %vm6579, %v6566, %v6569
      %v6588 = vsel %vm6582, %v6575, 920167782
      %v6589 = vsel %vm6581, %v6572, %v6588
      %v6590 = vsel %vm6580, %v6587, %v6589
      %v6591 = vsel %vm6579, %v6569, %v6572
      %v6592 = vsel %vm6582, %v6578, 1326507024
      %v6593 = vsel %vm6581, %v6575, %v6592
      %v6594 = vsel %vm6580, %v6591, %v6593
      %v6595 = vshll.u32 %v6555, 8
      %v6596 = vmul.u32.u64.compose %v6595, %v6594
      %v6597 = vextract.low.u32 %v6596
      %v6598 = vextract.high.u32 %v6596
      %v6599 = vmul.u32.u64.compose %v6595, %v6590
      %v6600 = vextract.low.u32 %v6599
      %v6601 = vextract.high.u32 %v6599
      %v6602 = vmul.u32 %v6595, %v6586
      %v6603 = vadd.s32 %v6598, %v6600
      %vm6604 = vc.u32 %v6598, %v6600
      %v6605 = vadd.s32 %v6601, 1
      %v6606 = vsel %vm6604, %v6605, %v6601
      %v6607 = vadd.s32 %v6602, %v6606
      %v6608 = vadd.s32 %v6607, 536870912
      %v6609 = vshrl.u32 %v6608, 30
      %v6610 = vshll.u32 %v6609, 30
      %v6611 = vsub.s32 %v6607, %v6610
      %vm6612 = vcmp.lt.s32.totalorder %v6611, 0
      %v6613 = vsub.s32 0, %v6611
      %v6614 = vsel %vm6612, %v6613, %v6611
      %v6615 = vclz %v6614
      %v6616 = vsub.s32 %v6615, 2
      %vm6617 = vcmp.gt.s32.totalorder 0, %v6616
      %v6618 = vsel %vm6617, 0, %v6616
      %v6619 = vsub.s32 32, %v6618
      %v6620 = vshll.u32 %v6611, %v6618
      %v6621 = vshrl.u32 %v6603, %v6619
      %v6622 = vor.u32 %v6620, %v6621
      %v6623 = vsub.s32 4294967266, %v6618
      %v6624 = vadd.s32 %v6623, 127
      %v6625 = vshll.u32 %v6624, 23
      %v6626 = vor.u32 4788187, %v6625
      %v6627 = vand.u32 2147483647, %v6626
      %v6629 = vcvt.s32.f32 %v6622
      %v6630 = vmul.f32 %v6629, %v6627
      %v6631 = vxor.u32 %v6630, 2147483648
      %v6632 = vsel %vm6549, %v6631, %v6630
      %v6633 = vsub.s32 4, %v6609
      %v6634 = vsel %vm6549, %v6633, %v6609
      %v6635 = vsel %vm6548, %v784, %v6632
      %v6636 = vsel %vm6548, 0, %v6634
      %v6637 = vcosq.f32.pop %v6635
      %v6638 = vsinq.f32.pop %v6635
      %vm6639 = vweird.f32 %v784
      %v6640 = vadd.s32 %v6636, 3
      %v6641 = vand.u32 %v6640, 3
      %vm6642 = vcmp.lt.s32.totalorder %v6641, 2
      %vm6643 = vcmp.eq.s32.totalorder %v6641, 0
      %v6644 = vxor.u32 %v6638, 2147483648
      %v6645 = vsel %vm6643, %v6637, %v6644
      %vm6646 = vcmp.eq.s32.totalorder %v6641, 2
      %v6647 = vxor.u32 %v6637, 2147483648
      %v6648 = vsel %vm6646, %v6647, %v6638
      %v6649 = vsel %vm6642, %v6645, %v6648
      %v6650 = vsel %vm6639, nan, %v6649
      %v6651 = vand.u32 2147483647, %v789
      %vm6652 = vcmp.le.f32.partialorder %v6651, 0.7853982
      %vm6653 = vcmp.lt.s32.totalorder %v789, 0
      %v6654 = vand.u32 %v789, 2139095040
      %v6655 = vshrl.u32 %v6654, 23
      %v6656 = vsub.s32 %v6655, 127
      %v6657 = vand.u32 2147483647, %v789
      %v6658 = vand.u32 %v6657, 8388607
      %v6659 = vor.u32 %v6658, 8388608
      %v6660 = vsub.s32 0, %v6659
      %v6661 = vadd.s32 %v6656, 1
      %vm6662 = vcmp.gt.s32.totalorder %v6661, 0
      %v6663 = vsel %vm6662, %v6661, 0
      %v6664 = vshrl.u32 %v6663, 5
      %v6665 = vand.u32 %v6663, 31
      %v6666 = vsub.s32 32, %v6665
      %v6667 = vshrl.u32 683565275, %v6666
      %v6668 = vshll.u32 683565275, %v6665
      %v6669 = vshrl.u32 2475754826, %v6666
      %v6670 = vor.u32 %v6668, %v6669
      %v6671 = vshll.u32 2475754826, %v6665
      %v6672 = vshrl.u32 2131351028, %v6666
      %v6673 = vor.u32 %v6671, %v6672
      %v6674 = vshll.u32 2131351028, %v6665
      %v6675 = vshrl.u32 2102212464, %v6666
      %v6676 = vor.u32 %v6674, %v6675
      %v6677 = vshll.u32 2102212464, %v6665
      %v6678 = vshrl.u32 920167782, %v6666
      %v6679 = vor.u32 %v6677, %v6678
      %v6680 = vshll.u32 920167782, %v6665
      %v6681 = vshrl.u32 1326507024, %v6666
      %v6682 = vor.u32 %v6680, %v6681
      %vm6683 = vcmp.lt.s32.totalorder %v6664, 1
      %vm6684 = vcmp.lt.s32.totalorder %v6664, 2
      %vm6685 = vcmp.lt.s32.totalorder %v6664, 3
      %vm6686 = vcmp.lt.s32.totalorder %v6664, 4
      %v6687 = vsel %vm6683, %v6667, %v6670
      %v6688 = vsel %vm6686, %v6676, 2102212464
      %v6689 = vsel %vm6685, %v6673, %v6688
      %v6690 = vsel %vm6684, %v6687, %v6689
      %v6691 = vsel %vm6683, %v6670, %v6673
      %v6692 = vsel %vm6686, %v6679, 920167782
      %v6693 = vsel %vm6685, %v6676, %v6692
      %v6694 = vsel %vm6684, %v6691, %v6693
      %v6695 = vsel %vm6683, %v6673, %v6676
      %v6696 = vsel %vm6686, %v6682, 1326507024
      %v6697 = vsel %vm6685, %v6679, %v6696
      %v6698 = vsel %vm6684, %v6695, %v6697
      %v6699 = vshll.u32 %v6659, 8
      %v6700 = vmul.u32.u64.compose %v6699, %v6698
      %v6701 = vextract.low.u32 %v6700
      %v6702 = vextract.high.u32 %v6700
      %v6703 = vmul.u32.u64.compose %v6699, %v6694
      %v6704 = vextract.low.u32 %v6703
      %v6705 = vextract.high.u32 %v6703
      %v6706 = vmul.u32 %v6699, %v6690
      %v6707 = vadd.s32 %v6702, %v6704
      %vm6708 = vc.u32 %v6702, %v6704
      %v6709 = vadd.s32 %v6705, 1
      %v6710 = vsel %vm6708, %v6709, %v6705
      %v6711 = vadd.s32 %v6706, %v6710
      %v6712 = vadd.s32 %v6711, 536870912
      %v6713 = vshrl.u32 %v6712, 30
      %v6714 = vshll.u32 %v6713, 30
      %v6715 = vsub.s32 %v6711, %v6714
      %vm6716 = vcmp.lt.s32.totalorder %v6715, 0
      %v6717 = vsub.s32 0, %v6715
      %v6718 = vsel %vm6716, %v6717, %v6715
      %v6719 = vclz %v6718
      %v6720 = vsub.s32 %v6719, 2
      %vm6721 = vcmp.gt.s32.totalorder 0, %v6720
      %v6722 = vsel %vm6721, 0, %v6720
      %v6723 = vsub.s32 32, %v6722
      %v6724 = vshll.u32 %v6715, %v6722
      %v6725 = vshrl.u32 %v6707, %v6723
      %v6726 = vor.u32 %v6724, %v6725
      %v6727 = vsub.s32 4294967266, %v6722
      %v6728 = vadd.s32 %v6727, 127
      %v6729 = vshll.u32 %v6728, 23
      %v6730 = vor.u32 4788187, %v6729
      %v6731 = vand.u32 2147483647, %v6730
      %v6733 = vcvt.s32.f32 %v6726
      %v6734 = vmul.f32 %v6733, %v6731
      %v6735 = vxor.u32 %v6734, 2147483648
      %v6736 = vsel %vm6653, %v6735, %v6734
      %v6737 = vsub.s32 4, %v6713
      %v6738 = vsel %vm6653, %v6737, %v6713
      %v6739 = vsel %vm6652, %v789, %v6736
      %v6740 = vsel %vm6652, 0, %v6738
      %v6741 = vcosq.f32.pop %v6739
      %v6742 = vsinq.f32.pop %v6739
      %vm6743 = vweird.f32 %v789
      %v6744 = vadd.s32 %v6740, 3
      %v6745 = vand.u32 %v6744, 3
      %vm6746 = vcmp.lt.s32.totalorder %v6745, 2
      %vm6747 = vcmp.eq.s32.totalorder %v6745, 0
      %v6748 = vxor.u32 %v6742, 2147483648
      %v6749 = vsel %vm6747, %v6741, %v6748
      %vm6750 = vcmp.eq.s32.totalorder %v6745, 2
      %v6751 = vxor.u32 %v6741, 2147483648
      %v6752 = vsel %vm6750, %v6751, %v6742
      %v6753 = vsel %vm6746, %v6749, %v6752
      %v6754 = vsel %vm6743, nan, %v6753
      %v6755 = vand.u32 2147483647, %v794
      %vm6756 = vcmp.le.f32.partialorder %v6755, 0.7853982
      %vm6757 = vcmp.lt.s32.totalorder %v794, 0
      %v6758 = vand.u32 %v794, 2139095040
      %v6759 = vshrl.u32 %v6758, 23
      %v6760 = vsub.s32 %v6759, 127
      %v6761 = vand.u32 2147483647, %v794
      %v6762 = vand.u32 %v6761, 8388607
      %v6763 = vor.u32 %v6762, 8388608
      %v6764 = vsub.s32 0, %v6763
      %v6765 = vadd.s32 %v6760, 1
      %vm6766 = vcmp.gt.s32.totalorder %v6765, 0
      %v6767 = vsel %vm6766, %v6765, 0
      %v6768 = vshrl.u32 %v6767, 5
      %v6769 = vand.u32 %v6767, 31
      %v6770 = vsub.s32 32, %v6769
      %v6771 = vshrl.u32 683565275, %v6770
      %v6772 = vshll.u32 683565275, %v6769
      %v6773 = vshrl.u32 2475754826, %v6770
      %v6774 = vor.u32 %v6772, %v6773
      %v6775 = vshll.u32 2475754826, %v6769
      %v6776 = vshrl.u32 2131351028, %v6770
      %v6777 = vor.u32 %v6775, %v6776
      %v6778 = vshll.u32 2131351028, %v6769
      %v6779 = vshrl.u32 2102212464, %v6770
      %v6780 = vor.u32 %v6778, %v6779
      %v6781 = vshll.u32 2102212464, %v6769
      %v6782 = vshrl.u32 920167782, %v6770
      %v6783 = vor.u32 %v6781, %v6782
      %v6784 = vshll.u32 920167782, %v6769
      %v6785 = vshrl.u32 1326507024, %v6770
      %v6786 = vor.u32 %v6784, %v6785
      %vm6787 = vcmp.lt.s32.totalorder %v6768, 1
      %vm6788 = vcmp.lt.s32.totalorder %v6768, 2
      %vm6789 = vcmp.lt.s32.totalorder %v6768, 3
      %vm6790 = vcmp.lt.s32.totalorder %v6768, 4
      %v6791 = vsel %vm6787, %v6771, %v6774
      %v6792 = vsel %vm6790, %v6780, 2102212464
      %v6793 = vsel %vm6789, %v6777, %v6792
      %v6794 = vsel %vm6788, %v6791, %v6793
      %v6795 = vsel %vm6787, %v6774, %v6777
      %v6796 = vsel %vm6790, %v6783, 920167782
      %v6797 = vsel %vm6789, %v6780, %v6796
      %v6798 = vsel %vm6788, %v6795, %v6797
      %v6799 = vsel %vm6787, %v6777, %v6780
      %v6800 = vsel %vm6790, %v6786, 1326507024
      %v6801 = vsel %vm6789, %v6783, %v6800
      %v6802 = vsel %vm6788, %v6799, %v6801
      %v6803 = vshll.u32 %v6763, 8
      %v6804 = vmul.u32.u64.compose %v6803, %v6802
      %v6805 = vextract.low.u32 %v6804
      %v6806 = vextract.high.u32 %v6804
      %v6807 = vmul.u32.u64.compose %v6803, %v6798
      %v6808 = vextract.low.u32 %v6807
      %v6809 = vextract.high.u32 %v6807
      %v6810 = vmul.u32 %v6803, %v6794
      %v6811 = vadd.s32 %v6806, %v6808
      %vm6812 = vc.u32 %v6806, %v6808
      %v6813 = vadd.s32 %v6809, 1
      %v6814 = vsel %vm6812, %v6813, %v6809
      %v6815 = vadd.s32 %v6810, %v6814
      %v6816 = vadd.s32 %v6815, 536870912
      %v6817 = vshrl.u32 %v6816, 30
      %v6818 = vshll.u32 %v6817, 30
      %v6819 = vsub.s32 %v6815, %v6818
      %vm6820 = vcmp.lt.s32.totalorder %v6819, 0
      %v6821 = vsub.s32 0, %v6819
      %v6822 = vsel %vm6820, %v6821, %v6819
      %v6823 = vclz %v6822
      %v6824 = vsub.s32 %v6823, 2
      %vm6825 = vcmp.gt.s32.totalorder 0, %v6824
      %v6826 = vsel %vm6825, 0, %v6824
      %v6827 = vsub.s32 32, %v6826
      %v6828 = vshll.u32 %v6819, %v6826
      %v6829 = vshrl.u32 %v6811, %v6827
      %v6830 = vor.u32 %v6828, %v6829
      %v6831 = vsub.s32 4294967266, %v6826
      %v6832 = vadd.s32 %v6831, 127
      %v6833 = vshll.u32 %v6832, 23
      %v6834 = vor.u32 4788187, %v6833
      %v6835 = vand.u32 2147483647, %v6834
      %v6837 = vcvt.s32.f32 %v6830
      %v6838 = vmul.f32 %v6837, %v6835
      %v6839 = vxor.u32 %v6838, 2147483648
      %v6840 = vsel %vm6757, %v6839, %v6838
      %v6841 = vsub.s32 4, %v6817
      %v6842 = vsel %vm6757, %v6841, %v6817
      %v6843 = vsel %vm6756, %v794, %v6840
      %v6844 = vsel %vm6756, 0, %v6842
      %v6845 = vcosq.f32.pop %v6843
      %v6846 = vsinq.f32.pop %v6843
      %vm6847 = vweird.f32 %v794
      %v6848 = vadd.s32 %v6844, 3
      %v6849 = vand.u32 %v6848, 3
      %vm6850 = vcmp.lt.s32.totalorder %v6849, 2
      %vm6851 = vcmp.eq.s32.totalorder %v6849, 0
      %v6852 = vxor.u32 %v6846, 2147483648
      %v6853 = vsel %vm6851, %v6845, %v6852
      %vm6854 = vcmp.eq.s32.totalorder %v6849, 2
      %v6855 = vxor.u32 %v6845, 2147483648
      %v6856 = vsel %vm6854, %v6855, %v6846
      %v6857 = vsel %vm6850, %v6853, %v6856
      %v6858 = vsel %vm6847, nan, %v6857
      %v6859 = vand.u32 2147483647, %v799
      %vm6860 = vcmp.le.f32.partialorder %v6859, 0.7853982
      %vm6861 = vcmp.lt.s32.totalorder %v799, 0
      %v6862 = vand.u32 %v799, 2139095040
      %v6863 = vshrl.u32 %v6862, 23
      %v6864 = vsub.s32 %v6863, 127
      %v6865 = vand.u32 2147483647, %v799
      %v6866 = vand.u32 %v6865, 8388607
      %v6867 = vor.u32 %v6866, 8388608
      %v6868 = vsub.s32 0, %v6867
      %v6869 = vadd.s32 %v6864, 1
      %vm6870 = vcmp.gt.s32.totalorder %v6869, 0
      %v6871 = vsel %vm6870, %v6869, 0
      %v6872 = vshrl.u32 %v6871, 5
      %v6873 = vand.u32 %v6871, 31
      %v6874 = vsub.s32 32, %v6873
      %v6875 = vshrl.u32 683565275, %v6874
      %v6876 = vshll.u32 683565275, %v6873
      %v6877 = vshrl.u32 2475754826, %v6874
      %v6878 = vor.u32 %v6876, %v6877
      %v6879 = vshll.u32 2475754826, %v6873
      %v6880 = vshrl.u32 2131351028, %v6874
      %v6881 = vor.u32 %v6879, %v6880
      %v6882 = vshll.u32 2131351028, %v6873
      %v6883 = vshrl.u32 2102212464, %v6874
      %v6884 = vor.u32 %v6882, %v6883
      %v6885 = vshll.u32 2102212464, %v6873
      %v6886 = vshrl.u32 920167782, %v6874
      %v6887 = vor.u32 %v6885, %v6886
      %v6888 = vshll.u32 920167782, %v6873
      %v6889 = vshrl.u32 1326507024, %v6874
      %v6890 = vor.u32 %v6888, %v6889
      %vm6891 = vcmp.lt.s32.totalorder %v6872, 1
      %vm6892 = vcmp.lt.s32.totalorder %v6872, 2
      %vm6893 = vcmp.lt.s32.totalorder %v6872, 3
      %vm6894 = vcmp.lt.s32.totalorder %v6872, 4
      %v6895 = vsel %vm6891, %v6875, %v6878
      %v6896 = vsel %vm6894, %v6884, 2102212464
      %v6897 = vsel %vm6893, %v6881, %v6896
      %v6898 = vsel %vm6892, %v6895, %v6897
      %v6899 = vsel %vm6891, %v6878, %v6881
      %v6900 = vsel %vm6894, %v6887, 920167782
      %v6901 = vsel %vm6893, %v6884, %v6900
      %v6902 = vsel %vm6892, %v6899, %v6901
      %v6903 = vsel %vm6891, %v6881, %v6884
      %v6904 = vsel %vm6894, %v6890, 1326507024
      %v6905 = vsel %vm6893, %v6887, %v6904
      %v6906 = vsel %vm6892, %v6903, %v6905
      %v6907 = vshll.u32 %v6867, 8
      %v6908 = vmul.u32.u64.compose %v6907, %v6906
      %v6909 = vextract.low.u32 %v6908
      %v6910 = vextract.high.u32 %v6908
      %v6911 = vmul.u32.u64.compose %v6907, %v6902
      %v6912 = vextract.low.u32 %v6911
      %v6913 = vextract.high.u32 %v6911
      %v6914 = vmul.u32 %v6907, %v6898
      %v6915 = vadd.s32 %v6910, %v6912
      %vm6916 = vc.u32 %v6910, %v6912
      %v6917 = vadd.s32 %v6913, 1
      %v6918 = vsel %vm6916, %v6917, %v6913
      %v6919 = vadd.s32 %v6914, %v6918
      %v6920 = vadd.s32 %v6919, 536870912
      %v6921 = vshrl.u32 %v6920, 30
      %v6922 = vshll.u32 %v6921, 30
      %v6923 = vsub.s32 %v6919, %v6922
      %vm6924 = vcmp.lt.s32.totalorder %v6923, 0
      %v6925 = vsub.s32 0, %v6923
      %v6926 = vsel %vm6924, %v6925, %v6923
      %v6927 = vclz %v6926
      %v6928 = vsub.s32 %v6927, 2
      %vm6929 = vcmp.gt.s32.totalorder 0, %v6928
      %v6930 = vsel %vm6929, 0, %v6928
      %v6931 = vsub.s32 32, %v6930
      %v6932 = vshll.u32 %v6923, %v6930
      %v6933 = vshrl.u32 %v6915, %v6931
      %v6934 = vor.u32 %v6932, %v6933
      %v6935 = vsub.s32 4294967266, %v6930
      %v6936 = vadd.s32 %v6935, 127
      %v6937 = vshll.u32 %v6936, 23
      %v6938 = vor.u32 4788187, %v6937
      %v6939 = vand.u32 2147483647, %v6938
      %v6941 = vcvt.s32.f32 %v6934
      %v6942 = vmul.f32 %v6941, %v6939
      %v6943 = vxor.u32 %v6942, 2147483648
      %v6944 = vsel %vm6861, %v6943, %v6942
      %v6945 = vsub.s32 4, %v6921
      %v6946 = vsel %vm6861, %v6945, %v6921
      %v6947 = vsel %vm6860, %v799, %v6944
      %v6948 = vsel %vm6860, 0, %v6946
      %v6949 = vcosq.f32.pop %v6947
      %v6950 = vsinq.f32.pop %v6947
      %vm6951 = vweird.f32 %v799
      %v6952 = vadd.s32 %v6948, 3
      %v6953 = vand.u32 %v6952, 3
      %vm6954 = vcmp.lt.s32.totalorder %v6953, 2
      %vm6955 = vcmp.eq.s32.totalorder %v6953, 0
      %v6956 = vxor.u32 %v6950, 2147483648
      %v6957 = vsel %vm6955, %v6949, %v6956
      %vm6958 = vcmp.eq.s32.totalorder %v6953, 2
      %v6959 = vxor.u32 %v6949, 2147483648
      %v6960 = vsel %vm6958, %v6959, %v6950
      %v6961 = vsel %vm6954, %v6957, %v6960
      %v6962 = vsel %vm6951, nan, %v6961
      %v6963 = vand.u32 2147483647, %v804
      %vm6964 = vcmp.le.f32.partialorder %v6963, 0.7853982
      %vm6965 = vcmp.lt.s32.totalorder %v804, 0
      %v6966 = vand.u32 %v804, 2139095040
      %v6967 = vshrl.u32 %v6966, 23
      %v6968 = vsub.s32 %v6967, 127
      %v6969 = vand.u32 2147483647, %v804
      %v6970 = vand.u32 %v6969, 8388607
      %v6971 = vor.u32 %v6970, 8388608
      %v6972 = vsub.s32 0, %v6971
      %v6973 = vadd.s32 %v6968, 1
      %vm6974 = vcmp.gt.s32.totalorder %v6973, 0
      %v6975 = vsel %vm6974, %v6973, 0
      %v6976 = vshrl.u32 %v6975, 5
      %v6977 = vand.u32 %v6975, 31
      %v6978 = vsub.s32 32, %v6977
      %v6979 = vshrl.u32 683565275, %v6978
      %v6980 = vshll.u32 683565275, %v6977
      %v6981 = vshrl.u32 2475754826, %v6978
      %v6982 = vor.u32 %v6980, %v6981
      %v6983 = vshll.u32 2475754826, %v6977
      %v6984 = vshrl.u32 2131351028, %v6978
      %v6985 = vor.u32 %v6983, %v6984
      %v6986 = vshll.u32 2131351028, %v6977
      %v6987 = vshrl.u32 2102212464, %v6978
      %v6988 = vor.u32 %v6986, %v6987
      %v6989 = vshll.u32 2102212464, %v6977
      %v6990 = vshrl.u32 920167782, %v6978
      %v6991 = vor.u32 %v6989, %v6990
      %v6992 = vshll.u32 920167782, %v6977
      %v6993 = vshrl.u32 1326507024, %v6978
      %v6994 = vor.u32 %v6992, %v6993
      %vm6995 = vcmp.lt.s32.totalorder %v6976, 1
      %vm6996 = vcmp.lt.s32.totalorder %v6976, 2
      %vm6997 = vcmp.lt.s32.totalorder %v6976, 3
      %vm6998 = vcmp.lt.s32.totalorder %v6976, 4
      %v6999 = vsel %vm6995, %v6979, %v6982
      %v7000 = vsel %vm6998, %v6988, 2102212464
      %v7001 = vsel %vm6997, %v6985, %v7000
      %v7002 = vsel %vm6996, %v6999, %v7001
      %v7003 = vsel %vm6995, %v6982, %v6985
      %v7004 = vsel %vm6998, %v6991, 920167782
      %v7005 = vsel %vm6997, %v6988, %v7004
      %v7006 = vsel %vm6996, %v7003, %v7005
      %v7007 = vsel %vm6995, %v6985, %v6988
      %v7008 = vsel %vm6998, %v6994, 1326507024
      %v7009 = vsel %vm6997, %v6991, %v7008
      %v7010 = vsel %vm6996, %v7007, %v7009
      %v7011 = vshll.u32 %v6971, 8
      %v7012 = vmul.u32.u64.compose %v7011, %v7010
      %v7013 = vextract.low.u32 %v7012
      %v7014 = vextract.high.u32 %v7012
      %v7015 = vmul.u32.u64.compose %v7011, %v7006
      %v7016 = vextract.low.u32 %v7015
      %v7017 = vextract.high.u32 %v7015
      %v7018 = vmul.u32 %v7011, %v7002
      %v7019 = vadd.s32 %v7014, %v7016
      %vm7020 = vc.u32 %v7014, %v7016
      %v7021 = vadd.s32 %v7017, 1
      %v7022 = vsel %vm7020, %v7021, %v7017
      %v7023 = vadd.s32 %v7018, %v7022
      %v7024 = vadd.s32 %v7023, 536870912
      %v7025 = vshrl.u32 %v7024, 30
      %v7026 = vshll.u32 %v7025, 30
      %v7027 = vsub.s32 %v7023, %v7026
      %vm7028 = vcmp.lt.s32.totalorder %v7027, 0
      %v7029 = vsub.s32 0, %v7027
      %v7030 = vsel %vm7028, %v7029, %v7027
      %v7031 = vclz %v7030
      %v7032 = vsub.s32 %v7031, 2
      %vm7033 = vcmp.gt.s32.totalorder 0, %v7032
      %v7034 = vsel %vm7033, 0, %v7032
      %v7035 = vsub.s32 32, %v7034
      %v7036 = vshll.u32 %v7027, %v7034
      %v7037 = vshrl.u32 %v7019, %v7035
      %v7038 = vor.u32 %v7036, %v7037
      %v7039 = vsub.s32 4294967266, %v7034
      %v7040 = vadd.s32 %v7039, 127
      %v7041 = vshll.u32 %v7040, 23
      %v7042 = vor.u32 4788187, %v7041
      %v7043 = vand.u32 2147483647, %v7042
      %v7045 = vcvt.s32.f32 %v7038
      %v7046 = vmul.f32 %v7045, %v7043
      %v7047 = vxor.u32 %v7046, 2147483648
      %v7048 = vsel %vm6965, %v7047, %v7046
      %v7049 = vsub.s32 4, %v7025
      %v7050 = vsel %vm6965, %v7049, %v7025
      %v7051 = vsel %vm6964, %v804, %v7048
      %v7052 = vsel %vm6964, 0, %v7050
      %v7053 = vcosq.f32.pop %v7051
      %v7054 = vsinq.f32.pop %v7051
      %vm7055 = vweird.f32 %v804
      %v7056 = vadd.s32 %v7052, 3
      %v7057 = vand.u32 %v7056, 3
      %vm7058 = vcmp.lt.s32.totalorder %v7057, 2
      %vm7059 = vcmp.eq.s32.totalorder %v7057, 0
      %v7060 = vxor.u32 %v7054, 2147483648
      %v7061 = vsel %vm7059, %v7053, %v7060
      %vm7062 = vcmp.eq.s32.totalorder %v7057, 2
      %v7063 = vxor.u32 %v7053, 2147483648
      %v7064 = vsel %vm7062, %v7063, %v7054
      %v7065 = vsel %vm7058, %v7061, %v7064
      %v7066 = vsel %vm7055, nan, %v7065
      %v7067 = vand.u32 2147483647, %v809
      %vm7068 = vcmp.le.f32.partialorder %v7067, 0.7853982
      %vm7069 = vcmp.lt.s32.totalorder %v809, 0
      %v7070 = vand.u32 %v809, 2139095040
      %v7071 = vshrl.u32 %v7070, 23
      %v7072 = vsub.s32 %v7071, 127
      %v7073 = vand.u32 2147483647, %v809
      %v7074 = vand.u32 %v7073, 8388607
      %v7075 = vor.u32 %v7074, 8388608
      %v7076 = vsub.s32 0, %v7075
      %v7077 = vadd.s32 %v7072, 1
      %vm7078 = vcmp.gt.s32.totalorder %v7077, 0
      %v7079 = vsel %vm7078, %v7077, 0
      %v7080 = vshrl.u32 %v7079, 5
      %v7081 = vand.u32 %v7079, 31
      %v7082 = vsub.s32 32, %v7081
      %v7083 = vshrl.u32 683565275, %v7082
      %v7084 = vshll.u32 683565275, %v7081
      %v7085 = vshrl.u32 2475754826, %v7082
      %v7086 = vor.u32 %v7084, %v7085
      %v7087 = vshll.u32 2475754826, %v7081
      %v7088 = vshrl.u32 2131351028, %v7082
      %v7089 = vor.u32 %v7087, %v7088
      %v7090 = vshll.u32 2131351028, %v7081
      %v7091 = vshrl.u32 2102212464, %v7082
      %v7092 = vor.u32 %v7090, %v7091
      %v7093 = vshll.u32 2102212464, %v7081
      %v7094 = vshrl.u32 920167782, %v7082
      %v7095 = vor.u32 %v7093, %v7094
      %v7096 = vshll.u32 920167782, %v7081
      %v7097 = vshrl.u32 1326507024, %v7082
      %v7098 = vor.u32 %v7096, %v7097
      %vm7099 = vcmp.lt.s32.totalorder %v7080, 1
      %vm7100 = vcmp.lt.s32.totalorder %v7080, 2
      %vm7101 = vcmp.lt.s32.totalorder %v7080, 3
      %vm7102 = vcmp.lt.s32.totalorder %v7080, 4
      %v7103 = vsel %vm7099, %v7083, %v7086
      %v7104 = vsel %vm7102, %v7092, 2102212464
      %v7105 = vsel %vm7101, %v7089, %v7104
      %v7106 = vsel %vm7100, %v7103, %v7105
      %v7107 = vsel %vm7099, %v7086, %v7089
      %v7108 = vsel %vm7102, %v7095, 920167782
      %v7109 = vsel %vm7101, %v7092, %v7108
      %v7110 = vsel %vm7100, %v7107, %v7109
      %v7111 = vsel %vm7099, %v7089, %v7092
      %v7112 = vsel %vm7102, %v7098, 1326507024
      %v7113 = vsel %vm7101, %v7095, %v7112
      %v7114 = vsel %vm7100, %v7111, %v7113
      %v7115 = vshll.u32 %v7075, 8
      %v7116 = vmul.u32.u64.compose %v7115, %v7114
      %v7117 = vextract.low.u32 %v7116
      %v7118 = vextract.high.u32 %v7116
      %v7119 = vmul.u32.u64.compose %v7115, %v7110
      %v7120 = vextract.low.u32 %v7119
      %v7121 = vextract.high.u32 %v7119
      %v7122 = vmul.u32 %v7115, %v7106
      %v7123 = vadd.s32 %v7118, %v7120
      %vm7124 = vc.u32 %v7118, %v7120
      %v7125 = vadd.s32 %v7121, 1
      %v7126 = vsel %vm7124, %v7125, %v7121
      %v7127 = vadd.s32 %v7122, %v7126
      %v7128 = vadd.s32 %v7127, 536870912
      %v7129 = vshrl.u32 %v7128, 30
      %v7130 = vshll.u32 %v7129, 30
      %v7131 = vsub.s32 %v7127, %v7130
      %vm7132 = vcmp.lt.s32.totalorder %v7131, 0
      %v7133 = vsub.s32 0, %v7131
      %v7134 = vsel %vm7132, %v7133, %v7131
      %v7135 = vclz %v7134
      %v7136 = vsub.s32 %v7135, 2
      %vm7137 = vcmp.gt.s32.totalorder 0, %v7136
      %v7138 = vsel %vm7137, 0, %v7136
      %v7139 = vsub.s32 32, %v7138
      %v7140 = vshll.u32 %v7131, %v7138
      %v7141 = vshrl.u32 %v7123, %v7139
      %v7142 = vor.u32 %v7140, %v7141
      %v7143 = vsub.s32 4294967266, %v7138
      %v7144 = vadd.s32 %v7143, 127
      %v7145 = vshll.u32 %v7144, 23
      %v7146 = vor.u32 4788187, %v7145
      %v7147 = vand.u32 2147483647, %v7146
      %v7149 = vcvt.s32.f32 %v7142
      %v7150 = vmul.f32 %v7149, %v7147
      %v7151 = vxor.u32 %v7150, 2147483648
      %v7152 = vsel %vm7069, %v7151, %v7150
      %v7153 = vsub.s32 4, %v7129
      %v7154 = vsel %vm7069, %v7153, %v7129
      %v7155 = vsel %vm7068, %v809, %v7152
      %v7156 = vsel %vm7068, 0, %v7154
      %v7157 = vcosq.f32.pop %v7155
      %v7158 = vsinq.f32.pop %v7155
      %vm7159 = vweird.f32 %v809
      %v7160 = vadd.s32 %v7156, 3
      %v7161 = vand.u32 %v7160, 3
      %vm7162 = vcmp.lt.s32.totalorder %v7161, 2
      %vm7163 = vcmp.eq.s32.totalorder %v7161, 0
      %v7164 = vxor.u32 %v7158, 2147483648
      %v7165 = vsel %vm7163, %v7157, %v7164
      %vm7166 = vcmp.eq.s32.totalorder %v7161, 2
      %v7167 = vxor.u32 %v7157, 2147483648
      %v7168 = vsel %vm7166, %v7167, %v7158
      %v7169 = vsel %vm7162, %v7165, %v7168
      %v7170 = vsel %vm7159, nan, %v7169
      %v7171 = vand.u32 2147483647, %v814
      %vm7172 = vcmp.le.f32.partialorder %v7171, 0.7853982
      %vm7173 = vcmp.lt.s32.totalorder %v814, 0
      %v7174 = vand.u32 %v814, 2139095040
      %v7175 = vshrl.u32 %v7174, 23
      %v7176 = vsub.s32 %v7175, 127
      %v7177 = vand.u32 2147483647, %v814
      %v7178 = vand.u32 %v7177, 8388607
      %v7179 = vor.u32 %v7178, 8388608
      %v7180 = vsub.s32 0, %v7179
      %v7181 = vadd.s32 %v7176, 1
      %vm7182 = vcmp.gt.s32.totalorder %v7181, 0
      %v7183 = vsel %vm7182, %v7181, 0
      %v7184 = vshrl.u32 %v7183, 5
      %v7185 = vand.u32 %v7183, 31
      %v7186 = vsub.s32 32, %v7185
      %v7187 = vshrl.u32 683565275, %v7186
      %v7188 = vshll.u32 683565275, %v7185
      %v7189 = vshrl.u32 2475754826, %v7186
      %v7190 = vor.u32 %v7188, %v7189
      %v7191 = vshll.u32 2475754826, %v7185
      %v7192 = vshrl.u32 2131351028, %v7186
      %v7193 = vor.u32 %v7191, %v7192
      %v7194 = vshll.u32 2131351028, %v7185
      %v7195 = vshrl.u32 2102212464, %v7186
      %v7196 = vor.u32 %v7194, %v7195
      %v7197 = vshll.u32 2102212464, %v7185
      %v7198 = vshrl.u32 920167782, %v7186
      %v7199 = vor.u32 %v7197, %v7198
      %v7200 = vshll.u32 920167782, %v7185
      %v7201 = vshrl.u32 1326507024, %v7186
      %v7202 = vor.u32 %v7200, %v7201
      %vm7203 = vcmp.lt.s32.totalorder %v7184, 1
      %vm7204 = vcmp.lt.s32.totalorder %v7184, 2
      %vm7205 = vcmp.lt.s32.totalorder %v7184, 3
      %vm7206 = vcmp.lt.s32.totalorder %v7184, 4
      %v7207 = vsel %vm7203, %v7187, %v7190
      %v7208 = vsel %vm7206, %v7196, 2102212464
      %v7209 = vsel %vm7205, %v7193, %v7208
      %v7210 = vsel %vm7204, %v7207, %v7209
      %v7211 = vsel %vm7203, %v7190, %v7193
      %v7212 = vsel %vm7206, %v7199, 920167782
      %v7213 = vsel %vm7205, %v7196, %v7212
      %v7214 = vsel %vm7204, %v7211, %v7213
      %v7215 = vsel %vm7203, %v7193, %v7196
      %v7216 = vsel %vm7206, %v7202, 1326507024
      %v7217 = vsel %vm7205, %v7199, %v7216
      %v7218 = vsel %vm7204, %v7215, %v7217
      %v7219 = vshll.u32 %v7179, 8
      %v7220 = vmul.u32.u64.compose %v7219, %v7218
      %v7221 = vextract.low.u32 %v7220
      %v7222 = vextract.high.u32 %v7220
      %v7223 = vmul.u32.u64.compose %v7219, %v7214
      %v7224 = vextract.low.u32 %v7223
      %v7225 = vextract.high.u32 %v7223
      %v7226 = vmul.u32 %v7219, %v7210
      %v7227 = vadd.s32 %v7222, %v7224
      %vm7228 = vc.u32 %v7222, %v7224
      %v7229 = vadd.s32 %v7225, 1
      %v7230 = vsel %vm7228, %v7229, %v7225
      %v7231 = vadd.s32 %v7226, %v7230
      %v7232 = vadd.s32 %v7231, 536870912
      %v7233 = vshrl.u32 %v7232, 30
      %v7234 = vshll.u32 %v7233, 30
      %v7235 = vsub.s32 %v7231, %v7234
      %vm7236 = vcmp.lt.s32.totalorder %v7235, 0
      %v7237 = vsub.s32 0, %v7235
      %v7238 = vsel %vm7236, %v7237, %v7235
      %v7239 = vclz %v7238
      %v7240 = vsub.s32 %v7239, 2
      %vm7241 = vcmp.gt.s32.totalorder 0, %v7240
      %v7242 = vsel %vm7241, 0, %v7240
      %v7243 = vsub.s32 32, %v7242
      %v7244 = vshll.u32 %v7235, %v7242
      %v7245 = vshrl.u32 %v7227, %v7243
      %v7246 = vor.u32 %v7244, %v7245
      %v7247 = vsub.s32 4294967266, %v7242
      %v7248 = vadd.s32 %v7247, 127
      %v7249 = vshll.u32 %v7248, 23
      %v7250 = vor.u32 4788187, %v7249
      %v7251 = vand.u32 2147483647, %v7250
      %v7253 = vcvt.s32.f32 %v7246
      %v7254 = vmul.f32 %v7253, %v7251
      %v7255 = vxor.u32 %v7254, 2147483648
      %v7256 = vsel %vm7173, %v7255, %v7254
      %v7257 = vsub.s32 4, %v7233
      %v7258 = vsel %vm7173, %v7257, %v7233
      %v7259 = vsel %vm7172, %v814, %v7256
      %v7260 = vsel %vm7172, 0, %v7258
      %v7261 = vcosq.f32.pop %v7259
      %v7262 = vsinq.f32.pop %v7259
      %vm7263 = vweird.f32 %v814
      %v7264 = vadd.s32 %v7260, 3
      %v7265 = vand.u32 %v7264, 3
      %vm7266 = vcmp.lt.s32.totalorder %v7265, 2
      %vm7267 = vcmp.eq.s32.totalorder %v7265, 0
      %v7268 = vxor.u32 %v7262, 2147483648
      %v7269 = vsel %vm7267, %v7261, %v7268
      %vm7270 = vcmp.eq.s32.totalorder %v7265, 2
      %v7271 = vxor.u32 %v7261, 2147483648
      %v7272 = vsel %vm7270, %v7271, %v7262
      %v7273 = vsel %vm7266, %v7269, %v7272
      %v7274 = vsel %vm7263, nan, %v7273
      %v7275 = vand.u32 2147483647, %v819
      %vm7276 = vcmp.le.f32.partialorder %v7275, 0.7853982
      %vm7277 = vcmp.lt.s32.totalorder %v819, 0
      %v7278 = vand.u32 %v819, 2139095040
      %v7279 = vshrl.u32 %v7278, 23
      %v7280 = vsub.s32 %v7279, 127
      %v7281 = vand.u32 2147483647, %v819
      %v7282 = vand.u32 %v7281, 8388607
      %v7283 = vor.u32 %v7282, 8388608
      %v7284 = vsub.s32 0, %v7283
      %v7285 = vadd.s32 %v7280, 1
      %vm7286 = vcmp.gt.s32.totalorder %v7285, 0
      %v7287 = vsel %vm7286, %v7285, 0
      %v7288 = vshrl.u32 %v7287, 5
      %v7289 = vand.u32 %v7287, 31
      %v7290 = vsub.s32 32, %v7289
      %v7291 = vshrl.u32 683565275, %v7290
      %v7292 = vshll.u32 683565275, %v7289
      %v7293 = vshrl.u32 2475754826, %v7290
      %v7294 = vor.u32 %v7292, %v7293
      %v7295 = vshll.u32 2475754826, %v7289
      %v7296 = vshrl.u32 2131351028, %v7290
      %v7297 = vor.u32 %v7295, %v7296
      %v7298 = vshll.u32 2131351028, %v7289
      %v7299 = vshrl.u32 2102212464, %v7290
      %v7300 = vor.u32 %v7298, %v7299
      %v7301 = vshll.u32 2102212464, %v7289
      %v7302 = vshrl.u32 920167782, %v7290
      %v7303 = vor.u32 %v7301, %v7302
      %v7304 = vshll.u32 920167782, %v7289
      %v7305 = vshrl.u32 1326507024, %v7290
      %v7306 = vor.u32 %v7304, %v7305
      %vm7307 = vcmp.lt.s32.totalorder %v7288, 1
      %vm7308 = vcmp.lt.s32.totalorder %v7288, 2
      %vm7309 = vcmp.lt.s32.totalorder %v7288, 3
      %vm7310 = vcmp.lt.s32.totalorder %v7288, 4
      %v7311 = vsel %vm7307, %v7291, %v7294
      %v7312 = vsel %vm7310, %v7300, 2102212464
      %v7313 = vsel %vm7309, %v7297, %v7312
      %v7314 = vsel %vm7308, %v7311, %v7313
      %v7315 = vsel %vm7307, %v7294, %v7297
      %v7316 = vsel %vm7310, %v7303, 920167782
      %v7317 = vsel %vm7309, %v7300, %v7316
      %v7318 = vsel %vm7308, %v7315, %v7317
      %v7319 = vsel %vm7307, %v7297, %v7300
      %v7320 = vsel %vm7310, %v7306, 1326507024
      %v7321 = vsel %vm7309, %v7303, %v7320
      %v7322 = vsel %vm7308, %v7319, %v7321
      %v7323 = vshll.u32 %v7283, 8
      %v7324 = vmul.u32.u64.compose %v7323, %v7322
      %v7325 = vextract.low.u32 %v7324
      %v7326 = vextract.high.u32 %v7324
      %v7327 = vmul.u32.u64.compose %v7323, %v7318
      %v7328 = vextract.low.u32 %v7327
      %v7329 = vextract.high.u32 %v7327
      %v7330 = vmul.u32 %v7323, %v7314
      %v7331 = vadd.s32 %v7326, %v7328
      %vm7332 = vc.u32 %v7326, %v7328
      %v7333 = vadd.s32 %v7329, 1
      %v7334 = vsel %vm7332, %v7333, %v7329
      %v7335 = vadd.s32 %v7330, %v7334
      %v7336 = vadd.s32 %v7335, 536870912
      %v7337 = vshrl.u32 %v7336, 30
      %v7338 = vshll.u32 %v7337, 30
      %v7339 = vsub.s32 %v7335, %v7338
      %vm7340 = vcmp.lt.s32.totalorder %v7339, 0
      %v7341 = vsub.s32 0, %v7339
      %v7342 = vsel %vm7340, %v7341, %v7339
      %v7343 = vclz %v7342
      %v7344 = vsub.s32 %v7343, 2
      %vm7345 = vcmp.gt.s32.totalorder 0, %v7344
      %v7346 = vsel %vm7345, 0, %v7344
      %v7347 = vsub.s32 32, %v7346
      %v7348 = vshll.u32 %v7339, %v7346
      %v7349 = vshrl.u32 %v7331, %v7347
      %v7350 = vor.u32 %v7348, %v7349
      %v7351 = vsub.s32 4294967266, %v7346
      %v7352 = vadd.s32 %v7351, 127
      %v7353 = vshll.u32 %v7352, 23
      %v7354 = vor.u32 4788187, %v7353
      %v7355 = vand.u32 2147483647, %v7354
      %v7357 = vcvt.s32.f32 %v7350
      %v7358 = vmul.f32 %v7357, %v7355
      %v7359 = vxor.u32 %v7358, 2147483648
      %v7360 = vsel %vm7277, %v7359, %v7358
      %v7361 = vsub.s32 4, %v7337
      %v7362 = vsel %vm7277, %v7361, %v7337
      %v7363 = vsel %vm7276, %v819, %v7360
      %v7364 = vsel %vm7276, 0, %v7362
      %v7365 = vcosq.f32.pop %v7363
      %v7366 = vsinq.f32.pop %v7363
      %vm7367 = vweird.f32 %v819
      %v7368 = vadd.s32 %v7364, 3
      %v7369 = vand.u32 %v7368, 3
      %vm7370 = vcmp.lt.s32.totalorder %v7369, 2
      %vm7371 = vcmp.eq.s32.totalorder %v7369, 0
      %v7372 = vxor.u32 %v7366, 2147483648
      %v7373 = vsel %vm7371, %v7365, %v7372
      %vm7374 = vcmp.eq.s32.totalorder %v7369, 2
      %v7375 = vxor.u32 %v7365, 2147483648
      %v7376 = vsel %vm7374, %v7375, %v7366
      %v7377 = vsel %vm7370, %v7373, %v7376
      %v7378 = vsel %vm7367, nan, %v7377
      %v7379 = vand.u32 2147483647, %v824
      %vm7380 = vcmp.le.f32.partialorder %v7379, 0.7853982
      %vm7381 = vcmp.lt.s32.totalorder %v824, 0
      %v7382 = vand.u32 %v824, 2139095040
      %v7383 = vshrl.u32 %v7382, 23
      %v7384 = vsub.s32 %v7383, 127
      %v7385 = vand.u32 2147483647, %v824
      %v7386 = vand.u32 %v7385, 8388607
      %v7387 = vor.u32 %v7386, 8388608
      %v7388 = vsub.s32 0, %v7387
      %v7389 = vadd.s32 %v7384, 1
      %vm7390 = vcmp.gt.s32.totalorder %v7389, 0
      %v7391 = vsel %vm7390, %v7389, 0
      %v7392 = vshrl.u32 %v7391, 5
      %v7393 = vand.u32 %v7391, 31
      %v7394 = vsub.s32 32, %v7393
      %v7395 = vshrl.u32 683565275, %v7394
      %v7396 = vshll.u32 683565275, %v7393
      %v7397 = vshrl.u32 2475754826, %v7394
      %v7398 = vor.u32 %v7396, %v7397
      %v7399 = vshll.u32 2475754826, %v7393
      %v7400 = vshrl.u32 2131351028, %v7394
      %v7401 = vor.u32 %v7399, %v7400
      %v7402 = vshll.u32 2131351028, %v7393
      %v7403 = vshrl.u32 2102212464, %v7394
      %v7404 = vor.u32 %v7402, %v7403
      %v7405 = vshll.u32 2102212464, %v7393
      %v7406 = vshrl.u32 920167782, %v7394
      %v7407 = vor.u32 %v7405, %v7406
      %v7408 = vshll.u32 920167782, %v7393
      %v7409 = vshrl.u32 1326507024, %v7394
      %v7410 = vor.u32 %v7408, %v7409
      %vm7411 = vcmp.lt.s32.totalorder %v7392, 1
      %vm7412 = vcmp.lt.s32.totalorder %v7392, 2
      %vm7413 = vcmp.lt.s32.totalorder %v7392, 3
      %vm7414 = vcmp.lt.s32.totalorder %v7392, 4
      %v7415 = vsel %vm7411, %v7395, %v7398
      %v7416 = vsel %vm7414, %v7404, 2102212464
      %v7417 = vsel %vm7413, %v7401, %v7416
      %v7418 = vsel %vm7412, %v7415, %v7417
      %v7419 = vsel %vm7411, %v7398, %v7401
      %v7420 = vsel %vm7414, %v7407, 920167782
      %v7421 = vsel %vm7413, %v7404, %v7420
      %v7422 = vsel %vm7412, %v7419, %v7421
      %v7423 = vsel %vm7411, %v7401, %v7404
      %v7424 = vsel %vm7414, %v7410, 1326507024
      %v7425 = vsel %vm7413, %v7407, %v7424
      %v7426 = vsel %vm7412, %v7423, %v7425
      %v7427 = vshll.u32 %v7387, 8
      %v7428 = vmul.u32.u64.compose %v7427, %v7426
      %v7429 = vextract.low.u32 %v7428
      %v7430 = vextract.high.u32 %v7428
      %v7431 = vmul.u32.u64.compose %v7427, %v7422
      %v7432 = vextract.low.u32 %v7431
      %v7433 = vextract.high.u32 %v7431
      %v7434 = vmul.u32 %v7427, %v7418
      %v7435 = vadd.s32 %v7430, %v7432
      %vm7436 = vc.u32 %v7430, %v7432
      %v7437 = vadd.s32 %v7433, 1
      %v7438 = vsel %vm7436, %v7437, %v7433
      %v7439 = vadd.s32 %v7434, %v7438
      %v7440 = vadd.s32 %v7439, 536870912
      %v7441 = vshrl.u32 %v7440, 30
      %v7442 = vshll.u32 %v7441, 30
      %v7443 = vsub.s32 %v7439, %v7442
      %vm7444 = vcmp.lt.s32.totalorder %v7443, 0
      %v7445 = vsub.s32 0, %v7443
      %v7446 = vsel %vm7444, %v7445, %v7443
      %v7447 = vclz %v7446
      %v7448 = vsub.s32 %v7447, 2
      %vm7449 = vcmp.gt.s32.totalorder 0, %v7448
      %v7450 = vsel %vm7449, 0, %v7448
      %v7451 = vsub.s32 32, %v7450
      %v7452 = vshll.u32 %v7443, %v7450
      %v7453 = vshrl.u32 %v7435, %v7451
      %v7454 = vor.u32 %v7452, %v7453
      %v7455 = vsub.s32 4294967266, %v7450
      %v7456 = vadd.s32 %v7455, 127
      %v7457 = vshll.u32 %v7456, 23
      %v7458 = vor.u32 4788187, %v7457
      %v7459 = vand.u32 2147483647, %v7458
      %v7461 = vcvt.s32.f32 %v7454
      %v7462 = vmul.f32 %v7461, %v7459
      %v7463 = vxor.u32 %v7462, 2147483648
      %v7464 = vsel %vm7381, %v7463, %v7462
      %v7465 = vsub.s32 4, %v7441
      %v7466 = vsel %vm7381, %v7465, %v7441
      %v7467 = vsel %vm7380, %v824, %v7464
      %v7468 = vsel %vm7380, 0, %v7466
      %v7469 = vcosq.f32.pop %v7467
      %v7470 = vsinq.f32.pop %v7467
      %vm7471 = vweird.f32 %v824
      %v7472 = vadd.s32 %v7468, 3
      %v7473 = vand.u32 %v7472, 3
      %vm7474 = vcmp.lt.s32.totalorder %v7473, 2
      %vm7475 = vcmp.eq.s32.totalorder %v7473, 0
      %v7476 = vxor.u32 %v7470, 2147483648
      %v7477 = vsel %vm7475, %v7469, %v7476
      %vm7478 = vcmp.eq.s32.totalorder %v7473, 2
      %v7479 = vxor.u32 %v7469, 2147483648
      %v7480 = vsel %vm7478, %v7479, %v7470
      %v7481 = vsel %vm7474, %v7477, %v7480
      %v7482 = vsel %vm7471, nan, %v7481
      %v7483 = vpack.c.bf16 %v1034, %v930
      %v7484 = vpack.c.bf16 %v1242, %v1138
      %v7485 = vpack.c.bf16 %v1450, %v1346
      %v7486 = vpack.c.bf16 %v1658, %v1554
      %v7487 = vpack.c.bf16 %v1866, %v1762
      %v7488 = vpack.c.bf16 %v2074, %v1970
      %v7489 = vpack.c.bf16 %v2282, %v2178
      %v7490 = vpack.c.bf16 %v2490, %v2386
      %v7491 = vpack.c.bf16 %v2698, %v2594
      %v7492 = vpack.c.bf16 %v2906, %v2802
      %v7493 = vpack.c.bf16 %v3114, %v3010
      %v7494 = vpack.c.bf16 %v3322, %v3218
      %v7495 = vpack.c.bf16 %v3530, %v3426
      %v7496 = vpack.c.bf16 %v3738, %v3634
      %v7497 = vpack.c.bf16 %v3946, %v3842
      %v7498 = vpack.c.bf16 %v4154, %v4050
      %v7499 = vpack.c.bf16 %v4362, %v4258
      %v7500 = vpack.c.bf16 %v4570, %v4466
      %v7501 = vpack.c.bf16 %v4778, %v4674
      %v7502 = vpack.c.bf16 %v4986, %v4882
      %v7503 = vpack.c.bf16 %v5194, %v5090
      %v7504 = vpack.c.bf16 %v5402, %v5298
      %v7505 = vpack.c.bf16 %v5610, %v5506
      %v7506 = vpack.c.bf16 %v5818, %v5714
      %v7507 = vpack.c.bf16 %v6026, %v5922
      %v7508 = vpack.c.bf16 %v6234, %v6130
      %v7509 = vpack.c.bf16 %v6442, %v6338
      %v7510 = vpack.c.bf16 %v6650, %v6546
      %v7511 = vpack.c.bf16 %v6858, %v6754
      %v7512 = vpack.c.bf16 %v7066, %v6962
      %v7513 = vpack.c.bf16 %v7274, %v7170
      %v7514 = vpack.c.bf16 %v7482, %v7378
      %v7515 = vpack.c.bf16 %v176, %v175
      %v7516 = vpack.c.bf16 %v178, %v177
      %v7517 = vpack.c.bf16 %v180, %v179
      %v7518 = vpack.c.bf16 %v182, %v181
      %v7519 = vpack.c.bf16 %v184, %v183
      %v7520 = vpack.c.bf16 %v186, %v185
      %v7521 = vpack.c.bf16 %v188, %v187
      %v7522 = vpack.c.bf16 %v190, %v189
      %v7523 = vpack.c.bf16 %v192, %v191
      %v7524 = vpack.c.bf16 %v194, %v193
      %v7525 = vpack.c.bf16 %v196, %v195
      %v7526 = vpack.c.bf16 %v198, %v197
      %v7527 = vpack.c.bf16 %v200, %v199
      %v7528 = vpack.c.bf16 %v202, %v201
      %v7529 = vpack.c.bf16 %v204, %v203
      %v7530 = vpack.c.bf16 %v206, %v205
      %v7531 = vpack.c.bf16 %v208, %v207
      %v7532 = vpack.c.bf16 %v210, %v209
      %v7533 = vpack.c.bf16 %v212, %v211
      %v7534 = vpack.c.bf16 %v214, %v213
      %v7535 = vpack.c.bf16 %v216, %v215
      %v7536 = vpack.c.bf16 %v218, %v217
      %v7537 = vpack.c.bf16 %v220, %v219
      %v7538 = vpack.c.bf16 %v222, %v221
      %v7539 = vpack.c.bf16 %v224, %v223
      %v7540 = vpack.c.bf16 %v226, %v225
      %v7541 = vpack.c.bf16 %v228, %v227
      %v7542 = vpack.c.bf16 %v230, %v229
      %v7543 = vpack.c.bf16 %v232, %v231
      %v7544 = vpack.c.bf16 %v234, %v233
      %v7545 = vpack.c.bf16 %v236, %v235
      %v7546 = vpack.c.bf16 %v238, %v237
      %v7547 = vld [vmem:[%s1] sm:$0xf]
      %v7548 = vld [vmem:[%s1 + $0x4] sm:$0xf]
      %v7549 = vld [vmem:[%s1 + $0x8] sm:$0xf]
      %v7550 = vld [vmem:[%s1 + $0x10] sm:$0xf]
      %7583 = vrot.lane.b32.xlu0 %v7515, 125
      %v7584 = vpop.permute.xlu0 %7583
      %7585 = vrot.lane.b32.xlu0 %v7516, 125
      %v7586 = vpop.permute.xlu0 %7585
      %7587 = vrot.lane.b32.xlu0 %v7517, 125
      %v7588 = vpop.permute.xlu0 %7587
      %7589 = vrot.lane.b32.xlu0 %v7518, 125
      %v7590 = vpop.permute.xlu0 %7589
      %7591 = vrot.lane.b32.xlu0 %v7519, 125
      %v7592 = vpop.permute.xlu0 %7591
      %7593 = vrot.lane.b32.xlu0 %v7520, 125
      %v7594 = vpop.permute.xlu0 %7593
      %7595 = vrot.lane.b32.xlu0 %v7521, 125
      %v7596 = vpop.permute.xlu0 %7595
      %7597 = vrot.lane.b32.xlu0 %v7522, 125
      %v7598 = vpop.permute.xlu0 %7597
      %7599 = vrot.lane.b32.xlu0 %v7523, 125
      %v7600 = vpop.permute.xlu0 %7599
      %7601 = vrot.lane.b32.xlu0 %v7524, 125
      %v7602 = vpop.permute.xlu0 %7601
      %7603 = vrot.lane.b32.xlu0 %v7525, 125
      %v7604 = vpop.permute.xlu0 %7603
      %7605 = vrot.lane.b32.xlu0 %v7526, 125
      %v7606 = vpop.permute.xlu0 %7605
      %7607 = vrot.lane.b32.xlu0 %v7527, 125
      %v7608 = vpop.permute.xlu0 %7607
      %7609 = vrot.lane.b32.xlu0 %v7528, 125
      %v7610 = vpop.permute.xlu0 %7609
      %7611 = vrot.lane.b32.xlu0 %v7529, 125
      %v7612 = vpop.permute.xlu0 %7611
      %7613 = vrot.lane.b32.xlu0 %v7530, 125
      %v7614 = vpop.permute.xlu0 %7613
      %7615 = vrot.lane.b32.xlu0 %v7531, 125
      %v7616 = vpop.permute.xlu0 %7615
      %7617 = vrot.lane.b32.xlu0 %v7532, 125
      %v7618 = vpop.permute.xlu0 %7617
      %7619 = vrot.lane.b32.xlu0 %v7533, 125
      %v7620 = vpop.permute.xlu0 %7619
      %7621 = vrot.lane.b32.xlu0 %v7534, 125
      %v7622 = vpop.permute.xlu0 %7621
      %7623 = vrot.lane.b32.xlu0 %v7535, 125
      %v7624 = vpop.permute.xlu0 %7623
      %7625 = vrot.lane.b32.xlu0 %v7536, 125
      %v7626 = vpop.permute.xlu0 %7625
      %7627 = vrot.lane.b32.xlu0 %v7537, 125
      %v7628 = vpop.permute.xlu0 %7627
      %7629 = vrot.lane.b32.xlu0 %v7538, 125
      %v7630 = vpop.permute.xlu0 %7629
      %7631 = vrot.lane.b32.xlu0 %v7539, 125
      %v7632 = vpop.permute.xlu0 %7631
      %7633 = vrot.lane.b32.xlu0 %v7540, 125
      %v7634 = vpop.permute.xlu0 %7633
      %7635 = vrot.lane.b32.xlu0 %v7541, 125
      %v7636 = vpop.permute.xlu0 %7635
      %7637 = vrot.lane.b32.xlu0 %v7542, 125
      %v7638 = vpop.permute.xlu0 %7637
      %7639 = vrot.lane.b32.xlu0 %v7543, 125
      %v7640 = vpop.permute.xlu0 %7639
      %7641 = vrot.lane.b32.xlu0 %v7544, 125
      %v7642 = vpop.permute.xlu0 %7641
      %7643 = vrot.lane.b32.xlu0 %v7545, 125
      %v7644 = vpop.permute.xlu0 %7643
      %7645 = vrot.lane.b32.xlu0 %v7546, 125
      %v7646 = vpop.permute.xlu0 %7645
      %vm7647 = vcmask 64512
      %v7649 = vsel %vm7647, %v7584, 0
      %v7652 = vsel %vm7647, %v7586, 0
      %v7655 = vsel %vm7647, %v7588, 0
      %v7658 = vsel %vm7647, %v7590, 0
      %v7661 = vsel %vm7647, %v7592, 0
      %v7664 = vsel %vm7647, %v7594, 0
      %v7667 = vsel %vm7647, %v7596, 0
      %v7670 = vsel %vm7647, %v7598, 0
      %v7673 = vsel %vm7647, %v7600, 0
      %v7676 = vsel %vm7647, %v7602, 0
      %v7679 = vsel %vm7647, %v7604, 0
      %v7682 = vsel %vm7647, %v7606, 0
      %v7685 = vsel %vm7647, %v7608, 0
      %v7688 = vsel %vm7647, %v7610, 0
      %v7691 = vsel %vm7647, %v7612, 0
      %v7694 = vsel %vm7647, %v7614, 0
      %v7697 = vsel %vm7647, %v7616, 0
      %v7700 = vsel %vm7647, %v7618, 0
      %v7703 = vsel %vm7647, %v7620, 0
      %v7706 = vsel %vm7647, %v7622, 0
      %v7709 = vsel %vm7647, %v7624, 0
      %v7712 = vsel %vm7647, %v7626, 0
      %v7715 = vsel %vm7647, %v7628, 0
      %v7718 = vsel %vm7647, %v7630, 0
      %v7721 = vsel %vm7647, %v7632, 0
      %v7724 = vsel %vm7647, %v7634, 0
      %v7727 = vsel %vm7647, %v7636, 0
      %v7730 = vsel %vm7647, %v7638, 0
      %v7733 = vsel %vm7647, %v7640, 0
      %v7736 = vsel %vm7647, %v7642, 0
      %v7739 = vsel %vm7647, %v7644, 0
      %v7742 = vsel %vm7647, %v7646, 0
      %vm7744 = vcmask 1043456
      %v7746 = vsel %vm7744, %v7550, 0
      %7748 = vmatprep.subr.bf16.mxu0 0
      %7749 = vmatpush1.bf16.msra.mxu0 %v7746
      %7750 = vmatprep.subr.bf16.mxu0 0
      %7751 = vmatpush1.bf16.msra.mxu0 0
      %7752 = vmatprep.subr.bf16.mxu0 0
      %7753 = vmatpush1.bf16.msra.mxu0 0
      %7754 = vmatprep.subr.bf16.mxu0 0
      %7755 = vmatpush1.bf16.msra.mxu0 0
      %7756 = vmatprep.subr.bf16.mxu0 0
      %7757 = vmatpush1.bf16.msra.mxu0 0
      %7758 = vmatprep.subr.bf16.mxu0 0
      %7759 = vmatpush1.bf16.msra.mxu0 0
      %7760 = vmatprep.subr.bf16.mxu0 0
      %7761 = vmatpush1.bf16.msra.mxu0 0
      %7762 = vmatprep.subr.bf16.mxu0 0
      %7763 = vmatpush1.bf16.msra.mxu0 0
      %7764 = vmatprep.subr.bf16.mxu0 0
      %7765 = vmatpush1.bf16.msra.mxu0 0
      %7766 = vmatprep.subr.bf16.mxu0 0
      %7767 = vmatpush1.bf16.msra.mxu0 0
      %7768 = vmatprep.subr.bf16.mxu0 0
      %7769 = vmatpush1.bf16.msra.mxu0 0
      %7770 = vmatprep.subr.bf16.mxu0 0
      %7771 = vmatpush1.bf16.msra.mxu0 0
      %7772 = vmatprep.subr.bf16.mxu0 0
      %7773 = vmatpush1.bf16.msra.mxu0 0
      %7774 = vmatprep.subr.bf16.mxu0 0
      %7775 = vmatpush1.bf16.msra.mxu0 0
      %7776 = vmatprep.subr.bf16.mxu0 0
      %7777 = vmatpush1.bf16.msra.mxu0 0
      %7778 = vmatprep.subr.bf16.mxu0 0
      %7779 = vmatpush1.bf16.msra.mxu0 0
      %7780 = vmatprep.mubr.bf16.mxu0 0
      %7781 = vmatmul.mubr.bf16.gmra.mrb[0].mxu0 %v7649
      %v7782 = vpop.f32.mrb[0].mxu0
      %v7783 = vadd.f32 0.0, %v7782
      %v7784 = vpop.f32.mrb[0].mxu0
      %v7785 = vpop.f32.mrb[0].mxu0
      %v7786 = vadd.f32 0.0, %v7785
      %v7787 = vpop.f32.mrb[0].mxu0
      %7788 = vmatprep.mubr.bf16.mxu0 0
      %7789 = vmatmul.mubr.bf16.gmra.mrb[0].mxu0 %v7652
      %v7790 = vpop.f32.mrb[0].mxu0
      %v7791 = vadd.f32 0.0, %v7790
      %v7792 = vpop.f32.mrb[0].mxu0
      %v7793 = vpop.f32.mrb[0].mxu0
      %v7794 = vadd.f32 0.0, %v7793
      %v7795 = vpop.f32.mrb[0].mxu0
      %7796 = vmatprep.mubr.bf16.mxu0 0
      %7797 = vmatmul.mubr.bf16.gmra.mrb[0].mxu0 %v7655
      %v7798 = vpop.f32.mrb[0].mxu0
      %v7799 = vadd.f32 0.0, %v7798
      %v7800 = vpop.f32.mrb[0].mxu0
      %v7801 = vpop.f32.mrb[0].mxu0
      %v7802 = vadd.f32 0.0, %v7801
      %v7803 = vpop.f32.mrb[0].mxu0
      %7804 = vmatprep.mubr.bf16.mxu0 0
      %7805 = vmatmul.mubr.bf16.gmra.mrb[0].mxu0 %v7658
      %v7806 = vpop.f32.mrb[0].mxu0
      %v7807 = vadd.f32 0.0, %v7806
      %v7808 = vpop.f32.mrb[0].mxu0
      %v7809 = vpop.f32.mrb[0].mxu0
      %v7810 = vadd.f32 0.0, %v7809
      %v7811 = vpop.f32.mrb[0].mxu0
      %7812 = vmatprep.mubr.bf16.mxu0 0
      %7813 = vmatmul.mubr.bf16.gmra.mrb[0].mxu0 %v7661
      %v7814 = vpop.f32.mrb[0].mxu0
      %v7815 = vadd.f32 0.0, %v7814
      %v7816 = vpop.f32.mrb[0].mxu0
      %v7817 = vpop.f32.mrb[0].mxu0
      %v7818 = vadd.f32 0.0, %v7817
      %v7819 = vpop.f32.mrb[0].mxu0
      %7820 = vmatprep.mubr.bf16.mxu0 0
      %7821 = vmatmul.mubr.bf16.gmra.mrb[0].mxu0 %v7664
      %v7822 = vpop.f32.mrb[0].mxu0
      %v7823 = vadd.f32 0.0, %v7822
      %v7824 = vpop.f32.mrb[0].mxu0
      %v7825 = vpop.f32.mrb[0].mxu0
      %v7826 = vadd.f32 0.0, %v7825
      %v7827 = vpop.f32.mrb[0].mxu0
      %7828 = vmatprep.mubr.bf16.mxu0 0
      %7829 = vmatmul.mubr.bf16.gmra.mrb[0].mxu0 %v7667
      %v7830 = vpop.f32.mrb[0].mxu0
      %v7831 = vadd.f32 0.0, %v7830
      %v7832 = vpop.f32.mrb[0].mxu0
      %v7833 = vpop.f32.mrb[0].mxu0
      %v7834 = vadd.f32 0.0, %v7833
      %v7835 = vpop.f32.mrb[0].mxu0
      %7836 = vmatprep.mubr.bf16.mxu0 0
      %7837 = vmatmul.mubr.bf16.gmra.mrb[0].mxu0 %v7670
      %v7838 = vpop.f32.mrb[0].mxu0
      %v7839 = vadd.f32 0.0, %v7838
      %v7840 = vpop.f32.mrb[0].mxu0
      %v7841 = vpop.f32.mrb[0].mxu0
      %v7842 = vadd.f32 0.0, %v7841
      %v7843 = vpop.f32.mrb[0].mxu0
      %7844 = vmatprep.mubr.bf16.mxu0 0
      %7845 = vmatmul.mubr.bf16.gmra.mrb[0].mxu0 %v7673
      %v7846 = vpop.f32.mrb[0].mxu0
      %v7847 = vadd.f32 0.0, %v7846
      %v7848 = vpop.f32.mrb[0].mxu0
      %v7849 = vpop.f32.mrb[0].mxu0
      %v7850 = vadd.f32 0.0, %v7849
      %v7851 = vpop.f32.mrb[0].mxu0
      %7852 = vmatprep.mubr.bf16.mxu0 0
      %7853 = vmatmul.mubr.bf16.gmra.mrb[0].mxu0 %v7676
      %v7854 = vpop.f32.mrb[0].mxu0
      %v7855 = vadd.f32 0.0, %v7854
      %v7856 = vpop.f32.mrb[0].mxu0
      %v7857 = vpop.f32.mrb[0].mxu0
      %v7858 = vadd.f32 0.0, %v7857
      %v7859 = vpop.f32.mrb[0].mxu0
      %7860 = vmatprep.mubr.bf16.mxu0 0
      %7861 = vmatmul.mubr.bf16.gmra.mrb[0].mxu0 %v7679
      %v7862 = vpop.f32.mrb[0].mxu0
      %v7863 = vadd.f32 0.0, %v7862
      %v7864 = vpop.f32.mrb[0].mxu0
      %v7865 = vpop.f32.mrb[0].mxu0
      %v7866 = vadd.f32 0.0, %v7865
      %v7867 = vpop.f32.mrb[0].mxu0
      %7868 = vmatprep.mubr.bf16.mxu0 0
      %7869 = vmatmul.mubr.bf16.gmra.mrb[0].mxu0 %v7682
      %v7870 = vpop.f32.mrb[0].mxu0
      %v7871 = vadd.f32 0.0, %v7870
      %v7872 = vpop.f32.mrb[0].mxu0
      %v7873 = vpop.f32.mrb[0].mxu0
      %v7874 = vadd.f32 0.0, %v7873
      %v7875 = vpop.f32.mrb[0].mxu0
      %7876 = vmatprep.mubr.bf16.mxu0 0
      %7877 = vmatmul.mubr.bf16.gmra.mrb[0].mxu0 %v7685
      %v7878 = vpop.f32.mrb[0].mxu0
      %v7879 = vadd.f32 0.0, %v7878
      %v7880 = vpop.f32.mrb[0].mxu0
      %v7881 = vpop.f32.mrb[0].mxu0
      %v7882 = vadd.f32 0.0, %v7881
      %v7883 = vpop.f32.mrb[0].mxu0
      %7884 = vmatprep.mubr.bf16.mxu0 0
      %7885 = vmatmul.mubr.bf16.gmra.mrb[0].mxu0 %v7688
      %v7886 = vpop.f32.mrb[0].mxu0
      %v7887 = vadd.f32 0.0, %v7886
      %v7888 = vpop.f32.mrb[0].mxu0
      %v7889 = vpop.f32.mrb[0].mxu0
      %v7890 = vadd.f32 0.0, %v7889
      %v7891 = vpop.f32.mrb[0].mxu0
      %7892 = vmatprep.mubr.bf16.mxu0 0
      %7893 = vmatmul.mubr.bf16.gmra.mrb[0].mxu0 %v7691
      %v7894 = vpop.f32.mrb[0].mxu0
      %v7895 = vadd.f32 0.0, %v7894
      %v7896 = vpop.f32.mrb[0].mxu0
      %v7897 = vpop.f32.mrb[0].mxu0
      %v7898 = vadd.f32 0.0, %v7897
      %v7899 = vpop.f32.mrb[0].mxu0
      %7900 = vmatprep.mubr.bf16.mxu0 0
      %7901 = vmatmul.mubr.bf16.gmra.mrb[0].mxu0 %v7694
      %v7902 = vpop.f32.mrb[0].mxu0
      %v7903 = vadd.f32 0.0, %v7902
      %v7904 = vpop.f32.mrb[0].mxu0
      %v7905 = vpop.f32.mrb[0].mxu0
      %v7906 = vadd.f32 0.0, %v7905
      %v7907 = vpop.f32.mrb[0].mxu0
      %7908 = vmatprep.mubr.bf16.mxu0 0
      %7909 = vmatmul.mubr.bf16.gmra.mrb[0].mxu0 %v7697
      %v7910 = vpop.f32.mrb[0].mxu0
      %v7911 = vadd.f32 0.0, %v7910
      %v7912 = vpop.f32.mrb[0].mxu0
      %v7913 = vpop.f32.mrb[0].mxu0
      %v7914 = vadd.f32 0.0, %v7913
      %v7915 = vpop.f32.mrb[0].mxu0
      %7916 = vmatprep.mubr.bf16.mxu0 0
      %7917 = vmatmul.mubr.bf16.gmra.mrb[0].mxu0 %v7700
      %v7918 = vpop.f32.mrb[0].mxu0
      %v7919 = vadd.f32 0.0, %v7918
      %v7920 = vpop.f32.mrb[0].mxu0
      %v7921 = vpop.f32.mrb[0].mxu0
      %v7922 = vadd.f32 0.0, %v7921
      %v7923 = vpop.f32.mrb[0].mxu0
      %7924 = vmatprep.mubr.bf16.mxu0 0
      %7925 = vmatmul.mubr.bf16.gmra.mrb[0].mxu0 %v7703
      %v7926 = vpop.f32.mrb[0].mxu0
      %v7927 = vadd.f32 0.0, %v7926
      %v7928 = vpop.f32.mrb[0].mxu0
      %v7929 = vpop.f32.mrb[0].mxu0
      %v7930 = vadd.f32 0.0, %v7929
      %v7931 = vpop.f32.mrb[0].mxu0
      %7932 = vmatprep.mubr.bf16.mxu0 0
      %7933 = vmatmul.mubr.bf16.gmra.mrb[0].mxu0 %v7706
      %v7934 = vpop.f32.mrb[0].mxu0
      %v7935 = vadd.f32 0.0, %v7934
      %v7936 = vpop.f32.mrb[0].mxu0
      %v7937 = vpop.f32.mrb[0].mxu0
      %v7938 = vadd.f32 0.0, %v7937
      %v7939 = vpop.f32.mrb[0].mxu0
      %7940 = vmatprep.mubr.bf16.mxu0 0
      %7941 = vmatmul.mubr.bf16.gmra.mrb[0].mxu0 %v7709
      %v7942 = vpop.f32.mrb[0].mxu0
      %v7943 = vadd.f32 0.0, %v7942
      %v7944 = vpop.f32.mrb[0].mxu0
      %v7945 = vpop.f32.mrb[0].mxu0
      %v7946 = vadd.f32 0.0, %v7945
      %v7947 = vpop.f32.mrb[0].mxu0
      %7948 = vmatprep.mubr.bf16.mxu0 0
      %7949 = vmatmul.mubr.bf16.gmra.mrb[0].mxu0 %v7712
      %v7950 = vpop.f32.mrb[0].mxu0
      %v7951 = vadd.f32 0.0, %v7950
      %v7952 = vpop.f32.mrb[0].mxu0
      %v7953 = vpop.f32.mrb[0].mxu0
      %v7954 = vadd.f32 0.0, %v7953
      %v7955 = vpop.f32.mrb[0].mxu0
      %7956 = vmatprep.mubr.bf16.mxu0 0
      %7957 = vmatmul.mubr.bf16.gmra.mrb[0].mxu0 %v7715
      %v7958 = vpop.f32.mrb[0].mxu0
      %v7959 = vadd.f32 0.0, %v7958
      %v7960 = vpop.f32.mrb[0].mxu0
      %v7961 = vpop.f32.mrb[0].mxu0
      %v7962 = vadd.f32 0.0, %v7961
      %v7963 = vpop.f32.mrb[0].mxu0
      %7964 = vmatprep.mubr.bf16.mxu0 0
      %7965 = vmatmul.mubr.bf16.gmra.mrb[0].mxu0 %v7718
      %v7966 = vpop.f32.mrb[0].mxu0
      %v7967 = vadd.f32 0.0, %v7966
      %v7968 = vpop.f32.mrb[0].mxu0
      %v7969 = vpop.f32.mrb[0].mxu0
      %v7970 = vadd.f32 0.0, %v7969
      %v7971 = vpop.f32.mrb[0].mxu0
      %7972 = vmatprep.mubr.bf16.mxu0 0
      %7973 = vmatmul.mubr.bf16.gmra.mrb[0].mxu0 %v7721
      %v7974 = vpop.f32.mrb[0].mxu0
      %v7975 = vadd.f32 0.0, %v7974
      %v7976 = vpop.f32.mrb[0].mxu0
      %v7977 = vpop.f32.mrb[0].mxu0
      %v7978 = vadd.f32 0.0, %v7977
      %v7979 = vpop.f32.mrb[0].mxu0
      %7980 = vmatprep.mubr.bf16.mxu0 0
      %7981 = vmatmul.mubr.bf16.gmra.mrb[0].mxu0 %v7724
      %v7982 = vpop.f32.mrb[0].mxu0
      %v7983 = vadd.f32 0.0, %v7982
      %v7984 = vpop.f32.mrb[0].mxu0
      %v7985 = vpop.f32.mrb[0].mxu0
      %v7986 = vadd.f32 0.0, %v7985
      %v7987 = vpop.f32.mrb[0].mxu0
      %7988 = vmatprep.mubr.bf16.mxu0 0
      %7989 = vmatmul.mubr.bf16.gmra.mrb[0].mxu0 %v7727
      %v7990 = vpop.f32.mrb[0].mxu0
      %v7991 = vadd.f32 0.0, %v7990
      %v7992 = vpop.f32.mrb[0].mxu0
      %v7993 = vpop.f32.mrb[0].mxu0
      %v7994 = vadd.f32 0.0, %v7993
      %v7995 = vpop.f32.mrb[0].mxu0
      %7996 = vmatprep.mubr.bf16.mxu0 0
      %7997 = vmatmul.mubr.bf16.gmra.mrb[0].mxu0 %v7730
      %v7998 = vpop.f32.mrb[0].mxu0
      %v7999 = vadd.f32 0.0, %v7998
      %v8000 = vpop.f32.mrb[0].mxu0
      %v8001 = vpop.f32.mrb[0].mxu0
      %v8002 = vadd.f32 0.0, %v8001
      %v8003 = vpop.f32.mrb[0].mxu0
      %8004 = vmatprep.mubr.bf16.mxu0 0
      %8005 = vmatmul.mubr.bf16.gmra.mrb[0].mxu0 %v7733
      %v8006 = vpop.f32.mrb[0].mxu0
      %v8007 = vadd.f32 0.0, %v8006
      %v8008 = vpop.f32.mrb[0].mxu0
      %v8009 = vpop.f32.mrb[0].mxu0
      %v8010 = vadd.f32 0.0, %v8009
      %v8011 = vpop.f32.mrb[0].mxu0
      %8012 = vmatprep.mubr.bf16.mxu0 0
      %8013 = vmatmul.mubr.bf16.gmra.mrb[0].mxu0 %v7736
      %v8014 = vpop.f32.mrb[0].mxu0
      %v8015 = vadd.f32 0.0, %v8014
      %v8016 = vpop.f32.mrb[0].mxu0
      %v8017 = vpop.f32.mrb[0].mxu0
      %v8018 = vadd.f32 0.0, %v8017
      %v8019 = vpop.f32.mrb[0].mxu0
      %8020 = vmatprep.mubr.bf16.mxu0 0
      %8021 = vmatmul.mubr.bf16.gmra.mrb[0].mxu0 %v7739
      %v8022 = vpop.f32.mrb[0].mxu0
      %v8023 = vadd.f32 0.0, %v8022
      %v8024 = vpop.f32.mrb[0].mxu0
      %v8025 = vpop.f32.mrb[0].mxu0
      %v8026 = vadd.f32 0.0, %v8025
      %v8027 = vpop.f32.mrb[0].mxu0
      %8028 = vmatprep.mubr.bf16.mxu0 0
      %8029 = vmatmul.mubr.bf16.gmra.mrb[0].mxu0 %v7742
      %v8030 = vpop.f32.mrb[0].mxu0
      %v8031 = vadd.f32 0.0, %v8030
      %v8032 = vpop.f32.mrb[0].mxu0
      %v8033 = vpop.f32.mrb[0].mxu0
      %v8034 = vadd.f32 0.0, %v8033
      %v8035 = vpop.f32.mrb[0].mxu0
      %8036 = vdwg.mxu0
      %v8040 = vunpack.c.l.b16 %v7547
      %v8041 = vunpack.c.l.b16 %v7548
      %v8042 = vunpack.c.l.b16 %v7549
      %v8043 = vpack.c.b16 %v8041, %v8040
      %v8044 = vpack.c.b16 %v8042, %v8042
      %vm8046 = vcmask 195584
      %v8048 = vsel %vm8046, %v7483, 0
      %v8051 = vsel %vm8046, %v7484, 0
      %v8054 = vsel %vm8046, %v7485, 0
      %v8057 = vsel %vm8046, %v7486, 0
      %v8060 = vsel %vm8046, %v7487, 0
      %v8063 = vsel %vm8046, %v7488, 0
      %v8066 = vsel %vm8046, %v7489, 0
      %v8069 = vsel %vm8046, %v7490, 0
      %v8072 = vsel %vm8046, %v7491, 0
      %v8075 = vsel %vm8046, %v7492, 0
      %v8078 = vsel %vm8046, %v7493, 0
      %v8081 = vsel %vm8046, %v7494, 0
      %v8084 = vsel %vm8046, %v7495, 0
      %v8087 = vsel %vm8046, %v7496, 0
      %v8090 = vsel %vm8046, %v7497, 0
      %v8093 = vsel %vm8046, %v7498, 0
      %v8096 = vsel %vm8046, %v7499, 0
      %v8099 = vsel %vm8046, %v7500, 0
      %v8102 = vsel %vm8046, %v7501, 0
      %v8105 = vsel %vm8046, %v7502, 0
      %v8108 = vsel %vm8046, %v7503, 0
      %v8111 = vsel %vm8046, %v7504, 0
      %v8114 = vsel %vm8046, %v7505, 0
      %v8117 = vsel %vm8046, %v7506, 0
      %v8120 = vsel %vm8046, %v7507, 0
      %v8123 = vsel %vm8046, %v7508, 0
      %v8126 = vsel %vm8046, %v7509, 0
      %v8129 = vsel %vm8046, %v7510, 0
      %v8132 = vsel %vm8046, %v7511, 0
      %v8135 = vsel %vm8046, %v7512, 0
      %v8138 = vsel %vm8046, %v7513, 0
      %v8141 = vsel %vm8046, %v7514, 0
      %v8144 = vsel %vm7744, %v8044, 0
      %8146 = vmatprep.subr.bf16.mxu0 0
      %8147 = vmatpush1.bf16.msra.mxu0 %v8043
      %8148 = vmatprep.subr.bf16.mxu0 0
      %8149 = vmatpush1.bf16.msra.mxu0 %v8144
      %8150 = vmatprep.subr.bf16.mxu0 0
      %8151 = vmatpush1.bf16.msra.mxu0 0
      %8152 = vmatprep.subr.bf16.mxu0 0
      %8153 = vmatpush1.bf16.msra.mxu0 0
      %8154 = vmatprep.subr.bf16.mxu0 0
      %8155 = vmatpush1.bf16.msra.mxu0 0
      %8156 = vmatprep.subr.bf16.mxu0 0
      %8157 = vmatpush1.bf16.msra.mxu0 0
      %8158 = vmatprep.subr.bf16.mxu0 0
      %8159 = vmatpush1.bf16.msra.mxu0 0
      %8160 = vmatprep.subr.bf16.mxu0 0
      %8161 = vmatpush1.bf16.msra.mxu0 0
      %8162 = vmatprep.subr.bf16.mxu0 0
      %8163 = vmatpush1.bf16.msra.mxu0 0
      %8164 = vmatprep.subr.bf16.mxu0 0
      %8165 = vmatpush1.bf16.msra.mxu0 0
      %8166 = vmatprep.subr.bf16.mxu0 0
      %8167 = vmatpush1.bf16.msra.mxu0 0
      %8168 = vmatprep.subr.bf16.mxu0 0
      %8169 = vmatpush1.bf16.msra.mxu0 0
      %8170 = vmatprep.subr.bf16.mxu0 0
      %8171 = vmatpush1.bf16.msra.mxu0 0
      %8172 = vmatprep.subr.bf16.mxu0 0
      %8173 = vmatpush1.bf16.msra.mxu0 0
      %8174 = vmatprep.subr.bf16.mxu0 0
      %8175 = vmatpush1.bf16.msra.mxu0 0
      %8176 = vmatprep.subr.bf16.mxu0 0
      %8177 = vmatpush1.bf16.msra.mxu0 0
      %8178 = vmatprep.mubr.bf16.mxu0 0
      %8179 = vmatmul.mubr.bf16.gmra.mrb[0].mxu0 %v8048
      %v8180 = vpop.f32.mrb[0].mxu0
      %v8181 = vadd.f32 %v7783, %v8180
      %v8182 = vpop.f32.mrb[0].mxu0
      %v8183 = vpop.f32.mrb[0].mxu0
      %v8184 = vadd.f32 %v7786, %v8183
      %v8185 = vpop.f32.mrb[0].mxu0
      %8186 = vmatprep.mubr.bf16.mxu0 0
      %8187 = vmatmul.mubr.bf16.gmra.mrb[0].mxu0 %v8051
      %v8188 = vpop.f32.mrb[0].mxu0
      %v8189 = vadd.f32 %v7791, %v8188
      %v8190 = vpop.f32.mrb[0].mxu0
      %v8191 = vpop.f32.mrb[0].mxu0
      %v8192 = vadd.f32 %v7794, %v8191
      %v8193 = vpop.f32.mrb[0].mxu0
      %8194 = vmatprep.mubr.bf16.mxu0 0
      %8195 = vmatmul.mubr.bf16.gmra.mrb[0].mxu0 %v8054
      %v8196 = vpop.f32.mrb[0].mxu0
      %v8197 = vadd.f32 %v7799, %v8196
      %v8198 = vpop.f32.mrb[0].mxu0
      %v8199 = vpop.f32.mrb[0].mxu0
      %v8200 = vadd.f32 %v7802, %v8199
      %v8201 = vpop.f32.mrb[0].mxu0
      %8202 = vmatprep.mubr.bf16.mxu0 0
      %8203 = vmatmul.mubr.bf16.gmra.mrb[0].mxu0 %v8057
      %v8204 = vpop.f32.mrb[0].mxu0
      %v8205 = vadd.f32 %v7807, %v8204
      %v8206 = vpop.f32.mrb[0].mxu0
      %v8207 = vpop.f32.mrb[0].mxu0
      %v8208 = vadd.f32 %v7810, %v8207
      %v8209 = vpop.f32.mrb[0].mxu0
      %8210 = vmatprep.mubr.bf16.mxu0 0
      %8211 = vmatmul.mubr.bf16.gmra.mrb[0].mxu0 %v8060
      %v8212 = vpop.f32.mrb[0].mxu0
      %v8213 = vadd.f32 %v7815, %v8212
      %v8214 = vpop.f32.mrb[0].mxu0
      %v8215 = vpop.f32.mrb[0].mxu0
      %v8216 = vadd.f32 %v7818, %v8215
      %v8217 = vpop.f32.mrb[0].mxu0
      %8218 = vmatprep.mubr.bf16.mxu0 0
      %8219 = vmatmul.mubr.bf16.gmra.mrb[0].mxu0 %v8063
      %v8220 = vpop.f32.mrb[0].mxu0
      %v8221 = vadd.f32 %v7823, %v8220
      %v8222 = vpop.f32.mrb[0].mxu0
      %v8223 = vpop.f32.mrb[0].mxu0
      %v8224 = vadd.f32 %v7826, %v8223
      %v8225 = vpop.f32.mrb[0].mxu0
      %8226 = vmatprep.mubr.bf16.mxu0 0
      %8227 = vmatmul.mubr.bf16.gmra.mrb[0].mxu0 %v8066
      %v8228 = vpop.f32.mrb[0].mxu0
      %v8229 = vadd.f32 %v7831, %v8228
      %v8230 = vpop.f32.mrb[0].mxu0
      %v8231 = vpop.f32.mrb[0].mxu0
      %v8232 = vadd.f32 %v7834, %v8231
      %v8233 = vpop.f32.mrb[0].mxu0
      %8234 = vmatprep.mubr.bf16.mxu0 0
      %8235 = vmatmul.mubr.bf16.gmra.mrb[0].mxu0 %v8069
      %v8236 = vpop.f32.mrb[0].mxu0
      %v8237 = vadd.f32 %v7839, %v8236
      %v8238 = vpop.f32.mrb[0].mxu0
      %v8239 = vpop.f32.mrb[0].mxu0
      %v8240 = vadd.f32 %v7842, %v8239
      %v8241 = vpop.f32.mrb[0].mxu0
      %8242 = vmatprep.mubr.bf16.mxu0 0
      %8243 = vmatmul.mubr.bf16.gmra.mrb[0].mxu0 %v8072
      %v8244 = vpop.f32.mrb[0].mxu0
      %v8245 = vadd.f32 %v7847, %v8244
      %v8246 = vpop.f32.mrb[0].mxu0
      %v8247 = vpop.f32.mrb[0].mxu0
      %v8248 = vadd.f32 %v7850, %v8247
      %v8249 = vpop.f32.mrb[0].mxu0
      %8250 = vmatprep.mubr.bf16.mxu0 0
      %8251 = vmatmul.mubr.bf16.gmra.mrb[0].mxu0 %v8075
      %v8252 = vpop.f32.mrb[0].mxu0
      %v8253 = vadd.f32 %v7855, %v8252
      %v8254 = vpop.f32.mrb[0].mxu0
      %v8255 = vpop.f32.mrb[0].mxu0
      %v8256 = vadd.f32 %v7858, %v8255
      %v8257 = vpop.f32.mrb[0].mxu0
      %8258 = vmatprep.mubr.bf16.mxu0 0
      %8259 = vmatmul.mubr.bf16.gmra.mrb[0].mxu0 %v8078
      %v8260 = vpop.f32.mrb[0].mxu0
      %v8261 = vadd.f32 %v7863, %v8260
      %v8262 = vpop.f32.mrb[0].mxu0
      %v8263 = vpop.f32.mrb[0].mxu0
      %v8264 = vadd.f32 %v7866, %v8263
      %v8265 = vpop.f32.mrb[0].mxu0
      %8266 = vmatprep.mubr.bf16.mxu0 0
      %8267 = vmatmul.mubr.bf16.gmra.mrb[0].mxu0 %v8081
      %v8268 = vpop.f32.mrb[0].mxu0
      %v8269 = vadd.f32 %v7871, %v8268
      %v8270 = vpop.f32.mrb[0].mxu0
      %v8271 = vpop.f32.mrb[0].mxu0
      %v8272 = vadd.f32 %v7874, %v8271
      %v8273 = vpop.f32.mrb[0].mxu0
      %8274 = vmatprep.mubr.bf16.mxu0 0
      %8275 = vmatmul.mubr.bf16.gmra.mrb[0].mxu0 %v8084
      %v8276 = vpop.f32.mrb[0].mxu0
      %v8277 = vadd.f32 %v7879, %v8276
      %v8278 = vpop.f32.mrb[0].mxu0
      %v8279 = vpop.f32.mrb[0].mxu0
      %v8280 = vadd.f32 %v7882, %v8279
      %v8281 = vpop.f32.mrb[0].mxu0
      %8282 = vmatprep.mubr.bf16.mxu0 0
      %8283 = vmatmul.mubr.bf16.gmra.mrb[0].mxu0 %v8087
      %v8284 = vpop.f32.mrb[0].mxu0
      %v8285 = vadd.f32 %v7887, %v8284
      %v8286 = vpop.f32.mrb[0].mxu0
      %v8287 = vpop.f32.mrb[0].mxu0
      %v8288 = vadd.f32 %v7890, %v8287
      %v8289 = vpop.f32.mrb[0].mxu0
      %8290 = vmatprep.mubr.bf16.mxu0 0
      %8291 = vmatmul.mubr.bf16.gmra.mrb[0].mxu0 %v8090
      %v8292 = vpop.f32.mrb[0].mxu0
      %v8293 = vadd.f32 %v7895, %v8292
      %v8294 = vpop.f32.mrb[0].mxu0
      %v8295 = vpop.f32.mrb[0].mxu0
      %v8296 = vadd.f32 %v7898, %v8295
      %v8297 = vpop.f32.mrb[0].mxu0
      %8298 = vmatprep.mubr.bf16.mxu0 0
      %8299 = vmatmul.mubr.bf16.gmra.mrb[0].mxu0 %v8093
      %v8300 = vpop.f32.mrb[0].mxu0
      %v8301 = vadd.f32 %v7903, %v8300
      %v8302 = vpop.f32.mrb[0].mxu0
      %v8303 = vpop.f32.mrb[0].mxu0
      %v8304 = vadd.f32 %v7906, %v8303
      %v8305 = vpop.f32.mrb[0].mxu0
      %8306 = vmatprep.mubr.bf16.mxu0 0
      %8307 = vmatmul.mubr.bf16.gmra.mrb[0].mxu0 %v8096
      %v8308 = vpop.f32.mrb[0].mxu0
      %v8309 = vadd.f32 %v7911, %v8308
      %v8310 = vpop.f32.mrb[0].mxu0
      %v8311 = vpop.f32.mrb[0].mxu0
      %v8312 = vadd.f32 %v7914, %v8311
      %v8313 = vpop.f32.mrb[0].mxu0
      %8314 = vmatprep.mubr.bf16.mxu0 0
      %8315 = vmatmul.mubr.bf16.gmra.mrb[0].mxu0 %v8099
      %v8316 = vpop.f32.mrb[0].mxu0
      %v8317 = vadd.f32 %v7919, %v8316
      %v8318 = vpop.f32.mrb[0].mxu0
      %v8319 = vpop.f32.mrb[0].mxu0
      %v8320 = vadd.f32 %v7922, %v8319
      %v8321 = vpop.f32.mrb[0].mxu0
      %8322 = vmatprep.mubr.bf16.mxu0 0
      %8323 = vmatmul.mubr.bf16.gmra.mrb[0].mxu0 %v8102
      %v8324 = vpop.f32.mrb[0].mxu0
      %v8325 = vadd.f32 %v7927, %v8324
      %v8326 = vpop.f32.mrb[0].mxu0
      %v8327 = vpop.f32.mrb[0].mxu0
      %v8328 = vadd.f32 %v7930, %v8327
      %v8329 = vpop.f32.mrb[0].mxu0
      %8330 = vmatprep.mubr.bf16.mxu0 0
      %8331 = vmatmul.mubr.bf16.gmra.mrb[0].mxu0 %v8105
      %v8332 = vpop.f32.mrb[0].mxu0
      %v8333 = vadd.f32 %v7935, %v8332
      %v8334 = vpop.f32.mrb[0].mxu0
      %v8335 = vpop.f32.mrb[0].mxu0
      %v8336 = vadd.f32 %v7938, %v8335
      %v8337 = vpop.f32.mrb[0].mxu0
      %8338 = vmatprep.mubr.bf16.mxu0 0
      %8339 = vmatmul.mubr.bf16.gmra.mrb[0].mxu0 %v8108
      %v8340 = vpop.f32.mrb[0].mxu0
      %v8341 = vadd.f32 %v7943, %v8340
      %v8342 = vpop.f32.mrb[0].mxu0
      %v8343 = vpop.f32.mrb[0].mxu0
      %v8344 = vadd.f32 %v7946, %v8343
      %v8345 = vpop.f32.mrb[0].mxu0
      %8346 = vmatprep.mubr.bf16.mxu0 0
      %8347 = vmatmul.mubr.bf16.gmra.mrb[0].mxu0 %v8111
      %v8348 = vpop.f32.mrb[0].mxu0
      %v8349 = vadd.f32 %v7951, %v8348
      %v8350 = vpop.f32.mrb[0].mxu0
      %v8351 = vpop.f32.mrb[0].mxu0
      %v8352 = vadd.f32 %v7954, %v8351
      %v8353 = vpop.f32.mrb[0].mxu0
      %8354 = vmatprep.mubr.bf16.mxu0 0
      %8355 = vmatmul.mubr.bf16.gmra.mrb[0].mxu0 %v8114
      %v8356 = vpop.f32.mrb[0].mxu0
      %v8357 = vadd.f32 %v7959, %v8356
      %v8358 = vpop.f32.mrb[0].mxu0
      %v8359 = vpop.f32.mrb[0].mxu0
      %v8360 = vadd.f32 %v7962, %v8359
      %v8361 = vpop.f32.mrb[0].mxu0
      %8362 = vmatprep.mubr.bf16.mxu0 0
      %8363 = vmatmul.mubr.bf16.gmra.mrb[0].mxu0 %v8117
      %v8364 = vpop.f32.mrb[0].mxu0
      %v8365 = vadd.f32 %v7967, %v8364
      %v8366 = vpop.f32.mrb[0].mxu0
      %v8367 = vpop.f32.mrb[0].mxu0
      %v8368 = vadd.f32 %v7970, %v8367
      %v8369 = vpop.f32.mrb[0].mxu0
      %8370 = vmatprep.mubr.bf16.mxu0 0
      %8371 = vmatmul.mubr.bf16.gmra.mrb[0].mxu0 %v8120
      %v8372 = vpop.f32.mrb[0].mxu0
      %v8373 = vadd.f32 %v7975, %v8372
      %v8374 = vpop.f32.mrb[0].mxu0
      %v8375 = vpop.f32.mrb[0].mxu0
      %v8376 = vadd.f32 %v7978, %v8375
      %v8377 = vpop.f32.mrb[0].mxu0
      %8378 = vmatprep.mubr.bf16.mxu0 0
      %8379 = vmatmul.mubr.bf16.gmra.mrb[0].mxu0 %v8123
      %v8380 = vpop.f32.mrb[0].mxu0
      %v8381 = vadd.f32 %v7983, %v8380
      %v8382 = vpop.f32.mrb[0].mxu0
      %v8383 = vpop.f32.mrb[0].mxu0
      %v8384 = vadd.f32 %v7986, %v8383
      %v8385 = vpop.f32.mrb[0].mxu0
      %8386 = vmatprep.mubr.bf16.mxu0 0
      %8387 = vmatmul.mubr.bf16.gmra.mrb[0].mxu0 %v8126
      %v8388 = vpop.f32.mrb[0].mxu0
      %v8389 = vadd.f32 %v7991, %v8388
      %v8390 = vpop.f32.mrb[0].mxu0
      %v8391 = vpop.f32.mrb[0].mxu0
      %v8392 = vadd.f32 %v7994, %v8391
      %v8393 = vpop.f32.mrb[0].mxu0
      %8394 = vmatprep.mubr.bf16.mxu0 0
      %8395 = vmatmul.mubr.bf16.gmra.mrb[0].mxu0 %v8129
      %v8396 = vpop.f32.mrb[0].mxu0
      %v8397 = vadd.f32 %v7999, %v8396
      %v8398 = vpop.f32.mrb[0].mxu0
      %v8399 = vpop.f32.mrb[0].mxu0
      %v8400 = vadd.f32 %v8002, %v8399
      %v8401 = vpop.f32.mrb[0].mxu0
      %8402 = vmatprep.mubr.bf16.mxu0 0
      %8403 = vmatmul.mubr.bf16.gmra.mrb[0].mxu0 %v8132
      %v8404 = vpop.f32.mrb[0].mxu0
      %v8405 = vadd.f32 %v8007, %v8404
      %v8406 = vpop.f32.mrb[0].mxu0
      %v8407 = vpop.f32.mrb[0].mxu0
      %v8408 = vadd.f32 %v8010, %v8407
      %v8409 = vpop.f32.mrb[0].mxu0
      %8410 = vmatprep.mubr.bf16.mxu0 0
      %8411 = vmatmul.mubr.bf16.gmra.mrb[0].mxu0 %v8135
      %v8412 = vpop.f32.mrb[0].mxu0
      %v8413 = vadd.f32 %v8015, %v8412
      %v8414 = vpop.f32.mrb[0].mxu0
      %v8415 = vpop.f32.mrb[0].mxu0
      %v8416 = vadd.f32 %v8018, %v8415
      %v8417 = vpop.f32.mrb[0].mxu0
      %8418 = vmatprep.mubr.bf16.mxu0 0
      %8419 = vmatmul.mubr.bf16.gmra.mrb[0].mxu0 %v8138
      %v8420 = vpop.f32.mrb[0].mxu0
      %v8421 = vadd.f32 %v8023, %v8420
      %v8422 = vpop.f32.mrb[0].mxu0
      %v8423 = vpop.f32.mrb[0].mxu0
      %v8424 = vadd.f32 %v8026, %v8423
      %v8425 = vpop.f32.mrb[0].mxu0
      %8426 = vmatprep.mubr.bf16.mxu0 0
      %8427 = vmatmul.mubr.bf16.gmra.mrb[0].mxu0 %v8141
      %v8428 = vpop.f32.mrb[0].mxu0
      %v8429 = vadd.f32 %v8031, %v8428
      %v8430 = vpop.f32.mrb[0].mxu0
      %v8431 = vpop.f32.mrb[0].mxu0
      %v8432 = vadd.f32 %v8034, %v8431
      %v8433 = vpop.f32.mrb[0].mxu0
      %8434 = vdwg.mxu0
      %v8435 = vld [vmem:[%s2 + $0x4] sm:$0x1]
      %v8436 = vlaneseq
      %v8437 = vshrl.u32 %v8436, 7
      %v8438 = vsub.s32 0, %v8437
      %v8439 = vrot.slane %v8435, %v8438
      %v8440 = vadd.f32 %v8181, %v8439
      %v8441 = vadd.f32 %v8184, %v8439
      %v8442 = vadd.f32 %v8189, %v8439
      %v8443 = vadd.f32 %v8192, %v8439
      %v8444 = vadd.f32 %v8197, %v8439
      %v8445 = vadd.f32 %v8200, %v8439
      %v8446 = vadd.f32 %v8205, %v8439
      %v8447 = vadd.f32 %v8208, %v8439
      %v8448 = vadd.f32 %v8213, %v8439
      %v8449 = vadd.f32 %v8216, %v8439
      %v8450 = vadd.f32 %v8221, %v8439
      %v8451 = vadd.f32 %v8224, %v8439
      %v8452 = vadd.f32 %v8229, %v8439
      %v8453 = vadd.f32 %v8232, %v8439
      %v8454 = vadd.f32 %v8237, %v8439
      %v8455 = vadd.f32 %v8240, %v8439
      %v8456 = vadd.f32 %v8245, %v8439
      %v8457 = vadd.f32 %v8248, %v8439
      %v8458 = vadd.f32 %v8253, %v8439
      %v8459 = vadd.f32 %v8256, %v8439
      %v8460 = vadd.f32 %v8261, %v8439
      %v8461 = vadd.f32 %v8264, %v8439
      %v8462 = vadd.f32 %v8269, %v8439
      %v8463 = vadd.f32 %v8272, %v8439
      %v8464 = vadd.f32 %v8277, %v8439
      %v8465 = vadd.f32 %v8280, %v8439
      %v8466 = vadd.f32 %v8285, %v8439
      %v8467 = vadd.f32 %v8288, %v8439
      %v8468 = vadd.f32 %v8293, %v8439
      %v8469 = vadd.f32 %v8296, %v8439
      %v8470 = vadd.f32 %v8301, %v8439
      %v8471 = vadd.f32 %v8304, %v8439
      %v8472 = vadd.f32 %v8309, %v8439
      %v8473 = vadd.f32 %v8312, %v8439
      %v8474 = vadd.f32 %v8317, %v8439
      %v8475 = vadd.f32 %v8320, %v8439
      %v8476 = vadd.f32 %v8325, %v8439
      %v8477 = vadd.f32 %v8328, %v8439
      %v8478 = vadd.f32 %v8333, %v8439
      %v8479 = vadd.f32 %v8336, %v8439
      %v8480 = vadd.f32 %v8341, %v8439
      %v8481 = vadd.f32 %v8344, %v8439
      %v8482 = vadd.f32 %v8349, %v8439
      %v8483 = vadd.f32 %v8352, %v8439
      %v8484 = vadd.f32 %v8357, %v8439
      %v8485 = vadd.f32 %v8360, %v8439
      %v8486 = vadd.f32 %v8365, %v8439
      %v8487 = vadd.f32 %v8368, %v8439
      %v8488 = vadd.f32 %v8373, %v8439
      %v8489 = vadd.f32 %v8376, %v8439
      %v8490 = vadd.f32 %v8381, %v8439
      %v8491 = vadd.f32 %v8384, %v8439
      %v8492 = vadd.f32 %v8389, %v8439
      %v8493 = vadd.f32 %v8392, %v8439
      %v8494 = vadd.f32 %v8397, %v8439
      %v8495 = vadd.f32 %v8400, %v8439
      %v8496 = vadd.f32 %v8405, %v8439
      %v8497 = vadd.f32 %v8408, %v8439
      %v8498 = vadd.f32 %v8413, %v8439
      %v8499 = vadd.f32 %v8416, %v8439
      %v8500 = vadd.f32 %v8421, %v8439
      %v8501 = vadd.f32 %v8424, %v8439
      %v8502 = vadd.f32 %v8429, %v8439
      %v8503 = vadd.f32 %v8432, %v8439
      %v8504 = vmax.f32 %v8440, 0.0
      %v8505 = vmax.f32 %v8441, 0.0
      %v8506 = vmax.f32 %v8442, 0.0
      %v8507 = vmax.f32 %v8443, 0.0
      %v8508 = vmax.f32 %v8444, 0.0
      %v8509 = vmax.f32 %v8445, 0.0
      %v8510 = vmax.f32 %v8446, 0.0
      %v8511 = vmax.f32 %v8447, 0.0
      %v8512 = vmax.f32 %v8448, 0.0
      %v8513 = vmax.f32 %v8449, 0.0
      %v8514 = vmax.f32 %v8450, 0.0
      %v8515 = vmax.f32 %v8451, 0.0
      %v8516 = vmax.f32 %v8452, 0.0
      %v8517 = vmax.f32 %v8453, 0.0
      %v8518 = vmax.f32 %v8454, 0.0
      %v8519 = vmax.f32 %v8455, 0.0
      %v8520 = vmax.f32 %v8456, 0.0
      %v8521 = vmax.f32 %v8457, 0.0
      %v8522 = vmax.f32 %v8458, 0.0
      %v8523 = vmax.f32 %v8459, 0.0
      %v8524 = vmax.f32 %v8460, 0.0
      %v8525 = vmax.f32 %v8461, 0.0
      %v8526 = vmax.f32 %v8462, 0.0
      %v8527 = vmax.f32 %v8463, 0.0
      %v8528 = vmax.f32 %v8464, 0.0
      %v8529 = vmax.f32 %v8465, 0.0
      %v8530 = vmax.f32 %v8466, 0.0
      %v8531 = vmax.f32 %v8467, 0.0
      %v8532 = vmax.f32 %v8468, 0.0
      %v8533 = vmax.f32 %v8469, 0.0
      %v8534 = vmax.f32 %v8470, 0.0
      %v8535 = vmax.f32 %v8471, 0.0
      %v8536 = vmax.f32 %v8472, 0.0
      %v8537 = vmax.f32 %v8473, 0.0
      %v8538 = vmax.f32 %v8474, 0.0
      %v8539 = vmax.f32 %v8475, 0.0
      %v8540 = vmax.f32 %v8476, 0.0
      %v8541 = vmax.f32 %v8477, 0.0
      %v8542 = vmax.f32 %v8478, 0.0
      %v8543 = vmax.f32 %v8479, 0.0
      %v8544 = vmax.f32 %v8480, 0.0
      %v8545 = vmax.f32 %v8481, 0.0
      %v8546 = vmax.f32 %v8482, 0.0
      %v8547 = vmax.f32 %v8483, 0.0
      %v8548 = vmax.f32 %v8484, 0.0
      %v8549 = vmax.f32 %v8485, 0.0
      %v8550 = vmax.f32 %v8486, 0.0
      %v8551 = vmax.f32 %v8487, 0.0
      %v8552 = vmax.f32 %v8488, 0.0
      %v8553 = vmax.f32 %v8489, 0.0
      %v8554 = vmax.f32 %v8490, 0.0
      %v8555 = vmax.f32 %v8491, 0.0
      %v8556 = vmax.f32 %v8492, 0.0
      %v8557 = vmax.f32 %v8493, 0.0
      %v8558 = vmax.f32 %v8494, 0.0
      %v8559 = vmax.f32 %v8495, 0.0
      %v8560 = vmax.f32 %v8496, 0.0
      %v8561 = vmax.f32 %v8497, 0.0
      %v8562 = vmax.f32 %v8498, 0.0
      %v8563 = vmax.f32 %v8499, 0.0
      %v8564 = vmax.f32 %v8500, 0.0
      %v8565 = vmax.f32 %v8501, 0.0
      %v8566 = vmax.f32 %v8502, 0.0
      %v8567 = vmax.f32 %v8503, 0.0
      %v8568 = vpack.c.bf16 %v8505, %v8504
      %v8569 = vpack.c.bf16 %v8507, %v8506
      %v8570 = vpack.c.bf16 %v8509, %v8508
      %v8571 = vpack.c.bf16 %v8511, %v8510
      %v8572 = vpack.c.bf16 %v8513, %v8512
      %v8573 = vpack.c.bf16 %v8515, %v8514
      %v8574 = vpack.c.bf16 %v8517, %v8516
      %v8575 = vpack.c.bf16 %v8519, %v8518
      %v8576 = vpack.c.bf16 %v8521, %v8520
      %v8577 = vpack.c.bf16 %v8523, %v8522
      %v8578 = vpack.c.bf16 %v8525, %v8524
      %v8579 = vpack.c.bf16 %v8527, %v8526
      %v8580 = vpack.c.bf16 %v8529, %v8528
      %v8581 = vpack.c.bf16 %v8531, %v8530
      %v8582 = vpack.c.bf16 %v8533, %v8532
      %v8583 = vpack.c.bf16 %v8535, %v8534
      %v8584 = vpack.c.bf16 %v8537, %v8536
      %v8585 = vpack.c.bf16 %v8539, %v8538
      %v8586 = vpack.c.bf16 %v8541, %v8540
      %v8587 = vpack.c.bf16 %v8543, %v8542
      %v8588 = vpack.c.bf16 %v8545, %v8544
      %v8589 = vpack.c.bf16 %v8547, %v8546
      %v8590 = vpack.c.bf16 %v8549, %v8548
      %v8591 = vpack.c.bf16 %v8551, %v8550
      %v8592 = vpack.c.bf16 %v8553, %v8552
      %v8593 = vpack.c.bf16 %v8555, %v8554
      %v8594 = vpack.c.bf16 %v8557, %v8556
      %v8595 = vpack.c.bf16 %v8559, %v8558
      %v8596 = vpack.c.bf16 %v8561, %v8560
      %v8597 = vpack.c.bf16 %v8563, %v8562
      %v8598 = vpack.c.bf16 %v8565, %v8564
      %v8599 = vpack.c.bf16 %v8567, %v8566
      %v8600 = vld [vmem:[%s1 + $0x18] sm:$0xf]
      %v8601 = vld [vmem:[%s1 + $0x1c] sm:$0xf]
      %v8602 = vld [vmem:[%s1 + $0x20] sm:$0xf]
      %v8603 = vld [vmem:[%s1 + $0x24] sm:$0xf]
      %v8604 = vld [vmem:[%s1 + $0x28] sm:$0xf]
      %v8605 = vld [vmem:[%s1 + $0x2c] sm:$0xf]
      %v8606 = vld [vmem:[%s1 + $0x30] sm:$0xf]
      %v8607 = vld [vmem:[%s1 + $0x34] sm:$0xf]
      %v8608 = vld [vmem:[%s1 + $0x38] sm:$0xf]
      %v8609 = vld [vmem:[%s1 + $0x3c] sm:$0xf]
      %v8610 = vld [vmem:[%s1 + $0x40] sm:$0xf]
      %v8611 = vld [vmem:[%s1 + $0x44] sm:$0xf]
      %v8612 = vld [vmem:[%s1 + $0x48] sm:$0xf]
      %v8613 = vld [vmem:[%s1 + $0x4c] sm:$0xf]
      %v8614 = vld [vmem:[%s1 + $0x50] sm:$0xf]
      %v8615 = vld [vmem:[%s1 + $0x54] sm:$0xf]
      %v8616 = vld [vmem:[%s2 + $0x5] sm:$0x1]
      %v8617 = vlaneseq
      %v8618 = vshrl.u32 %v8617, 7
      %v8619 = vsub.s32 0, %v8618
      %v8620 = vrot.slane %v8616, %v8619
      %v8637 = vunpack.c.l.b16 %v8600
      %v8638 = vunpack.c.l.b16 %v8601
      %v8639 = vunpack.c.l.b16 %v8602
      %v8640 = vunpack.c.l.b16 %v8603
      %v8641 = vunpack.c.l.b16 %v8604
      %v8642 = vunpack.c.l.b16 %v8605
      %v8643 = vunpack.c.l.b16 %v8606
      %v8644 = vunpack.c.l.b16 %v8607
      %v8645 = vunpack.c.l.b16 %v8608
      %v8646 = vunpack.c.l.b16 %v8609
      %v8647 = vunpack.c.l.b16 %v8610
      %v8648 = vunpack.c.l.b16 %v8611
      %v8649 = vunpack.c.l.b16 %v8612
      %v8650 = vunpack.c.l.b16 %v8613
      %v8651 = vunpack.c.l.b16 %v8614
      %v8652 = vunpack.c.l.b16 %v8615
      %v8653 = vpack.c.b16 %v8638, %v8637
      %v8654 = vpack.c.b16 %v8640, %v8639
      %v8655 = vpack.c.b16 %v8642, %v8641
      %v8656 = vpack.c.b16 %v8644, %v8643
      %v8657 = vpack.c.b16 %v8646, %v8645
      %v8658 = vpack.c.b16 %v8648, %v8647
      %v8659 = vpack.c.b16 %v8650, %v8649
      %v8660 = vpack.c.b16 %v8652, %v8651
      %8669 = vmatprep.subr.bf16.mxu0 0
      %8670 = vmatpush1.bf16.msra.mxu0 %v8653
      %8671 = vmatprep.subr.bf16.mxu0 0
      %8672 = vmatpush1.bf16.msra.mxu0 %v8654
      %8673 = vmatprep.subr.bf16.mxu0 0
      %8674 = vmatpush1.bf16.msra.mxu0 %v8655
      %8675 = vmatprep.subr.bf16.mxu0 0
      %8676 = vmatpush1.bf16.msra.mxu0 %v8656
      %8677 = vmatprep.subr.bf16.mxu0 0
      %8678 = vmatpush1.bf16.msra.mxu0 %v8657
      %8679 = vmatprep.subr.bf16.mxu0 0
      %8680 = vmatpush1.bf16.msra.mxu0 %v8658
      %8681 = vmatprep.subr.bf16.mxu0 0
      %8682 = vmatpush1.bf16.msra.mxu0 %v8659
      %8683 = vmatprep.subr.bf16.mxu0 0
      %8684 = vmatpush1.bf16.msra.mxu0 %v8660
      %8685 = vmatprep.subr.bf16.mxu0 0
      %8686 = vmatpush1.bf16.msra.mxu0 0
      %8687 = vmatprep.subr.bf16.mxu0 0
      %8688 = vmatpush1.bf16.msra.mxu0 0
      %8689 = vmatprep.subr.bf16.mxu0 0
      %8690 = vmatpush1.bf16.msra.mxu0 0
      %8691 = vmatprep.subr.bf16.mxu0 0
      %8692 = vmatpush1.bf16.msra.mxu0 0
      %8693 = vmatprep.subr.bf16.mxu0 0
      %8694 = vmatpush1.bf16.msra.mxu0 0
      %8695 = vmatprep.subr.bf16.mxu0 0
      %8696 = vmatpush1.bf16.msra.mxu0 0
      %8697 = vmatprep.subr.bf16.mxu0 0
      %8698 = vmatpush1.bf16.msra.mxu0 0
      %8699 = vmatprep.subr.bf16.mxu0 0
      %8700 = vmatpush1.bf16.msra.mxu0 0
      %8701 = vmatprep.mubr.bf16.mxu0 0
      %8702 = vmatmul.mubr.bf16.gmra.mrb[0].mxu0 %v8568
      %v8703 = vpop.f32.mrb[0].mxu0
      %v8704 = vadd.f32 %v8620, %v8703
      %v8705 = vpop.f32.mrb[0].mxu0
      %v8706 = vpop.f32.mrb[0].mxu0
      %v8707 = vadd.f32 %v8620, %v8706
      %v8708 = vpop.f32.mrb[0].mxu0
      %8709 = vmatprep.mubr.bf16.mxu0 0
      %8710 = vmatmul.mubr.bf16.gmra.mrb[0].mxu0 %v8569
      %v8711 = vpop.f32.mrb[0].mxu0
      %v8712 = vadd.f32 %v8620, %v8711
      %v8713 = vpop.f32.mrb[0].mxu0
      %v8714 = vpop.f32.mrb[0].mxu0
      %v8715 = vadd.f32 %v8620, %v8714
      %v8716 = vpop.f32.mrb[0].mxu0
      %8717 = vmatprep.mubr.bf16.mxu0 0
      %8718 = vmatmul.mubr.bf16.gmra.mrb[0].mxu0 %v8570
      %v8719 = vpop.f32.mrb[0].mxu0
      %v8720 = vadd.f32 %v8620, %v8719
      %v8721 = vpop.f32.mrb[0].mxu0
      %v8722 = vpop.f32.mrb[0].mxu0
      %v8723 = vadd.f32 %v8620, %v8722
      %v8724 = vpop.f32.mrb[0].mxu0
      %8725 = vmatprep.mubr.bf16.mxu0 0
      %8726 = vmatmul.mubr.bf16.gmra.mrb[0].mxu0 %v8571
      %v8727 = vpop.f32.mrb[0].mxu0
      %v8728 = vadd.f32 %v8620, %v8727
      %v8729 = vpop.f32.mrb[0].mxu0
      %v8730 = vpop.f32.mrb[0].mxu0
      %v8731 = vadd.f32 %v8620, %v8730
      %v8732 = vpop.f32.mrb[0].mxu0
      %8733 = vmatprep.mubr.bf16.mxu0 0
      %8734 = vmatmul.mubr.bf16.gmra.mrb[0].mxu0 %v8572
      %v8735 = vpop.f32.mrb[0].mxu0
      %v8736 = vadd.f32 %v8620, %v8735
      %v8737 = vpop.f32.mrb[0].mxu0
      %v8738 = vpop.f32.mrb[0].mxu0
      %v8739 = vadd.f32 %v8620, %v8738
      %v8740 = vpop.f32.mrb[0].mxu0
      %8741 = vmatprep.mubr.bf16.mxu0 0
      %8742 = vmatmul.mubr.bf16.gmra.mrb[0].mxu0 %v8573
      %v8743 = vpop.f32.mrb[0].mxu0
      %v8744 = vadd.f32 %v8620, %v8743
      %v8745 = vpop.f32.mrb[0].mxu0
      %v8746 = vpop.f32.mrb[0].mxu0
      %v8747 = vadd.f32 %v8620, %v8746
      %v8748 = vpop.f32.mrb[0].mxu0
      %8749 = vmatprep.mubr.bf16.mxu0 0
      %8750 = vmatmul.mubr.bf16.gmra.mrb[0].mxu0 %v8574
      %v8751 = vpop.f32.mrb[0].mxu0
      %v8752 = vadd.f32 %v8620, %v8751
      %v8753 = vpop.f32.mrb[0].mxu0
      %v8754 = vpop.f32.mrb[0].mxu0
      %v8755 = vadd.f32 %v8620, %v8754
      %v8756 = vpop.f32.mrb[0].mxu0
      %8757 = vmatprep.mubr.bf16.mxu0 0
      %8758 = vmatmul.mubr.bf16.gmra.mrb[0].mxu0 %v8575
      %v8759 = vpop.f32.mrb[0].mxu0
      %v8760 = vadd.f32 %v8620, %v8759
      %v8761 = vpop.f32.mrb[0].mxu0
      %v8762 = vpop.f32.mrb[0].mxu0
      %v8763 = vadd.f32 %v8620, %v8762
      %v8764 = vpop.f32.mrb[0].mxu0
      %8765 = vmatprep.mubr.bf16.mxu0 0
      %8766 = vmatmul.mubr.bf16.gmra.mrb[0].mxu0 %v8576
      %v8767 = vpop.f32.mrb[0].mxu0
      %v8768 = vadd.f32 %v8620, %v8767
      %v8769 = vpop.f32.mrb[0].mxu0
      %v8770 = vpop.f32.mrb[0].mxu0
      %v8771 = vadd.f32 %v8620, %v8770
      %v8772 = vpop.f32.mrb[0].mxu0
      %8773 = vmatprep.mubr.bf16.mxu0 0
      %8774 = vmatmul.mubr.bf16.gmra.mrb[0].mxu0 %v8577
      %v8775 = vpop.f32.mrb[0].mxu0
      %v8776 = vadd.f32 %v8620, %v8775
      %v8777 = vpop.f32.mrb[0].mxu0
      %v8778 = vpop.f32.mrb[0].mxu0
      %v8779 = vadd.f32 %v8620, %v8778
      %v8780 = vpop.f32.mrb[0].mxu0
      %8781 = vmatprep.mubr.bf16.mxu0 0
      %8782 = vmatmul.mubr.bf16.gmra.mrb[0].mxu0 %v8578
      %v8783 = vpop.f32.mrb[0].mxu0
      %v8784 = vadd.f32 %v8620, %v8783
      %v8785 = vpop.f32.mrb[0].mxu0
      %v8786 = vpop.f32.mrb[0].mxu0
      %v8787 = vadd.f32 %v8620, %v8786
      %v8788 = vpop.f32.mrb[0].mxu0
      %8789 = vmatprep.mubr.bf16.mxu0 0
      %8790 = vmatmul.mubr.bf16.gmra.mrb[0].mxu0 %v8579
      %v8791 = vpop.f32.mrb[0].mxu0
      %v8792 = vadd.f32 %v8620, %v8791
      %v8793 = vpop.f32.mrb[0].mxu0
      %v8794 = vpop.f32.mrb[0].mxu0
      %v8795 = vadd.f32 %v8620, %v8794
      %v8796 = vpop.f32.mrb[0].mxu0
      %8797 = vmatprep.mubr.bf16.mxu0 0
      %8798 = vmatmul.mubr.bf16.gmra.mrb[0].mxu0 %v8580
      %v8799 = vpop.f32.mrb[0].mxu0
      %v8800 = vadd.f32 %v8620, %v8799
      %v8801 = vpop.f32.mrb[0].mxu0
      %v8802 = vpop.f32.mrb[0].mxu0
      %v8803 = vadd.f32 %v8620, %v8802
      %v8804 = vpop.f32.mrb[0].mxu0
      %8805 = vmatprep.mubr.bf16.mxu0 0
      %8806 = vmatmul.mubr.bf16.gmra.mrb[0].mxu0 %v8581
      %v8807 = vpop.f32.mrb[0].mxu0
      %v8808 = vadd.f32 %v8620, %v8807
      %v8809 = vpop.f32.mrb[0].mxu0
      %v8810 = vpop.f32.mrb[0].mxu0
      %v8811 = vadd.f32 %v8620, %v8810
      %v8812 = vpop.f32.mrb[0].mxu0
      %8813 = vmatprep.mubr.bf16.mxu0 0
      %8814 = vmatmul.mubr.bf16.gmra.mrb[0].mxu0 %v8582
      %v8815 = vpop.f32.mrb[0].mxu0
      %v8816 = vadd.f32 %v8620, %v8815
      %v8817 = vpop.f32.mrb[0].mxu0
      %v8818 = vpop.f32.mrb[0].mxu0
      %v8819 = vadd.f32 %v8620, %v8818
      %v8820 = vpop.f32.mrb[0].mxu0
      %8821 = vmatprep.mubr.bf16.mxu0 0
      %8822 = vmatmul.mubr.bf16.gmra.mrb[0].mxu0 %v8583
      %v8823 = vpop.f32.mrb[0].mxu0
      %v8824 = vadd.f32 %v8620, %v8823
      %v8825 = vpop.f32.mrb[0].mxu0
      %v8826 = vpop.f32.mrb[0].mxu0
      %v8827 = vadd.f32 %v8620, %v8826
      %v8828 = vpop.f32.mrb[0].mxu0
      %8829 = vmatprep.mubr.bf16.mxu0 0
      %8830 = vmatmul.mubr.bf16.gmra.mrb[0].mxu0 %v8584
      %v8831 = vpop.f32.mrb[0].mxu0
      %v8832 = vadd.f32 %v8620, %v8831
      %v8833 = vpop.f32.mrb[0].mxu0
      %v8834 = vpop.f32.mrb[0].mxu0
      %v8835 = vadd.f32 %v8620, %v8834
      %v8836 = vpop.f32.mrb[0].mxu0
      %8837 = vmatprep.mubr.bf16.mxu0 0
      %8838 = vmatmul.mubr.bf16.gmra.mrb[0].mxu0 %v8585
      %v8839 = vpop.f32.mrb[0].mxu0
      %v8840 = vadd.f32 %v8620, %v8839
      %v8841 = vpop.f32.mrb[0].mxu0
      %v8842 = vpop.f32.mrb[0].mxu0
      %v8843 = vadd.f32 %v8620, %v8842
      %v8844 = vpop.f32.mrb[0].mxu0
      %8845 = vmatprep.mubr.bf16.mxu0 0
      %8846 = vmatmul.mubr.bf16.gmra.mrb[0].mxu0 %v8586
      %v8847 = vpop.f32.mrb[0].mxu0
      %v8848 = vadd.f32 %v8620, %v8847
      %v8849 = vpop.f32.mrb[0].mxu0
      %v8850 = vpop.f32.mrb[0].mxu0
      %v8851 = vadd.f32 %v8620, %v8850
      %v8852 = vpop.f32.mrb[0].mxu0
      %8853 = vmatprep.mubr.bf16.mxu0 0
      %8854 = vmatmul.mubr.bf16.gmra.mrb[0].mxu0 %v8587
      %v8855 = vpop.f32.mrb[0].mxu0
      %v8856 = vadd.f32 %v8620, %v8855
      %v8857 = vpop.f32.mrb[0].mxu0
      %v8858 = vpop.f32.mrb[0].mxu0
      %v8859 = vadd.f32 %v8620, %v8858
      %v8860 = vpop.f32.mrb[0].mxu0
      %8861 = vmatprep.mubr.bf16.mxu0 0
      %8862 = vmatmul.mubr.bf16.gmra.mrb[0].mxu0 %v8588
      %v8863 = vpop.f32.mrb[0].mxu0
      %v8864 = vadd.f32 %v8620, %v8863
      %v8865 = vpop.f32.mrb[0].mxu0
      %v8866 = vpop.f32.mrb[0].mxu0
      %v8867 = vadd.f32 %v8620, %v8866
      %v8868 = vpop.f32.mrb[0].mxu0
      %8869 = vmatprep.mubr.bf16.mxu0 0
      %8870 = vmatmul.mubr.bf16.gmra.mrb[0].mxu0 %v8589
      %v8871 = vpop.f32.mrb[0].mxu0
      %v8872 = vadd.f32 %v8620, %v8871
      %v8873 = vpop.f32.mrb[0].mxu0
      %v8874 = vpop.f32.mrb[0].mxu0
      %v8875 = vadd.f32 %v8620, %v8874
      %v8876 = vpop.f32.mrb[0].mxu0
      %8877 = vmatprep.mubr.bf16.mxu0 0
      %8878 = vmatmul.mubr.bf16.gmra.mrb[0].mxu0 %v8590
      %v8879 = vpop.f32.mrb[0].mxu0
      %v8880 = vadd.f32 %v8620, %v8879
      %v8881 = vpop.f32.mrb[0].mxu0
      %v8882 = vpop.f32.mrb[0].mxu0
      %v8883 = vadd.f32 %v8620, %v8882
      %v8884 = vpop.f32.mrb[0].mxu0
      %8885 = vmatprep.mubr.bf16.mxu0 0
      %8886 = vmatmul.mubr.bf16.gmra.mrb[0].mxu0 %v8591
      %v8887 = vpop.f32.mrb[0].mxu0
      %v8888 = vadd.f32 %v8620, %v8887
      %v8889 = vpop.f32.mrb[0].mxu0
      %v8890 = vpop.f32.mrb[0].mxu0
      %v8891 = vadd.f32 %v8620, %v8890
      %v8892 = vpop.f32.mrb[0].mxu0
      %8893 = vmatprep.mubr.bf16.mxu0 0
      %8894 = vmatmul.mubr.bf16.gmra.mrb[0].mxu0 %v8592
      %v8895 = vpop.f32.mrb[0].mxu0
      %v8896 = vadd.f32 %v8620, %v8895
      %v8897 = vpop.f32.mrb[0].mxu0
      %v8898 = vpop.f32.mrb[0].mxu0
      %v8899 = vadd.f32 %v8620, %v8898
      %v8900 = vpop.f32.mrb[0].mxu0
      %8901 = vmatprep.mubr.bf16.mxu0 0
      %8902 = vmatmul.mubr.bf16.gmra.mrb[0].mxu0 %v8593
      %v8903 = vpop.f32.mrb[0].mxu0
      %v8904 = vadd.f32 %v8620, %v8903
      %v8905 = vpop.f32.mrb[0].mxu0
      %v8906 = vpop.f32.mrb[0].mxu0
      %v8907 = vadd.f32 %v8620, %v8906
      %v8908 = vpop.f32.mrb[0].mxu0
      %8909 = vmatprep.mubr.bf16.mxu0 0
      %8910 = vmatmul.mubr.bf16.gmra.mrb[0].mxu0 %v8594
      %v8911 = vpop.f32.mrb[0].mxu0
      %v8912 = vadd.f32 %v8620, %v8911
      %v8913 = vpop.f32.mrb[0].mxu0
      %v8914 = vpop.f32.mrb[0].mxu0
      %v8915 = vadd.f32 %v8620, %v8914
      %v8916 = vpop.f32.mrb[0].mxu0
      %8917 = vmatprep.mubr.bf16.mxu0 0
      %8918 = vmatmul.mubr.bf16.gmra.mrb[0].mxu0 %v8595
      %v8919 = vpop.f32.mrb[0].mxu0
      %v8920 = vadd.f32 %v8620, %v8919
      %v8921 = vpop.f32.mrb[0].mxu0
      %v8922 = vpop.f32.mrb[0].mxu0
      %v8923 = vadd.f32 %v8620, %v8922
      %v8924 = vpop.f32.mrb[0].mxu0
      %8925 = vmatprep.mubr.bf16.mxu0 0
      %8926 = vmatmul.mubr.bf16.gmra.mrb[0].mxu0 %v8596
      %v8927 = vpop.f32.mrb[0].mxu0
      %v8928 = vadd.f32 %v8620, %v8927
      %v8929 = vpop.f32.mrb[0].mxu0
      %v8930 = vpop.f32.mrb[0].mxu0
      %v8931 = vadd.f32 %v8620, %v8930
      %v8932 = vpop.f32.mrb[0].mxu0
      %8933 = vmatprep.mubr.bf16.mxu0 0
      %8934 = vmatmul.mubr.bf16.gmra.mrb[0].mxu0 %v8597
      %v8935 = vpop.f32.mrb[0].mxu0
      %v8936 = vadd.f32 %v8620, %v8935
      %v8937 = vpop.f32.mrb[0].mxu0
      %v8938 = vpop.f32.mrb[0].mxu0
      %v8939 = vadd.f32 %v8620, %v8938
      %v8940 = vpop.f32.mrb[0].mxu0
      %8941 = vmatprep.mubr.bf16.mxu0 0
      %8942 = vmatmul.mubr.bf16.gmra.mrb[0].mxu0 %v8598
      %v8943 = vpop.f32.mrb[0].mxu0
      %v8944 = vadd.f32 %v8620, %v8943
      %v8945 = vpop.f32.mrb[0].mxu0
      %v8946 = vpop.f32.mrb[0].mxu0
      %v8947 = vadd.f32 %v8620, %v8946
      %v8948 = vpop.f32.mrb[0].mxu0
      %8949 = vmatprep.mubr.bf16.mxu0 0
      %8950 = vmatmul.mubr.bf16.gmra.mrb[0].mxu0 %v8599
      %v8951 = vpop.f32.mrb[0].mxu0
      %v8952 = vadd.f32 %v8620, %v8951
      %v8953 = vpop.f32.mrb[0].mxu0
      %v8954 = vpop.f32.mrb[0].mxu0
      %v8955 = vadd.f32 %v8620, %v8954
      %v8956 = vpop.f32.mrb[0].mxu0
      %8957 = vdwg.mxu0
      %v8958 = vmax.f32 %v8704, 0.0
      %v8959 = vmax.f32 %v8707, 0.0
      %v8960 = vmax.f32 %v8712, 0.0
      %v8961 = vmax.f32 %v8715, 0.0
      %v8962 = vmax.f32 %v8720, 0.0
      %v8963 = vmax.f32 %v8723, 0.0
      %v8964 = vmax.f32 %v8728, 0.0
      %v8965 = vmax.f32 %v8731, 0.0
      %v8966 = vmax.f32 %v8736, 0.0
      %v8967 = vmax.f32 %v8739, 0.0
      %v8968 = vmax.f32 %v8744, 0.0
      %v8969 = vmax.f32 %v8747, 0.0
      %v8970 = vmax.f32 %v8752, 0.0
      %v8971 = vmax.f32 %v8755, 0.0
      %v8972 = vmax.f32 %v8760, 0.0
      %v8973 = vmax.f32 %v8763, 0.0
      %v8974 = vmax.f32 %v8768, 0.0
      %v8975 = vmax.f32 %v8771, 0.0
      %v8976 = vmax.f32 %v8776, 0.0
      %v8977 = vmax.f32 %v8779, 0.0
      %v8978 = vmax.f32 %v8784, 0.0
      %v8979 = vmax.f32 %v8787, 0.0
      %v8980 = vmax.f32 %v8792, 0.0
      %v8981 = vmax.f32 %v8795, 0.0
      %v8982 = vmax.f32 %v8800, 0.0
      %v8983 = vmax.f32 %v8803, 0.0
      %v8984 = vmax.f32 %v8808, 0.0
      %v8985 = vmax.f32 %v8811, 0.0
      %v8986 = vmax.f32 %v8816, 0.0
      %v8987 = vmax.f32 %v8819, 0.0
      %v8988 = vmax.f32 %v8824, 0.0
      %v8989 = vmax.f32 %v8827, 0.0
      %v8990 = vmax.f32 %v8832, 0.0
      %v8991 = vmax.f32 %v8835, 0.0
      %v8992 = vmax.f32 %v8840, 0.0
      %v8993 = vmax.f32 %v8843, 0.0
      %v8994 = vmax.f32 %v8848, 0.0
      %v8995 = vmax.f32 %v8851, 0.0
      %v8996 = vmax.f32 %v8856, 0.0
      %v8997 = vmax.f32 %v8859, 0.0
      %v8998 = vmax.f32 %v8864, 0.0
      %v8999 = vmax.f32 %v8867, 0.0
      %v9000 = vmax.f32 %v8872, 0.0
      %v9001 = vmax.f32 %v8875, 0.0
      %v9002 = vmax.f32 %v8880, 0.0
      %v9003 = vmax.f32 %v8883, 0.0
      %v9004 = vmax.f32 %v8888, 0.0
      %v9005 = vmax.f32 %v8891, 0.0
      %v9006 = vmax.f32 %v8896, 0.0
      %v9007 = vmax.f32 %v8899, 0.0
      %v9008 = vmax.f32 %v8904, 0.0
      %v9009 = vmax.f32 %v8907, 0.0
      %v9010 = vmax.f32 %v8912, 0.0
      %v9011 = vmax.f32 %v8915, 0.0
      %v9012 = vmax.f32 %v8920, 0.0
      %v9013 = vmax.f32 %v8923, 0.0
      %v9014 = vmax.f32 %v8928, 0.0
      %v9015 = vmax.f32 %v8931, 0.0
      %v9016 = vmax.f32 %v8936, 0.0
      %v9017 = vmax.f32 %v8939, 0.0
      %v9018 = vmax.f32 %v8944, 0.0
      %v9019 = vmax.f32 %v8947, 0.0
      %v9020 = vmax.f32 %v8952, 0.0
      %v9021 = vmax.f32 %v8955, 0.0
      %v9022 = vpack.c.bf16 %v8959, %v8958
      %v9023 = vpack.c.bf16 %v8961, %v8960
      %v9024 = vpack.c.bf16 %v8963, %v8962
      %v9025 = vpack.c.bf16 %v8965, %v8964
      %v9026 = vpack.c.bf16 %v8967, %v8966
      %v9027 = vpack.c.bf16 %v8969, %v8968
      %v9028 = vpack.c.bf16 %v8971, %v8970
      %v9029 = vpack.c.bf16 %v8973, %v8972
      %v9030 = vpack.c.bf16 %v8975, %v8974
      %v9031 = vpack.c.bf16 %v8977, %v8976
      %v9032 = vpack.c.bf16 %v8979, %v8978
      %v9033 = vpack.c.bf16 %v8981, %v8980
      %v9034 = vpack.c.bf16 %v8983, %v8982
      %v9035 = vpack.c.bf16 %v8985, %v8984
      %v9036 = vpack.c.bf16 %v8987, %v8986
      %v9037 = vpack.c.bf16 %v8989, %v8988
      %v9038 = vpack.c.bf16 %v8991, %v8990
      %v9039 = vpack.c.bf16 %v8993, %v8992
      %v9040 = vpack.c.bf16 %v8995, %v8994
      %v9041 = vpack.c.bf16 %v8997, %v8996
      %v9042 = vpack.c.bf16 %v8999, %v8998
      %v9043 = vpack.c.bf16 %v9001, %v9000
      %v9044 = vpack.c.bf16 %v9003, %v9002
      %v9045 = vpack.c.bf16 %v9005, %v9004
      %v9046 = vpack.c.bf16 %v9007, %v9006
      %v9047 = vpack.c.bf16 %v9009, %v9008
      %v9048 = vpack.c.bf16 %v9011, %v9010
      %v9049 = vpack.c.bf16 %v9013, %v9012
      %v9050 = vpack.c.bf16 %v9015, %v9014
      %v9051 = vpack.c.bf16 %v9017, %v9016
      %v9052 = vpack.c.bf16 %v9019, %v9018
      %v9053 = vpack.c.bf16 %v9021, %v9020
      %v9054 = vld [vmem:[%s1 + $0x58] sm:$0xf]
      %v9055 = vld [vmem:[%s1 + $0x5c] sm:$0xf]
      %v9056 = vld [vmem:[%s1 + $0x60] sm:$0xf]
      %v9057 = vld [vmem:[%s1 + $0x64] sm:$0xf]
      %v9058 = vld [vmem:[%s1 + $0x68] sm:$0xf]
      %v9059 = vld [vmem:[%s1 + $0x6c] sm:$0xf]
      %v9060 = vld [vmem:[%s1 + $0x70] sm:$0xf]
      %v9061 = vld [vmem:[%s1 + $0x74] sm:$0xf]
      %v9062 = vld [vmem:[%s2 + $0x6] sm:$0x1]
      %v9063 = vlaneseq
      %v9064 = vshrl.u32 %v9063, 7
      %v9065 = vsub.s32 0, %v9064
      %v9066 = vrot.slane %v9062, %v9065
      %v9075 = vunpack.c.l.b16 %v9054
      %v9076 = vunpack.c.l.b16 %v9055
      %v9077 = vunpack.c.l.b16 %v9056
      %v9078 = vunpack.c.l.b16 %v9057
      %v9079 = vunpack.c.l.b16 %v9058
      %v9080 = vunpack.c.l.b16 %v9059
      %v9081 = vunpack.c.l.b16 %v9060
      %v9082 = vunpack.c.l.b16 %v9061
      %v9083 = vpack.c.b16 %v9076, %v9075
      %v9084 = vpack.c.b16 %v9078, %v9077
      %v9085 = vpack.c.b16 %v9080, %v9079
      %v9086 = vpack.c.b16 %v9082, %v9081
      %vm9091 = vcmask 523264
      %v9093 = vsel %vm9091, %v9022, 0
      %v9096 = vsel %vm9091, %v9023, 0
      %v9099 = vsel %vm9091, %v9024, 0
      %v9102 = vsel %vm9091, %v9025, 0
      %v9105 = vsel %vm9091, %v9026, 0
      %v9108 = vsel %vm9091, %v9027, 0
      %v9111 = vsel %vm9091, %v9028, 0
      %v9114 = vsel %vm9091, %v9029, 0
      %v9117 = vsel %vm9091, %v9030, 0
      %v9120 = vsel %vm9091, %v9031, 0
      %v9123 = vsel %vm9091, %v9032, 0
      %v9126 = vsel %vm9091, %v9033, 0
      %v9129 = vsel %vm9091, %v9034, 0
      %v9132 = vsel %vm9091, %v9035, 0
      %v9135 = vsel %vm9091, %v9036, 0
      %v9138 = vsel %vm9091, %v9037, 0
      %v9141 = vsel %vm9091, %v9038, 0
      %v9144 = vsel %vm9091, %v9039, 0
      %v9147 = vsel %vm9091, %v9040, 0
      %v9150 = vsel %vm9091, %v9041, 0
      %v9153 = vsel %vm9091, %v9042, 0
      %v9156 = vsel %vm9091, %v9043, 0
      %v9159 = vsel %vm9091, %v9044, 0
      %v9162 = vsel %vm9091, %v9045, 0
      %v9165 = vsel %vm9091, %v9046, 0
      %v9168 = vsel %vm9091, %v9047, 0
      %v9171 = vsel %vm9091, %v9048, 0
      %v9174 = vsel %vm9091, %v9049, 0
      %v9177 = vsel %vm9091, %v9050, 0
      %v9180 = vsel %vm9091, %v9051, 0
      %v9183 = vsel %vm9091, %v9052, 0
      %v9186 = vsel %vm9091, %v9053, 0
      %9188 = vmatprep.subr.bf16.mxu0 0
      %9189 = vmatpush1.bf16.msra.mxu0 %v9083
      %9190 = vmatprep.subr.bf16.mxu0 0
      %9191 = vmatpush1.bf16.msra.mxu0 %v9084
      %9192 = vmatprep.subr.bf16.mxu0 0
      %9193 = vmatpush1.bf16.msra.mxu0 %v9085
      %9194 = vmatprep.subr.bf16.mxu0 0
      %9195 = vmatpush1.bf16.msra.mxu0 %v9086
      %9196 = vmatprep.subr.bf16.mxu0 0
      %9197 = vmatpush1.bf16.msra.mxu0 0
      %9198 = vmatprep.subr.bf16.mxu0 0
      %9199 = vmatpush1.bf16.msra.mxu0 0
      %9200 = vmatprep.subr.bf16.mxu0 0
      %9201 = vmatpush1.bf16.msra.mxu0 0
      %9202 = vmatprep.subr.bf16.mxu0 0
      %9203 = vmatpush1.bf16.msra.mxu0 0
      %9204 = vmatprep.subr.bf16.mxu0 0
      %9205 = vmatpush1.bf16.msra.mxu0 0
      %9206 = vmatprep.subr.bf16.mxu0 0
      %9207 = vmatpush1.bf16.msra.mxu0 0
      %9208 = vmatprep.subr.bf16.mxu0 0
      %9209 = vmatpush1.bf16.msra.mxu0 0
      %9210 = vmatprep.subr.bf16.mxu0 0
      %9211 = vmatpush1.bf16.msra.mxu0 0
      %9212 = vmatprep.subr.bf16.mxu0 0
      %9213 = vmatpush1.bf16.msra.mxu0 0
      %9214 = vmatprep.subr.bf16.mxu0 0
      %9215 = vmatpush1.bf16.msra.mxu0 0
      %9216 = vmatprep.subr.bf16.mxu0 0
      %9217 = vmatpush1.bf16.msra.mxu0 0
      %9218 = vmatprep.subr.bf16.mxu0 0
      %9219 = vmatpush1.bf16.msra.mxu0 0
      %9220 = vmatprep.mubr.bf16.mxu0 0
      %9221 = vmatmul.mubr.bf16.gmra.mrb[0].mxu0 %v9093
      %v9222 = vpop.f32.mrb[0].mxu0
      %v9223 = vadd.f32 %v9066, %v9222
      %v9224 = vpop.f32.mrb[0].mxu0
      %v9225 = vpop.f32.mrb[0].mxu0
      %v9226 = vadd.f32 %v9066, %v9225
      %v9227 = vpop.f32.mrb[0].mxu0
      %9228 = vmatprep.mubr.bf16.mxu0 0
      %9229 = vmatmul.mubr.bf16.gmra.mrb[0].mxu0 %v9096
      %v9230 = vpop.f32.mrb[0].mxu0
      %v9231 = vadd.f32 %v9066, %v9230
      %v9232 = vpop.f32.mrb[0].mxu0
      %v9233 = vpop.f32.mrb[0].mxu0
      %v9234 = vadd.f32 %v9066, %v9233
      %v9235 = vpop.f32.mrb[0].mxu0
      %9236 = vmatprep.mubr.bf16.mxu0 0
      %9237 = vmatmul.mubr.bf16.gmra.mrb[0].mxu0 %v9099
      %v9238 = vpop.f32.mrb[0].mxu0
      %v9239 = vadd.f32 %v9066, %v9238
      %v9240 = vpop.f32.mrb[0].mxu0
      %v9241 = vpop.f32.mrb[0].mxu0
      %v9242 = vadd.f32 %v9066, %v9241
      %v9243 = vpop.f32.mrb[0].mxu0
      %9244 = vmatprep.mubr.bf16.mxu0 0
      %9245 = vmatmul.mubr.bf16.gmra.mrb[0].mxu0 %v9102
      %v9246 = vpop.f32.mrb[0].mxu0
      %v9247 = vadd.f32 %v9066, %v9246
      %v9248 = vpop.f32.mrb[0].mxu0
      %v9249 = vpop.f32.mrb[0].mxu0
      %v9250 = vadd.f32 %v9066, %v9249
      %v9251 = vpop.f32.mrb[0].mxu0
      %9252 = vmatprep.mubr.bf16.mxu0 0
      %9253 = vmatmul.mubr.bf16.gmra.mrb[0].mxu0 %v9105
      %v9254 = vpop.f32.mrb[0].mxu0
      %v9255 = vadd.f32 %v9066, %v9254
      %v9256 = vpop.f32.mrb[0].mxu0
      %v9257 = vpop.f32.mrb[0].mxu0
      %v9258 = vadd.f32 %v9066, %v9257
      %v9259 = vpop.f32.mrb[0].mxu0
      %9260 = vmatprep.mubr.bf16.mxu0 0
      %9261 = vmatmul.mubr.bf16.gmra.mrb[0].mxu0 %v9108
      %v9262 = vpop.f32.mrb[0].mxu0
      %v9263 = vadd.f32 %v9066, %v9262
      %v9264 = vpop.f32.mrb[0].mxu0
      %v9265 = vpop.f32.mrb[0].mxu0
      %v9266 = vadd.f32 %v9066, %v9265
      %v9267 = vpop.f32.mrb[0].mxu0
      %9268 = vmatprep.mubr.bf16.mxu0 0
      %9269 = vmatmul.mubr.bf16.gmra.mrb[0].mxu0 %v9111
      %v9270 = vpop.f32.mrb[0].mxu0
      %v9271 = vadd.f32 %v9066, %v9270
      %v9272 = vpop.f32.mrb[0].mxu0
      %v9273 = vpop.f32.mrb[0].mxu0
      %v9274 = vadd.f32 %v9066, %v9273
      %v9275 = vpop.f32.mrb[0].mxu0
      %9276 = vmatprep.mubr.bf16.mxu0 0
      %9277 = vmatmul.mubr.bf16.gmra.mrb[0].mxu0 %v9114
      %v9278 = vpop.f32.mrb[0].mxu0
      %v9279 = vadd.f32 %v9066, %v9278
      %v9280 = vpop.f32.mrb[0].mxu0
      %v9281 = vpop.f32.mrb[0].mxu0
      %v9282 = vadd.f32 %v9066, %v9281
      %v9283 = vpop.f32.mrb[0].mxu0
      %9284 = vmatprep.mubr.bf16.mxu0 0
      %9285 = vmatmul.mubr.bf16.gmra.mrb[0].mxu0 %v9117
      %v9286 = vpop.f32.mrb[0].mxu0
      %v9287 = vadd.f32 %v9066, %v9286
      %v9288 = vpop.f32.mrb[0].mxu0
      %v9289 = vpop.f32.mrb[0].mxu0
      %v9290 = vadd.f32 %v9066, %v9289
      %v9291 = vpop.f32.mrb[0].mxu0
      %9292 = vmatprep.mubr.bf16.mxu0 0
      %9293 = vmatmul.mubr.bf16.gmra.mrb[0].mxu0 %v9120
      %v9294 = vpop.f32.mrb[0].mxu0
      %v9295 = vadd.f32 %v9066, %v9294
      %v9296 = vpop.f32.mrb[0].mxu0
      %v9297 = vpop.f32.mrb[0].mxu0
      %v9298 = vadd.f32 %v9066, %v9297
      %v9299 = vpop.f32.mrb[0].mxu0
      %9300 = vmatprep.mubr.bf16.mxu0 0
      %9301 = vmatmul.mubr.bf16.gmra.mrb[0].mxu0 %v9123
      %v9302 = vpop.f32.mrb[0].mxu0
      %v9303 = vadd.f32 %v9066, %v9302
      %v9304 = vpop.f32.mrb[0].mxu0
      %v9305 = vpop.f32.mrb[0].mxu0
      %v9306 = vadd.f32 %v9066, %v9305
      %v9307 = vpop.f32.mrb[0].mxu0
      %9308 = vmatprep.mubr.bf16.mxu0 0
      %9309 = vmatmul.mubr.bf16.gmra.mrb[0].mxu0 %v9126
      %v9310 = vpop.f32.mrb[0].mxu0
      %v9311 = vadd.f32 %v9066, %v9310
      %v9312 = vpop.f32.mrb[0].mxu0
      %v9313 = vpop.f32.mrb[0].mxu0
      %v9314 = vadd.f32 %v9066, %v9313
      %v9315 = vpop.f32.mrb[0].mxu0
      %9316 = vmatprep.mubr.bf16.mxu0 0
      %9317 = vmatmul.mubr.bf16.gmra.mrb[0].mxu0 %v9129
      %v9318 = vpop.f32.mrb[0].mxu0
      %v9319 = vadd.f32 %v9066, %v9318
      %v9320 = vpop.f32.mrb[0].mxu0
      %v9321 = vpop.f32.mrb[0].mxu0
      %v9322 = vadd.f32 %v9066, %v9321
      %v9323 = vpop.f32.mrb[0].mxu0
      %9324 = vmatprep.mubr.bf16.mxu0 0
      %9325 = vmatmul.mubr.bf16.gmra.mrb[0].mxu0 %v9132
      %v9326 = vpop.f32.mrb[0].mxu0
      %v9327 = vadd.f32 %v9066, %v9326
      %v9328 = vpop.f32.mrb[0].mxu0
      %v9329 = vpop.f32.mrb[0].mxu0
      %v9330 = vadd.f32 %v9066, %v9329
      %v9331 = vpop.f32.mrb[0].mxu0
      %9332 = vmatprep.mubr.bf16.mxu0 0
      %9333 = vmatmul.mubr.bf16.gmra.mrb[0].mxu0 %v9135
      %v9334 = vpop.f32.mrb[0].mxu0
      %v9335 = vadd.f32 %v9066, %v9334
      %v9336 = vpop.f32.mrb[0].mxu0
      %v9337 = vpop.f32.mrb[0].mxu0
      %v9338 = vadd.f32 %v9066, %v9337
      %v9339 = vpop.f32.mrb[0].mxu0
      %9340 = vmatprep.mubr.bf16.mxu0 0
      %9341 = vmatmul.mubr.bf16.gmra.mrb[0].mxu0 %v9138
      %v9342 = vpop.f32.mrb[0].mxu0
      %v9343 = vadd.f32 %v9066, %v9342
      %v9344 = vpop.f32.mrb[0].mxu0
      %v9345 = vpop.f32.mrb[0].mxu0
      %v9346 = vadd.f32 %v9066, %v9345
      %v9347 = vpop.f32.mrb[0].mxu0
      %9348 = vmatprep.mubr.bf16.mxu0 0
      %9349 = vmatmul.mubr.bf16.gmra.mrb[0].mxu0 %v9141
      %v9350 = vpop.f32.mrb[0].mxu0
      %v9351 = vadd.f32 %v9066, %v9350
      %v9352 = vpop.f32.mrb[0].mxu0
      %v9353 = vpop.f32.mrb[0].mxu0
      %v9354 = vadd.f32 %v9066, %v9353
      %v9355 = vpop.f32.mrb[0].mxu0
      %9356 = vmatprep.mubr.bf16.mxu0 0
      %9357 = vmatmul.mubr.bf16.gmra.mrb[0].mxu0 %v9144
      %v9358 = vpop.f32.mrb[0].mxu0
      %v9359 = vadd.f32 %v9066, %v9358
      %v9360 = vpop.f32.mrb[0].mxu0
      %v9361 = vpop.f32.mrb[0].mxu0
      %v9362 = vadd.f32 %v9066, %v9361
      %v9363 = vpop.f32.mrb[0].mxu0
      %9364 = vmatprep.mubr.bf16.mxu0 0
      %9365 = vmatmul.mubr.bf16.gmra.mrb[0].mxu0 %v9147
      %v9366 = vpop.f32.mrb[0].mxu0
      %v9367 = vadd.f32 %v9066, %v9366
      %v9368 = vpop.f32.mrb[0].mxu0
      %v9369 = vpop.f32.mrb[0].mxu0
      %v9370 = vadd.f32 %v9066, %v9369
      %v9371 = vpop.f32.mrb[0].mxu0
      %9372 = vmatprep.mubr.bf16.mxu0 0
      %9373 = vmatmul.mubr.bf16.gmra.mrb[0].mxu0 %v9150
      %v9374 = vpop.f32.mrb[0].mxu0
      %v9375 = vadd.f32 %v9066, %v9374
      %v9376 = vpop.f32.mrb[0].mxu0
      %v9377 = vpop.f32.mrb[0].mxu0
      %v9378 = vadd.f32 %v9066, %v9377
      %v9379 = vpop.f32.mrb[0].mxu0
      %9380 = vmatprep.mubr.bf16.mxu0 0
      %9381 = vmatmul.mubr.bf16.gmra.mrb[0].mxu0 %v9153
      %v9382 = vpop.f32.mrb[0].mxu0
      %v9383 = vadd.f32 %v9066, %v9382
      %v9384 = vpop.f32.mrb[0].mxu0
      %v9385 = vpop.f32.mrb[0].mxu0
      %v9386 = vadd.f32 %v9066, %v9385
      %v9387 = vpop.f32.mrb[0].mxu0
      %9388 = vmatprep.mubr.bf16.mxu0 0
      %9389 = vmatmul.mubr.bf16.gmra.mrb[0].mxu0 %v9156
      %v9390 = vpop.f32.mrb[0].mxu0
      %v9391 = vadd.f32 %v9066, %v9390
      %v9392 = vpop.f32.mrb[0].mxu0
      %v9393 = vpop.f32.mrb[0].mxu0
      %v9394 = vadd.f32 %v9066, %v9393
      %v9395 = vpop.f32.mrb[0].mxu0
      %9396 = vmatprep.mubr.bf16.mxu0 0
      %9397 = vmatmul.mubr.bf16.gmra.mrb[0].mxu0 %v9159
      %v9398 = vpop.f32.mrb[0].mxu0
      %v9399 = vadd.f32 %v9066, %v9398
      %v9400 = vpop.f32.mrb[0].mxu0
      %v9401 = vpop.f32.mrb[0].mxu0
      %v9402 = vadd.f32 %v9066, %v9401
      %v9403 = vpop.f32.mrb[0].mxu0
      %9404 = vmatprep.mubr.bf16.mxu0 0
      %9405 = vmatmul.mubr.bf16.gmra.mrb[0].mxu0 %v9162
      %v9406 = vpop.f32.mrb[0].mxu0
      %v9407 = vadd.f32 %v9066, %v9406
      %v9408 = vpop.f32.mrb[0].mxu0
      %v9409 = vpop.f32.mrb[0].mxu0
      %v9410 = vadd.f32 %v9066, %v9409
      %v9411 = vpop.f32.mrb[0].mxu0
      %9412 = vmatprep.mubr.bf16.mxu0 0
      %9413 = vmatmul.mubr.bf16.gmra.mrb[0].mxu0 %v9165
      %v9414 = vpop.f32.mrb[0].mxu0
      %v9415 = vadd.f32 %v9066, %v9414
      %v9416 = vpop.f32.mrb[0].mxu0
      %v9417 = vpop.f32.mrb[0].mxu0
      %v9418 = vadd.f32 %v9066, %v9417
      %v9419 = vpop.f32.mrb[0].mxu0
      %9420 = vmatprep.mubr.bf16.mxu0 0
      %9421 = vmatmul.mubr.bf16.gmra.mrb[0].mxu0 %v9168
      %v9422 = vpop.f32.mrb[0].mxu0
      %v9423 = vadd.f32 %v9066, %v9422
      %v9424 = vpop.f32.mrb[0].mxu0
      %v9425 = vpop.f32.mrb[0].mxu0
      %v9426 = vadd.f32 %v9066, %v9425
      %v9427 = vpop.f32.mrb[0].mxu0
      %9428 = vmatprep.mubr.bf16.mxu0 0
      %9429 = vmatmul.mubr.bf16.gmra.mrb[0].mxu0 %v9171
      %v9430 = vpop.f32.mrb[0].mxu0
      %v9431 = vadd.f32 %v9066, %v9430
      %v9432 = vpop.f32.mrb[0].mxu0
      %v9433 = vpop.f32.mrb[0].mxu0
      %v9434 = vadd.f32 %v9066, %v9433
      %v9435 = vpop.f32.mrb[0].mxu0
      %9436 = vmatprep.mubr.bf16.mxu0 0
      %9437 = vmatmul.mubr.bf16.gmra.mrb[0].mxu0 %v9174
      %v9438 = vpop.f32.mrb[0].mxu0
      %v9439 = vadd.f32 %v9066, %v9438
      %v9440 = vpop.f32.mrb[0].mxu0
      %v9441 = vpop.f32.mrb[0].mxu0
      %v9442 = vadd.f32 %v9066, %v9441
      %v9443 = vpop.f32.mrb[0].mxu0
      %9444 = vmatprep.mubr.bf16.mxu0 0
      %9445 = vmatmul.mubr.bf16.gmra.mrb[0].mxu0 %v9177
      %v9446 = vpop.f32.mrb[0].mxu0
      %v9447 = vadd.f32 %v9066, %v9446
      %v9448 = vpop.f32.mrb[0].mxu0
      %v9449 = vpop.f32.mrb[0].mxu0
      %v9450 = vadd.f32 %v9066, %v9449
      %v9451 = vpop.f32.mrb[0].mxu0
      %9452 = vmatprep.mubr.bf16.mxu0 0
      %9453 = vmatmul.mubr.bf16.gmra.mrb[0].mxu0 %v9180
      %v9454 = vpop.f32.mrb[0].mxu0
      %v9455 = vadd.f32 %v9066, %v9454
      %v9456 = vpop.f32.mrb[0].mxu0
      %v9457 = vpop.f32.mrb[0].mxu0
      %v9458 = vadd.f32 %v9066, %v9457
      %v9459 = vpop.f32.mrb[0].mxu0
      %9460 = vmatprep.mubr.bf16.mxu0 0
      %9461 = vmatmul.mubr.bf16.gmra.mrb[0].mxu0 %v9183
      %v9462 = vpop.f32.mrb[0].mxu0
      %v9463 = vadd.f32 %v9066, %v9462
      %v9464 = vpop.f32.mrb[0].mxu0
      %v9465 = vpop.f32.mrb[0].mxu0
      %v9466 = vadd.f32 %v9066, %v9465
      %v9467 = vpop.f32.mrb[0].mxu0
      %9468 = vmatprep.mubr.bf16.mxu0 0
      %9469 = vmatmul.mubr.bf16.gmra.mrb[0].mxu0 %v9186
      %v9470 = vpop.f32.mrb[0].mxu0
      %v9471 = vadd.f32 %v9066, %v9470
      %v9472 = vpop.f32.mrb[0].mxu0
      %v9473 = vpop.f32.mrb[0].mxu0
      %v9474 = vadd.f32 %v9066, %v9473
      %v9475 = vpop.f32.mrb[0].mxu0
      %9476 = vdwg.mxu0
      %v9477 = vmax.f32 %v9223, 0.0
      %v9478 = vmax.f32 %v9226, 0.0
      %v9479 = vmax.f32 %v9231, 0.0
      %v9480 = vmax.f32 %v9234, 0.0
      %v9481 = vmax.f32 %v9239, 0.0
      %v9482 = vmax.f32 %v9242, 0.0
      %v9483 = vmax.f32 %v9247, 0.0
      %v9484 = vmax.f32 %v9250, 0.0
      %v9485 = vmax.f32 %v9255, 0.0
      %v9486 = vmax.f32 %v9258, 0.0
      %v9487 = vmax.f32 %v9263, 0.0
      %v9488 = vmax.f32 %v9266, 0.0
      %v9489 = vmax.f32 %v9271, 0.0
      %v9490 = vmax.f32 %v9274, 0.0
      %v9491 = vmax.f32 %v9279, 0.0
      %v9492 = vmax.f32 %v9282, 0.0
      %v9493 = vmax.f32 %v9287, 0.0
      %v9494 = vmax.f32 %v9290, 0.0
      %v9495 = vmax.f32 %v9295, 0.0
      %v9496 = vmax.f32 %v9298, 0.0
      %v9497 = vmax.f32 %v9303, 0.0
      %v9498 = vmax.f32 %v9306, 0.0
      %v9499 = vmax.f32 %v9311, 0.0
      %v9500 = vmax.f32 %v9314, 0.0
      %v9501 = vmax.f32 %v9319, 0.0
      %v9502 = vmax.f32 %v9322, 0.0
      %v9503 = vmax.f32 %v9327, 0.0
      %v9504 = vmax.f32 %v9330, 0.0
      %v9505 = vmax.f32 %v9335, 0.0
      %v9506 = vmax.f32 %v9338, 0.0
      %v9507 = vmax.f32 %v9343, 0.0
      %v9508 = vmax.f32 %v9346, 0.0
      %v9509 = vmax.f32 %v9351, 0.0
      %v9510 = vmax.f32 %v9354, 0.0
      %v9511 = vmax.f32 %v9359, 0.0
      %v9512 = vmax.f32 %v9362, 0.0
      %v9513 = vmax.f32 %v9367, 0.0
      %v9514 = vmax.f32 %v9370, 0.0
      %v9515 = vmax.f32 %v9375, 0.0
      %v9516 = vmax.f32 %v9378, 0.0
      %v9517 = vmax.f32 %v9383, 0.0
      %v9518 = vmax.f32 %v9386, 0.0
      %v9519 = vmax.f32 %v9391, 0.0
      %v9520 = vmax.f32 %v9394, 0.0
      %v9521 = vmax.f32 %v9399, 0.0
      %v9522 = vmax.f32 %v9402, 0.0
      %v9523 = vmax.f32 %v9407, 0.0
      %v9524 = vmax.f32 %v9410, 0.0
      %v9525 = vmax.f32 %v9415, 0.0
      %v9526 = vmax.f32 %v9418, 0.0
      %v9527 = vmax.f32 %v9423, 0.0
      %v9528 = vmax.f32 %v9426, 0.0
      %v9529 = vmax.f32 %v9431, 0.0
      %v9530 = vmax.f32 %v9434, 0.0
      %v9531 = vmax.f32 %v9439, 0.0
      %v9532 = vmax.f32 %v9442, 0.0
      %v9533 = vmax.f32 %v9447, 0.0
      %v9534 = vmax.f32 %v9450, 0.0
      %v9535 = vmax.f32 %v9455, 0.0
      %v9536 = vmax.f32 %v9458, 0.0
      %v9537 = vmax.f32 %v9463, 0.0
      %v9538 = vmax.f32 %v9466, 0.0
      %v9539 = vmax.f32 %v9471, 0.0
      %v9540 = vmax.f32 %v9474, 0.0
      %v9541 = vpack.c.bf16 %v9478, %v9477
      %v9542 = vpack.c.bf16 %v9480, %v9479
      %v9543 = vpack.c.bf16 %v9482, %v9481
      %v9544 = vpack.c.bf16 %v9484, %v9483
      %v9545 = vpack.c.bf16 %v9486, %v9485
      %v9546 = vpack.c.bf16 %v9488, %v9487
      %v9547 = vpack.c.bf16 %v9490, %v9489
      %v9548 = vpack.c.bf16 %v9492, %v9491
      %v9549 = vpack.c.bf16 %v9494, %v9493
      %v9550 = vpack.c.bf16 %v9496, %v9495
      %v9551 = vpack.c.bf16 %v9498, %v9497
      %v9552 = vpack.c.bf16 %v9500, %v9499
      %v9553 = vpack.c.bf16 %v9502, %v9501
      %v9554 = vpack.c.bf16 %v9504, %v9503
      %v9555 = vpack.c.bf16 %v9506, %v9505
      %v9556 = vpack.c.bf16 %v9508, %v9507
      %v9557 = vpack.c.bf16 %v9510, %v9509
      %v9558 = vpack.c.bf16 %v9512, %v9511
      %v9559 = vpack.c.bf16 %v9514, %v9513
      %v9560 = vpack.c.bf16 %v9516, %v9515
      %v9561 = vpack.c.bf16 %v9518, %v9517
      %v9562 = vpack.c.bf16 %v9520, %v9519
      %v9563 = vpack.c.bf16 %v9522, %v9521
      %v9564 = vpack.c.bf16 %v9524, %v9523
      %v9565 = vpack.c.bf16 %v9526, %v9525
      %v9566 = vpack.c.bf16 %v9528, %v9527
      %v9567 = vpack.c.bf16 %v9530, %v9529
      %v9568 = vpack.c.bf16 %v9532, %v9531
      %v9569 = vpack.c.bf16 %v9534, %v9533
      %v9570 = vpack.c.bf16 %v9536, %v9535
      %v9571 = vpack.c.bf16 %v9538, %v9537
      %v9572 = vpack.c.bf16 %v9540, %v9539
      %v9573 = vld [vmem:[%s1 + $0x78] sm:$0xf]
      %v9574 = vld [vmem:[%s1 + $0x7c] sm:$0xf]
      %v9575 = vld [vmem:[%s1 + $0x80] sm:$0xf]
      %v9576 = vld [vmem:[%s1 + $0x84] sm:$0xf]
      %v9577 = vld [vmem:[%s1 + $0x88] sm:$0xf]
      %v9578 = vld [vmem:[%s1 + $0x8c] sm:$0xf]
      %v9579 = vld [vmem:[%s1 + $0x90] sm:$0xf]
      %v9580 = vld [vmem:[%s1 + $0x94] sm:$0xf]
      %v9581 = vld [vmem:[%s2 + $0x7] sm:$0x1]
      %v9582 = vlaneseq
      %v9583 = vshrl.u32 %v9582, 7
      %v9584 = vsub.s32 0, %v9583
      %v9585 = vrot.slane %v9581, %v9584
      %v9594 = vunpack.c.l.b16 %v9573
      %v9595 = vunpack.c.l.b16 %v9574
      %v9596 = vunpack.c.l.b16 %v9575
      %v9597 = vunpack.c.l.b16 %v9576
      %v9598 = vunpack.c.l.b16 %v9577
      %v9599 = vunpack.c.l.b16 %v9578
      %v9600 = vunpack.c.l.b16 %v9579
      %v9601 = vunpack.c.l.b16 %v9580
      %v9602 = vpack.c.b16 %v9595, %v9594
      %v9603 = vpack.c.b16 %v9597, %v9596
      %v9604 = vpack.c.b16 %v9599, %v9598
      %v9605 = vpack.c.b16 %v9601, %v9600
      %v9611 = vsel %vm9091, %v9541, 0
      %v9614 = vsel %vm9091, %v9542, 0
      %v9617 = vsel %vm9091, %v9543, 0
      %v9620 = vsel %vm9091, %v9544, 0
      %v9623 = vsel %vm9091, %v9545, 0
      %v9626 = vsel %vm9091, %v9546, 0
      %v9629 = vsel %vm9091, %v9547, 0
      %v9632 = vsel %vm9091, %v9548, 0
      %v9635 = vsel %vm9091, %v9549, 0
      %v9638 = vsel %vm9091, %v9550, 0
      %v9641 = vsel %vm9091, %v9551, 0
      %v9644 = vsel %vm9091, %v9552, 0
      %v9647 = vsel %vm9091, %v9553, 0
      %v9650 = vsel %vm9091, %v9554, 0
      %v9653 = vsel %vm9091, %v9555, 0
      %v9656 = vsel %vm9091, %v9556, 0
      %v9659 = vsel %vm9091, %v9557, 0
      %v9662 = vsel %vm9091, %v9558, 0
      %v9665 = vsel %vm9091, %v9559, 0
      %v9668 = vsel %vm9091, %v9560, 0
      %v9671 = vsel %vm9091, %v9561, 0
      %v9674 = vsel %vm9091, %v9562, 0
      %v9677 = vsel %vm9091, %v9563, 0
      %v9680 = vsel %vm9091, %v9564, 0
      %v9683 = vsel %vm9091, %v9565, 0
      %v9686 = vsel %vm9091, %v9566, 0
      %v9689 = vsel %vm9091, %v9567, 0
      %v9692 = vsel %vm9091, %v9568, 0
      %v9695 = vsel %vm9091, %v9569, 0
      %v9698 = vsel %vm9091, %v9570, 0
      %v9701 = vsel %vm9091, %v9571, 0
      %v9704 = vsel %vm9091, %v9572, 0
      %9706 = vmatprep.subr.bf16.mxu0 0
      %9707 = vmatpush1.bf16.msra.mxu0 %v9602
      %9708 = vmatprep.subr.bf16.mxu0 0
      %9709 = vmatpush1.bf16.msra.mxu0 %v9603
      %9710 = vmatprep.subr.bf16.mxu0 0
      %9711 = vmatpush1.bf16.msra.mxu0 %v9604
      %9712 = vmatprep.subr.bf16.mxu0 0
      %9713 = vmatpush1.bf16.msra.mxu0 %v9605
      %9714 = vmatprep.subr.bf16.mxu0 0
      %9715 = vmatpush1.bf16.msra.mxu0 0
      %9716 = vmatprep.subr.bf16.mxu0 0
      %9717 = vmatpush1.bf16.msra.mxu0 0
      %9718 = vmatprep.subr.bf16.mxu0 0
      %9719 = vmatpush1.bf16.msra.mxu0 0
      %9720 = vmatprep.subr.bf16.mxu0 0
      %9721 = vmatpush1.bf16.msra.mxu0 0
      %9722 = vmatprep.subr.bf16.mxu0 0
      %9723 = vmatpush1.bf16.msra.mxu0 0
      %9724 = vmatprep.subr.bf16.mxu0 0
      %9725 = vmatpush1.bf16.msra.mxu0 0
      %9726 = vmatprep.subr.bf16.mxu0 0
      %9727 = vmatpush1.bf16.msra.mxu0 0
      %9728 = vmatprep.subr.bf16.mxu0 0
      %9729 = vmatpush1.bf16.msra.mxu0 0
      %9730 = vmatprep.subr.bf16.mxu0 0
      %9731 = vmatpush1.bf16.msra.mxu0 0
      %9732 = vmatprep.subr.bf16.mxu0 0
      %9733 = vmatpush1.bf16.msra.mxu0 0
      %9734 = vmatprep.subr.bf16.mxu0 0
      %9735 = vmatpush1.bf16.msra.mxu0 0
      %9736 = vmatprep.subr.bf16.mxu0 0
      %9737 = vmatpush1.bf16.msra.mxu0 0
      %9738 = vmatprep.mubr.bf16.mxu0 0
      %9739 = vmatmul.mubr.bf16.gmra.mrb[0].mxu0 %v9611
      %v9740 = vpop.f32.mrb[0].mxu0
      %v9741 = vadd.f32 %v9585, %v9740
      %v9742 = vpop.f32.mrb[0].mxu0
      %v9743 = vpop.f32.mrb[0].mxu0
      %v9744 = vadd.f32 %v9585, %v9743
      %v9745 = vpop.f32.mrb[0].mxu0
      %9746 = vmatprep.mubr.bf16.mxu0 0
      %9747 = vmatmul.mubr.bf16.gmra.mrb[0].mxu0 %v9614
      %v9748 = vpop.f32.mrb[0].mxu0
      %v9749 = vadd.f32 %v9585, %v9748
      %v9750 = vpop.f32.mrb[0].mxu0
      %v9751 = vpop.f32.mrb[0].mxu0
      %v9752 = vadd.f32 %v9585, %v9751
      %v9753 = vpop.f32.mrb[0].mxu0
      %9754 = vmatprep.mubr.bf16.mxu0 0
      %9755 = vmatmul.mubr.bf16.gmra.mrb[0].mxu0 %v9617
      %v9756 = vpop.f32.mrb[0].mxu0
      %v9757 = vadd.f32 %v9585, %v9756
      %v9758 = vpop.f32.mrb[0].mxu0
      %v9759 = vpop.f32.mrb[0].mxu0
      %v9760 = vadd.f32 %v9585, %v9759
      %v9761 = vpop.f32.mrb[0].mxu0
      %9762 = vmatprep.mubr.bf16.mxu0 0
      %9763 = vmatmul.mubr.bf16.gmra.mrb[0].mxu0 %v9620
      %v9764 = vpop.f32.mrb[0].mxu0
      %v9765 = vadd.f32 %v9585, %v9764
      %v9766 = vpop.f32.mrb[0].mxu0
      %v9767 = vpop.f32.mrb[0].mxu0
      %v9768 = vadd.f32 %v9585, %v9767
      %v9769 = vpop.f32.mrb[0].mxu0
      %9770 = vmatprep.mubr.bf16.mxu0 0
      %9771 = vmatmul.mubr.bf16.gmra.mrb[0].mxu0 %v9623
      %v9772 = vpop.f32.mrb[0].mxu0
      %v9773 = vadd.f32 %v9585, %v9772
      %v9774 = vpop.f32.mrb[0].mxu0
      %v9775 = vpop.f32.mrb[0].mxu0
      %v9776 = vadd.f32 %v9585, %v9775
      %v9777 = vpop.f32.mrb[0].mxu0
      %9778 = vmatprep.mubr.bf16.mxu0 0
      %9779 = vmatmul.mubr.bf16.gmra.mrb[0].mxu0 %v9626
      %v9780 = vpop.f32.mrb[0].mxu0
      %v9781 = vadd.f32 %v9585, %v9780
      %v9782 = vpop.f32.mrb[0].mxu0
      %v9783 = vpop.f32.mrb[0].mxu0
      %v9784 = vadd.f32 %v9585, %v9783
      %v9785 = vpop.f32.mrb[0].mxu0
      %9786 = vmatprep.mubr.bf16.mxu0 0
      %9787 = vmatmul.mubr.bf16.gmra.mrb[0].mxu0 %v9629
      %v9788 = vpop.f32.mrb[0].mxu0
      %v9789 = vadd.f32 %v9585, %v9788
      %v9790 = vpop.f32.mrb[0].mxu0
      %v9791 = vpop.f32.mrb[0].mxu0
      %v9792 = vadd.f32 %v9585, %v9791
      %v9793 = vpop.f32.mrb[0].mxu0
      %9794 = vmatprep.mubr.bf16.mxu0 0
      %9795 = vmatmul.mubr.bf16.gmra.mrb[0].mxu0 %v9632
      %v9796 = vpop.f32.mrb[0].mxu0
      %v9797 = vadd.f32 %v9585, %v9796
      %v9798 = vpop.f32.mrb[0].mxu0
      %v9799 = vpop.f32.mrb[0].mxu0
      %v9800 = vadd.f32 %v9585, %v9799
      %v9801 = vpop.f32.mrb[0].mxu0
      %9802 = vmatprep.mubr.bf16.mxu0 0
      %9803 = vmatmul.mubr.bf16.gmra.mrb[0].mxu0 %v9635
      %v9804 = vpop.f32.mrb[0].mxu0
      %v9805 = vadd.f32 %v9585, %v9804
      %v9806 = vpop.f32.mrb[0].mxu0
      %v9807 = vpop.f32.mrb[0].mxu0
      %v9808 = vadd.f32 %v9585, %v9807
      %v9809 = vpop.f32.mrb[0].mxu0
      %9810 = vmatprep.mubr.bf16.mxu0 0
      %9811 = vmatmul.mubr.bf16.gmra.mrb[0].mxu0 %v9638
      %v9812 = vpop.f32.mrb[0].mxu0
      %v9813 = vadd.f32 %v9585, %v9812
      %v9814 = vpop.f32.mrb[0].mxu0
      %v9815 = vpop.f32.mrb[0].mxu0
      %v9816 = vadd.f32 %v9585, %v9815
      %v9817 = vpop.f32.mrb[0].mxu0
      %9818 = vmatprep.mubr.bf16.mxu0 0
      %9819 = vmatmul.mubr.bf16.gmra.mrb[0].mxu0 %v9641
      %v9820 = vpop.f32.mrb[0].mxu0
      %v9821 = vadd.f32 %v9585, %v9820
      %v9822 = vpop.f32.mrb[0].mxu0
      %v9823 = vpop.f32.mrb[0].mxu0
      %v9824 = vadd.f32 %v9585, %v9823
      %v9825 = vpop.f32.mrb[0].mxu0
      %9826 = vmatprep.mubr.bf16.mxu0 0
      %9827 = vmatmul.mubr.bf16.gmra.mrb[0].mxu0 %v9644
      %v9828 = vpop.f32.mrb[0].mxu0
      %v9829 = vadd.f32 %v9585, %v9828
      %v9830 = vpop.f32.mrb[0].mxu0
      %v9831 = vpop.f32.mrb[0].mxu0
      %v9832 = vadd.f32 %v9585, %v9831
      %v9833 = vpop.f32.mrb[0].mxu0
      %9834 = vmatprep.mubr.bf16.mxu0 0
      %9835 = vmatmul.mubr.bf16.gmra.mrb[0].mxu0 %v9647
      %v9836 = vpop.f32.mrb[0].mxu0
      %v9837 = vadd.f32 %v9585, %v9836
      %v9838 = vpop.f32.mrb[0].mxu0
      %v9839 = vpop.f32.mrb[0].mxu0
      %v9840 = vadd.f32 %v9585, %v9839
      %v9841 = vpop.f32.mrb[0].mxu0
      %9842 = vmatprep.mubr.bf16.mxu0 0
      %9843 = vmatmul.mubr.bf16.gmra.mrb[0].mxu0 %v9650
      %v9844 = vpop.f32.mrb[0].mxu0
      %v9845 = vadd.f32 %v9585, %v9844
      %v9846 = vpop.f32.mrb[0].mxu0
      %v9847 = vpop.f32.mrb[0].mxu0
      %v9848 = vadd.f32 %v9585, %v9847
      %v9849 = vpop.f32.mrb[0].mxu0
      %9850 = vmatprep.mubr.bf16.mxu0 0
      %9851 = vmatmul.mubr.bf16.gmra.mrb[0].mxu0 %v9653
      %v9852 = vpop.f32.mrb[0].mxu0
      %v9853 = vadd.f32 %v9585, %v9852
      %v9854 = vpop.f32.mrb[0].mxu0
      %v9855 = vpop.f32.mrb[0].mxu0
      %v9856 = vadd.f32 %v9585, %v9855
      %v9857 = vpop.f32.mrb[0].mxu0
      %9858 = vmatprep.mubr.bf16.mxu0 0
      %9859 = vmatmul.mubr.bf16.gmra.mrb[0].mxu0 %v9656
      %v9860 = vpop.f32.mrb[0].mxu0
      %v9861 = vadd.f32 %v9585, %v9860
      %v9862 = vpop.f32.mrb[0].mxu0
      %v9863 = vpop.f32.mrb[0].mxu0
      %v9864 = vadd.f32 %v9585, %v9863
      %v9865 = vpop.f32.mrb[0].mxu0
      %9866 = vmatprep.mubr.bf16.mxu0 0
      %9867 = vmatmul.mubr.bf16.gmra.mrb[0].mxu0 %v9659
      %v9868 = vpop.f32.mrb[0].mxu0
      %v9869 = vadd.f32 %v9585, %v9868
      %v9870 = vpop.f32.mrb[0].mxu0
      %v9871 = vpop.f32.mrb[0].mxu0
      %v9872 = vadd.f32 %v9585, %v9871
      %v9873 = vpop.f32.mrb[0].mxu0
      %9874 = vmatprep.mubr.bf16.mxu0 0
      %9875 = vmatmul.mubr.bf16.gmra.mrb[0].mxu0 %v9662
      %v9876 = vpop.f32.mrb[0].mxu0
      %v9877 = vadd.f32 %v9585, %v9876
      %v9878 = vpop.f32.mrb[0].mxu0
      %v9879 = vpop.f32.mrb[0].mxu0
      %v9880 = vadd.f32 %v9585, %v9879
      %v9881 = vpop.f32.mrb[0].mxu0
      %9882 = vmatprep.mubr.bf16.mxu0 0
      %9883 = vmatmul.mubr.bf16.gmra.mrb[0].mxu0 %v9665
      %v9884 = vpop.f32.mrb[0].mxu0
      %v9885 = vadd.f32 %v9585, %v9884
      %v9886 = vpop.f32.mrb[0].mxu0
      %v9887 = vpop.f32.mrb[0].mxu0
      %v9888 = vadd.f32 %v9585, %v9887
      %v9889 = vpop.f32.mrb[0].mxu0
      %9890 = vmatprep.mubr.bf16.mxu0 0
      %9891 = vmatmul.mubr.bf16.gmra.mrb[0].mxu0 %v9668
      %v9892 = vpop.f32.mrb[0].mxu0
      %v9893 = vadd.f32 %v9585, %v9892
      %v9894 = vpop.f32.mrb[0].mxu0
      %v9895 = vpop.f32.mrb[0].mxu0
      %v9896 = vadd.f32 %v9585, %v9895
      %v9897 = vpop.f32.mrb[0].mxu0
      %9898 = vmatprep.mubr.bf16.mxu0 0
      %9899 = vmatmul.mubr.bf16.gmra.mrb[0].mxu0 %v9671
      %v9900 = vpop.f32.mrb[0].mxu0
      %v9901 = vadd.f32 %v9585, %v9900
      %v9902 = vpop.f32.mrb[0].mxu0
      %v9903 = vpop.f32.mrb[0].mxu0
      %v9904 = vadd.f32 %v9585, %v9903
      %v9905 = vpop.f32.mrb[0].mxu0
      %9906 = vmatprep.mubr.bf16.mxu0 0
      %9907 = vmatmul.mubr.bf16.gmra.mrb[0].mxu0 %v9674
      %v9908 = vpop.f32.mrb[0].mxu0
      %v9909 = vadd.f32 %v9585, %v9908
      %v9910 = vpop.f32.mrb[0].mxu0
      %v9911 = vpop.f32.mrb[0].mxu0
      %v9912 = vadd.f32 %v9585, %v9911
      %v9913 = vpop.f32.mrb[0].mxu0
      %9914 = vmatprep.mubr.bf16.mxu0 0
      %9915 = vmatmul.mubr.bf16.gmra.mrb[0].mxu0 %v9677
      %v9916 = vpop.f32.mrb[0].mxu0
      %v9917 = vadd.f32 %v9585, %v9916
      %v9918 = vpop.f32.mrb[0].mxu0
      %v9919 = vpop.f32.mrb[0].mxu0
      %v9920 = vadd.f32 %v9585, %v9919
      %v9921 = vpop.f32.mrb[0].mxu0
      %9922 = vmatprep.mubr.bf16.mxu0 0
      %9923 = vmatmul.mubr.bf16.gmra.mrb[0].mxu0 %v9680
      %v9924 = vpop.f32.mrb[0].mxu0
      %v9925 = vadd.f32 %v9585, %v9924
      %v9926 = vpop.f32.mrb[0].mxu0
      %v9927 = vpop.f32.mrb[0].mxu0
      %v9928 = vadd.f32 %v9585, %v9927
      %v9929 = vpop.f32.mrb[0].mxu0
      %9930 = vmatprep.mubr.bf16.mxu0 0
      %9931 = vmatmul.mubr.bf16.gmra.mrb[0].mxu0 %v9683
      %v9932 = vpop.f32.mrb[0].mxu0
      %v9933 = vadd.f32 %v9585, %v9932
      %v9934 = vpop.f32.mrb[0].mxu0
      %v9935 = vpop.f32.mrb[0].mxu0
      %v9936 = vadd.f32 %v9585, %v9935
      %v9937 = vpop.f32.mrb[0].mxu0
      %9938 = vmatprep.mubr.bf16.mxu0 0
      %9939 = vmatmul.mubr.bf16.gmra.mrb[0].mxu0 %v9686
      %v9940 = vpop.f32.mrb[0].mxu0
      %v9941 = vadd.f32 %v9585, %v9940
      %v9942 = vpop.f32.mrb[0].mxu0
      %v9943 = vpop.f32.mrb[0].mxu0
      %v9944 = vadd.f32 %v9585, %v9943
      %v9945 = vpop.f32.mrb[0].mxu0
      %9946 = vmatprep.mubr.bf16.mxu0 0
      %9947 = vmatmul.mubr.bf16.gmra.mrb[0].mxu0 %v9689
      %v9948 = vpop.f32.mrb[0].mxu0
      %v9949 = vadd.f32 %v9585, %v9948
      %v9950 = vpop.f32.mrb[0].mxu0
      %v9951 = vpop.f32.mrb[0].mxu0
      %v9952 = vadd.f32 %v9585, %v9951
      %v9953 = vpop.f32.mrb[0].mxu0
      %9954 = vmatprep.mubr.bf16.mxu0 0
      %9955 = vmatmul.mubr.bf16.gmra.mrb[0].mxu0 %v9692
      %v9956 = vpop.f32.mrb[0].mxu0
      %v9957 = vadd.f32 %v9585, %v9956
      %v9958 = vpop.f32.mrb[0].mxu0
      %v9959 = vpop.f32.mrb[0].mxu0
      %v9960 = vadd.f32 %v9585, %v9959
      %v9961 = vpop.f32.mrb[0].mxu0
      %9962 = vmatprep.mubr.bf16.mxu0 0
      %9963 = vmatmul.mubr.bf16.gmra.mrb[0].mxu0 %v9695
      %v9964 = vpop.f32.mrb[0].mxu0
      %v9965 = vadd.f32 %v9585, %v9964
      %v9966 = vpop.f32.mrb[0].mxu0
      %v9967 = vpop.f32.mrb[0].mxu0
      %v9968 = vadd.f32 %v9585, %v9967
      %v9969 = vpop.f32.mrb[0].mxu0
      %9970 = vmatprep.mubr.bf16.mxu0 0
      %9971 = vmatmul.mubr.bf16.gmra.mrb[0].mxu0 %v9698
      %v9972 = vpop.f32.mrb[0].mxu0
      %v9973 = vadd.f32 %v9585, %v9972
      %v9974 = vpop.f32.mrb[0].mxu0
      %v9975 = vpop.f32.mrb[0].mxu0
      %v9976 = vadd.f32 %v9585, %v9975
      %v9977 = vpop.f32.mrb[0].mxu0
      %9978 = vmatprep.mubr.bf16.mxu0 0
      %9979 = vmatmul.mubr.bf16.gmra.mrb[0].mxu0 %v9701
      %v9980 = vpop.f32.mrb[0].mxu0
      %v9981 = vadd.f32 %v9585, %v9980
      %v9982 = vpop.f32.mrb[0].mxu0
      %v9983 = vpop.f32.mrb[0].mxu0
      %v9984 = vadd.f32 %v9585, %v9983
      %v9985 = vpop.f32.mrb[0].mxu0
      %9986 = vmatprep.mubr.bf16.mxu0 0
      %9987 = vmatmul.mubr.bf16.gmra.mrb[0].mxu0 %v9704
      %v9988 = vpop.f32.mrb[0].mxu0
      %v9989 = vadd.f32 %v9585, %v9988
      %v9990 = vpop.f32.mrb[0].mxu0
      %v9991 = vpop.f32.mrb[0].mxu0
      %v9992 = vadd.f32 %v9585, %v9991
      %v9993 = vpop.f32.mrb[0].mxu0
      %9994 = vdwg.mxu0
      %v9995 = vmax.f32 %v9741, 0.0
      %v9996 = vmax.f32 %v9744, 0.0
      %v9997 = vmax.f32 %v9749, 0.0
      %v9998 = vmax.f32 %v9752, 0.0
      %v9999 = vmax.f32 %v9757, 0.0
      %v10000 = vmax.f32 %v9760, 0.0
      %v10001 = vmax.f32 %v9765, 0.0
      %v10002 = vmax.f32 %v9768, 0.0
      %v10003 = vmax.f32 %v9773, 0.0
      %v10004 = vmax.f32 %v9776, 0.0
      %v10005 = vmax.f32 %v9781, 0.0
      %v10006 = vmax.f32 %v9784, 0.0
      %v10007 = vmax.f32 %v9789, 0.0
      %v10008 = vmax.f32 %v9792, 0.0
      %v10009 = vmax.f32 %v9797, 0.0
      %v10010 = vmax.f32 %v9800, 0.0
      %v10011 = vmax.f32 %v9805, 0.0
      %v10012 = vmax.f32 %v9808, 0.0
      %v10013 = vmax.f32 %v9813, 0.0
      %v10014 = vmax.f32 %v9816, 0.0
      %v10015 = vmax.f32 %v9821, 0.0
      %v10016 = vmax.f32 %v9824, 0.0
      %v10017 = vmax.f32 %v9829, 0.0
      %v10018 = vmax.f32 %v9832, 0.0
      %v10019 = vmax.f32 %v9837, 0.0
      %v10020 = vmax.f32 %v9840, 0.0
      %v10021 = vmax.f32 %v9845, 0.0
      %v10022 = vmax.f32 %v9848, 0.0
      %v10023 = vmax.f32 %v9853, 0.0
      %v10024 = vmax.f32 %v9856, 0.0
      %v10025 = vmax.f32 %v9861, 0.0
      %v10026 = vmax.f32 %v9864, 0.0
      %v10027 = vmax.f32 %v9869, 0.0
      %v10028 = vmax.f32 %v9872, 0.0
      %v10029 = vmax.f32 %v9877, 0.0
      %v10030 = vmax.f32 %v9880, 0.0
      %v10031 = vmax.f32 %v9885, 0.0
      %v10032 = vmax.f32 %v9888, 0.0
      %v10033 = vmax.f32 %v9893, 0.0
      %v10034 = vmax.f32 %v9896, 0.0
      %v10035 = vmax.f32 %v9901, 0.0
      %v10036 = vmax.f32 %v9904, 0.0
      %v10037 = vmax.f32 %v9909, 0.0
      %v10038 = vmax.f32 %v9912, 0.0
      %v10039 = vmax.f32 %v9917, 0.0
      %v10040 = vmax.f32 %v9920, 0.0
      %v10041 = vmax.f32 %v9925, 0.0
      %v10042 = vmax.f32 %v9928, 0.0
      %v10043 = vmax.f32 %v9933, 0.0
      %v10044 = vmax.f32 %v9936, 0.0
      %v10045 = vmax.f32 %v9941, 0.0
      %v10046 = vmax.f32 %v9944, 0.0
      %v10047 = vmax.f32 %v9949, 0.0
      %v10048 = vmax.f32 %v9952, 0.0
      %v10049 = vmax.f32 %v9957, 0.0
      %v10050 = vmax.f32 %v9960, 0.0
      %v10051 = vmax.f32 %v9965, 0.0
      %v10052 = vmax.f32 %v9968, 0.0
      %v10053 = vmax.f32 %v9973, 0.0
      %v10054 = vmax.f32 %v9976, 0.0
      %v10055 = vmax.f32 %v9981, 0.0
      %v10056 = vmax.f32 %v9984, 0.0
      %v10057 = vmax.f32 %v9989, 0.0
      %v10058 = vmax.f32 %v9992, 0.0
      %v10059 = vpack.c.bf16 %v9996, %v9995
      %v10060 = vpack.c.bf16 %v9998, %v9997
      %v10061 = vpack.c.bf16 %v10000, %v9999
      %v10062 = vpack.c.bf16 %v10002, %v10001
      %v10063 = vpack.c.bf16 %v10004, %v10003
      %v10064 = vpack.c.bf16 %v10006, %v10005
      %v10065 = vpack.c.bf16 %v10008, %v10007
      %v10066 = vpack.c.bf16 %v10010, %v10009
      %v10067 = vpack.c.bf16 %v10012, %v10011
      %v10068 = vpack.c.bf16 %v10014, %v10013
      %v10069 = vpack.c.bf16 %v10016, %v10015
      %v10070 = vpack.c.bf16 %v10018, %v10017
      %v10071 = vpack.c.bf16 %v10020, %v10019
      %v10072 = vpack.c.bf16 %v10022, %v10021
      %v10073 = vpack.c.bf16 %v10024, %v10023
      %v10074 = vpack.c.bf16 %v10026, %v10025
      %v10075 = vpack.c.bf16 %v10028, %v10027
      %v10076 = vpack.c.bf16 %v10030, %v10029
      %v10077 = vpack.c.bf16 %v10032, %v10031
      %v10078 = vpack.c.bf16 %v10034, %v10033
      %v10079 = vpack.c.bf16 %v10036, %v10035
      %v10080 = vpack.c.bf16 %v10038, %v10037
      %v10081 = vpack.c.bf16 %v10040, %v10039
      %v10082 = vpack.c.bf16 %v10042, %v10041
      %v10083 = vpack.c.bf16 %v10044, %v10043
      %v10084 = vpack.c.bf16 %v10046, %v10045
      %v10085 = vpack.c.bf16 %v10048, %v10047
      %v10086 = vpack.c.bf16 %v10050, %v10049
      %v10087 = vpack.c.bf16 %v10052, %v10051
      %v10088 = vpack.c.bf16 %v10054, %v10053
      %v10089 = vpack.c.bf16 %v10056, %v10055
      %v10090 = vpack.c.bf16 %v10058, %v10057
      %v10091 = vld [vmem:[%s1 + $0x98] sm:$0xf]
      %v10092 = vld [vmem:[%s1 + $0x9c] sm:$0xf]
      %v10093 = vld [vmem:[%s1 + $0xa0] sm:$0xf]
      %v10094 = vld [vmem:[%s1 + $0xa4] sm:$0xf]
      %v10095 = vld [vmem:[%s1 + $0xa8] sm:$0xf]
      %v10096 = vld [vmem:[%s1 + $0xac] sm:$0xf]
      %v10097 = vld [vmem:[%s1 + $0xb0] sm:$0xf]
      %v10098 = vld [vmem:[%s1 + $0xb4] sm:$0xf]
      %v10107 = vunpack.c.l.b16 %v10091
      %v10108 = vunpack.c.l.b16 %v10092
      %v10109 = vunpack.c.l.b16 %v10093
      %v10110 = vunpack.c.l.b16 %v10094
      %v10111 = vunpack.c.l.b16 %v10095
      %v10112 = vunpack.c.l.b16 %v10096
      %v10113 = vunpack.c.l.b16 %v10097
      %v10114 = vunpack.c.l.b16 %v10098
      %v10115 = vpack.c.b16 %v10108, %v10107
      %v10116 = vpack.c.b16 %v10110, %v10109
      %v10117 = vpack.c.b16 %v10112, %v10111
      %v10118 = vpack.c.b16 %v10114, %v10113
      %v10124 = vsel %vm9091, %v10059, 0
      %v10127 = vsel %vm9091, %v10060, 0
      %v10130 = vsel %vm9091, %v10061, 0
      %v10133 = vsel %vm9091, %v10062, 0
      %v10136 = vsel %vm9091, %v10063, 0
      %v10139 = vsel %vm9091, %v10064, 0
      %v10142 = vsel %vm9091, %v10065, 0
      %v10145 = vsel %vm9091, %v10066, 0
      %v10148 = vsel %vm9091, %v10067, 0
      %v10151 = vsel %vm9091, %v10068, 0
      %v10154 = vsel %vm9091, %v10069, 0
      %v10157 = vsel %vm9091, %v10070, 0
      %v10160 = vsel %vm9091, %v10071, 0
      %v10163 = vsel %vm9091, %v10072, 0
      %v10166 = vsel %vm9091, %v10073, 0
      %v10169 = vsel %vm9091, %v10074, 0
      %v10172 = vsel %vm9091, %v10075, 0
      %v10175 = vsel %vm9091, %v10076, 0
      %v10178 = vsel %vm9091, %v10077, 0
      %v10181 = vsel %vm9091, %v10078, 0
      %v10184 = vsel %vm9091, %v10079, 0
      %v10187 = vsel %vm9091, %v10080, 0
      %v10190 = vsel %vm9091, %v10081, 0
      %v10193 = vsel %vm9091, %v10082, 0
      %v10196 = vsel %vm9091, %v10083, 0
      %v10199 = vsel %vm9091, %v10084, 0
      %v10202 = vsel %vm9091, %v10085, 0
      %v10205 = vsel %vm9091, %v10086, 0
      %v10208 = vsel %vm9091, %v10087, 0
      %v10211 = vsel %vm9091, %v10088, 0
      %v10214 = vsel %vm9091, %v10089, 0
      %v10217 = vsel %vm9091, %v10090, 0
      %10219 = vmatprep.subr.bf16.mxu0 0
      %10220 = vmatpush1.bf16.msra.mxu0 %v10115
      %10221 = vmatprep.subr.bf16.mxu0 0
      %10222 = vmatpush1.bf16.msra.mxu0 %v10116
      %10223 = vmatprep.subr.bf16.mxu0 0
      %10224 = vmatpush1.bf16.msra.mxu0 %v10117
      %10225 = vmatprep.subr.bf16.mxu0 0
      %10226 = vmatpush1.bf16.msra.mxu0 %v10118
      %10227 = vmatprep.subr.bf16.mxu0 0
      %10228 = vmatpush1.bf16.msra.mxu0 0
      %10229 = vmatprep.subr.bf16.mxu0 0
      %10230 = vmatpush1.bf16.msra.mxu0 0
      %10231 = vmatprep.subr.bf16.mxu0 0
      %10232 = vmatpush1.bf16.msra.mxu0 0
      %10233 = vmatprep.subr.bf16.mxu0 0
      %10234 = vmatpush1.bf16.msra.mxu0 0
      %10235 = vmatprep.subr.bf16.mxu0 0
      %10236 = vmatpush1.bf16.msra.mxu0 0
      %10237 = vmatprep.subr.bf16.mxu0 0
      %10238 = vmatpush1.bf16.msra.mxu0 0
      %10239 = vmatprep.subr.bf16.mxu0 0
      %10240 = vmatpush1.bf16.msra.mxu0 0
      %10241 = vmatprep.subr.bf16.mxu0 0
      %10242 = vmatpush1.bf16.msra.mxu0 0
      %10243 = vmatprep.subr.bf16.mxu0 0
      %10244 = vmatpush1.bf16.msra.mxu0 0
      %10245 = vmatprep.subr.bf16.mxu0 0
      %10246 = vmatpush1.bf16.msra.mxu0 0
      %10247 = vmatprep.subr.bf16.mxu0 0
      %10248 = vmatpush1.bf16.msra.mxu0 0
      %10249 = vmatprep.subr.bf16.mxu0 0
      %10250 = vmatpush1.bf16.msra.mxu0 0
      %10251 = vmatprep.mubr.bf16.mxu0 0
      %10252 = vmatmul.mubr.bf16.gmra.mrb[0].mxu0 %v10124
      %v10253 = vpop.f32.mrb[0].mxu0
      %v10254 = vadd.f32 0.0, %v10253
      %v10255 = vpop.f32.mrb[0].mxu0
      %v10256 = vpop.f32.mrb[0].mxu0
      %v10257 = vadd.f32 0.0, %v10256
      %v10258 = vpop.f32.mrb[0].mxu0
      %10259 = vmatprep.mubr.bf16.mxu0 0
      %10260 = vmatmul.mubr.bf16.gmra.mrb[0].mxu0 %v10127
      %v10261 = vpop.f32.mrb[0].mxu0
      %v10262 = vadd.f32 0.0, %v10261
      %v10263 = vpop.f32.mrb[0].mxu0
      %v10264 = vpop.f32.mrb[0].mxu0
      %v10265 = vadd.f32 0.0, %v10264
      %v10266 = vpop.f32.mrb[0].mxu0
      %10267 = vmatprep.mubr.bf16.mxu0 0
      %10268 = vmatmul.mubr.bf16.gmra.mrb[0].mxu0 %v10130
      %v10269 = vpop.f32.mrb[0].mxu0
      %v10270 = vadd.f32 0.0, %v10269
      %v10271 = vpop.f32.mrb[0].mxu0
      %v10272 = vpop.f32.mrb[0].mxu0
      %v10273 = vadd.f32 0.0, %v10272
      %v10274 = vpop.f32.mrb[0].mxu0
      %10275 = vmatprep.mubr.bf16.mxu0 0
      %10276 = vmatmul.mubr.bf16.gmra.mrb[0].mxu0 %v10133
      %v10277 = vpop.f32.mrb[0].mxu0
      %v10278 = vadd.f32 0.0, %v10277
      %v10279 = vpop.f32.mrb[0].mxu0
      %v10280 = vpop.f32.mrb[0].mxu0
      %v10281 = vadd.f32 0.0, %v10280
      %v10282 = vpop.f32.mrb[0].mxu0
      %10283 = vmatprep.mubr.bf16.mxu0 0
      %10284 = vmatmul.mubr.bf16.gmra.mrb[0].mxu0 %v10136
      %v10285 = vpop.f32.mrb[0].mxu0
      %v10286 = vadd.f32 0.0, %v10285
      %v10287 = vpop.f32.mrb[0].mxu0
      %v10288 = vpop.f32.mrb[0].mxu0
      %v10289 = vadd.f32 0.0, %v10288
      %v10290 = vpop.f32.mrb[0].mxu0
      %10291 = vmatprep.mubr.bf16.mxu0 0
      %10292 = vmatmul.mubr.bf16.gmra.mrb[0].mxu0 %v10139
      %v10293 = vpop.f32.mrb[0].mxu0
      %v10294 = vadd.f32 0.0, %v10293
      %v10295 = vpop.f32.mrb[0].mxu0
      %v10296 = vpop.f32.mrb[0].mxu0
      %v10297 = vadd.f32 0.0, %v10296
      %v10298 = vpop.f32.mrb[0].mxu0
      %10299 = vmatprep.mubr.bf16.mxu0 0
      %10300 = vmatmul.mubr.bf16.gmra.mrb[0].mxu0 %v10142
      %v10301 = vpop.f32.mrb[0].mxu0
      %v10302 = vadd.f32 0.0, %v10301
      %v10303 = vpop.f32.mrb[0].mxu0
      %v10304 = vpop.f32.mrb[0].mxu0
      %v10305 = vadd.f32 0.0, %v10304
      %v10306 = vpop.f32.mrb[0].mxu0
      %10307 = vmatprep.mubr.bf16.mxu0 0
      %10308 = vmatmul.mubr.bf16.gmra.mrb[0].mxu0 %v10145
      %v10309 = vpop.f32.mrb[0].mxu0
      %v10310 = vadd.f32 0.0, %v10309
      %v10311 = vpop.f32.mrb[0].mxu0
      %v10312 = vpop.f32.mrb[0].mxu0
      %v10313 = vadd.f32 0.0, %v10312
      %v10314 = vpop.f32.mrb[0].mxu0
      %10315 = vmatprep.mubr.bf16.mxu0 0
      %10316 = vmatmul.mubr.bf16.gmra.mrb[0].mxu0 %v10148
      %v10317 = vpop.f32.mrb[0].mxu0
      %v10318 = vadd.f32 0.0, %v10317
      %v10319 = vpop.f32.mrb[0].mxu0
      %v10320 = vpop.f32.mrb[0].mxu0
      %v10321 = vadd.f32 0.0, %v10320
      %v10322 = vpop.f32.mrb[0].mxu0
      %10323 = vmatprep.mubr.bf16.mxu0 0
      %10324 = vmatmul.mubr.bf16.gmra.mrb[0].mxu0 %v10151
      %v10325 = vpop.f32.mrb[0].mxu0
      %v10326 = vadd.f32 0.0, %v10325
      %v10327 = vpop.f32.mrb[0].mxu0
      %v10328 = vpop.f32.mrb[0].mxu0
      %v10329 = vadd.f32 0.0, %v10328
      %v10330 = vpop.f32.mrb[0].mxu0
      %10331 = vmatprep.mubr.bf16.mxu0 0
      %10332 = vmatmul.mubr.bf16.gmra.mrb[0].mxu0 %v10154
      %v10333 = vpop.f32.mrb[0].mxu0
      %v10334 = vadd.f32 0.0, %v10333
      %v10335 = vpop.f32.mrb[0].mxu0
      %v10336 = vpop.f32.mrb[0].mxu0
      %v10337 = vadd.f32 0.0, %v10336
      %v10338 = vpop.f32.mrb[0].mxu0
      %10339 = vmatprep.mubr.bf16.mxu0 0
      %10340 = vmatmul.mubr.bf16.gmra.mrb[0].mxu0 %v10157
      %v10341 = vpop.f32.mrb[0].mxu0
      %v10342 = vadd.f32 0.0, %v10341
      %v10343 = vpop.f32.mrb[0].mxu0
      %v10344 = vpop.f32.mrb[0].mxu0
      %v10345 = vadd.f32 0.0, %v10344
      %v10346 = vpop.f32.mrb[0].mxu0
      %10347 = vmatprep.mubr.bf16.mxu0 0
      %10348 = vmatmul.mubr.bf16.gmra.mrb[0].mxu0 %v10160
      %v10349 = vpop.f32.mrb[0].mxu0
      %v10350 = vadd.f32 0.0, %v10349
      %v10351 = vpop.f32.mrb[0].mxu0
      %v10352 = vpop.f32.mrb[0].mxu0
      %v10353 = vadd.f32 0.0, %v10352
      %v10354 = vpop.f32.mrb[0].mxu0
      %10355 = vmatprep.mubr.bf16.mxu0 0
      %10356 = vmatmul.mubr.bf16.gmra.mrb[0].mxu0 %v10163
      %v10357 = vpop.f32.mrb[0].mxu0
      %v10358 = vadd.f32 0.0, %v10357
      %v10359 = vpop.f32.mrb[0].mxu0
      %v10360 = vpop.f32.mrb[0].mxu0
      %v10361 = vadd.f32 0.0, %v10360
      %v10362 = vpop.f32.mrb[0].mxu0
      %10363 = vmatprep.mubr.bf16.mxu0 0
      %10364 = vmatmul.mubr.bf16.gmra.mrb[0].mxu0 %v10166
      %v10365 = vpop.f32.mrb[0].mxu0
      %v10366 = vadd.f32 0.0, %v10365
      %v10367 = vpop.f32.mrb[0].mxu0
      %v10368 = vpop.f32.mrb[0].mxu0
      %v10369 = vadd.f32 0.0, %v10368
      %v10370 = vpop.f32.mrb[0].mxu0
      %10371 = vmatprep.mubr.bf16.mxu0 0
      %10372 = vmatmul.mubr.bf16.gmra.mrb[0].mxu0 %v10169
      %v10373 = vpop.f32.mrb[0].mxu0
      %v10374 = vadd.f32 0.0, %v10373
      %v10375 = vpop.f32.mrb[0].mxu0
      %v10376 = vpop.f32.mrb[0].mxu0
      %v10377 = vadd.f32 0.0, %v10376
      %v10378 = vpop.f32.mrb[0].mxu0
      %10379 = vmatprep.mubr.bf16.mxu0 0
      %10380 = vmatmul.mubr.bf16.gmra.mrb[0].mxu0 %v10172
      %v10381 = vpop.f32.mrb[0].mxu0
      %v10382 = vadd.f32 0.0, %v10381
      %v10383 = vpop.f32.mrb[0].mxu0
      %v10384 = vpop.f32.mrb[0].mxu0
      %v10385 = vadd.f32 0.0, %v10384
      %v10386 = vpop.f32.mrb[0].mxu0
      %10387 = vmatprep.mubr.bf16.mxu0 0
      %10388 = vmatmul.mubr.bf16.gmra.mrb[0].mxu0 %v10175
      %v10389 = vpop.f32.mrb[0].mxu0
      %v10390 = vadd.f32 0.0, %v10389
      %v10391 = vpop.f32.mrb[0].mxu0
      %v10392 = vpop.f32.mrb[0].mxu0
      %v10393 = vadd.f32 0.0, %v10392
      %v10394 = vpop.f32.mrb[0].mxu0
      %10395 = vmatprep.mubr.bf16.mxu0 0
      %10396 = vmatmul.mubr.bf16.gmra.mrb[0].mxu0 %v10178
      %v10397 = vpop.f32.mrb[0].mxu0
      %v10398 = vadd.f32 0.0, %v10397
      %v10399 = vpop.f32.mrb[0].mxu0
      %v10400 = vpop.f32.mrb[0].mxu0
      %v10401 = vadd.f32 0.0, %v10400
      %v10402 = vpop.f32.mrb[0].mxu0
      %10403 = vmatprep.mubr.bf16.mxu0 0
      %10404 = vmatmul.mubr.bf16.gmra.mrb[0].mxu0 %v10181
      %v10405 = vpop.f32.mrb[0].mxu0
      %v10406 = vadd.f32 0.0, %v10405
      %v10407 = vpop.f32.mrb[0].mxu0
      %v10408 = vpop.f32.mrb[0].mxu0
      %v10409 = vadd.f32 0.0, %v10408
      %v10410 = vpop.f32.mrb[0].mxu0
      %10411 = vmatprep.mubr.bf16.mxu0 0
      %10412 = vmatmul.mubr.bf16.gmra.mrb[0].mxu0 %v10184
      %v10413 = vpop.f32.mrb[0].mxu0
      %v10414 = vadd.f32 0.0, %v10413
      %v10415 = vpop.f32.mrb[0].mxu0
      %v10416 = vpop.f32.mrb[0].mxu0
      %v10417 = vadd.f32 0.0, %v10416
      %v10418 = vpop.f32.mrb[0].mxu0
      %10419 = vmatprep.mubr.bf16.mxu0 0
      %10420 = vmatmul.mubr.bf16.gmra.mrb[0].mxu0 %v10187
      %v10421 = vpop.f32.mrb[0].mxu0
      %v10422 = vadd.f32 0.0, %v10421
      %v10423 = vpop.f32.mrb[0].mxu0
      %v10424 = vpop.f32.mrb[0].mxu0
      %v10425 = vadd.f32 0.0, %v10424
      %v10426 = vpop.f32.mrb[0].mxu0
      %10427 = vmatprep.mubr.bf16.mxu0 0
      %10428 = vmatmul.mubr.bf16.gmra.mrb[0].mxu0 %v10190
      %v10429 = vpop.f32.mrb[0].mxu0
      %v10430 = vadd.f32 0.0, %v10429
      %v10431 = vpop.f32.mrb[0].mxu0
      %v10432 = vpop.f32.mrb[0].mxu0
      %v10433 = vadd.f32 0.0, %v10432
      %v10434 = vpop.f32.mrb[0].mxu0
      %10435 = vmatprep.mubr.bf16.mxu0 0
      %10436 = vmatmul.mubr.bf16.gmra.mrb[0].mxu0 %v10193
      %v10437 = vpop.f32.mrb[0].mxu0
      %v10438 = vadd.f32 0.0, %v10437
      %v10439 = vpop.f32.mrb[0].mxu0
      %v10440 = vpop.f32.mrb[0].mxu0
      %v10441 = vadd.f32 0.0, %v10440
      %v10442 = vpop.f32.mrb[0].mxu0
      %10443 = vmatprep.mubr.bf16.mxu0 0
      %10444 = vmatmul.mubr.bf16.gmra.mrb[0].mxu0 %v10196
      %v10445 = vpop.f32.mrb[0].mxu0
      %v10446 = vadd.f32 0.0, %v10445
      %v10447 = vpop.f32.mrb[0].mxu0
      %v10448 = vpop.f32.mrb[0].mxu0
      %v10449 = vadd.f32 0.0, %v10448
      %v10450 = vpop.f32.mrb[0].mxu0
      %10451 = vmatprep.mubr.bf16.mxu0 0
      %10452 = vmatmul.mubr.bf16.gmra.mrb[0].mxu0 %v10199
      %v10453 = vpop.f32.mrb[0].mxu0
      %v10454 = vadd.f32 0.0, %v10453
      %v10455 = vpop.f32.mrb[0].mxu0
      %v10456 = vpop.f32.mrb[0].mxu0
      %v10457 = vadd.f32 0.0, %v10456
      %v10458 = vpop.f32.mrb[0].mxu0
      %10459 = vmatprep.mubr.bf16.mxu0 0
      %10460 = vmatmul.mubr.bf16.gmra.mrb[0].mxu0 %v10202
      %v10461 = vpop.f32.mrb[0].mxu0
      %v10462 = vadd.f32 0.0, %v10461
      %v10463 = vpop.f32.mrb[0].mxu0
      %v10464 = vpop.f32.mrb[0].mxu0
      %v10465 = vadd.f32 0.0, %v10464
      %v10466 = vpop.f32.mrb[0].mxu0
      %10467 = vmatprep.mubr.bf16.mxu0 0
      %10468 = vmatmul.mubr.bf16.gmra.mrb[0].mxu0 %v10205
      %v10469 = vpop.f32.mrb[0].mxu0
      %v10470 = vadd.f32 0.0, %v10469
      %v10471 = vpop.f32.mrb[0].mxu0
      %v10472 = vpop.f32.mrb[0].mxu0
      %v10473 = vadd.f32 0.0, %v10472
      %v10474 = vpop.f32.mrb[0].mxu0
      %10475 = vmatprep.mubr.bf16.mxu0 0
      %10476 = vmatmul.mubr.bf16.gmra.mrb[0].mxu0 %v10208
      %v10477 = vpop.f32.mrb[0].mxu0
      %v10478 = vadd.f32 0.0, %v10477
      %v10479 = vpop.f32.mrb[0].mxu0
      %v10480 = vpop.f32.mrb[0].mxu0
      %v10481 = vadd.f32 0.0, %v10480
      %v10482 = vpop.f32.mrb[0].mxu0
      %10483 = vmatprep.mubr.bf16.mxu0 0
      %10484 = vmatmul.mubr.bf16.gmra.mrb[0].mxu0 %v10211
      %v10485 = vpop.f32.mrb[0].mxu0
      %v10486 = vadd.f32 0.0, %v10485
      %v10487 = vpop.f32.mrb[0].mxu0
      %v10488 = vpop.f32.mrb[0].mxu0
      %v10489 = vadd.f32 0.0, %v10488
      %v10490 = vpop.f32.mrb[0].mxu0
      %10491 = vmatprep.mubr.bf16.mxu0 0
      %10492 = vmatmul.mubr.bf16.gmra.mrb[0].mxu0 %v10214
      %v10493 = vpop.f32.mrb[0].mxu0
      %v10494 = vadd.f32 0.0, %v10493
      %v10495 = vpop.f32.mrb[0].mxu0
      %v10496 = vpop.f32.mrb[0].mxu0
      %v10497 = vadd.f32 0.0, %v10496
      %v10498 = vpop.f32.mrb[0].mxu0
      %10499 = vmatprep.mubr.bf16.mxu0 0
      %10500 = vmatmul.mubr.bf16.gmra.mrb[0].mxu0 %v10217
      %v10501 = vpop.f32.mrb[0].mxu0
      %v10502 = vadd.f32 0.0, %v10501
      %v10503 = vpop.f32.mrb[0].mxu0
      %v10504 = vpop.f32.mrb[0].mxu0
      %v10505 = vadd.f32 0.0, %v10504
      %v10506 = vpop.f32.mrb[0].mxu0
      %10507 = vdwg.mxu0
      %v10508 = vadd.f32 %v8440, %v10254
      %v10509 = vadd.f32 %v8441, %v10257
      %v10510 = vadd.f32 %v8442, %v10262
      %v10511 = vadd.f32 %v8443, %v10265
      %v10512 = vadd.f32 %v8444, %v10270
      %v10513 = vadd.f32 %v8445, %v10273
      %v10514 = vadd.f32 %v8446, %v10278
      %v10515 = vadd.f32 %v8447, %v10281
      %v10516 = vadd.f32 %v8448, %v10286
      %v10517 = vadd.f32 %v8449, %v10289
      %v10518 = vadd.f32 %v8450, %v10294
      %v10519 = vadd.f32 %v8451, %v10297
      %v10520 = vadd.f32 %v8452, %v10302
      %v10521 = vadd.f32 %v8453, %v10305
      %v10522 = vadd.f32 %v8454, %v10310
      %v10523 = vadd.f32 %v8455, %v10313
      %v10524 = vadd.f32 %v8456, %v10318
      %v10525 = vadd.f32 %v8457, %v10321
      %v10526 = vadd.f32 %v8458, %v10326
      %v10527 = vadd.f32 %v8459, %v10329
      %v10528 = vadd.f32 %v8460, %v10334
      %v10529 = vadd.f32 %v8461, %v10337
      %v10530 = vadd.f32 %v8462, %v10342
      %v10531 = vadd.f32 %v8463, %v10345
      %v10532 = vadd.f32 %v8464, %v10350
      %v10533 = vadd.f32 %v8465, %v10353
      %v10534 = vadd.f32 %v8466, %v10358
      %v10535 = vadd.f32 %v8467, %v10361
      %v10536 = vadd.f32 %v8468, %v10366
      %v10537 = vadd.f32 %v8469, %v10369
      %v10538 = vadd.f32 %v8470, %v10374
      %v10539 = vadd.f32 %v8471, %v10377
      %v10540 = vadd.f32 %v8472, %v10382
      %v10541 = vadd.f32 %v8473, %v10385
      %v10542 = vadd.f32 %v8474, %v10390
      %v10543 = vadd.f32 %v8475, %v10393
      %v10544 = vadd.f32 %v8476, %v10398
      %v10545 = vadd.f32 %v8477, %v10401
      %v10546 = vadd.f32 %v8478, %v10406
      %v10547 = vadd.f32 %v8479, %v10409
      %v10548 = vadd.f32 %v8480, %v10414
      %v10549 = vadd.f32 %v8481, %v10417
      %v10550 = vadd.f32 %v8482, %v10422
      %v10551 = vadd.f32 %v8483, %v10425
      %v10552 = vadd.f32 %v8484, %v10430
      %v10553 = vadd.f32 %v8485, %v10433
      %v10554 = vadd.f32 %v8486, %v10438
      %v10555 = vadd.f32 %v8487, %v10441
      %v10556 = vadd.f32 %v8488, %v10446
      %v10557 = vadd.f32 %v8489, %v10449
      %v10558 = vadd.f32 %v8490, %v10454
      %v10559 = vadd.f32 %v8491, %v10457
      %v10560 = vadd.f32 %v8492, %v10462
      %v10561 = vadd.f32 %v8493, %v10465
      %v10562 = vadd.f32 %v8494, %v10470
      %v10563 = vadd.f32 %v8495, %v10473
      %v10564 = vadd.f32 %v8496, %v10478
      %v10565 = vadd.f32 %v8497, %v10481
      %v10566 = vadd.f32 %v8498, %v10486
      %v10567 = vadd.f32 %v8499, %v10489
      %v10568 = vadd.f32 %v8500, %v10494
      %v10569 = vadd.f32 %v8501, %v10497
      %v10570 = vadd.f32 %v8502, %v10502
      %v10571 = vadd.f32 %v8503, %v10505
      %v10572 = vmax.f32 %v10508, 0.0
      %v10573 = vmax.f32 %v10509, 0.0
      %v10574 = vmax.f32 %v10510, 0.0
      %v10575 = vmax.f32 %v10511, 0.0
      %v10576 = vmax.f32 %v10512, 0.0
      %v10577 = vmax.f32 %v10513, 0.0
      %v10578 = vmax.f32 %v10514, 0.0
      %v10579 = vmax.f32 %v10515, 0.0
      %v10580 = vmax.f32 %v10516, 0.0
      %v10581 = vmax.f32 %v10517, 0.0
      %v10582 = vmax.f32 %v10518, 0.0
      %v10583 = vmax.f32 %v10519, 0.0
      %v10584 = vmax.f32 %v10520, 0.0
      %v10585 = vmax.f32 %v10521, 0.0
      %v10586 = vmax.f32 %v10522, 0.0
      %v10587 = vmax.f32 %v10523, 0.0
      %v10588 = vmax.f32 %v10524, 0.0
      %v10589 = vmax.f32 %v10525, 0.0
      %v10590 = vmax.f32 %v10526, 0.0
      %v10591 = vmax.f32 %v10527, 0.0
      %v10592 = vmax.f32 %v10528, 0.0
      %v10593 = vmax.f32 %v10529, 0.0
      %v10594 = vmax.f32 %v10530, 0.0
      %v10595 = vmax.f32 %v10531, 0.0
      %v10596 = vmax.f32 %v10532, 0.0
      %v10597 = vmax.f32 %v10533, 0.0
      %v10598 = vmax.f32 %v10534, 0.0
      %v10599 = vmax.f32 %v10535, 0.0
      %v10600 = vmax.f32 %v10536, 0.0
      %v10601 = vmax.f32 %v10537, 0.0
      %v10602 = vmax.f32 %v10538, 0.0
      %v10603 = vmax.f32 %v10539, 0.0
      %v10604 = vmax.f32 %v10540, 0.0
      %v10605 = vmax.f32 %v10541, 0.0
      %v10606 = vmax.f32 %v10542, 0.0
      %v10607 = vmax.f32 %v10543, 0.0
      %v10608 = vmax.f32 %v10544, 0.0
      %v10609 = vmax.f32 %v10545, 0.0
      %v10610 = vmax.f32 %v10546, 0.0
      %v10611 = vmax.f32 %v10547, 0.0
      %v10612 = vmax.f32 %v10548, 0.0
      %v10613 = vmax.f32 %v10549, 0.0
      %v10614 = vmax.f32 %v10550, 0.0
      %v10615 = vmax.f32 %v10551, 0.0
      %v10616 = vmax.f32 %v10552, 0.0
      %v10617 = vmax.f32 %v10553, 0.0
      %v10618 = vmax.f32 %v10554, 0.0
      %v10619 = vmax.f32 %v10555, 0.0
      %v10620 = vmax.f32 %v10556, 0.0
      %v10621 = vmax.f32 %v10557, 0.0
      %v10622 = vmax.f32 %v10558, 0.0
      %v10623 = vmax.f32 %v10559, 0.0
      %v10624 = vmax.f32 %v10560, 0.0
      %v10625 = vmax.f32 %v10561, 0.0
      %v10626 = vmax.f32 %v10562, 0.0
      %v10627 = vmax.f32 %v10563, 0.0
      %v10628 = vmax.f32 %v10564, 0.0
      %v10629 = vmax.f32 %v10565, 0.0
      %v10630 = vmax.f32 %v10566, 0.0
      %v10631 = vmax.f32 %v10567, 0.0
      %v10632 = vmax.f32 %v10568, 0.0
      %v10633 = vmax.f32 %v10569, 0.0
      %v10634 = vmax.f32 %v10570, 0.0
      %v10635 = vmax.f32 %v10571, 0.0
      %v10636 = vpack.c.bf16 %v10573, %v10572
      %v10637 = vpack.c.bf16 %v10575, %v10574
      %v10638 = vpack.c.bf16 %v10577, %v10576
      %v10639 = vpack.c.bf16 %v10579, %v10578
      %v10640 = vpack.c.bf16 %v10581, %v10580
      %v10641 = vpack.c.bf16 %v10583, %v10582
      %v10642 = vpack.c.bf16 %v10585, %v10584
      %v10643 = vpack.c.bf16 %v10587, %v10586
      %v10644 = vpack.c.bf16 %v10589, %v10588
      %v10645 = vpack.c.bf16 %v10591, %v10590
      %v10646 = vpack.c.bf16 %v10593, %v10592
      %v10647 = vpack.c.bf16 %v10595, %v10594
      %v10648 = vpack.c.bf16 %v10597, %v10596
      %v10649 = vpack.c.bf16 %v10599, %v10598
      %v10650 = vpack.c.bf16 %v10601, %v10600
      %v10651 = vpack.c.bf16 %v10603, %v10602
      %v10652 = vpack.c.bf16 %v10605, %v10604
      %v10653 = vpack.c.bf16 %v10607, %v10606
      %v10654 = vpack.c.bf16 %v10609, %v10608
      %v10655 = vpack.c.bf16 %v10611, %v10610
      %v10656 = vpack.c.bf16 %v10613, %v10612
      %v10657 = vpack.c.bf16 %v10615, %v10614
      %v10658 = vpack.c.bf16 %v10617, %v10616
      %v10659 = vpack.c.bf16 %v10619, %v10618
      %v10660 = vpack.c.bf16 %v10621, %v10620
      %v10661 = vpack.c.bf16 %v10623, %v10622
      %v10662 = vpack.c.bf16 %v10625, %v10624
      %v10663 = vpack.c.bf16 %v10627, %v10626
      %v10664 = vpack.c.bf16 %v10629, %v10628
      %v10665 = vpack.c.bf16 %v10631, %v10630
      %v10666 = vpack.c.bf16 %v10633, %v10632
      %v10667 = vpack.c.bf16 %v10635, %v10634
      %v10668 = vld [vmem:[%s1 + $0xb8] sm:$0xf]
      %v10669 = vld [vmem:[%s1 + $0xbc] sm:$0xf]
      %v10670 = vld [vmem:[%s1 + $0xc0] sm:$0xf]
      %v10671 = vld [vmem:[%s1 + $0xc4] sm:$0xf]
      %v10672 = vld [vmem:[%s1 + $0xc8] sm:$0xf]
      %v10673 = vld [vmem:[%s1 + $0xcc] sm:$0xf]
      %v10674 = vld [vmem:[%s1 + $0xd0] sm:$0xf]
      %v10675 = vld [vmem:[%s1 + $0xd4] sm:$0xf]
      %v10676 = vld [vmem:[%s1 + $0xd8] sm:$0xf]
      %v10677 = vld [vmem:[%s1 + $0xdc] sm:$0xf]
      %v10678 = vld [vmem:[%s1 + $0xe0] sm:$0xf]
      %v10679 = vld [vmem:[%s1 + $0xe4] sm:$0xf]
      %v10680 = vld [vmem:[%s1 + $0xe8] sm:$0xf]
      %v10681 = vld [vmem:[%s1 + $0xec] sm:$0xf]
      %v10682 = vld [vmem:[%s1 + $0xf0] sm:$0xf]
      %v10683 = vld [vmem:[%s1 + $0xf4] sm:$0xf]
      %v10684 = vld [vmem:[%s2 + $0x8] sm:$0x1]
      %v10685 = vlaneseq
      %v10686 = vshrl.u32 %v10685, 7
      %v10687 = vsub.s32 0, %v10686
      %v10688 = vrot.slane %v10684, %v10687
      %v10705 = vunpack.c.l.b16 %v10668
      %v10706 = vunpack.c.l.b16 %v10669
      %v10707 = vunpack.c.l.b16 %v10670
      %v10708 = vunpack.c.l.b16 %v10671
      %v10709 = vunpack.c.l.b16 %v10672
      %v10710 = vunpack.c.l.b16 %v10673
      %v10711 = vunpack.c.l.b16 %v10674
      %v10712 = vunpack.c.l.b16 %v10675
      %v10713 = vunpack.c.l.b16 %v10676
      %v10714 = vunpack.c.l.b16 %v10677
      %v10715 = vunpack.c.l.b16 %v10678
      %v10716 = vunpack.c.l.b16 %v10679
      %v10717 = vunpack.c.l.b16 %v10680
      %v10718 = vunpack.c.l.b16 %v10681
      %v10719 = vunpack.c.l.b16 %v10682
      %v10720 = vunpack.c.l.b16 %v10683
      %v10721 = vpack.c.b16 %v10706, %v10705
      %v10722 = vpack.c.b16 %v10708, %v10707
      %v10723 = vpack.c.b16 %v10710, %v10709
      %v10724 = vpack.c.b16 %v10712, %v10711
      %v10725 = vpack.c.b16 %v10714, %v10713
      %v10726 = vpack.c.b16 %v10716, %v10715
      %v10727 = vpack.c.b16 %v10718, %v10717
      %v10728 = vpack.c.b16 %v10720, %v10719
      %10737 = vmatprep.subr.bf16.mxu0 0
      %10738 = vmatpush1.bf16.msra.mxu0 %v10721
      %10739 = vmatprep.subr.bf16.mxu0 0
      %10740 = vmatpush1.bf16.msra.mxu0 %v10722
      %10741 = vmatprep.subr.bf16.mxu0 0
      %10742 = vmatpush1.bf16.msra.mxu0 %v10723
      %10743 = vmatprep.subr.bf16.mxu0 0
      %10744 = vmatpush1.bf16.msra.mxu0 %v10724
      %10745 = vmatprep.subr.bf16.mxu0 0
      %10746 = vmatpush1.bf16.msra.mxu0 %v10725
      %10747 = vmatprep.subr.bf16.mxu0 0
      %10748 = vmatpush1.bf16.msra.mxu0 %v10726
      %10749 = vmatprep.subr.bf16.mxu0 0
      %10750 = vmatpush1.bf16.msra.mxu0 %v10727
      %10751 = vmatprep.subr.bf16.mxu0 0
      %10752 = vmatpush1.bf16.msra.mxu0 %v10728
      %10753 = vmatprep.subr.bf16.mxu0 0
      %10754 = vmatpush1.bf16.msra.mxu0 0
      %10755 = vmatprep.subr.bf16.mxu0 0
      %10756 = vmatpush1.bf16.msra.mxu0 0
      %10757 = vmatprep.subr.bf16.mxu0 0
      %10758 = vmatpush1.bf16.msra.mxu0 0
      %10759 = vmatprep.subr.bf16.mxu0 0
      %10760 = vmatpush1.bf16.msra.mxu0 0
      %10761 = vmatprep.subr.bf16.mxu0 0
      %10762 = vmatpush1.bf16.msra.mxu0 0
      %10763 = vmatprep.subr.bf16.mxu0 0
      %10764 = vmatpush1.bf16.msra.mxu0 0
      %10765 = vmatprep.subr.bf16.mxu0 0
      %10766 = vmatpush1.bf16.msra.mxu0 0
      %10767 = vmatprep.subr.bf16.mxu0 0
      %10768 = vmatpush1.bf16.msra.mxu0 0
      %10769 = vmatprep.mubr.bf16.mxu0 0
      %10770 = vmatmul.mubr.bf16.gmra.mrb[0].mxu0 %v10636
      %v10771 = vpop.f32.mrb[0].mxu0
      %v10772 = vadd.f32 %v10688, %v10771
      %v10773 = vpop.f32.mrb[0].mxu0
      %v10774 = vpop.f32.mrb[0].mxu0
      %v10775 = vadd.f32 %v10688, %v10774
      %v10776 = vpop.f32.mrb[0].mxu0
      %10777 = vmatprep.mubr.bf16.mxu0 0
      %10778 = vmatmul.mubr.bf16.gmra.mrb[0].mxu0 %v10637
      %v10779 = vpop.f32.mrb[0].mxu0
      %v10780 = vadd.f32 %v10688, %v10779
      %v10781 = vpop.f32.mrb[0].mxu0
      %v10782 = vpop.f32.mrb[0].mxu0
      %v10783 = vadd.f32 %v10688, %v10782
      %v10784 = vpop.f32.mrb[0].mxu0
      %10785 = vmatprep.mubr.bf16.mxu0 0
      %10786 = vmatmul.mubr.bf16.gmra.mrb[0].mxu0 %v10638
      %v10787 = vpop.f32.mrb[0].mxu0
      %v10788 = vadd.f32 %v10688, %v10787
      %v10789 = vpop.f32.mrb[0].mxu0
      %v10790 = vpop.f32.mrb[0].mxu0
      %v10791 = vadd.f32 %v10688, %v10790
      %v10792 = vpop.f32.mrb[0].mxu0
      %10793 = vmatprep.mubr.bf16.mxu0 0
      %10794 = vmatmul.mubr.bf16.gmra.mrb[0].mxu0 %v10639
      %v10795 = vpop.f32.mrb[0].mxu0
      %v10796 = vadd.f32 %v10688, %v10795
      %v10797 = vpop.f32.mrb[0].mxu0
      %v10798 = vpop.f32.mrb[0].mxu0
      %v10799 = vadd.f32 %v10688, %v10798
      %v10800 = vpop.f32.mrb[0].mxu0
      %10801 = vmatprep.mubr.bf16.mxu0 0
      %10802 = vmatmul.mubr.bf16.gmra.mrb[0].mxu0 %v10640
      %v10803 = vpop.f32.mrb[0].mxu0
      %v10804 = vadd.f32 %v10688, %v10803
      %v10805 = vpop.f32.mrb[0].mxu0
      %v10806 = vpop.f32.mrb[0].mxu0
      %v10807 = vadd.f32 %v10688, %v10806
      %v10808 = vpop.f32.mrb[0].mxu0
      %10809 = vmatprep.mubr.bf16.mxu0 0
      %10810 = vmatmul.mubr.bf16.gmra.mrb[0].mxu0 %v10641
      %v10811 = vpop.f32.mrb[0].mxu0
      %v10812 = vadd.f32 %v10688, %v10811
      %v10813 = vpop.f32.mrb[0].mxu0
      %v10814 = vpop.f32.mrb[0].mxu0
      %v10815 = vadd.f32 %v10688, %v10814
      %v10816 = vpop.f32.mrb[0].mxu0
      %10817 = vmatprep.mubr.bf16.mxu0 0
      %10818 = vmatmul.mubr.bf16.gmra.mrb[0].mxu0 %v10642
      %v10819 = vpop.f32.mrb[0].mxu0
      %v10820 = vadd.f32 %v10688, %v10819
      %v10821 = vpop.f32.mrb[0].mxu0
      %v10822 = vpop.f32.mrb[0].mxu0
      %v10823 = vadd.f32 %v10688, %v10822
      %v10824 = vpop.f32.mrb[0].mxu0
      %10825 = vmatprep.mubr.bf16.mxu0 0
      %10826 = vmatmul.mubr.bf16.gmra.mrb[0].mxu0 %v10643
      %v10827 = vpop.f32.mrb[0].mxu0
      %v10828 = vadd.f32 %v10688, %v10827
      %v10829 = vpop.f32.mrb[0].mxu0
      %v10830 = vpop.f32.mrb[0].mxu0
      %v10831 = vadd.f32 %v10688, %v10830
      %v10832 = vpop.f32.mrb[0].mxu0
      %10833 = vmatprep.mubr.bf16.mxu0 0
      %10834 = vmatmul.mubr.bf16.gmra.mrb[0].mxu0 %v10644
      %v10835 = vpop.f32.mrb[0].mxu0
      %v10836 = vadd.f32 %v10688, %v10835
      %v10837 = vpop.f32.mrb[0].mxu0
      %v10838 = vpop.f32.mrb[0].mxu0
      %v10839 = vadd.f32 %v10688, %v10838
      %v10840 = vpop.f32.mrb[0].mxu0
      %10841 = vmatprep.mubr.bf16.mxu0 0
      %10842 = vmatmul.mubr.bf16.gmra.mrb[0].mxu0 %v10645
      %v10843 = vpop.f32.mrb[0].mxu0
      %v10844 = vadd.f32 %v10688, %v10843
      %v10845 = vpop.f32.mrb[0].mxu0
      %v10846 = vpop.f32.mrb[0].mxu0
      %v10847 = vadd.f32 %v10688, %v10846
      %v10848 = vpop.f32.mrb[0].mxu0
      %10849 = vmatprep.mubr.bf16.mxu0 0
      %10850 = vmatmul.mubr.bf16.gmra.mrb[0].mxu0 %v10646
      %v10851 = vpop.f32.mrb[0].mxu0
      %v10852 = vadd.f32 %v10688, %v10851
      %v10853 = vpop.f32.mrb[0].mxu0
      %v10854 = vpop.f32.mrb[0].mxu0
      %v10855 = vadd.f32 %v10688, %v10854
      %v10856 = vpop.f32.mrb[0].mxu0
      %10857 = vmatprep.mubr.bf16.mxu0 0
      %10858 = vmatmul.mubr.bf16.gmra.mrb[0].mxu0 %v10647
      %v10859 = vpop.f32.mrb[0].mxu0
      %v10860 = vadd.f32 %v10688, %v10859
      %v10861 = vpop.f32.mrb[0].mxu0
      %v10862 = vpop.f32.mrb[0].mxu0
      %v10863 = vadd.f32 %v10688, %v10862
      %v10864 = vpop.f32.mrb[0].mxu0
      %10865 = vmatprep.mubr.bf16.mxu0 0
      %10866 = vmatmul.mubr.bf16.gmra.mrb[0].mxu0 %v10648
      %v10867 = vpop.f32.mrb[0].mxu0
      %v10868 = vadd.f32 %v10688, %v10867
      %v10869 = vpop.f32.mrb[0].mxu0
      %v10870 = vpop.f32.mrb[0].mxu0
      %v10871 = vadd.f32 %v10688, %v10870
      %v10872 = vpop.f32.mrb[0].mxu0
      %10873 = vmatprep.mubr.bf16.mxu0 0
      %10874 = vmatmul.mubr.bf16.gmra.mrb[0].mxu0 %v10649
      %v10875 = vpop.f32.mrb[0].mxu0
      %v10876 = vadd.f32 %v10688, %v10875
      %v10877 = vpop.f32.mrb[0].mxu0
      %v10878 = vpop.f32.mrb[0].mxu0
      %v10879 = vadd.f32 %v10688, %v10878
      %v10880 = vpop.f32.mrb[0].mxu0
      %10881 = vmatprep.mubr.bf16.mxu0 0
      %10882 = vmatmul.mubr.bf16.gmra.mrb[0].mxu0 %v10650
      %v10883 = vpop.f32.mrb[0].mxu0
      %v10884 = vadd.f32 %v10688, %v10883
      %v10885 = vpop.f32.mrb[0].mxu0
      %v10886 = vpop.f32.mrb[0].mxu0
      %v10887 = vadd.f32 %v10688, %v10886
      %v10888 = vpop.f32.mrb[0].mxu0
      %10889 = vmatprep.mubr.bf16.mxu0 0
      %10890 = vmatmul.mubr.bf16.gmra.mrb[0].mxu0 %v10651
      %v10891 = vpop.f32.mrb[0].mxu0
      %v10892 = vadd.f32 %v10688, %v10891
      %v10893 = vpop.f32.mrb[0].mxu0
      %v10894 = vpop.f32.mrb[0].mxu0
      %v10895 = vadd.f32 %v10688, %v10894
      %v10896 = vpop.f32.mrb[0].mxu0
      %10897 = vmatprep.mubr.bf16.mxu0 0
      %10898 = vmatmul.mubr.bf16.gmra.mrb[0].mxu0 %v10652
      %v10899 = vpop.f32.mrb[0].mxu0
      %v10900 = vadd.f32 %v10688, %v10899
      %v10901 = vpop.f32.mrb[0].mxu0
      %v10902 = vpop.f32.mrb[0].mxu0
      %v10903 = vadd.f32 %v10688, %v10902
      %v10904 = vpop.f32.mrb[0].mxu0
      %10905 = vmatprep.mubr.bf16.mxu0 0
      %10906 = vmatmul.mubr.bf16.gmra.mrb[0].mxu0 %v10653
      %v10907 = vpop.f32.mrb[0].mxu0
      %v10908 = vadd.f32 %v10688, %v10907
      %v10909 = vpop.f32.mrb[0].mxu0
      %v10910 = vpop.f32.mrb[0].mxu0
      %v10911 = vadd.f32 %v10688, %v10910
      %v10912 = vpop.f32.mrb[0].mxu0
      %10913 = vmatprep.mubr.bf16.mxu0 0
      %10914 = vmatmul.mubr.bf16.gmra.mrb[0].mxu0 %v10654
      %v10915 = vpop.f32.mrb[0].mxu0
      %v10916 = vadd.f32 %v10688, %v10915
      %v10917 = vpop.f32.mrb[0].mxu0
      %v10918 = vpop.f32.mrb[0].mxu0
      %v10919 = vadd.f32 %v10688, %v10918
      %v10920 = vpop.f32.mrb[0].mxu0
      %10921 = vmatprep.mubr.bf16.mxu0 0
      %10922 = vmatmul.mubr.bf16.gmra.mrb[0].mxu0 %v10655
      %v10923 = vpop.f32.mrb[0].mxu0
      %v10924 = vadd.f32 %v10688, %v10923
      %v10925 = vpop.f32.mrb[0].mxu0
      %v10926 = vpop.f32.mrb[0].mxu0
      %v10927 = vadd.f32 %v10688, %v10926
      %v10928 = vpop.f32.mrb[0].mxu0
      %10929 = vmatprep.mubr.bf16.mxu0 0
      %10930 = vmatmul.mubr.bf16.gmra.mrb[0].mxu0 %v10656
      %v10931 = vpop.f32.mrb[0].mxu0
      %v10932 = vadd.f32 %v10688, %v10931
      %v10933 = vpop.f32.mrb[0].mxu0
      %v10934 = vpop.f32.mrb[0].mxu0
      %v10935 = vadd.f32 %v10688, %v10934
      %v10936 = vpop.f32.mrb[0].mxu0
      %10937 = vmatprep.mubr.bf16.mxu0 0
      %10938 = vmatmul.mubr.bf16.gmra.mrb[0].mxu0 %v10657
      %v10939 = vpop.f32.mrb[0].mxu0
      %v10940 = vadd.f32 %v10688, %v10939
      %v10941 = vpop.f32.mrb[0].mxu0
      %v10942 = vpop.f32.mrb[0].mxu0
      %v10943 = vadd.f32 %v10688, %v10942
      %v10944 = vpop.f32.mrb[0].mxu0
      %10945 = vmatprep.mubr.bf16.mxu0 0
      %10946 = vmatmul.mubr.bf16.gmra.mrb[0].mxu0 %v10658
      %v10947 = vpop.f32.mrb[0].mxu0
      %v10948 = vadd.f32 %v10688, %v10947
      %v10949 = vpop.f32.mrb[0].mxu0
      %v10950 = vpop.f32.mrb[0].mxu0
      %v10951 = vadd.f32 %v10688, %v10950
      %v10952 = vpop.f32.mrb[0].mxu0
      %10953 = vmatprep.mubr.bf16.mxu0 0
      %10954 = vmatmul.mubr.bf16.gmra.mrb[0].mxu0 %v10659
      %v10955 = vpop.f32.mrb[0].mxu0
      %v10956 = vadd.f32 %v10688, %v10955
      %v10957 = vpop.f32.mrb[0].mxu0
      %v10958 = vpop.f32.mrb[0].mxu0
      %v10959 = vadd.f32 %v10688, %v10958
      %v10960 = vpop.f32.mrb[0].mxu0
      %10961 = vmatprep.mubr.bf16.mxu0 0
      %10962 = vmatmul.mubr.bf16.gmra.mrb[0].mxu0 %v10660
      %v10963 = vpop.f32.mrb[0].mxu0
      %v10964 = vadd.f32 %v10688, %v10963
      %v10965 = vpop.f32.mrb[0].mxu0
      %v10966 = vpop.f32.mrb[0].mxu0
      %v10967 = vadd.f32 %v10688, %v10966
      %v10968 = vpop.f32.mrb[0].mxu0
      %10969 = vmatprep.mubr.bf16.mxu0 0
      %10970 = vmatmul.mubr.bf16.gmra.mrb[0].mxu0 %v10661
      %v10971 = vpop.f32.mrb[0].mxu0
      %v10972 = vadd.f32 %v10688, %v10971
      %v10973 = vpop.f32.mrb[0].mxu0
      %v10974 = vpop.f32.mrb[0].mxu0
      %v10975 = vadd.f32 %v10688, %v10974
      %v10976 = vpop.f32.mrb[0].mxu0
      %10977 = vmatprep.mubr.bf16.mxu0 0
      %10978 = vmatmul.mubr.bf16.gmra.mrb[0].mxu0 %v10662
      %v10979 = vpop.f32.mrb[0].mxu0
      %v10980 = vadd.f32 %v10688, %v10979
      %v10981 = vpop.f32.mrb[0].mxu0
      %v10982 = vpop.f32.mrb[0].mxu0
      %v10983 = vadd.f32 %v10688, %v10982
      %v10984 = vpop.f32.mrb[0].mxu0
      %10985 = vmatprep.mubr.bf16.mxu0 0
      %10986 = vmatmul.mubr.bf16.gmra.mrb[0].mxu0 %v10663
      %v10987 = vpop.f32.mrb[0].mxu0
      %v10988 = vadd.f32 %v10688, %v10987
      %v10989 = vpop.f32.mrb[0].mxu0
      %v10990 = vpop.f32.mrb[0].mxu0
      %v10991 = vadd.f32 %v10688, %v10990
      %v10992 = vpop.f32.mrb[0].mxu0
      %10993 = vmatprep.mubr.bf16.mxu0 0
      %10994 = vmatmul.mubr.bf16.gmra.mrb[0].mxu0 %v10664
      %v10995 = vpop.f32.mrb[0].mxu0
      %v10996 = vadd.f32 %v10688, %v10995
      %v10997 = vpop.f32.mrb[0].mxu0
      %v10998 = vpop.f32.mrb[0].mxu0
      %v10999 = vadd.f32 %v10688, %v10998
      %v11000 = vpop.f32.mrb[0].mxu0
      %11001 = vmatprep.mubr.bf16.mxu0 0
      %11002 = vmatmul.mubr.bf16.gmra.mrb[0].mxu0 %v10665
      %v11003 = vpop.f32.mrb[0].mxu0
      %v11004 = vadd.f32 %v10688, %v11003
      %v11005 = vpop.f32.mrb[0].mxu0
      %v11006 = vpop.f32.mrb[0].mxu0
      %v11007 = vadd.f32 %v10688, %v11006
      %v11008 = vpop.f32.mrb[0].mxu0
      %11009 = vmatprep.mubr.bf16.mxu0 0
      %11010 = vmatmul.mubr.bf16.gmra.mrb[0].mxu0 %v10666
      %v11011 = vpop.f32.mrb[0].mxu0
      %v11012 = vadd.f32 %v10688, %v11011
      %v11013 = vpop.f32.mrb[0].mxu0
      %v11014 = vpop.f32.mrb[0].mxu0
      %v11015 = vadd.f32 %v10688, %v11014
      %v11016 = vpop.f32.mrb[0].mxu0
      %11017 = vmatprep.mubr.bf16.mxu0 0
      %11018 = vmatmul.mubr.bf16.gmra.mrb[0].mxu0 %v10667
      %v11019 = vpop.f32.mrb[0].mxu0
      %v11020 = vadd.f32 %v10688, %v11019
      %v11021 = vpop.f32.mrb[0].mxu0
      %v11022 = vpop.f32.mrb[0].mxu0
      %v11023 = vadd.f32 %v10688, %v11022
      %v11024 = vpop.f32.mrb[0].mxu0
      %11025 = vdwg.mxu0
      %v11026 = vmax.f32 %v10772, 0.0
      %v11027 = vmax.f32 %v10775, 0.0
      %v11028 = vmax.f32 %v10780, 0.0
      %v11029 = vmax.f32 %v10783, 0.0
      %v11030 = vmax.f32 %v10788, 0.0
      %v11031 = vmax.f32 %v10791, 0.0
      %v11032 = vmax.f32 %v10796, 0.0
      %v11033 = vmax.f32 %v10799, 0.0
      %v11034 = vmax.f32 %v10804, 0.0
      %v11035 = vmax.f32 %v10807, 0.0
      %v11036 = vmax.f32 %v10812, 0.0
      %v11037 = vmax.f32 %v10815, 0.0
      %v11038 = vmax.f32 %v10820, 0.0
      %v11039 = vmax.f32 %v10823, 0.0
      %v11040 = vmax.f32 %v10828, 0.0
      %v11041 = vmax.f32 %v10831, 0.0
      %v11042 = vmax.f32 %v10836, 0.0
      %v11043 = vmax.f32 %v10839, 0.0
      %v11044 = vmax.f32 %v10844, 0.0
      %v11045 = vmax.f32 %v10847, 0.0
      %v11046 = vmax.f32 %v10852, 0.0
      %v11047 = vmax.f32 %v10855, 0.0
      %v11048 = vmax.f32 %v10860, 0.0
      %v11049 = vmax.f32 %v10863, 0.0
      %v11050 = vmax.f32 %v10868, 0.0
      %v11051 = vmax.f32 %v10871, 0.0
      %v11052 = vmax.f32 %v10876, 0.0
      %v11053 = vmax.f32 %v10879, 0.0
      %v11054 = vmax.f32 %v10884, 0.0
      %v11055 = vmax.f32 %v10887, 0.0
      %v11056 = vmax.f32 %v10892, 0.0
      %v11057 = vmax.f32 %v10895, 0.0
      %v11058 = vmax.f32 %v10900, 0.0
      %v11059 = vmax.f32 %v10903, 0.0
      %v11060 = vmax.f32 %v10908, 0.0
      %v11061 = vmax.f32 %v10911, 0.0
      %v11062 = vmax.f32 %v10916, 0.0
      %v11063 = vmax.f32 %v10919, 0.0
      %v11064 = vmax.f32 %v10924, 0.0
      %v11065 = vmax.f32 %v10927, 0.0
      %v11066 = vmax.f32 %v10932, 0.0
      %v11067 = vmax.f32 %v10935, 0.0
      %v11068 = vmax.f32 %v10940, 0.0
      %v11069 = vmax.f32 %v10943, 0.0
      %v11070 = vmax.f32 %v10948, 0.0
      %v11071 = vmax.f32 %v10951, 0.0
      %v11072 = vmax.f32 %v10956, 0.0
      %v11073 = vmax.f32 %v10959, 0.0
      %v11074 = vmax.f32 %v10964, 0.0
      %v11075 = vmax.f32 %v10967, 0.0
      %v11076 = vmax.f32 %v10972, 0.0
      %v11077 = vmax.f32 %v10975, 0.0
      %v11078 = vmax.f32 %v10980, 0.0
      %v11079 = vmax.f32 %v10983, 0.0
      %v11080 = vmax.f32 %v10988, 0.0
      %v11081 = vmax.f32 %v10991, 0.0
      %v11082 = vmax.f32 %v10996, 0.0
      %v11083 = vmax.f32 %v10999, 0.0
      %v11084 = vmax.f32 %v11004, 0.0
      %v11085 = vmax.f32 %v11007, 0.0
      %v11086 = vmax.f32 %v11012, 0.0
      %v11087 = vmax.f32 %v11015, 0.0
      %v11088 = vmax.f32 %v11020, 0.0
      %v11089 = vmax.f32 %v11023, 0.0
      %v11090 = vpack.c.bf16 %v11027, %v11026
      %v11091 = vpack.c.bf16 %v11029, %v11028
      %v11092 = vpack.c.bf16 %v11031, %v11030
      %v11093 = vpack.c.bf16 %v11033, %v11032
      %v11094 = vpack.c.bf16 %v11035, %v11034
      %v11095 = vpack.c.bf16 %v11037, %v11036
      %v11096 = vpack.c.bf16 %v11039, %v11038
      %v11097 = vpack.c.bf16 %v11041, %v11040
      %v11098 = vpack.c.bf16 %v11043, %v11042
      %v11099 = vpack.c.bf16 %v11045, %v11044
      %v11100 = vpack.c.bf16 %v11047, %v11046
      %v11101 = vpack.c.bf16 %v11049, %v11048
      %v11102 = vpack.c.bf16 %v11051, %v11050
      %v11103 = vpack.c.bf16 %v11053, %v11052
      %v11104 = vpack.c.bf16 %v11055, %v11054
      %v11105 = vpack.c.bf16 %v11057, %v11056
      %v11106 = vpack.c.bf16 %v11059, %v11058
      %v11107 = vpack.c.bf16 %v11061, %v11060
      %v11108 = vpack.c.bf16 %v11063, %v11062
      %v11109 = vpack.c.bf16 %v11065, %v11064
      %v11110 = vpack.c.bf16 %v11067, %v11066
      %v11111 = vpack.c.bf16 %v11069, %v11068
      %v11112 = vpack.c.bf16 %v11071, %v11070
      %v11113 = vpack.c.bf16 %v11073, %v11072
      %v11114 = vpack.c.bf16 %v11075, %v11074
      %v11115 = vpack.c.bf16 %v11077, %v11076
      %v11116 = vpack.c.bf16 %v11079, %v11078
      %v11117 = vpack.c.bf16 %v11081, %v11080
      %v11118 = vpack.c.bf16 %v11083, %v11082
      %v11119 = vpack.c.bf16 %v11085, %v11084
      %v11120 = vpack.c.bf16 %v11087, %v11086
      %v11121 = vpack.c.bf16 %v11089, %v11088
      %v11122 = vld [vmem:[%s1 + $0xf8] sm:$0xf]
      %v11123 = vld [vmem:[%s1 + $0xfc] sm:$0xf]
      %v11124 = vld [vmem:[%s1 + $0x100] sm:$0xf]
      %v11125 = vld [vmem:[%s1 + $0x104] sm:$0xf]
      %v11126 = vld [vmem:[%s1 + $0x108] sm:$0xf]
      %v11127 = vld [vmem:[%s1 + $0x10c] sm:$0xf]
      %v11128 = vld [vmem:[%s1 + $0x110] sm:$0xf]
      %v11129 = vld [vmem:[%s1 + $0x114] sm:$0xf]
      %v11130 = vld [vmem:[%s2 + $0x9] sm:$0x1]
      %v11131 = vlaneseq
      %v11132 = vshrl.u32 %v11131, 7
      %v11133 = vsub.s32 0, %v11132
      %v11134 = vrot.slane %v11130, %v11133
      %v11143 = vunpack.c.l.b16 %v11122
      %v11144 = vunpack.c.l.b16 %v11123
      %v11145 = vunpack.c.l.b16 %v11124
      %v11146 = vunpack.c.l.b16 %v11125
      %v11147 = vunpack.c.l.b16 %v11126
      %v11148 = vunpack.c.l.b16 %v11127
      %v11149 = vunpack.c.l.b16 %v11128
      %v11150 = vunpack.c.l.b16 %v11129
      %v11151 = vpack.c.b16 %v11144, %v11143
      %v11152 = vpack.c.b16 %v11146, %v11145
      %v11153 = vpack.c.b16 %v11148, %v11147
      %v11154 = vpack.c.b16 %v11150, %v11149
      %v11160 = vsel %vm9091, %v11090, 0
      %v11163 = vsel %vm9091, %v11091, 0
      %v11166 = vsel %vm9091, %v11092, 0
      %v11169 = vsel %vm9091, %v11093, 0
      %v11172 = vsel %vm9091, %v11094, 0
      %v11175 = vsel %vm9091, %v11095, 0
      %v11178 = vsel %vm9091, %v11096, 0
      %v11181 = vsel %vm9091, %v11097, 0
      %v11184 = vsel %vm9091, %v11098, 0
      %v11187 = vsel %vm9091, %v11099, 0
      %v11190 = vsel %vm9091, %v11100, 0
      %v11193 = vsel %vm9091, %v11101, 0
      %v11196 = vsel %vm9091, %v11102, 0
      %v11199 = vsel %vm9091, %v11103, 0
      %v11202 = vsel %vm9091, %v11104, 0
      %v11205 = vsel %vm9091, %v11105, 0
      %v11208 = vsel %vm9091, %v11106, 0
      %v11211 = vsel %vm9091, %v11107, 0
      %v11214 = vsel %vm9091, %v11108, 0
      %v11217 = vsel %vm9091, %v11109, 0
      %v11220 = vsel %vm9091, %v11110, 0
      %v11223 = vsel %vm9091, %v11111, 0
      %v11226 = vsel %vm9091, %v11112, 0
      %v11229 = vsel %vm9091, %v11113, 0
      %v11232 = vsel %vm9091, %v11114, 0
      %v11235 = vsel %vm9091, %v11115, 0
      %v11238 = vsel %vm9091, %v11116, 0
      %v11241 = vsel %vm9091, %v11117, 0
      %v11244 = vsel %vm9091, %v11118, 0
      %v11247 = vsel %vm9091, %v11119, 0
      %v11250 = vsel %vm9091, %v11120, 0
      %v11253 = vsel %vm9091, %v11121, 0
      %11255 = vmatprep.subr.bf16.mxu0 0
      %11256 = vmatpush1.bf16.msra.mxu0 %v11151
      %11257 = vmatprep.subr.bf16.mxu0 0
      %11258 = vmatpush1.bf16.msra.mxu0 %v11152
      %11259 = vmatprep.subr.bf16.mxu0 0
      %11260 = vmatpush1.bf16.msra.mxu0 %v11153
      %11261 = vmatprep.subr.bf16.mxu0 0
      %11262 = vmatpush1.bf16.msra.mxu0 %v11154
      %11263 = vmatprep.subr.bf16.mxu0 0
      %11264 = vmatpush1.bf16.msra.mxu0 0
      %11265 = vmatprep.subr.bf16.mxu0 0
      %11266 = vmatpush1.bf16.msra.mxu0 0
      %11267 = vmatprep.subr.bf16.mxu0 0
      %11268 = vmatpush1.bf16.msra.mxu0 0
      %11269 = vmatprep.subr.bf16.mxu0 0
      %11270 = vmatpush1.bf16.msra.mxu0 0
      %11271 = vmatprep.subr.bf16.mxu0 0
      %11272 = vmatpush1.bf16.msra.mxu0 0
      %11273 = vmatprep.subr.bf16.mxu0 0
      %11274 = vmatpush1.bf16.msra.mxu0 0
      %11275 = vmatprep.subr.bf16.mxu0 0
      %11276 = vmatpush1.bf16.msra.mxu0 0
      %11277 = vmatprep.subr.bf16.mxu0 0
      %11278 = vmatpush1.bf16.msra.mxu0 0
      %11279 = vmatprep.subr.bf16.mxu0 0
      %11280 = vmatpush1.bf16.msra.mxu0 0
      %11281 = vmatprep.subr.bf16.mxu0 0
      %11282 = vmatpush1.bf16.msra.mxu0 0
      %11283 = vmatprep.subr.bf16.mxu0 0
      %11284 = vmatpush1.bf16.msra.mxu0 0
      %11285 = vmatprep.subr.bf16.mxu0 0
      %11286 = vmatpush1.bf16.msra.mxu0 0
      %11287 = vmatprep.mubr.bf16.mxu0 0
      %11288 = vmatmul.mubr.bf16.gmra.mrb[0].mxu0 %v11160
      %v11289 = vpop.f32.mrb[0].mxu0
      %v11290 = vadd.f32 %v11134, %v11289
      %v11291 = vpop.f32.mrb[0].mxu0
      %v11292 = vpop.f32.mrb[0].mxu0
      %v11293 = vadd.f32 %v11134, %v11292
      %v11294 = vpop.f32.mrb[0].mxu0
      %11295 = vmatprep.mubr.bf16.mxu0 0
      %11296 = vmatmul.mubr.bf16.gmra.mrb[0].mxu0 %v11163
      %v11297 = vpop.f32.mrb[0].mxu0
      %v11298 = vadd.f32 %v11134, %v11297
      %v11299 = vpop.f32.mrb[0].mxu0
      %v11300 = vpop.f32.mrb[0].mxu0
      %v11301 = vadd.f32 %v11134, %v11300
      %v11302 = vpop.f32.mrb[0].mxu0
      %11303 = vmatprep.mubr.bf16.mxu0 0
      %11304 = vmatmul.mubr.bf16.gmra.mrb[0].mxu0 %v11166
      %v11305 = vpop.f32.mrb[0].mxu0
      %v11306 = vadd.f32 %v11134, %v11305
      %v11307 = vpop.f32.mrb[0].mxu0
      %v11308 = vpop.f32.mrb[0].mxu0
      %v11309 = vadd.f32 %v11134, %v11308
      %v11310 = vpop.f32.mrb[0].mxu0
      %11311 = vmatprep.mubr.bf16.mxu0 0
      %11312 = vmatmul.mubr.bf16.gmra.mrb[0].mxu0 %v11169
      %v11313 = vpop.f32.mrb[0].mxu0
      %v11314 = vadd.f32 %v11134, %v11313
      %v11315 = vpop.f32.mrb[0].mxu0
      %v11316 = vpop.f32.mrb[0].mxu0
      %v11317 = vadd.f32 %v11134, %v11316
      %v11318 = vpop.f32.mrb[0].mxu0
      %11319 = vmatprep.mubr.bf16.mxu0 0
      %11320 = vmatmul.mubr.bf16.gmra.mrb[0].mxu0 %v11172
      %v11321 = vpop.f32.mrb[0].mxu0
      %v11322 = vadd.f32 %v11134, %v11321
      %v11323 = vpop.f32.mrb[0].mxu0
      %v11324 = vpop.f32.mrb[0].mxu0
      %v11325 = vadd.f32 %v11134, %v11324
      %v11326 = vpop.f32.mrb[0].mxu0
      %11327 = vmatprep.mubr.bf16.mxu0 0
      %11328 = vmatmul.mubr.bf16.gmra.mrb[0].mxu0 %v11175
      %v11329 = vpop.f32.mrb[0].mxu0
      %v11330 = vadd.f32 %v11134, %v11329
      %v11331 = vpop.f32.mrb[0].mxu0
      %v11332 = vpop.f32.mrb[0].mxu0
      %v11333 = vadd.f32 %v11134, %v11332
      %v11334 = vpop.f32.mrb[0].mxu0
      %11335 = vmatprep.mubr.bf16.mxu0 0
      %11336 = vmatmul.mubr.bf16.gmra.mrb[0].mxu0 %v11178
      %v11337 = vpop.f32.mrb[0].mxu0
      %v11338 = vadd.f32 %v11134, %v11337
      %v11339 = vpop.f32.mrb[0].mxu0
      %v11340 = vpop.f32.mrb[0].mxu0
      %v11341 = vadd.f32 %v11134, %v11340
      %v11342 = vpop.f32.mrb[0].mxu0
      %11343 = vmatprep.mubr.bf16.mxu0 0
      %11344 = vmatmul.mubr.bf16.gmra.mrb[0].mxu0 %v11181
      %v11345 = vpop.f32.mrb[0].mxu0
      %v11346 = vadd.f32 %v11134, %v11345
      %v11347 = vpop.f32.mrb[0].mxu0
      %v11348 = vpop.f32.mrb[0].mxu0
      %v11349 = vadd.f32 %v11134, %v11348
      %v11350 = vpop.f32.mrb[0].mxu0
      %11351 = vmatprep.mubr.bf16.mxu0 0
      %11352 = vmatmul.mubr.bf16.gmra.mrb[0].mxu0 %v11184
      %v11353 = vpop.f32.mrb[0].mxu0
      %v11354 = vadd.f32 %v11134, %v11353
      %v11355 = vpop.f32.mrb[0].mxu0
      %v11356 = vpop.f32.mrb[0].mxu0
      %v11357 = vadd.f32 %v11134, %v11356
      %v11358 = vpop.f32.mrb[0].mxu0
      %11359 = vmatprep.mubr.bf16.mxu0 0
      %11360 = vmatmul.mubr.bf16.gmra.mrb[0].mxu0 %v11187
      %v11361 = vpop.f32.mrb[0].mxu0
      %v11362 = vadd.f32 %v11134, %v11361
      %v11363 = vpop.f32.mrb[0].mxu0
      %v11364 = vpop.f32.mrb[0].mxu0
      %v11365 = vadd.f32 %v11134, %v11364
      %v11366 = vpop.f32.mrb[0].mxu0
      %11367 = vmatprep.mubr.bf16.mxu0 0
      %11368 = vmatmul.mubr.bf16.gmra.mrb[0].mxu0 %v11190
      %v11369 = vpop.f32.mrb[0].mxu0
      %v11370 = vadd.f32 %v11134, %v11369
      %v11371 = vpop.f32.mrb[0].mxu0
      %v11372 = vpop.f32.mrb[0].mxu0
      %v11373 = vadd.f32 %v11134, %v11372
      %v11374 = vpop.f32.mrb[0].mxu0
      %11375 = vmatprep.mubr.bf16.mxu0 0
      %11376 = vmatmul.mubr.bf16.gmra.mrb[0].mxu0 %v11193
      %v11377 = vpop.f32.mrb[0].mxu0
      %v11378 = vadd.f32 %v11134, %v11377
      %v11379 = vpop.f32.mrb[0].mxu0
      %v11380 = vpop.f32.mrb[0].mxu0
      %v11381 = vadd.f32 %v11134, %v11380
      %v11382 = vpop.f32.mrb[0].mxu0
      %11383 = vmatprep.mubr.bf16.mxu0 0
      %11384 = vmatmul.mubr.bf16.gmra.mrb[0].mxu0 %v11196
      %v11385 = vpop.f32.mrb[0].mxu0
      %v11386 = vadd.f32 %v11134, %v11385
      %v11387 = vpop.f32.mrb[0].mxu0
      %v11388 = vpop.f32.mrb[0].mxu0
      %v11389 = vadd.f32 %v11134, %v11388
      %v11390 = vpop.f32.mrb[0].mxu0
      %11391 = vmatprep.mubr.bf16.mxu0 0
      %11392 = vmatmul.mubr.bf16.gmra.mrb[0].mxu0 %v11199
      %v11393 = vpop.f32.mrb[0].mxu0
      %v11394 = vadd.f32 %v11134, %v11393
      %v11395 = vpop.f32.mrb[0].mxu0
      %v11396 = vpop.f32.mrb[0].mxu0
      %v11397 = vadd.f32 %v11134, %v11396
      %v11398 = vpop.f32.mrb[0].mxu0
      %11399 = vmatprep.mubr.bf16.mxu0 0
      %11400 = vmatmul.mubr.bf16.gmra.mrb[0].mxu0 %v11202
      %v11401 = vpop.f32.mrb[0].mxu0
      %v11402 = vadd.f32 %v11134, %v11401
      %v11403 = vpop.f32.mrb[0].mxu0
      %v11404 = vpop.f32.mrb[0].mxu0
      %v11405 = vadd.f32 %v11134, %v11404
      %v11406 = vpop.f32.mrb[0].mxu0
      %11407 = vmatprep.mubr.bf16.mxu0 0
      %11408 = vmatmul.mubr.bf16.gmra.mrb[0].mxu0 %v11205
      %v11409 = vpop.f32.mrb[0].mxu0
      %v11410 = vadd.f32 %v11134, %v11409
      %v11411 = vpop.f32.mrb[0].mxu0
      %v11412 = vpop.f32.mrb[0].mxu0
      %v11413 = vadd.f32 %v11134, %v11412
      %v11414 = vpop.f32.mrb[0].mxu0
      %11415 = vmatprep.mubr.bf16.mxu0 0
      %11416 = vmatmul.mubr.bf16.gmra.mrb[0].mxu0 %v11208
      %v11417 = vpop.f32.mrb[0].mxu0
      %v11418 = vadd.f32 %v11134, %v11417
      %v11419 = vpop.f32.mrb[0].mxu0
      %v11420 = vpop.f32.mrb[0].mxu0
      %v11421 = vadd.f32 %v11134, %v11420
      %v11422 = vpop.f32.mrb[0].mxu0
      %11423 = vmatprep.mubr.bf16.mxu0 0
      %11424 = vmatmul.mubr.bf16.gmra.mrb[0].mxu0 %v11211
      %v11425 = vpop.f32.mrb[0].mxu0
      %v11426 = vadd.f32 %v11134, %v11425
      %v11427 = vpop.f32.mrb[0].mxu0
      %v11428 = vpop.f32.mrb[0].mxu0
      %v11429 = vadd.f32 %v11134, %v11428
      %v11430 = vpop.f32.mrb[0].mxu0
      %11431 = vmatprep.mubr.bf16.mxu0 0
      %11432 = vmatmul.mubr.bf16.gmra.mrb[0].mxu0 %v11214
      %v11433 = vpop.f32.mrb[0].mxu0
      %v11434 = vadd.f32 %v11134, %v11433
      %v11435 = vpop.f32.mrb[0].mxu0
      %v11436 = vpop.f32.mrb[0].mxu0
      %v11437 = vadd.f32 %v11134, %v11436
      %v11438 = vpop.f32.mrb[0].mxu0
      %11439 = vmatprep.mubr.bf16.mxu0 0
      %11440 = vmatmul.mubr.bf16.gmra.mrb[0].mxu0 %v11217
      %v11441 = vpop.f32.mrb[0].mxu0
      %v11442 = vadd.f32 %v11134, %v11441
      %v11443 = vpop.f32.mrb[0].mxu0
      %v11444 = vpop.f32.mrb[0].mxu0
      %v11445 = vadd.f32 %v11134, %v11444
      %v11446 = vpop.f32.mrb[0].mxu0
      %11447 = vmatprep.mubr.bf16.mxu0 0
      %11448 = vmatmul.mubr.bf16.gmra.mrb[0].mxu0 %v11220
      %v11449 = vpop.f32.mrb[0].mxu0
      %v11450 = vadd.f32 %v11134, %v11449
      %v11451 = vpop.f32.mrb[0].mxu0
      %v11452 = vpop.f32.mrb[0].mxu0
      %v11453 = vadd.f32 %v11134, %v11452
      %v11454 = vpop.f32.mrb[0].mxu0
      %11455 = vmatprep.mubr.bf16.mxu0 0
      %11456 = vmatmul.mubr.bf16.gmra.mrb[0].mxu0 %v11223
      %v11457 = vpop.f32.mrb[0].mxu0
      %v11458 = vadd.f32 %v11134, %v11457
      %v11459 = vpop.f32.mrb[0].mxu0
      %v11460 = vpop.f32.mrb[0].mxu0
      %v11461 = vadd.f32 %v11134, %v11460
      %v11462 = vpop.f32.mrb[0].mxu0
      %11463 = vmatprep.mubr.bf16.mxu0 0
      %11464 = vmatmul.mubr.bf16.gmra.mrb[0].mxu0 %v11226
      %v11465 = vpop.f32.mrb[0].mxu0
      %v11466 = vadd.f32 %v11134, %v11465
      %v11467 = vpop.f32.mrb[0].mxu0
      %v11468 = vpop.f32.mrb[0].mxu0
      %v11469 = vadd.f32 %v11134, %v11468
      %v11470 = vpop.f32.mrb[0].mxu0
      %11471 = vmatprep.mubr.bf16.mxu0 0
      %11472 = vmatmul.mubr.bf16.gmra.mrb[0].mxu0 %v11229
      %v11473 = vpop.f32.mrb[0].mxu0
      %v11474 = vadd.f32 %v11134, %v11473
      %v11475 = vpop.f32.mrb[0].mxu0
      %v11476 = vpop.f32.mrb[0].mxu0
      %v11477 = vadd.f32 %v11134, %v11476
      %v11478 = vpop.f32.mrb[0].mxu0
      %11479 = vmatprep.mubr.bf16.mxu0 0
      %11480 = vmatmul.mubr.bf16.gmra.mrb[0].mxu0 %v11232
      %v11481 = vpop.f32.mrb[0].mxu0
      %v11482 = vadd.f32 %v11134, %v11481
      %v11483 = vpop.f32.mrb[0].mxu0
      %v11484 = vpop.f32.mrb[0].mxu0
      %v11485 = vadd.f32 %v11134, %v11484
      %v11486 = vpop.f32.mrb[0].mxu0
      %11487 = vmatprep.mubr.bf16.mxu0 0
      %11488 = vmatmul.mubr.bf16.gmra.mrb[0].mxu0 %v11235
      %v11489 = vpop.f32.mrb[0].mxu0
      %v11490 = vadd.f32 %v11134, %v11489
      %v11491 = vpop.f32.mrb[0].mxu0
      %v11492 = vpop.f32.mrb[0].mxu0
      %v11493 = vadd.f32 %v11134, %v11492
      %v11494 = vpop.f32.mrb[0].mxu0
      %11495 = vmatprep.mubr.bf16.mxu0 0
      %11496 = vmatmul.mubr.bf16.gmra.mrb[0].mxu0 %v11238
      %v11497 = vpop.f32.mrb[0].mxu0
      %v11498 = vadd.f32 %v11134, %v11497
      %v11499 = vpop.f32.mrb[0].mxu0
      %v11500 = vpop.f32.mrb[0].mxu0
      %v11501 = vadd.f32 %v11134, %v11500
      %v11502 = vpop.f32.mrb[0].mxu0
      %11503 = vmatprep.mubr.bf16.mxu0 0
      %11504 = vmatmul.mubr.bf16.gmra.mrb[0].mxu0 %v11241
      %v11505 = vpop.f32.mrb[0].mxu0
      %v11506 = vadd.f32 %v11134, %v11505
      %v11507 = vpop.f32.mrb[0].mxu0
      %v11508 = vpop.f32.mrb[0].mxu0
      %v11509 = vadd.f32 %v11134, %v11508
      %v11510 = vpop.f32.mrb[0].mxu0
      %11511 = vmatprep.mubr.bf16.mxu0 0
      %11512 = vmatmul.mubr.bf16.gmra.mrb[0].mxu0 %v11244
      %v11513 = vpop.f32.mrb[0].mxu0
      %v11514 = vadd.f32 %v11134, %v11513
      %v11515 = vpop.f32.mrb[0].mxu0
      %v11516 = vpop.f32.mrb[0].mxu0
      %v11517 = vadd.f32 %v11134, %v11516
      %v11518 = vpop.f32.mrb[0].mxu0
      %11519 = vmatprep.mubr.bf16.mxu0 0
      %11520 = vmatmul.mubr.bf16.gmra.mrb[0].mxu0 %v11247
      %v11521 = vpop.f32.mrb[0].mxu0
      %v11522 = vadd.f32 %v11134, %v11521
      %v11523 = vpop.f32.mrb[0].mxu0
      %v11524 = vpop.f32.mrb[0].mxu0
      %v11525 = vadd.f32 %v11134, %v11524
      %v11526 = vpop.f32.mrb[0].mxu0
      %11527 = vmatprep.mubr.bf16.mxu0 0
      %11528 = vmatmul.mubr.bf16.gmra.mrb[0].mxu0 %v11250
      %v11529 = vpop.f32.mrb[0].mxu0
      %v11530 = vadd.f32 %v11134, %v11529
      %v11531 = vpop.f32.mrb[0].mxu0
      %v11532 = vpop.f32.mrb[0].mxu0
      %v11533 = vadd.f32 %v11134, %v11532
      %v11534 = vpop.f32.mrb[0].mxu0
      %11535 = vmatprep.mubr.bf16.mxu0 0
      %11536 = vmatmul.mubr.bf16.gmra.mrb[0].mxu0 %v11253
      %v11537 = vpop.f32.mrb[0].mxu0
      %v11538 = vadd.f32 %v11134, %v11537
      %v11539 = vpop.f32.mrb[0].mxu0
      %v11540 = vpop.f32.mrb[0].mxu0
      %v11541 = vadd.f32 %v11134, %v11540
      %v11542 = vpop.f32.mrb[0].mxu0
      %11543 = vdwg.mxu0
      %v11544 = vmax.f32 %v11290, 0.0
      %v11545 = vmax.f32 %v11293, 0.0
      %v11546 = vmax.f32 %v11298, 0.0
      %v11547 = vmax.f32 %v11301, 0.0
      %v11548 = vmax.f32 %v11306, 0.0
      %v11549 = vmax.f32 %v11309, 0.0
      %v11550 = vmax.f32 %v11314, 0.0
      %v11551 = vmax.f32 %v11317, 0.0
      %v11552 = vmax.f32 %v11322, 0.0
      %v11553 = vmax.f32 %v11325, 0.0
      %v11554 = vmax.f32 %v11330, 0.0
      %v11555 = vmax.f32 %v11333, 0.0
      %v11556 = vmax.f32 %v11338, 0.0
      %v11557 = vmax.f32 %v11341, 0.0
      %v11558 = vmax.f32 %v11346, 0.0
      %v11559 = vmax.f32 %v11349, 0.0
      %v11560 = vmax.f32 %v11354, 0.0
      %v11561 = vmax.f32 %v11357, 0.0
      %v11562 = vmax.f32 %v11362, 0.0
      %v11563 = vmax.f32 %v11365, 0.0
      %v11564 = vmax.f32 %v11370, 0.0
      %v11565 = vmax.f32 %v11373, 0.0
      %v11566 = vmax.f32 %v11378, 0.0
      %v11567 = vmax.f32 %v11381, 0.0
      %v11568 = vmax.f32 %v11386, 0.0
      %v11569 = vmax.f32 %v11389, 0.0
      %v11570 = vmax.f32 %v11394, 0.0
      %v11571 = vmax.f32 %v11397, 0.0
      %v11572 = vmax.f32 %v11402, 0.0
      %v11573 = vmax.f32 %v11405, 0.0
      %v11574 = vmax.f32 %v11410, 0.0
      %v11575 = vmax.f32 %v11413, 0.0
      %v11576 = vmax.f32 %v11418, 0.0
      %v11577 = vmax.f32 %v11421, 0.0
      %v11578 = vmax.f32 %v11426, 0.0
      %v11579 = vmax.f32 %v11429, 0.0
      %v11580 = vmax.f32 %v11434, 0.0
      %v11581 = vmax.f32 %v11437, 0.0
      %v11582 = vmax.f32 %v11442, 0.0
      %v11583 = vmax.f32 %v11445, 0.0
      %v11584 = vmax.f32 %v11450, 0.0
      %v11585 = vmax.f32 %v11453, 0.0
      %v11586 = vmax.f32 %v11458, 0.0
      %v11587 = vmax.f32 %v11461, 0.0
      %v11588 = vmax.f32 %v11466, 0.0
      %v11589 = vmax.f32 %v11469, 0.0
      %v11590 = vmax.f32 %v11474, 0.0
      %v11591 = vmax.f32 %v11477, 0.0
      %v11592 = vmax.f32 %v11482, 0.0
      %v11593 = vmax.f32 %v11485, 0.0
      %v11594 = vmax.f32 %v11490, 0.0
      %v11595 = vmax.f32 %v11493, 0.0
      %v11596 = vmax.f32 %v11498, 0.0
      %v11597 = vmax.f32 %v11501, 0.0
      %v11598 = vmax.f32 %v11506, 0.0
      %v11599 = vmax.f32 %v11509, 0.0
      %v11600 = vmax.f32 %v11514, 0.0
      %v11601 = vmax.f32 %v11517, 0.0
      %v11602 = vmax.f32 %v11522, 0.0
      %v11603 = vmax.f32 %v11525, 0.0
      %v11604 = vmax.f32 %v11530, 0.0
      %v11605 = vmax.f32 %v11533, 0.0
      %v11606 = vmax.f32 %v11538, 0.0
      %v11607 = vmax.f32 %v11541, 0.0
      %11608 = vrot.lane.b32.xlu0 %v175, 125
      %v11609 = vpop.permute.xlu0 %11608
      %11610 = vrot.lane.b32.xlu0 %v176, 125
      %v11611 = vpop.permute.xlu0 %11610
      %11612 = vrot.lane.b32.xlu0 %v177, 125
      %v11613 = vpop.permute.xlu0 %11612
      %11614 = vrot.lane.b32.xlu0 %v178, 125
      %v11615 = vpop.permute.xlu0 %11614
      %11616 = vrot.lane.b32.xlu0 %v179, 125
      %v11617 = vpop.permute.xlu0 %11616
      %11618 = vrot.lane.b32.xlu0 %v180, 125
      %v11619 = vpop.permute.xlu0 %11618
      %11620 = vrot.lane.b32.xlu0 %v181, 125
      %v11621 = vpop.permute.xlu0 %11620
      %11622 = vrot.lane.b32.xlu0 %v182, 125
      %v11623 = vpop.permute.xlu0 %11622
      %11624 = vrot.lane.b32.xlu0 %v183, 125
      %v11625 = vpop.permute.xlu0 %11624
      %11626 = vrot.lane.b32.xlu0 %v184, 125
      %v11627 = vpop.permute.xlu0 %11626
      %11628 = vrot.lane.b32.xlu0 %v185, 125
      %v11629 = vpop.permute.xlu0 %11628
      %11630 = vrot.lane.b32.xlu0 %v186, 125
      %v11631 = vpop.permute.xlu0 %11630
      %11632 = vrot.lane.b32.xlu0 %v187, 125
      %v11633 = vpop.permute.xlu0 %11632
      %11634 = vrot.lane.b32.xlu0 %v188, 125
      %v11635 = vpop.permute.xlu0 %11634
      %11636 = vrot.lane.b32.xlu0 %v189, 125
      %v11637 = vpop.permute.xlu0 %11636
      %11638 = vrot.lane.b32.xlu0 %v190, 125
      %v11639 = vpop.permute.xlu0 %11638
      %11640 = vrot.lane.b32.xlu0 %v191, 125
      %v11641 = vpop.permute.xlu0 %11640
      %11642 = vrot.lane.b32.xlu0 %v192, 125
      %v11643 = vpop.permute.xlu0 %11642
      %11644 = vrot.lane.b32.xlu0 %v193, 125
      %v11645 = vpop.permute.xlu0 %11644
      %11646 = vrot.lane.b32.xlu0 %v194, 125
      %v11647 = vpop.permute.xlu0 %11646
      %11648 = vrot.lane.b32.xlu0 %v195, 125
      %v11649 = vpop.permute.xlu0 %11648
      %11650 = vrot.lane.b32.xlu0 %v196, 125
      %v11651 = vpop.permute.xlu0 %11650
      %11652 = vrot.lane.b32.xlu0 %v197, 125
      %v11653 = vpop.permute.xlu0 %11652
      %11654 = vrot.lane.b32.xlu0 %v198, 125
      %v11655 = vpop.permute.xlu0 %11654
      %11656 = vrot.lane.b32.xlu0 %v199, 125
      %v11657 = vpop.permute.xlu0 %11656
      %11658 = vrot.lane.b32.xlu0 %v200, 125
      %v11659 = vpop.permute.xlu0 %11658
      %11660 = vrot.lane.b32.xlu0 %v201, 125
      %v11661 = vpop.permute.xlu0 %11660
      %11662 = vrot.lane.b32.xlu0 %v202, 125
      %v11663 = vpop.permute.xlu0 %11662
      %11664 = vrot.lane.b32.xlu0 %v203, 125
      %v11665 = vpop.permute.xlu0 %11664
      %11666 = vrot.lane.b32.xlu0 %v204, 125
      %v11667 = vpop.permute.xlu0 %11666
      %11668 = vrot.lane.b32.xlu0 %v205, 125
      %v11669 = vpop.permute.xlu0 %11668
      %11670 = vrot.lane.b32.xlu0 %v206, 125
      %v11671 = vpop.permute.xlu0 %11670
      %11672 = vrot.lane.b32.xlu0 %v207, 125
      %v11673 = vpop.permute.xlu0 %11672
      %11674 = vrot.lane.b32.xlu0 %v208, 125
      %v11675 = vpop.permute.xlu0 %11674
      %11676 = vrot.lane.b32.xlu0 %v209, 125
      %v11677 = vpop.permute.xlu0 %11676
      %11678 = vrot.lane.b32.xlu0 %v210, 125
      %v11679 = vpop.permute.xlu0 %11678
      %11680 = vrot.lane.b32.xlu0 %v211, 125
      %v11681 = vpop.permute.xlu0 %11680
      %11682 = vrot.lane.b32.xlu0 %v212, 125
      %v11683 = vpop.permute.xlu0 %11682
      %11684 = vrot.lane.b32.xlu0 %v213, 125
      %v11685 = vpop.permute.xlu0 %11684
      %11686 = vrot.lane.b32.xlu0 %v214, 125
      %v11687 = vpop.permute.xlu0 %11686
      %11688 = vrot.lane.b32.xlu0 %v215, 125
      %v11689 = vpop.permute.xlu0 %11688
      %11690 = vrot.lane.b32.xlu0 %v216, 125
      %v11691 = vpop.permute.xlu0 %11690
      %11692 = vrot.lane.b32.xlu0 %v217, 125
      %v11693 = vpop.permute.xlu0 %11692
      %11694 = vrot.lane.b32.xlu0 %v218, 125
      %v11695 = vpop.permute.xlu0 %11694
      %11696 = vrot.lane.b32.xlu0 %v219, 125
      %v11697 = vpop.permute.xlu0 %11696
      %11698 = vrot.lane.b32.xlu0 %v220, 125
      %v11699 = vpop.permute.xlu0 %11698
      %11700 = vrot.lane.b32.xlu0 %v221, 125
      %v11701 = vpop.permute.xlu0 %11700
      %11702 = vrot.lane.b32.xlu0 %v222, 125
      %v11703 = vpop.permute.xlu0 %11702
      %11704 = vrot.lane.b32.xlu0 %v223, 125
      %v11705 = vpop.permute.xlu0 %11704
      %11706 = vrot.lane.b32.xlu0 %v224, 125
      %v11707 = vpop.permute.xlu0 %11706
      %11708 = vrot.lane.b32.xlu0 %v225, 125
      %v11709 = vpop.permute.xlu0 %11708
      %11710 = vrot.lane.b32.xlu0 %v226, 125
      %v11711 = vpop.permute.xlu0 %11710
      %11712 = vrot.lane.b32.xlu0 %v227, 125
      %v11713 = vpop.permute.xlu0 %11712
      %11714 = vrot.lane.b32.xlu0 %v228, 125
      %v11715 = vpop.permute.xlu0 %11714
      %11716 = vrot.lane.b32.xlu0 %v229, 125
      %v11717 = vpop.permute.xlu0 %11716
      %11718 = vrot.lane.b32.xlu0 %v230, 125
      %v11719 = vpop.permute.xlu0 %11718
      %11720 = vrot.lane.b32.xlu0 %v231, 125
      %v11721 = vpop.permute.xlu0 %11720
      %11722 = vrot.lane.b32.xlu0 %v232, 125
      %v11723 = vpop.permute.xlu0 %11722
      %11724 = vrot.lane.b32.xlu0 %v233, 125
      %v11725 = vpop.permute.xlu0 %11724
      %11726 = vrot.lane.b32.xlu0 %v234, 125
      %v11727 = vpop.permute.xlu0 %11726
      %11728 = vrot.lane.b32.xlu0 %v235, 125
      %v11729 = vpop.permute.xlu0 %11728
      %11730 = vrot.lane.b32.xlu0 %v236, 125
      %v11731 = vpop.permute.xlu0 %11730
      %11732 = vrot.lane.b32.xlu0 %v237, 125
      %v11733 = vpop.permute.xlu0 %11732
      %11734 = vrot.lane.b32.xlu0 %v238, 125
      %v11735 = vpop.permute.xlu0 %11734
      %v11800 = vadd.f32 %v11544, %v11609
      %v11801 = vadd.f32 %v11545, %v11611
      %v11802 = vadd.f32 %v11546, %v11613
      %v11803 = vadd.f32 %v11547, %v11615
      %v11804 = vadd.f32 %v11548, %v11617
      %v11805 = vadd.f32 %v11549, %v11619
      %v11806 = vadd.f32 %v11550, %v11621
      %v11807 = vadd.f32 %v11551, %v11623
      %v11808 = vadd.f32 %v11552, %v11625
      %v11809 = vadd.f32 %v11553, %v11627
      %v11810 = vadd.f32 %v11554, %v11629
      %v11811 = vadd.f32 %v11555, %v11631
      %v11812 = vadd.f32 %v11556, %v11633
      %v11813 = vadd.f32 %v11557, %v11635
      %v11814 = vadd.f32 %v11558, %v11637
      %v11815 = vadd.f32 %v11559, %v11639
      %v11816 = vadd.f32 %v11560, %v11641
      %v11817 = vadd.f32 %v11561, %v11643
      %v11818 = vadd.f32 %v11562, %v11645
      %v11819 = vadd.f32 %v11563, %v11647
      %v11820 = vadd.f32 %v11564, %v11649
      %v11821 = vadd.f32 %v11565, %v11651
      %v11822 = vadd.f32 %v11566, %v11653
      %v11823 = vadd.f32 %v11567, %v11655
      %v11824 = vadd.f32 %v11568, %v11657
      %v11825 = vadd.f32 %v11569, %v11659
      %v11826 = vadd.f32 %v11570, %v11661
      %v11827 = vadd.f32 %v11571, %v11663
      %v11828 = vadd.f32 %v11572, %v11665
      %v11829 = vadd.f32 %v11573, %v11667
      %v11830 = vadd.f32 %v11574, %v11669
      %v11831 = vadd.f32 %v11575, %v11671
      %v11832 = vadd.f32 %v11576, %v11673
      %v11833 = vadd.f32 %v11577, %v11675
      %v11834 = vadd.f32 %v11578, %v11677
      %v11835 = vadd.f32 %v11579, %v11679
      %v11836 = vadd.f32 %v11580, %v11681
      %v11837 = vadd.f32 %v11581, %v11683
      %v11838 = vadd.f32 %v11582, %v11685
      %v11839 = vadd.f32 %v11583, %v11687
      %v11840 = vadd.f32 %v11584, %v11689
      %v11841 = vadd.f32 %v11585, %v11691
      %v11842 = vadd.f32 %v11586, %v11693
      %v11843 = vadd.f32 %v11587, %v11695
      %v11844 = vadd.f32 %v11588, %v11697
      %v11845 = vadd.f32 %v11589, %v11699
      %v11846 = vadd.f32 %v11590, %v11701
      %v11847 = vadd.f32 %v11591, %v11703
      %v11848 = vadd.f32 %v11592, %v11705
      %v11849 = vadd.f32 %v11593, %v11707
      %v11850 = vadd.f32 %v11594, %v11709
      %v11851 = vadd.f32 %v11595, %v11711
      %v11852 = vadd.f32 %v11596, %v11713
      %v11853 = vadd.f32 %v11597, %v11715
      %v11854 = vadd.f32 %v11598, %v11717
      %v11855 = vadd.f32 %v11599, %v11719
      %v11856 = vadd.f32 %v11600, %v11721
      %v11857 = vadd.f32 %v11601, %v11723
      %v11858 = vadd.f32 %v11602, %v11725
      %v11859 = vadd.f32 %v11603, %v11727
      %v11860 = vadd.f32 %v11604, %v11729
      %v11861 = vadd.f32 %v11605, %v11731
      %v11862 = vadd.f32 %v11606, %v11733
      %v11863 = vadd.f32 %v11607, %v11735
      %11864 = vst.msk [vmem:[%s172] sm:$0xff] %vm7647, %v11800
      %11865 = vst.msk [vmem:[%s172 + $0x8] sm:$0xff] %vm7647, %v11801
      %11866 = vst.msk [vmem:[%s172 + $0x10] sm:$0xff] %vm7647, %v11802
      %11867 = vst.msk [vmem:[%s172 + $0x18] sm:$0xff] %vm7647, %v11803
      %11868 = vst.msk [vmem:[%s172 + $0x20] sm:$0xff] %vm7647, %v11804
      %11869 = vst.msk [vmem:[%s172 + $0x28] sm:$0xff] %vm7647, %v11805
      %11870 = vst.msk [vmem:[%s172 + $0x30] sm:$0xff] %vm7647, %v11806
      %11871 = vst.msk [vmem:[%s172 + $0x38] sm:$0xff] %vm7647, %v11807
      %11872 = vst.msk [vmem:[%s172 + $0x40] sm:$0xff] %vm7647, %v11808
      %11873 = vst.msk [vmem:[%s172 + $0x48] sm:$0xff] %vm7647, %v11809
      %11874 = vst.msk [vmem:[%s172 + $0x50] sm:$0xff] %vm7647, %v11810
      %11875 = vst.msk [vmem:[%s172 + $0x58] sm:$0xff] %vm7647, %v11811
      %11876 = vst.msk [vmem:[%s172 + $0x60] sm:$0xff] %vm7647, %v11812
      %11877 = vst.msk [vmem:[%s172 + $0x68] sm:$0xff] %vm7647, %v11813
      %11878 = vst.msk [vmem:[%s172 + $0x70] sm:$0xff] %vm7647, %v11814
      %11879 = vst.msk [vmem:[%s172 + $0x78] sm:$0xff] %vm7647, %v11815
      %11880 = vst.msk [vmem:[%s172 + $0x80] sm:$0xff] %vm7647, %v11816
      %11881 = vst.msk [vmem:[%s172 + $0x88] sm:$0xff] %vm7647, %v11817
      %11882 = vst.msk [vmem:[%s172 + $0x90] sm:$0xff] %vm7647, %v11818
      %11883 = vst.msk [vmem:[%s172 + $0x98] sm:$0xff] %vm7647, %v11819
      %11884 = vst.msk [vmem:[%s172 + $0xa0] sm:$0xff] %vm7647, %v11820
      %11885 = vst.msk [vmem:[%s172 + $0xa8] sm:$0xff] %vm7647, %v11821
      %11886 = vst.msk [vmem:[%s172 + $0xb0] sm:$0xff] %vm7647, %v11822
      %11887 = vst.msk [vmem:[%s172 + $0xb8] sm:$0xff] %vm7647, %v11823
      %11888 = vst.msk [vmem:[%s172 + $0xc0] sm:$0xff] %vm7647, %v11824
      %11889 = vst.msk [vmem:[%s172 + $0xc8] sm:$0xff] %vm7647, %v11825
      %11890 = vst.msk [vmem:[%s172 + $0xd0] sm:$0xff] %vm7647, %v11826
      %11891 = vst.msk [vmem:[%s172 + $0xd8] sm:$0xff] %vm7647, %v11827
      %11892 = vst.msk [vmem:[%s172 + $0xe0] sm:$0xff] %vm7647, %v11828
      %11893 = vst.msk [vmem:[%s172 + $0xe8] sm:$0xff] %vm7647, %v11829
      %11894 = vst.msk [vmem:[%s172 + $0xf0] sm:$0xff] %vm7647, %v11830
      %11895 = vst.msk [vmem:[%s172 + $0xf8] sm:$0xff] %vm7647, %v11831
      %11896 = vst.msk [vmem:[%s172 + $0x100] sm:$0xff] %vm7647, %v11832
      %11897 = vst.msk [vmem:[%s172 + $0x108] sm:$0xff] %vm7647, %v11833
      %11898 = vst.msk [vmem:[%s172 + $0x110] sm:$0xff] %vm7647, %v11834
      %11899 = vst.msk [vmem:[%s172 + $0x118] sm:$0xff] %vm7647, %v11835
      %11900 = vst.msk [vmem:[%s172 + $0x120] sm:$0xff] %vm7647, %v11836
      %11901 = vst.msk [vmem:[%s172 + $0x128] sm:$0xff] %vm7647, %v11837
      %11902 = vst.msk [vmem:[%s172 + $0x130] sm:$0xff] %vm7647, %v11838
      %11903 = vst.msk [vmem:[%s172 + $0x138] sm:$0xff] %vm7647, %v11839
      %11904 = vst.msk [vmem:[%s172 + $0x140] sm:$0xff] %vm7647, %v11840
      %11905 = vst.msk [vmem:[%s172 + $0x148] sm:$0xff] %vm7647, %v11841
      %11906 = vst.msk [vmem:[%s172 + $0x150] sm:$0xff] %vm7647, %v11842
      %11907 = vst.msk [vmem:[%s172 + $0x158] sm:$0xff] %vm7647, %v11843
      %11908 = vst.msk [vmem:[%s172 + $0x160] sm:$0xff] %vm7647, %v11844
      %11909 = vst.msk [vmem:[%s172 + $0x168] sm:$0xff] %vm7647, %v11845
      %11910 = vst.msk [vmem:[%s172 + $0x170] sm:$0xff] %vm7647, %v11846
      %11911 = vst.msk [vmem:[%s172 + $0x178] sm:$0xff] %vm7647, %v11847
      %11912 = vst.msk [vmem:[%s172 + $0x180] sm:$0xff] %vm7647, %v11848
      %11913 = vst.msk [vmem:[%s172 + $0x188] sm:$0xff] %vm7647, %v11849
      %11914 = vst.msk [vmem:[%s172 + $0x190] sm:$0xff] %vm7647, %v11850
      %11915 = vst.msk [vmem:[%s172 + $0x198] sm:$0xff] %vm7647, %v11851
      %11916 = vst.msk [vmem:[%s172 + $0x1a0] sm:$0xff] %vm7647, %v11852
      %11917 = vst.msk [vmem:[%s172 + $0x1a8] sm:$0xff] %vm7647, %v11853
      %11918 = vst.msk [vmem:[%s172 + $0x1b0] sm:$0xff] %vm7647, %v11854
      %11919 = vst.msk [vmem:[%s172 + $0x1b8] sm:$0xff] %vm7647, %v11855
      %11920 = vst.msk [vmem:[%s172 + $0x1c0] sm:$0xff] %vm7647, %v11856
      %11921 = vst.msk [vmem:[%s172 + $0x1c8] sm:$0xff] %vm7647, %v11857
      %11922 = vst.msk [vmem:[%s172 + $0x1d0] sm:$0xff] %vm7647, %v11858
      %11923 = vst.msk [vmem:[%s172 + $0x1d8] sm:$0xff] %vm7647, %v11859
      %11924 = vst.msk [vmem:[%s172 + $0x1e0] sm:$0xff] %vm7647, %v11860
      %11925 = vst.msk [vmem:[%s172 + $0x1e8] sm:$0xff] %vm7647, %v11861
      %11926 = vst.msk [vmem:[%s172 + $0x1f0] sm:$0xff] %vm7647, %v11862
      %11927 = vst.msk [vmem:[%s172 + $0x1f8] sm:$0xff] %vm7647, %v11863
      %s11928 = smul.u32 64, %s14
      %p11929 = scmp.lt.s32.totalorder %s11928, 127
      %s11930 = scalar_select %p11929, %s11928, 127
      %s11931 = smul.addr %s11930, 8
      %s11932 = scalar_lea.vmem %s3, %s11931
      // Predicated region
      $region33: #{tpu_custom_call.1} parent=31 // pred_check
        %p11933 = pneg %p100
      $region34: #{tpu_custom_call.1} parent=31 // pred_check_branch
        %11935 = sbr.rel (%p11933) target = $region36
      $region35: #{tpu_custom_call.1} parent=31 // pred_region
        %s11936 = smul.u32 64, %s14
      $region36: #{tpu_custom_call.1} parent=31 // pred_fallthru
        _
    $region32: #{tpu_custom_call.1} parent=5 // pred_fallthru
      _
    %p11937 = scmp.le.s32.totalorder 2, %s9
    // Predicated region
    $region37: #{tpu_custom_call.1} parent=5 // pred_check
      %p11938 = pneg %p11937
    $region38: #{tpu_custom_call.1} parent=5 // pred_check_branch
      %11940 = sbr.rel (%p11938) target = $region40
    $region39: #{tpu_custom_call.1} parent=5 // pred_region
      %s11941 = ssub.s32 %s9, 2
      // Predicated region
      $region41: #{tpu_custom_call.1} parent=39 // pred_check
        %p11942 = pneg %p106
      $region42: #{tpu_custom_call.1} parent=39 // pred_check_branch
        %11944 = sbr.rel (%p11942) target = $region44
      $region43: #{tpu_custom_call.1} parent=39 // pred_region
        %s11945 = smul.u32 64, %s15
        %p11946 = scmp.lt.s32.totalorder %s11945, 127
        %s11947 = scalar_select %p11946, %s11945, 127
        %s11948 = smul.addr %s11947, 8
        %s11949 = scalar_lea.vmem %s3, %s11948
      $region44: #{tpu_custom_call.1} parent=39 // pred_fallthru
        _
    $region40: #{tpu_custom_call.1} parent=5 // pred_fallthru
      _
  $region6: #{tpu_custom_call.1} parent=0 // loop_footer
    %s13 = sadd.s32 1, %s9
  $region7: #{tpu_custom_call.1} parent=0 // loop_footer_branch
    %8 = sbr.rel target = $region3
  $region8: #{tpu_custom_call.1} parent=0 // loop_exit
    _

</llo_original>
